<compile_context>
chip_gen: v7x
topology: tpu7x:2x2x1
jax: 0.10.0
libtpu: 0.0.40
codegen_flags: <defaults>
</compile_context>

<pallas_src>
import functools

import jax
import jax.numpy as jnp
from jax.experimental import pallas as pl
from jax.experimental.pallas import tpu as pltpu


def _round_up(x, m):
    return ((x + m - 1) // m) * m


def _pick_tile(total, candidates):
    for t in candidates:
        if total % t == 0:
            return t
    return total


# ---------------------------------------------------------------------------
# Pallas kernel: implicit-GEMM conv tile
#   x_ref : (1, FlatLen, TC)   bf16   -- padded image, spatially flattened
#   w_ref : (KH*KW, TC, TN)    bf16   -- per-tap weight slabs
#   b_ref : (1, TN)            f32
#   o_ref : (1, L, TN)         out dtype
#   acc   : (L, TN)            f32 VMEM scratch
# ---------------------------------------------------------------------------
def _make_conv_kernel(shifts, L, n_taps):
    def kernel(x_ref, w_ref, b_ref, o_ref, acc_ref):
        c = pl.program_id(2)

        @pl.when(c == 0)
        def _():
            acc_ref[...] = jnp.zeros_like(acc_ref)

        # Static unrolled loop over the KH*KW kernel taps: each tap is one
        # MXU matmul on a statically shifted window of the flattened input.
        for t in range(n_taps):
            lhs = x_ref[0, pl.ds(shifts[t], L), :]          # (L, TC) bf16
            acc_ref[...] += jnp.dot(
                lhs, w_ref[t], preferred_element_type=jnp.float32)

        @pl.when(c == pl.num_programs(2) - 1)
        def _():
            o_ref[0] = (acc_ref[...]
                        + b_ref[...].astype(jnp.float32)).astype(o_ref.dtype)

    return kernel


# ---------------------------------------------------------------------------
# IPEXConvNd forward (conv2d, NCHW in / NCHW out), groups == 1
# ---------------------------------------------------------------------------
def ipex_conv2d_forward(x_nchw, weight_oihw, bias, *, stride, padding,
                        dilation, groups=1, padding_mode="zeros",
                        compute_dtype=jnp.bfloat16):
    assert groups == 1  # TODO(synk): grouped / depthwise prepacked convs
    N, C, H, W = x_nchw.shape
    O, Cw, KH, KW = weight_oihw.shape
    assert C == Cw, "groups != 1 not supported"
    sh, sw = stride
    ph, pw = padding
    dh, dw = dilation
    out_dtype = x_nchw.dtype

    # _IPEXConvNd: non-'zeros' padding modes are applied with F.pad first,
    # then the conv runs with zero "real" padding.
    if padding_mode != "zeros":
        mode = {"reflect": "reflect", "replicate": "edge",
                "circular": "wrap"}[padding_mode]
        x_nchw = jnp.pad(
            x_nchw, ((0, 0), (0, 0), (ph, ph), (pw, pw)), mode=mode)
        ph = pw = 0
        N, C, H, W = x_nchw.shape

    OH = (H + 2 * ph - dh * (KH - 1) - 1) // sh + 1
    OW = (W + 2 * pw - dw * (KW - 1) - 1) // sw + 1
    assert OH > 0 and OW > 0

    # Geometry for the fused implicit GEMM (input-coordinate accumulator).
    Wpp = _round_up(W + 2 * pw, 8)                 # padded width (sublane-tidy)
    Hacc = (OH - 1) * sh + 1                       # accumulator rows needed
    Hx = max(H + 2 * ph, Hacc + (KH - 1) * dh + 1)  # rows of padded x exposed
    Cp = _round_up(C, 128)                         # lane-dense reduction dim
    Opad = _round_up(O, 128)                       # lane-dense output dim
    flat_len = Hx * Wpp
    L = Hacc * Wpp

    # NCHW -> NHWC, zero-pad H/W/C, flatten spatial, cast to MXU feed dtype.
    x = jnp.transpose(x_nchw, (0, 2, 3, 1))
    x = jnp.pad(x, ((0, 0), (ph, Hx - H - ph), (pw, Wpp - W - pw), (0, Cp - C)))
    x = x.reshape(N, flat_len, Cp).astype(compute_dtype)

    # Weight OIHW -> (KH*KW, Cp, Opad), matching the per-tap accumulation.
    w = jnp.transpose(weight_oihw, (2, 3, 1, 0))   # (KH, KW, C, O)
    w = jnp.pad(w, ((0, 0), (0, 0), (0, Cp - C), (0, Opad - O)))
    w = w.reshape(KH * KW, Cp, Opad).astype(compute_dtype)

    if bias is None:
        b = jnp.zeros((1, Opad), jnp.float32)
    else:
        b = jnp.pad(bias.astype(jnp.float32), (0, Opad - O)).reshape(1, Opad)

    # Static per-tap shifts in the flattened (row-major H*W) input.
    shifts = tuple(kh * dh * Wpp + kw * dw
                   for kh in range(KH) for kw in range(KW))

    TN = _pick_tile(Opad, (256, 128))
    TC = _pick_tile(Cp, (512, 256, 128))
    grid = (N, Opad // TN, Cp // TC)

    kernel = _make_conv_kernel(shifts, L, KH * KW)

    flops = 2 * N * L * Cp * Opad * KH * KW
    bytes_accessed = (N * flat_len * Cp * 2 + KH * KW * Cp * Opad * 2
                      + Opad * 4 + N * L * Opad * jnp.dtype(out_dtype).itemsize)

    out_flat = pl.pallas_call(
        kernel,
        out_shape=jax.ShapeDtypeStruct((N, L, Opad), out_dtype),
        grid_spec=pltpu.PrefetchScalarGridSpec(
            num_scalar_prefetch=0,
            grid=grid,
            in_specs=[
                pl.BlockSpec((1, flat_len, TC), lambda n, o, c: (n, 0, c)),
                pl.BlockSpec((KH * KW, TC, TN), lambda n, o, c: (0, c, o)),
                pl.BlockSpec((1, TN), lambda n, o, c: (0, o)),
            ],
            out_specs=pl.BlockSpec((1, L, TN), lambda n, o, c: (n, 0, o)),
            scratch_shapes=[pltpu.VMEM((L, TN), jnp.float32)],
        ),
        compiler_params=pltpu.CompilerParams(
            dimension_semantics=("parallel", "parallel", "arbitrary"),
            vmem_limit_bytes=48 * 1024 * 1024,
        ),
        cost_estimate=pl.CostEstimate(
            flops=flops, transcendentals=0, bytes_accessed=bytes_accessed),
    )(x, w, b)

    # Crop / stride-subsample back to (N, O, OH, OW).
    out = out_flat.reshape(N, Hacc, Wpp, Opad)
    out = out[:, ::sh, ::sw, :O][:, :OH, :OW]
    return jnp.transpose(out, (0, 3, 1, 2)).astype(out_dtype)


# ---------------------------------------------------------------------------
# Demo / check
# ---------------------------------------------------------------------------
if __name__ == "__main__":
    key = jax.random.PRNGKey(0)
    kx, kw_, kb = jax.random.split(key, 3)

    # Shapes consistent with a Conv2d: N=2, C=4, H=W=16, O=8, 3x3 kernel.
    N, C, H, W = 2, 4, 16, 16
    O, KH, KW = 8, 3, 3

    x = jax.random.normal(kx, (N, C, H, W), dtype=jnp.float32)
    weight = jax.random.normal(kw_, (O, C, KH, KW), dtype=jnp.float32) * 0.1
    bias = jax.random.normal(kb, (O,), dtype=jnp.float32)

    # The kernel feeds the MXU bf16; compare against a reference on the same
    # bf16-quantized operands (accumulation is f32 on both sides).
    xq = x.astype(jnp.bfloat16).astype(jnp.float32)
    wq = weight.astype(jnp.bfloat16).astype(jnp.float32)

    # --- Test 1: stride 1, padding 1, dilation 1, with bias ---
    stride, padding, dilation = (1, 1), (1, 1), (1, 1)
    fwd = jax.jit(functools.partial(
        ipex_conv2d_forward, stride=stride, padding=padding,
        dilation=dilation, padding_mode="zeros"))
    y = fwd(x, weight, bias)
    jax.block_until_ready(y)

    ref = jax.lax.conv_general_dilated(
        xq, wq, window_strides=stride, padding=[padding, padding],
        rhs_dilation=dilation,
        dimension_numbers=("NCHW", "OIHW", "NCHW"))
    ref = ref + bias.reshape(1, O, 1, 1)
    assert y.shape == ref.shape == (N, O, H, W)
    assert jnp.allclose(y, ref, atol=2e-2, rtol=2e-2)

    # --- Test 2: stride 2, no padding, no bias ---
    stride2, padding2, dilation2 = (2, 2), (0, 0), (1, 1)
    fwd2 = jax.jit(functools.partial(
        ipex_conv2d_forward, stride=stride2, padding=padding2,
        dilation=dilation2, padding_mode="zeros"))
    y2 = fwd2(x, weight, None)
    jax.block_until_ready(y2)

    ref2 = jax.lax.conv_general_dilated(
        xq, wq, window_strides=stride2, padding=[padding2, padding2],
        rhs_dilation=dilation2,
        dimension_numbers=("NCHW", "OIHW", "NCHW"))
    assert y2.shape == ref2.shape
    assert jnp.allclose(y2, ref2, atol=2e-2, rtol=2e-2)

    print("KERNEL_OK")
</pallas_src>

<mosaic_0001>
module attributes {stable_mosaic.version = 11 : i64} {
  func.func @kernel(%arg0: i32, %arg1: i32, %arg2: i32, %arg3: memref<1x456x128xbf16, #tpu.memory_space<vmem>>, %arg4: memref<9x128x128xbf16, #tpu.memory_space<vmem>>, %arg5: memref<1x128xf32, #tpu.memory_space<vmem>>, %arg6: memref<1x384x128xf32, #tpu.memory_space<vmem>>, %arg7: memref<384x128xf32, #tpu.memory_space<vmem>>) attributes {dimension_semantics = [#tpu.dimension_semantics<parallel>, #tpu.dimension_semantics<parallel>, #tpu.dimension_semantics<arbitrary>], iteration_bounds = array<i64: 2, 1, 1>, scalar_prefetch = 0 : i64, scratch_operands = 1 : i64, tpu.core_type = #tpu.core_type<tc>, window_params = [{transform_indices = @transform_0, window_bounds = array<i64: 1, 456, 128>}, {transform_indices = @transform_1, window_bounds = array<i64: 9, 128, 128>}, {transform_indices = @transform_2, window_bounds = array<i64: 1, 128>}, {transform_indices = @transform_3, window_bounds = array<i64: 1, 384, 128>}]} {
    %c0_i32 = arith.constant 0 : i32
    %0 = arith.cmpi eq, %arg2, %c0_i32 : i32
    %1 = arith.extui %0 : i1 to i32
    %c0_i32_0 = arith.constant 0 : i32
    %2 = arith.cmpi ne, %1, %c0_i32_0 : i32
    scf.if %2 {
      %cst_86 = arith.constant 0.000000e+00 : f32
      %78 = vector.broadcast %cst_86 : f32 to vector<384x128xf32>
      %c0_87 = arith.constant 0 : index
      %c0_88 = arith.constant 0 : index
      %79 = vector.load %arg7[%c0_87, %c0_88] : memref<384x128xf32, #tpu.memory_space<vmem>>, vector<384x128xf32>
      tpu.vector_store %arg7[%c0_87, %c0_88], %78 {strides = array<i32>} : memref<384x128xf32, #tpu.memory_space<vmem>>, vector<384x128xf32>,
    } else {
    }
    %c0 = arith.constant 0 : index
    %c0_1 = arith.constant 0 : index
    %c0_2 = arith.constant 0 : index
    %3 = vector.load %arg3[%c0, %c0_1, %c0_2] : memref<1x456x128xbf16, #tpu.memory_space<vmem>>, vector<1x384x128xbf16>
    %4 = vector.shape_cast %3 : vector<1x384x128xbf16> to vector<384x128xbf16>
    %c0_3 = arith.constant 0 : index
    %c0_4 = arith.constant 0 : index
    %5 = vector.load %arg7[%c0_3, %c0_4] : memref<384x128xf32, #tpu.memory_space<vmem>>, vector<384x128xf32>
    %c0_5 = arith.constant 0 : index
    %c0_6 = arith.constant 0 : index
    %c0_7 = arith.constant 0 : index
    %6 = vector.load %arg4[%c0_5, %c0_6, %c0_7] : memref<9x128x128xbf16, #tpu.memory_space<vmem>>, vector<1x128x128xbf16>
    %7 = vector.shape_cast %6 : vector<1x128x128xbf16> to vector<128x128xbf16>
    %cst = arith.constant dense<0.000000e+00> : vector<384x128xf32>
    %8 = tpu.matmul %4, %7, %cst {dimension_numbers = #tpu.dot_dimension_numbers<[1], [0], [0], [1], [0, 0, 1, 1], [], []>} : vector<384x128xbf16>, vector<128x128xbf16>, vector<384x128xf32> -> vector<384x128xf32>
    %9 = arith.addf %5, %8 : vector<384x128xf32>
    %c0_8 = arith.constant 0 : index
    %c0_9 = arith.constant 0 : index
    %10 = vector.load %arg7[%c0_8, %c0_9] : memref<384x128xf32, #tpu.memory_space<vmem>>, vector<384x128xf32>
    tpu.vector_store %arg7[%c0_8, %c0_9], %9 {strides = array<i32>} : memref<384x128xf32, #tpu.memory_space<vmem>>, vector<384x128xf32>,
    %c0_10 = arith.constant 0 : index
    %c1 = arith.constant 1 : index
    %c0_11 = arith.constant 0 : index
    %11 = vector.load %arg3[%c0_10, %c1, %c0_11] : memref<1x456x128xbf16, #tpu.memory_space<vmem>>, vector<1x384x128xbf16>
    %12 = vector.shape_cast %11 : vector<1x384x128xbf16> to vector<384x128xbf16>
    %c0_12 = arith.constant 0 : index
    %c0_13 = arith.constant 0 : index
    %13 = vector.load %arg7[%c0_12, %c0_13] : memref<384x128xf32, #tpu.memory_space<vmem>>, vector<384x128xf32>
    %c1_14 = arith.constant 1 : index
    %c0_15 = arith.constant 0 : index
    %c0_16 = arith.constant 0 : index
    %14 = vector.load %arg4[%c1_14, %c0_15, %c0_16] : memref<9x128x128xbf16, #tpu.memory_space<vmem>>, vector<1x128x128xbf16>
    %15 = vector.shape_cast %14 : vector<1x128x128xbf16> to vector<128x128xbf16>
    %cst_17 = arith.constant dense<0.000000e+00> : vector<384x128xf32>
    %16 = tpu.matmul %12, %15, %cst_17 {dimension_numbers = #tpu.dot_dimension_numbers<[1], [0], [0], [1], [0, 0, 1, 1], [], []>} : vector<384x128xbf16>, vector<128x128xbf16>, vector<384x128xf32> -> vector<384x128xf32>
    %17 = arith.addf %13, %16 : vector<384x128xf32>
    %c0_18 = arith.constant 0 : index
    %c0_19 = arith.constant 0 : index
    %18 = vector.load %arg7[%c0_18, %c0_19] : memref<384x128xf32, #tpu.memory_space<vmem>>, vector<384x128xf32>
    tpu.vector_store %arg7[%c0_18, %c0_19], %17 {strides = array<i32>} : memref<384x128xf32, #tpu.memory_space<vmem>>, vector<384x128xf32>,
    %c0_20 = arith.constant 0 : index
    %c2 = arith.constant 2 : index
    %c0_21 = arith.constant 0 : index
    %19 = vector.load %arg3[%c0_20, %c2, %c0_21] : memref<1x456x128xbf16, #tpu.memory_space<vmem>>, vector<1x384x128xbf16>
    %20 = vector.shape_cast %19 : vector<1x384x128xbf16> to vector<384x128xbf16>
    %c0_22 = arith.constant 0 : index
    %c0_23 = arith.constant 0 : index
    %21 = vector.load %arg7[%c0_22, %c0_23] : memref<384x128xf32, #tpu.memory_space<vmem>>, vector<384x128xf32>
    %c2_24 = arith.constant 2 : index
    %c0_25 = arith.constant 0 : index
    %c0_26 = arith.constant 0 : index
    %22 = vector.load %arg4[%c2_24, %c0_25, %c0_26] : memref<9x128x128xbf16, #tpu.memory_space<vmem>>, vector<1x128x128xbf16>
    %23 = vector.shape_cast %22 : vector<1x128x128xbf16> to vector<128x128xbf16>
    %cst_27 = arith.constant dense<0.000000e+00> : vector<384x128xf32>
    %24 = tpu.matmul %20, %23, %cst_27 {dimension_numbers = #tpu.dot_dimension_numbers<[1], [0], [0], [1], [0, 0, 1, 1], [], []>} : vector<384x128xbf16>, vector<128x128xbf16>, vector<384x128xf32> -> vector<384x128xf32>
    %25 = arith.addf %21, %24 : vector<384x128xf32>
    %c0_28 = arith.constant 0 : index
    %c0_29 = arith.constant 0 : index
    %26 = vector.load %arg7[%c0_28, %c0_29] : memref<384x128xf32, #tpu.memory_space<vmem>>, vector<384x128xf32>
    tpu.vector_store %arg7[%c0_28, %c0_29], %25 {strides = array<i32>} : memref<384x128xf32, #tpu.memory_space<vmem>>, vector<384x128xf32>,
    %c0_30 = arith.constant 0 : index
    %c24 = arith.constant 24 : index
    %c0_31 = arith.constant 0 : index
    %27 = vector.load %arg3[%c0_30, %c24, %c0_31] : memref<1x456x128xbf16, #tpu.memory_space<vmem>>, vector<1x384x128xbf16>
    %28 = vector.shape_cast %27 : vector<1x384x128xbf16> to vector<384x128xbf16>
    %c0_32 = arith.constant 0 : index
    %c0_33 = arith.constant 0 : index
    %29 = vector.load %arg7[%c0_32, %c0_33] : memref<384x128xf32, #tpu.memory_space<vmem>>, vector<384x128xf32>
    %c3 = arith.constant 3 : index
    %c0_34 = arith.constant 0 : index
    %c0_35 = arith.constant 0 : index
    %30 = vector.load %arg4[%c3, %c0_34, %c0_35] : memref<9x128x128xbf16, #tpu.memory_space<vmem>>, vector<1x128x128xbf16>
    %31 = vector.shape_cast %30 : vector<1x128x128xbf16> to vector<128x128xbf16>
    %cst_36 = arith.constant dense<0.000000e+00> : vector<384x128xf32>
    %32 = tpu.matmul %28, %31, %cst_36 {dimension_numbers = #tpu.dot_dimension_numbers<[1], [0], [0], [1], [0, 0, 1, 1], [], []>} : vector<384x128xbf16>, vector<128x128xbf16>, vector<384x128xf32> -> vector<384x128xf32>
    %33 = arith.addf %29, %32 : vector<384x128xf32>
    %c0_37 = arith.constant 0 : index
    %c0_38 = arith.constant 0 : index
    %34 = vector.load %arg7[%c0_37, %c0_38] : memref<384x128xf32, #tpu.memory_space<vmem>>, vector<384x128xf32>
    tpu.vector_store %arg7[%c0_37, %c0_38], %33 {strides = array<i32>} : memref<384x128xf32, #tpu.memory_space<vmem>>, vector<384x128xf32>,
    %c0_39 = arith.constant 0 : index
    %c25 = arith.constant 25 : index
    %c0_40 = arith.constant 0 : index
    %35 = vector.load %arg3[%c0_39, %c25, %c0_40] : memref<1x456x128xbf16, #tpu.memory_space<vmem>>, vector<1x384x128xbf16>
    %36 = vector.shape_cast %35 : vector<1x384x128xbf16> to vector<384x128xbf16>
    %c0_41 = arith.constant 0 : index
    %c0_42 = arith.constant 0 : index
    %37 = vector.load %arg7[%c0_41, %c0_42] : memref<384x128xf32, #tpu.memory_space<vmem>>, vector<384x128xf32>
    %c4 = arith.constant 4 : index
    %c0_43 = arith.constant 0 : index
    %c0_44 = arith.constant 0 : index
    %38 = vector.load %arg4[%c4, %c0_43, %c0_44] : memref<9x128x128xbf16, #tpu.memory_space<vmem>>, vector<1x128x128xbf16>
    %39 = vector.shape_cast %38 : vector<1x128x128xbf16> to vector<128x128xbf16>
    %cst_45 = arith.constant dense<0.000000e+00> : vector<384x128xf32>
    %40 = tpu.matmul %36, %39, %cst_45 {dimension_numbers = #tpu.dot_dimension_numbers<[1], [0], [0], [1], [0, 0, 1, 1], [], []>} : vector<384x128xbf16>, vector<128x128xbf16>, vector<384x128xf32> -> vector<384x128xf32>
    %41 = arith.addf %37, %40 : vector<384x128xf32>
    %c0_46 = arith.constant 0 : index
    %c0_47 = arith.constant 0 : index
    %42 = vector.load %arg7[%c0_46, %c0_47] : memref<384x128xf32, #tpu.memory_space<vmem>>, vector<384x128xf32>
    tpu.vector_store %arg7[%c0_46, %c0_47], %41 {strides = array<i32>} : memref<384x128xf32, #tpu.memory_space<vmem>>, vector<384x128xf32>,
    %c0_48 = arith.constant 0 : index
    %c26 = arith.constant 26 : index
    %c0_49 = arith.constant 0 : index
    %43 = vector.load %arg3[%c0_48, %c26, %c0_49] : memref<1x456x128xbf16, #tpu.memory_space<vmem>>, vector<1x384x128xbf16>
    %44 = vector.shape_cast %43 : vector<1x384x128xbf16> to vector<384x128xbf16>
    %c0_50 = arith.constant 0 : index
    %c0_51 = arith.constant 0 : index
    %45 = vector.load %arg7[%c0_50, %c0_51] : memref<384x128xf32, #tpu.memory_space<vmem>>, vector<384x128xf32>
    %c5 = arith.constant 5 : index
    %c0_52 = arith.constant 0 : index
    %c0_53 = arith.constant 0 : index
    %46 = vector.load %arg4[%c5, %c0_52, %c0_53] : memref<9x128x128xbf16, #tpu.memory_space<vmem>>, vector<1x128x128xbf16>
    %47 = vector.shape_cast %46 : vector<1x128x128xbf16> to vector<128x128xbf16>
    %cst_54 = arith.constant dense<0.000000e+00> : vector<384x128xf32>
    %48 = tpu.matmul %44, %47, %cst_54 {dimension_numbers = #tpu.dot_dimension_numbers<[1], [0], [0], [1], [0, 0, 1, 1], [], []>} : vector<384x128xbf16>, vector<128x128xbf16>, vector<384x128xf32> -> vector<384x128xf32>
    %49 = arith.addf %45, %48 : vector<384x128xf32>
    %c0_55 = arith.constant 0 : index
    %c0_56 = arith.constant 0 : index
    %50 = vector.load %arg7[%c0_55, %c0_56] : memref<384x128xf32, #tpu.memory_space<vmem>>, vector<384x128xf32>
    tpu.vector_store %arg7[%c0_55, %c0_56], %49 {strides = array<i32>} : memref<384x128xf32, #tpu.memory_space<vmem>>, vector<384x128xf32>,
    %c0_57 = arith.constant 0 : index
    %c48 = arith.constant 48 : index
    %c0_58 = arith.constant 0 : index
    %51 = vector.load %arg3[%c0_57, %c48, %c0_58] : memref<1x456x128xbf16, #tpu.memory_space<vmem>>, vector<1x384x128xbf16>
    %52 = vector.shape_cast %51 : vector<1x384x128xbf16> to vector<384x128xbf16>
    %c0_59 = arith.constant 0 : index
    %c0_60 = arith.constant 0 : index
    %53 = vector.load %arg7[%c0_59, %c0_60] : memref<384x128xf32, #tpu.memory_space<vmem>>, vector<384x128xf32>
    %c6 = arith.constant 6 : index
    %c0_61 = arith.constant 0 : index
    %c0_62 = arith.constant 0 : index
    %54 = vector.load %arg4[%c6, %c0_61, %c0_62] : memref<9x128x128xbf16, #tpu.memory_space<vmem>>, vector<1x128x128xbf16>
    %55 = vector.shape_cast %54 : vector<1x128x128xbf16> to vector<128x128xbf16>
    %cst_63 = arith.constant dense<0.000000e+00> : vector<384x128xf32>
    %56 = tpu.matmul %52, %55, %cst_63 {dimension_numbers = #tpu.dot_dimension_numbers<[1], [0], [0], [1], [0, 0, 1, 1], [], []>} : vector<384x128xbf16>, vector<128x128xbf16>, vector<384x128xf32> -> vector<384x128xf32>
    %57 = arith.addf %53, %56 : vector<384x128xf32>
    %c0_64 = arith.constant 0 : index
    %c0_65 = arith.constant 0 : index
    %58 = vector.load %arg7[%c0_64, %c0_65] : memref<384x128xf32, #tpu.memory_space<vmem>>, vector<384x128xf32>
    tpu.vector_store %arg7[%c0_64, %c0_65], %57 {strides = array<i32>} : memref<384x128xf32, #tpu.memory_space<vmem>>, vector<384x128xf32>,
    %c0_66 = arith.constant 0 : index
    %c49 = arith.constant 49 : index
    %c0_67 = arith.constant 0 : index
    %59 = vector.load %arg3[%c0_66, %c49, %c0_67] : memref<1x456x128xbf16, #tpu.memory_space<vmem>>, vector<1x384x128xbf16>
    %60 = vector.shape_cast %59 : vector<1x384x128xbf16> to vector<384x128xbf16>
    %c0_68 = arith.constant 0 : index
    %c0_69 = arith.constant 0 : index
    %61 = vector.load %arg7[%c0_68, %c0_69] : memref<384x128xf32, #tpu.memory_space<vmem>>, vector<384x128xf32>
    %c7 = arith.constant 7 : index
    %c0_70 = arith.constant 0 : index
    %c0_71 = arith.constant 0 : index
    %62 = vector.load %arg4[%c7, %c0_70, %c0_71] : memref<9x128x128xbf16, #tpu.memory_space<vmem>>, vector<1x128x128xbf16>
    %63 = vector.shape_cast %62 : vector<1x128x128xbf16> to vector<128x128xbf16>
    %cst_72 = arith.constant dense<0.000000e+00> : vector<384x128xf32>
    %64 = tpu.matmul %60, %63, %cst_72 {dimension_numbers = #tpu.dot_dimension_numbers<[1], [0], [0], [1], [0, 0, 1, 1], [], []>} : vector<384x128xbf16>, vector<128x128xbf16>, vector<384x128xf32> -> vector<384x128xf32>
    %65 = arith.addf %61, %64 : vector<384x128xf32>
    %c0_73 = arith.constant 0 : index
    %c0_74 = arith.constant 0 : index
    %66 = vector.load %arg7[%c0_73, %c0_74] : memref<384x128xf32, #tpu.memory_space<vmem>>, vector<384x128xf32>
    tpu.vector_store %arg7[%c0_73, %c0_74], %65 {strides = array<i32>} : memref<384x128xf32, #tpu.memory_space<vmem>>, vector<384x128xf32>,
    %c0_75 = arith.constant 0 : index
    %c50 = arith.constant 50 : index
    %c0_76 = arith.constant 0 : index
    %67 = vector.load %arg3[%c0_75, %c50, %c0_76] : memref<1x456x128xbf16, #tpu.memory_space<vmem>>, vector<1x384x128xbf16>
    %68 = vector.shape_cast %67 : vector<1x384x128xbf16> to vector<384x128xbf16>
    %c0_77 = arith.constant 0 : index
    %c0_78 = arith.constant 0 : index
    %69 = vector.load %arg7[%c0_77, %c0_78] : memref<384x128xf32, #tpu.memory_space<vmem>>, vector<384x128xf32>
    %c8 = arith.constant 8 : index
    %c0_79 = arith.constant 0 : index
    %c0_80 = arith.constant 0 : index
    %70 = vector.load %arg4[%c8, %c0_79, %c0_80] : memref<9x128x128xbf16, #tpu.memory_space<vmem>>, vector<1x128x128xbf16>
    %71 = vector.shape_cast %70 : vector<1x128x128xbf16> to vector<128x128xbf16>
    %cst_81 = arith.constant dense<0.000000e+00> : vector<384x128xf32>
    %72 = tpu.matmul %68, %71, %cst_81 {dimension_numbers = #tpu.dot_dimension_numbers<[1], [0], [0], [1], [0, 0, 1, 1], [], []>} : vector<384x128xbf16>, vector<128x128xbf16>, vector<384x128xf32> -> vector<384x128xf32>
    %73 = arith.addf %69, %72 : vector<384x128xf32>
    %c0_82 = arith.constant 0 : index
    %c0_83 = arith.constant 0 : index
    %74 = vector.load %arg7[%c0_82, %c0_83] : memref<384x128xf32, #tpu.memory_space<vmem>>, vector<384x128xf32>
    tpu.vector_store %arg7[%c0_82, %c0_83], %73 {strides = array<i32>} : memref<384x128xf32, #tpu.memory_space<vmem>>, vector<384x128xf32>,
    %c0_i32_84 = arith.constant 0 : i32
    %75 = arith.cmpi eq, %arg2, %c0_i32_84 : i32
    %76 = arith.extui %75 : i1 to i32
    %c0_i32_85 = arith.constant 0 : i32
    %77 = arith.cmpi ne, %76, %c0_i32_85 : i32
    scf.if %77 {
      %c0_86 = arith.constant 0 : index
      %c0_87 = arith.constant 0 : index
      %78 = vector.load %arg7[%c0_86, %c0_87] : memref<384x128xf32, #tpu.memory_space<vmem>>, vector<384x128xf32>
      %c0_88 = arith.constant 0 : index
      %c0_89 = arith.constant 0 : index
      %79 = vector.load %arg5[%c0_88, %c0_89] : memref<1x128xf32, #tpu.memory_space<vmem>>, vector<1x128xf32>
      %80 = vector.broadcast %79 : vector<1x128xf32> to vector<384x128xf32>
      %81 = arith.addf %78, %80 : vector<384x128xf32>
      %c0_90 = arith.constant 0 : index
      %c0_91 = arith.constant 0 : index
      %c0_92 = arith.constant 0 : index
      %82 = vector.load %arg6[%c0_90, %c0_91, %c0_92] : memref<1x384x128xf32, #tpu.memory_space<vmem>>, vector<1x384x128xf32>
      %83 = vector.shape_cast %82 : vector<1x384x128xf32> to vector<384x128xf32>
      %84 = vector.shape_cast %81 : vector<384x128xf32> to vector<1x384x128xf32>
      tpu.vector_store %arg6[%c0_90, %c0_91, %c0_92], %84 {strides = array<i32>} : memref<1x384x128xf32, #tpu.memory_space<vmem>>, vector<1x384x128xf32>,
    } else {
    }
    return
  }
  func.func @transform_0(%arg0: i32, %arg1: i32, %arg2: i32) -> (i32, i32, i32) {
    %c0_i32 = arith.constant 0 : i32
    %c0_i32_0 = arith.constant 0 : i32
    return %arg0, %c0_i32, %arg2 : i32, i32, i32
  }
  func.func @transform_1(%arg0: i32, %arg1: i32, %arg2: i32) -> (i32, i32, i32) {
    %c0_i32 = arith.constant 0 : i32
    %c0_i32_0 = arith.constant 0 : i32
    return %c0_i32, %arg2, %arg1 : i32, i32, i32
  }
  func.func @transform_2(%arg0: i32, %arg1: i32, %arg2: i32) -> (i32, i32) {
    %c0_i32 = arith.constant 0 : i32
    %c0_i32_0 = arith.constant 0 : i32
    return %c0_i32, %arg1 : i32, i32
  }
  func.func @transform_3(%arg0: i32, %arg1: i32, %arg2: i32) -> (i32, i32, i32) {
    %c0_i32 = arith.constant 0 : i32
    %c0_i32_0 = arith.constant 0 : i32
    return %arg0, %c0_i32, %arg1 : i32, i32, i32
  }
}

</mosaic_0001>

<llo_original>
// kernel: ipex_conv2d_forward.1
$region0: #{ipex_conv2d_forward.1}
  #allocation0 [shape = 'u32[]', space=smem, size = 0x4, offset = 0x4, fixed_abs, tag = 'smem constant byte address 0x4 - core index']
  #allocation1 [shape = 'u32[144,128]{1,0:T(1,128)}', space=vmem, size = 0x12000, scoped, tag = 'internal scratch']
  #allocation2 [shape = 'f32[384,128]{1,0:T(8,128)}', space=vmem, size = 0x30000, scoped, tag = 'scratch operand']
  %s0 = inlined_call_operand.vmem [shape: bf16[2,456,128], index: 0, kind: input, shape index: {}]
  %s1 = inlined_call_operand.vmem [shape: bf16[9,128,128], index: 1, kind: input, shape index: {}]
  %s2 = inlined_call_operand.vmem [shape: f32[1,128], index: 2, kind: input, shape index: {}]
  %s3 = inlined_call_operand.vmem [shape: f32[2,384,128], index: 3, kind: output, shape index: {}]
  %s4 = sld [smem:[#allocation0]]
  $region53: #{ipex_conv2d_forward.1} parent=0
    _
  %s6 = ssub.s32 1, %s4
  %s7 = scalar_select 0, %s6, %s4
  loop: start=0, step=1, limit=4
  $region2: #{ipex_conv2d_forward.1} parent=0 // loop_pre_header
    _
  $region3: #{ipex_conv2d_forward.1} parent=0 // loop_header
    %s9 = sphi 0, %s13
    %p10 = scmp.ge.s32.totalorder %s9, 4
    %s16 = sphi 0, %s35
    %s17 = sphi 0, %s31
    %s18 = sphi 0, %s27
    %s19 = sphi 0, %s16
    %s20 = sphi 0, %s17
    %s21 = sphi 0, %s18
    %s22 = sphi 0, %s19
    %s23 = sphi 0, %s20
    %s24 = sphi 0, %s21
    %s40 = sphi 0, %s42
    %s43 = sphi 0, %s40
    %s44 = sphi 0, %s43
    %s60 = sphi 0, %s44
    %s68 = sphi 0, %s70
    %s71 = sphi 0, %s68
    %s72 = sphi 0, %s71
    %s88 = sphi 0, %s72
    %s94 = sphi 0, %s96
    %s97 = sphi 0, %s94
    %s98 = sphi 0, %s97
    %s114 = sphi 0, %s98
    %s122 = sphi 0, %s124
    %s125 = sphi 0, %s122
    %s126 = sphi 0, %s125
    %s142 = sphi 0, %s126
  $region4: #{ipex_conv2d_forward.1} parent=0 // loop_header_branch
    %12 = sbr.rel (%p10) target = $region8
  $region5: #{ipex_conv2d_forward.1} parent=0 // loop_body
    %s14 = ssub.s32 %s9, 1
    %s15 = ssub.s32 %s9, 2
    %s25 = sadd.s32 1, %s18
    %p26 = scmp.ge.s32.totalorder %s25, 1
    %s27 = scalar_select %p26, 0, %s25
    %s28 = sadd.s32 1, %s17
    %s29 = scalar_select %p26, %s28, %s17
    %p30 = scmp.ge.s32.totalorder %s29, 1
    %s31 = scalar_select %p30, 0, %s29
    %s32 = sadd.s32 1, %s16
    %s33 = scalar_select %p30, %s32, %s16
    %p34 = scmp.ge.s32.totalorder %s33, 2
    %s35 = scalar_select %p34, 0, %s33
    %s36 = ssub.s32 %s16, %s35
    %s37 = ssub.s32 %s18, %s27
    %s38 = sor.u32 %s36, %s37
    %p39 = scmp.eq.s32.totalorder %s38, 0
    %s41 = sadd.s32 %s40, 1
    %s42 = scalar_select %p39, %s40, %s41
    %p45 = pneg %p39
    %p46 = scmp.eq.s32.totalorder %s9, 1
    %p47 = por %p45, %p46
    %p48 = scmp.ne.s32.totalorder %s40, %s43
    %p49 = scmp.eq.s32.totalorder %s9, 0
    %p50 = por %p48, %p49
    %p51 = scmp.ne.s32.totalorder %s40, %s43
    %p52 = scmp.eq.s32.totalorder %s14, 1
    %p53 = por %p51, %p52
    %p54 = scmp.ne.s32.totalorder %s43, %s44
    %p55 = scmp.eq.s32.totalorder %s14, 0
    %p56 = por %p54, %p55
    %p57 = scmp.ne.s32.totalorder %s43, %s44
    %p58 = scmp.eq.s32.totalorder %s15, 1
    %p59 = por %p57, %p58
    %p61 = scmp.ne.s32.totalorder %s44, %s60
    %p62 = scmp.eq.s32.totalorder %s15, 0
    %p63 = por %p61, %p62
    %s64 = ssub.s32 %s18, %s27
    %s65 = ssub.s32 %s17, %s31
    %s66 = sor.u32 %s64, %s65
    %p67 = scmp.eq.s32.totalorder %s66, 0
    %s69 = sadd.s32 %s68, 1
    %s70 = scalar_select %p67, %s68, %s69
    %p73 = pneg %p67
    %p74 = scmp.eq.s32.totalorder %s9, 1
    %p75 = por %p73, %p74
    %p76 = scmp.ne.s32.totalorder %s68, %s71
    %p77 = scmp.eq.s32.totalorder %s9, 0
    %p78 = por %p76, %p77
    %p79 = scmp.ne.s32.totalorder %s68, %s71
    %p80 = scmp.eq.s32.totalorder %s14, 1
    %p81 = por %p79, %p80
    %p82 = scmp.ne.s32.totalorder %s71, %s72
    %p83 = scmp.eq.s32.totalorder %s14, 0
    %p84 = por %p82, %p83
    %p85 = scmp.ne.s32.totalorder %s71, %s72
    %p86 = scmp.eq.s32.totalorder %s15, 1
    %p87 = por %p85, %p86
    %p89 = scmp.ne.s32.totalorder %s72, %s88
    %p90 = scmp.eq.s32.totalorder %s15, 0
    %p91 = por %p89, %p90
    %s92 = ssub.s32 %s17, %s31
    %p93 = scmp.eq.s32.totalorder %s92, 0
    %s95 = sadd.s32 %s94, 1
    %s96 = scalar_select %p93, %s94, %s95
    %p99 = pneg %p93
    %p100 = scmp.eq.s32.totalorder %s9, 1
    %p101 = por %p99, %p100
    %p102 = scmp.ne.s32.totalorder %s94, %s97
    %p103 = scmp.eq.s32.totalorder %s9, 0
    %p104 = por %p102, %p103
    %p105 = scmp.ne.s32.totalorder %s94, %s97
    %p106 = scmp.eq.s32.totalorder %s14, 1
    %p107 = por %p105, %p106
    %p108 = scmp.ne.s32.totalorder %s97, %s98
    %p109 = scmp.eq.s32.totalorder %s14, 0
    %p110 = por %p108, %p109
    %p111 = scmp.ne.s32.totalorder %s97, %s98
    %p112 = scmp.eq.s32.totalorder %s15, 1
    %p113 = por %p111, %p112
    %p115 = scmp.ne.s32.totalorder %s98, %s114
    %p116 = scmp.eq.s32.totalorder %s15, 0
    %p117 = por %p115, %p116
    %s118 = ssub.s32 %s16, %s35
    %s119 = ssub.s32 %s17, %s31
    %s120 = sor.u32 %s118, %s119
    %p121 = scmp.eq.s32.totalorder %s120, 0
    %s123 = sadd.s32 %s122, 1
    %s124 = scalar_select %p121, %s122, %s123
    %p127 = pneg %p121
    %p128 = scmp.eq.s32.totalorder %s9, 1
    %p129 = por %p127, %p128
    %p130 = scmp.ne.s32.totalorder %s122, %s125
    %p131 = scmp.eq.s32.totalorder %s9, 0
    %p132 = por %p130, %p131
    %p133 = scmp.ne.s32.totalorder %s122, %s125
    %p134 = scmp.eq.s32.totalorder %s14, 1
    %p135 = por %p133, %p134
    %p136 = scmp.ne.s32.totalorder %s125, %s126
    %p137 = scmp.eq.s32.totalorder %s14, 0
    %p138 = por %p136, %p137
    %p139 = scmp.ne.s32.totalorder %s125, %s126
    %p140 = scmp.eq.s32.totalorder %s15, 1
    %p141 = por %p139, %p140
    %p143 = scmp.ne.s32.totalorder %s126, %s142
    %p144 = scmp.eq.s32.totalorder %s15, 0
    %p145 = por %p143, %p144
    %p146 = scmp.le.s32.totalorder 1, %s9
    %p147 = scmp.lt.s32.totalorder %s9, 3
    %p148 = pnand %p146, %p147
    %p149 = pneg %p148
    // Predicated region
    $region9: #{ipex_conv2d_forward.1} parent=5 // pred_check
      _
    $region10: #{ipex_conv2d_forward.1} parent=5 // pred_check_branch
      %151 = sbr.rel (%p148) target = $region12
    $region11: #{ipex_conv2d_forward.1} parent=5 // pred_region
      %s152 = ssub.s32 %s9, 1
      // Predicated region
      $region13: #{ipex_conv2d_forward.1} parent=11 // pred_check
        %p153 = pneg %p84
      $region14: #{ipex_conv2d_forward.1} parent=11 // pred_check_branch
        %155 = sbr.rel (%p153) target = $region16
      $region15: #{ipex_conv2d_forward.1} parent=11 // pred_region
        %s156 = smul.u32 16, %s21
        %p157 = scmp.lt.s32.totalorder %s156, 15
        %s158 = scalar_select %p157, %s156, 15
        %p159 = scmp.lt.s32.totalorder %s20, 0
        %s160 = scalar_select %p159, %s20, 0
        %s161 = sadd.s32 %s160, %s158
        %s162 = smul.addr %s161, 4
        %s163 = scalar_lea.vmem %s1, %s162
        %s164 = smul.u32 16, %s21
      $region16: #{ipex_conv2d_forward.1} parent=11 // pred_fallthru
        _
      // Predicated region
      $region17: #{ipex_conv2d_forward.1} parent=11 // pred_check
        %p165 = pneg %p110
      $region18: #{ipex_conv2d_forward.1} parent=11 // pred_check_branch
        %167 = sbr.rel (%p165) target = $region20
      $region19: #{ipex_conv2d_forward.1} parent=11 // pred_region
        %p168 = scmp.lt.s32.totalorder %s20, 0
        %s169 = scalar_select %p168, %s20, 0
        %s170 = scalar_lea.vmem %s2, %s169
      $region20: #{ipex_conv2d_forward.1} parent=11 // pred_fallthru
        _
    $region12: #{ipex_conv2d_forward.1} parent=5 // pred_fallthru
      _
    %p171 = scmp.lt.s32.totalorder %s9, 2
    // Predicated region
    $region21: #{ipex_conv2d_forward.1} parent=5 // pred_check
      %p172 = pneg %p171
    $region22: #{ipex_conv2d_forward.1} parent=5 // pred_check_branch
      %174 = sbr.rel (%p172) target = $region24
    $region23: #{ipex_conv2d_forward.1} parent=5 // pred_region
      // Predicated region
      $region25: #{ipex_conv2d_forward.1} parent=23 // pred_check
        %p175 = pneg %p50
      $region26: #{ipex_conv2d_forward.1} parent=23 // pred_check_branch
        %177 = sbr.rel (%p175) target = $region28
      $region27: #{ipex_conv2d_forward.1} parent=23 // pred_region
        %p178 = scmp.lt.s32.totalorder %s16, 1
        %s179 = scalar_select %p178, %s16, 1
        %p180 = scmp.lt.s32.totalorder %s18, 0
        %s181 = scalar_select %p180, %s18, 0
        %s182 = smul.addr %s179, 57
        %s183 = sadd.s32 %s181, %s182
        %s184 = smul.addr %s183, 4
        %s185 = scalar_lea.vmem %s0, %s184
      $region28: #{ipex_conv2d_forward.1} parent=23 // pred_fallthru
        _
    $region24: #{ipex_conv2d_forward.1} parent=5 // pred_fallthru
      _
    %p186 = scmp.le.s32.totalorder 1, %s9
    %p187 = scmp.lt.s32.totalorder %s9, 3
    %p188 = pnand %p186, %p187
    %p189 = pneg %p188
    // Predicated region
    $region29: #{ipex_conv2d_forward.1} parent=5 // pred_check
      _
    $region30: #{ipex_conv2d_forward.1} parent=5 // pred_check_branch
      %191 = sbr.rel (%p188) target = $region32
    $region31: #{ipex_conv2d_forward.1} parent=5 // pred_region
      %s192 = ssub.s32 %s9, 1
      %p193 = scmp.lt.s32.totalorder %s19, 1
      %s194 = scalar_select %p193, %s19, 1
      %p195 = scmp.lt.s32.totalorder %s21, 0
      %s196 = scalar_select %p195, %s21, 0
      %s197 = smul.addr %s194, 57
      %s198 = sadd.s32 %s196, %s197
      %s199 = smul.addr %s198, 4
      %s200 = scalar_lea.vmem %s0, %s199
      %p201 = pneg %p56
      %p202 = pneg %p53
      %s203 = smul.u32 16, %s21
      %p204 = scmp.lt.s32.totalorder %s203, 15
      %s205 = scalar_select %p204, %s203, 15
      %p206 = scmp.lt.s32.totalorder %s20, 0
      %s207 = scalar_select %p206, %s20, 0
      %s208 = sadd.s32 %s207, %s205
      %s209 = smul.addr %s208, 4
      %s210 = scalar_lea.vmem %s1, %s209
      %p211 = pneg %p84
      %p212 = pneg %p81
      %p213 = scmp.lt.s32.totalorder %s20, 0
      %s214 = scalar_select %p213, %s20, 0
      %s215 = scalar_lea.vmem %s2, %s214
      %p216 = pneg %p110
      %p217 = pneg %p107
      %p218 = pneg %p138
      %p219 = pneg %p135
      %p220 = scmp.lt.s32.totalorder %s19, 1
      %s221 = scalar_select %p220, %s19, 1
      %p222 = scmp.lt.s32.totalorder %s20, 0
      %s223 = scalar_select %p222, %s20, 0
      %s224 = smul.addr %s221, 48
      %s225 = sadd.s32 %s223, %s224
      %s226 = smul.addr %s225, 8
      %s227 = scalar_lea.vmem %s3, %s226
      %p228 = scmp.lt.s32.totalorder %s19, 1
      %s229 = scalar_select %p228, %s19, 1
      %p230 = scmp.lt.s32.totalorder %s21, 0
      %s231 = scalar_select %p230, %s21, 0
      %s232 = smul.addr %s229, 57
      %s233 = sadd.s32 %s231, %s232
      %s234 = smul.addr %s233, 4
      %s235 = scalar_lea.vmem %s0, %s234
      %s236 = smul.u32 16, %s21
      %p237 = scmp.lt.s32.totalorder %s236, 15
      %s238 = scalar_select %p237, %s236, 15
      %p239 = scmp.lt.s32.totalorder %s20, 0
      %s240 = scalar_select %p239, %s20, 0
      %s241 = sadd.s32 %s240, %s238
      %s242 = smul.addr %s241, 4
      %s243 = scalar_lea.vmem %s1, %s242
      %s244 = smul.u32 16, %s21
      %p245 = scmp.lt.s32.totalorder %s20, 0
      %s246 = scalar_select %p245, %s20, 0
      %s247 = scalar_lea.vmem %s2, %s246
      %p248 = scmp.lt.s32.totalorder %s19, 1
      %s249 = scalar_select %p248, %s19, 1
      %p250 = scmp.lt.s32.totalorder %s20, 0
      %s251 = scalar_select %p250, %s20, 0
      %s252 = smul.addr %s249, 48
      %s253 = sadd.s32 %s251, %s252
      %s254 = smul.addr %s253, 8
      %s255 = scalar_lea.vmem %s3, %s254
      %p257 = scmp.eq.s32.totalorder %s21, 0
      // Predicated region
      $region33: #{ipex_conv2d_forward.1} parent=31 // pred_check
        %p258 = pneg %p257
      $region34: #{ipex_conv2d_forward.1} parent=31 // pred_check_branch
        %260 = sbr.rel (%p258) target = $region36
      $region35: #{ipex_conv2d_forward.1} parent=31 // pred_region
        %261 = vst [vmem:[#allocation2] sm:$0xff] 0.0
        %262 = vst [vmem:[#allocation2 + $0x8] sm:$0xff] 0.0
        %263 = vst [vmem:[#allocation2 + $0x10] sm:$0xff] 0.0
        %264 = vst [vmem:[#allocation2 + $0x18] sm:$0xff] 0.0
        %265 = vst [vmem:[#allocation2 + $0x20] sm:$0xff] 0.0
        %266 = vst [vmem:[#allocation2 + $0x28] sm:$0xff] 0.0
        %267 = vst [vmem:[#allocation2 + $0x30] sm:$0xff] 0.0
        %268 = vst [vmem:[#allocation2 + $0x38] sm:$0xff] 0.0
        %269 = vst [vmem:[#allocation2 + $0x40] sm:$0xff] 0.0
        %270 = vst [vmem:[#allocation2 + $0x48] sm:$0xff] 0.0
        %271 = vst [vmem:[#allocation2 + $0x50] sm:$0xff] 0.0
        %272 = vst [vmem:[#allocation2 + $0x58] sm:$0xff] 0.0
        %273 = vst [vmem:[#allocation2 + $0x60] sm:$0xff] 0.0
        %274 = vst [vmem:[#allocation2 + $0x68] sm:$0xff] 0.0
        %275 = vst [vmem:[#allocation2 + $0x70] sm:$0xff] 0.0
        %276 = vst [vmem:[#allocation2 + $0x78] sm:$0xff] 0.0
        %277 = vst [vmem:[#allocation2 + $0x80] sm:$0xff] 0.0
        %278 = vst [vmem:[#allocation2 + $0x88] sm:$0xff] 0.0
        %279 = vst [vmem:[#allocation2 + $0x90] sm:$0xff] 0.0
        %280 = vst [vmem:[#allocation2 + $0x98] sm:$0xff] 0.0
        %281 = vst [vmem:[#allocation2 + $0xa0] sm:$0xff] 0.0
        %282 = vst [vmem:[#allocation2 + $0xa8] sm:$0xff] 0.0
        %283 = vst [vmem:[#allocation2 + $0xb0] sm:$0xff] 0.0
        %284 = vst [vmem:[#allocation2 + $0xb8] sm:$0xff] 0.0
        %285 = vst [vmem:[#allocation2 + $0xc0] sm:$0xff] 0.0
        %286 = vst [vmem:[#allocation2 + $0xc8] sm:$0xff] 0.0
        %287 = vst [vmem:[#allocation2 + $0xd0] sm:$0xff] 0.0
        %288 = vst [vmem:[#allocation2 + $0xd8] sm:$0xff] 0.0
        %289 = vst [vmem:[#allocation2 + $0xe0] sm:$0xff] 0.0
        %290 = vst [vmem:[#allocation2 + $0xe8] sm:$0xff] 0.0
        %291 = vst [vmem:[#allocation2 + $0xf0] sm:$0xff] 0.0
        %292 = vst [vmem:[#allocation2 + $0xf8] sm:$0xff] 0.0
        %293 = vst [vmem:[#allocation2 + $0x100] sm:$0xff] 0.0
        %294 = vst [vmem:[#allocation2 + $0x108] sm:$0xff] 0.0
        %295 = vst [vmem:[#allocation2 + $0x110] sm:$0xff] 0.0
        %296 = vst [vmem:[#allocation2 + $0x118] sm:$0xff] 0.0
        %297 = vst [vmem:[#allocation2 + $0x120] sm:$0xff] 0.0
        %298 = vst [vmem:[#allocation2 + $0x128] sm:$0xff] 0.0
        %299 = vst [vmem:[#allocation2 + $0x130] sm:$0xff] 0.0
        %300 = vst [vmem:[#allocation2 + $0x138] sm:$0xff] 0.0
        %301 = vst [vmem:[#allocation2 + $0x140] sm:$0xff] 0.0
        %302 = vst [vmem:[#allocation2 + $0x148] sm:$0xff] 0.0
        %303 = vst [vmem:[#allocation2 + $0x150] sm:$0xff] 0.0
        %304 = vst [vmem:[#allocation2 + $0x158] sm:$0xff] 0.0
        %305 = vst [vmem:[#allocation2 + $0x160] sm:$0xff] 0.0
        %306 = vst [vmem:[#allocation2 + $0x168] sm:$0xff] 0.0
        %307 = vst [vmem:[#allocation2 + $0x170] sm:$0xff] 0.0
        %308 = vst [vmem:[#allocation2 + $0x178] sm:$0xff] 0.0
      $region36: #{ipex_conv2d_forward.1} parent=31 // pred_fallthru
        _
      %v309 = vld [vmem:[%s235] sm:$0xf]
      %v310 = vld [vmem:[%s235 + $0x4] sm:$0xf]
      %v311 = vld [vmem:[%s235 + $0x8] sm:$0xf]
      %v312 = vld [vmem:[%s235 + $0xc] sm:$0xf]
      %v313 = vld [vmem:[%s235 + $0x10] sm:$0xf]
      %v314 = vld [vmem:[%s235 + $0x14] sm:$0xf]
      %v315 = vld [vmem:[%s235 + $0x18] sm:$0xf]
      %v316 = vld [vmem:[%s235 + $0x1c] sm:$0xf]
      %v317 = vld [vmem:[%s235 + $0x20] sm:$0xf]
      %v318 = vld [vmem:[%s235 + $0x24] sm:$0xf]
      %v319 = vld [vmem:[%s235 + $0x28] sm:$0xf]
      %v320 = vld [vmem:[%s235 + $0x2c] sm:$0xf]
      %v321 = vld [vmem:[%s235 + $0x30] sm:$0xf]
      %v322 = vld [vmem:[%s235 + $0x34] sm:$0xf]
      %v323 = vld [vmem:[%s235 + $0x38] sm:$0xf]
      %v324 = vld [vmem:[%s235 + $0x3c] sm:$0xf]
      %v325 = vld [vmem:[%s235 + $0x40] sm:$0xf]
      %v326 = vld [vmem:[%s235 + $0x44] sm:$0xf]
      %v327 = vld [vmem:[%s235 + $0x48] sm:$0xf]
      %v328 = vld [vmem:[%s235 + $0x4c] sm:$0xf]
      %v329 = vld [vmem:[%s235 + $0x50] sm:$0xf]
      %v330 = vld [vmem:[%s235 + $0x54] sm:$0xf]
      %v331 = vld [vmem:[%s235 + $0x58] sm:$0xf]
      %v332 = vld [vmem:[%s235 + $0x5c] sm:$0xf]
      %v333 = vld [vmem:[%s235 + $0x60] sm:$0xf]
      %v334 = vld [vmem:[%s235 + $0x64] sm:$0xf]
      %v335 = vld [vmem:[%s235 + $0x68] sm:$0xf]
      %v336 = vld [vmem:[%s235 + $0x6c] sm:$0xf]
      %v337 = vld [vmem:[%s235 + $0x70] sm:$0xf]
      %v338 = vld [vmem:[%s235 + $0x74] sm:$0xf]
      %v339 = vld [vmem:[%s235 + $0x78] sm:$0xf]
      %v340 = vld [vmem:[%s235 + $0x7c] sm:$0xf]
      %v341 = vld [vmem:[%s235 + $0x80] sm:$0xf]
      %v342 = vld [vmem:[%s235 + $0x84] sm:$0xf]
      %v343 = vld [vmem:[%s235 + $0x88] sm:$0xf]
      %v344 = vld [vmem:[%s235 + $0x8c] sm:$0xf]
      %v345 = vld [vmem:[%s235 + $0x90] sm:$0xf]
      %v346 = vld [vmem:[%s235 + $0x94] sm:$0xf]
      %v347 = vld [vmem:[%s235 + $0x98] sm:$0xf]
      %v348 = vld [vmem:[%s235 + $0x9c] sm:$0xf]
      %v349 = vld [vmem:[%s235 + $0xa0] sm:$0xf]
      %v350 = vld [vmem:[%s235 + $0xa4] sm:$0xf]
      %v351 = vld [vmem:[%s235 + $0xa8] sm:$0xf]
      %v352 = vld [vmem:[%s235 + $0xac] sm:$0xf]
      %v353 = vld [vmem:[%s235 + $0xb0] sm:$0xf]
      %v354 = vld [vmem:[%s235 + $0xb4] sm:$0xf]
      %v355 = vld [vmem:[%s235 + $0xb8] sm:$0xf]
      %v356 = vld [vmem:[%s235 + $0xbc] sm:$0xf]
      %v357 = vld [vmem:[#allocation2] sm:$0xff]
      %v358 = vld [vmem:[#allocation2 + $0x8] sm:$0xff]
      %v359 = vld [vmem:[#allocation2 + $0x10] sm:$0xff]
      %v360 = vld [vmem:[#allocation2 + $0x18] sm:$0xff]
      %v361 = vld [vmem:[#allocation2 + $0x20] sm:$0xff]
      %v362 = vld [vmem:[#allocation2 + $0x28] sm:$0xff]
      %v363 = vld [vmem:[#allocation2 + $0x30] sm:$0xff]
      %v364 = vld [vmem:[#allocation2 + $0x38] sm:$0xff]
      %v365 = vld [vmem:[#allocation2 + $0x40] sm:$0xff]
      %v366 = vld [vmem:[#allocation2 + $0x48] sm:$0xff]
      %v367 = vld [vmem:[#allocation2 + $0x50] sm:$0xff]
      %v368 = vld [vmem:[#allocation2 + $0x58] sm:$0xff]
      %v369 = vld [vmem:[#allocation2 + $0x60] sm:$0xff]
      %v370 = vld [vmem:[#allocation2 + $0x68] sm:$0xff]
      %v371 = vld [vmem:[#allocation2 + $0x70] sm:$0xff]
      %v372 = vld [vmem:[#allocation2 + $0x78] sm:$0xff]
      %v373 = vld [vmem:[#allocation2 + $0x80] sm:$0xff]
      %v374 = vld [vmem:[#allocation2 + $0x88] sm:$0xff]
      %v375 = vld [vmem:[#allocation2 + $0x90] sm:$0xff]
      %v376 = vld [vmem:[#allocation2 + $0x98] sm:$0xff]
      %v377 = vld [vmem:[#allocation2 + $0xa0] sm:$0xff]
      %v378 = vld [vmem:[#allocation2 + $0xa8] sm:$0xff]
      %v379 = vld [vmem:[#allocation2 + $0xb0] sm:$0xff]
      %v380 = vld [vmem:[#allocation2 + $0xb8] sm:$0xff]
      %v381 = vld [vmem:[#allocation2 + $0xc0] sm:$0xff]
      %v382 = vld [vmem:[#allocation2 + $0xc8] sm:$0xff]
      %v383 = vld [vmem:[#allocation2 + $0xd0] sm:$0xff]
      %v384 = vld [vmem:[#allocation2 + $0xd8] sm:$0xff]
      %v385 = vld [vmem:[#allocation2 + $0xe0] sm:$0xff]
      %v386 = vld [vmem:[#allocation2 + $0xe8] sm:$0xff]
      %v387 = vld [vmem:[#allocation2 + $0xf0] sm:$0xff]
      %v388 = vld [vmem:[#allocation2 + $0xf8] sm:$0xff]
      %v389 = vld [vmem:[#allocation2 + $0x100] sm:$0xff]
      %v390 = vld [vmem:[#allocation2 + $0x108] sm:$0xff]
      %v391 = vld [vmem:[#allocation2 + $0x110] sm:$0xff]
      %v392 = vld [vmem:[#allocation2 + $0x118] sm:$0xff]
      %v393 = vld [vmem:[#allocation2 + $0x120] sm:$0xff]
      %v394 = vld [vmem:[#allocation2 + $0x128] sm:$0xff]
      %v395 = vld [vmem:[#allocation2 + $0x130] sm:$0xff]
      %v396 = vld [vmem:[#allocation2 + $0x138] sm:$0xff]
      %v397 = vld [vmem:[#allocation2 + $0x140] sm:$0xff]
      %v398 = vld [vmem:[#allocation2 + $0x148] sm:$0xff]
      %v399 = vld [vmem:[#allocation2 + $0x150] sm:$0xff]
      %v400 = vld [vmem:[#allocation2 + $0x158] sm:$0xff]
      %v401 = vld [vmem:[#allocation2 + $0x160] sm:$0xff]
      %v402 = vld [vmem:[#allocation2 + $0x168] sm:$0xff]
      %v403 = vld [vmem:[#allocation2 + $0x170] sm:$0xff]
      %v404 = vld [vmem:[#allocation2 + $0x178] sm:$0xff]
      %v405 = vld [vmem:[%s243] sm:$0xf]
      %v406 = vld [vmem:[%s243 + $0x4] sm:$0xf]
      %v407 = vld [vmem:[%s243 + $0x8] sm:$0xf]
      %v408 = vld [vmem:[%s243 + $0xc] sm:$0xf]
      %v409 = vld [vmem:[%s243 + $0x10] sm:$0xf]
      %v410 = vld [vmem:[%s243 + $0x14] sm:$0xf]
      %v411 = vld [vmem:[%s243 + $0x18] sm:$0xf]
      %v412 = vld [vmem:[%s243 + $0x1c] sm:$0xf]
      %v413 = vld [vmem:[%s243 + $0x20] sm:$0xf]
      %v414 = vld [vmem:[%s243 + $0x24] sm:$0xf]
      %v415 = vld [vmem:[%s243 + $0x28] sm:$0xf]
      %v416 = vld [vmem:[%s243 + $0x2c] sm:$0xf]
      %v417 = vld [vmem:[%s243 + $0x30] sm:$0xf]
      %v418 = vld [vmem:[%s243 + $0x34] sm:$0xf]
      %v419 = vld [vmem:[%s243 + $0x38] sm:$0xf]
      %v420 = vld [vmem:[%s243 + $0x3c] sm:$0xf]
      %v469 = vunpack.c.l.b16 %v309
      %v470 = vunpack.c.l.b16 %v310
      %v471 = vunpack.c.l.b16 %v311
      %v472 = vunpack.c.l.b16 %v312
      %v473 = vunpack.c.l.b16 %v313
      %v474 = vunpack.c.l.b16 %v314
      %v475 = vunpack.c.l.b16 %v315
      %v476 = vunpack.c.l.b16 %v316
      %v477 = vunpack.c.l.b16 %v317
      %v478 = vunpack.c.l.b16 %v318
      %v479 = vunpack.c.l.b16 %v319
      %v480 = vunpack.c.l.b16 %v320
      %v481 = vunpack.c.l.b16 %v321
      %v482 = vunpack.c.l.b16 %v322
      %v483 = vunpack.c.l.b16 %v323
      %v484 = vunpack.c.l.b16 %v324
      %v485 = vunpack.c.l.b16 %v325
      %v486 = vunpack.c.l.b16 %v326
      %v487 = vunpack.c.l.b16 %v327
      %v488 = vunpack.c.l.b16 %v328
      %v489 = vunpack.c.l.b16 %v329
      %v490 = vunpack.c.l.b16 %v330
      %v491 = vunpack.c.l.b16 %v331
      %v492 = vunpack.c.l.b16 %v332
      %v493 = vunpack.c.l.b16 %v333
      %v494 = vunpack.c.l.b16 %v334
      %v495 = vunpack.c.l.b16 %v335
      %v496 = vunpack.c.l.b16 %v336
      %v497 = vunpack.c.l.b16 %v337
      %v498 = vunpack.c.l.b16 %v338
      %v499 = vunpack.c.l.b16 %v339
      %v500 = vunpack.c.l.b16 %v340
      %v501 = vunpack.c.l.b16 %v341
      %v502 = vunpack.c.l.b16 %v342
      %v503 = vunpack.c.l.b16 %v343
      %v504 = vunpack.c.l.b16 %v344
      %v505 = vunpack.c.l.b16 %v345
      %v506 = vunpack.c.l.b16 %v346
      %v507 = vunpack.c.l.b16 %v347
      %v508 = vunpack.c.l.b16 %v348
      %v509 = vunpack.c.l.b16 %v349
      %v510 = vunpack.c.l.b16 %v350
      %v511 = vunpack.c.l.b16 %v351
      %v512 = vunpack.c.l.b16 %v352
      %v513 = vunpack.c.l.b16 %v353
      %v514 = vunpack.c.l.b16 %v354
      %v515 = vunpack.c.l.b16 %v355
      %v516 = vunpack.c.l.b16 %v356
      %v517 = vpack.c.b16 %v470, %v469
      %v518 = vpack.c.b16 %v472, %v471
      %v519 = vpack.c.b16 %v474, %v473
      %v520 = vpack.c.b16 %v476, %v475
      %v521 = vpack.c.b16 %v478, %v477
      %v522 = vpack.c.b16 %v480, %v479
      %v523 = vpack.c.b16 %v482, %v481
      %v524 = vpack.c.b16 %v484, %v483
      %v525 = vpack.c.b16 %v486, %v485
      %v526 = vpack.c.b16 %v488, %v487
      %v527 = vpack.c.b16 %v490, %v489
      %v528 = vpack.c.b16 %v492, %v491
      %v529 = vpack.c.b16 %v494, %v493
      %v530 = vpack.c.b16 %v496, %v495
      %v531 = vpack.c.b16 %v498, %v497
      %v532 = vpack.c.b16 %v500, %v499
      %v533 = vpack.c.b16 %v502, %v501
      %v534 = vpack.c.b16 %v504, %v503
      %v535 = vpack.c.b16 %v506, %v505
      %v536 = vpack.c.b16 %v508, %v507
      %v537 = vpack.c.b16 %v510, %v509
      %v538 = vpack.c.b16 %v512, %v511
      %v539 = vpack.c.b16 %v514, %v513
      %v540 = vpack.c.b16 %v516, %v515
      %v581 = vunpack.c.l.b16 %v405
      %v582 = vunpack.c.l.b16 %v406
      %v583 = vunpack.c.l.b16 %v407
      %v584 = vunpack.c.l.b16 %v408
      %v585 = vunpack.c.l.b16 %v409
      %v586 = vunpack.c.l.b16 %v410
      %v587 = vunpack.c.l.b16 %v411
      %v588 = vunpack.c.l.b16 %v412
      %v589 = vunpack.c.l.b16 %v413
      %v590 = vunpack.c.l.b16 %v414
      %v591 = vunpack.c.l.b16 %v415
      %v592 = vunpack.c.l.b16 %v416
      %v593 = vunpack.c.l.b16 %v417
      %v594 = vunpack.c.l.b16 %v418
      %v595 = vunpack.c.l.b16 %v419
      %v596 = vunpack.c.l.b16 %v420
      %v597 = vpack.c.b16 %v582, %v581
      %v598 = vpack.c.b16 %v584, %v583
      %v599 = vpack.c.b16 %v586, %v585
      %v600 = vpack.c.b16 %v588, %v587
      %v601 = vpack.c.b16 %v590, %v589
      %v602 = vpack.c.b16 %v592, %v591
      %v603 = vpack.c.b16 %v594, %v593
      %v604 = vpack.c.b16 %v596, %v595
      %613 = vmatprep.subr.bf16.mxu0 0
      %614 = vmatpush1.bf16.msra.mxu0 %v597
      %615 = vmatprep.subr.bf16.mxu0 0
      %616 = vmatpush1.bf16.msra.mxu0 %v598
      %617 = vmatprep.subr.bf16.mxu0 0
      %618 = vmatpush1.bf16.msra.mxu0 %v599
      %619 = vmatprep.subr.bf16.mxu0 0
      %620 = vmatpush1.bf16.msra.mxu0 %v600
      %621 = vmatprep.subr.bf16.mxu0 0
      %622 = vmatpush1.bf16.msra.mxu0 %v601
      %623 = vmatprep.subr.bf16.mxu0 0
      %624 = vmatpush1.bf16.msra.mxu0 %v602
      %625 = vmatprep.subr.bf16.mxu0 0
      %626 = vmatpush1.bf16.msra.mxu0 %v603
      %627 = vmatprep.subr.bf16.mxu0 0
      %628 = vmatpush1.bf16.msra.mxu0 %v604
      %629 = vmatprep.subr.bf16.mxu0 0
      %630 = vmatpush1.bf16.msra.mxu0 0
      %631 = vmatprep.subr.bf16.mxu0 0
      %632 = vmatpush1.bf16.msra.mxu0 0
      %633 = vmatprep.subr.bf16.mxu0 0
      %634 = vmatpush1.bf16.msra.mxu0 0
      %635 = vmatprep.subr.bf16.mxu0 0
      %636 = vmatpush1.bf16.msra.mxu0 0
      %637 = vmatprep.subr.bf16.mxu0 0
      %638 = vmatpush1.bf16.msra.mxu0 0
      %639 = vmatprep.subr.bf16.mxu0 0
      %640 = vmatpush1.bf16.msra.mxu0 0
      %641 = vmatprep.subr.bf16.mxu0 0
      %642 = vmatpush1.bf16.msra.mxu0 0
      %643 = vmatprep.subr.bf16.mxu0 0
      %644 = vmatpush1.bf16.msra.mxu0 0
      %645 = vmatprep.mubr.bf16.mxu0 0
      %646 = vmatmul.mubr.bf16.gmra.mrb[0].mxu0 %v517
      %v647 = vpop.f32.mrb[0].mxu0
      %v648 = vadd.f32 0.0, %v647
      %v649 = vpop.f32.mrb[0].mxu0
      %v650 = vpop.f32.mrb[0].mxu0
      %v651 = vadd.f32 0.0, %v650
      %v652 = vpop.f32.mrb[0].mxu0
      %653 = vmatprep.mubr.bf16.mxu0 0
      %654 = vmatmul.mubr.bf16.gmra.mrb[0].mxu0 %v518
      %v655 = vpop.f32.mrb[0].mxu0
      %v656 = vadd.f32 0.0, %v655
      %v657 = vpop.f32.mrb[0].mxu0
      %v658 = vpop.f32.mrb[0].mxu0
      %v659 = vadd.f32 0.0, %v658
      %v660 = vpop.f32.mrb[0].mxu0
      %661 = vmatprep.mubr.bf16.mxu0 0
      %662 = vmatmul.mubr.bf16.gmra.mrb[0].mxu0 %v519
      %v663 = vpop.f32.mrb[0].mxu0
      %v664 = vadd.f32 0.0, %v663
      %v665 = vpop.f32.mrb[0].mxu0
      %v666 = vpop.f32.mrb[0].mxu0
      %v667 = vadd.f32 0.0, %v666
      %v668 = vpop.f32.mrb[0].mxu0
      %669 = vmatprep.mubr.bf16.mxu0 0
      %670 = vmatmul.mubr.bf16.gmra.mrb[0].mxu0 %v520
      %v671 = vpop.f32.mrb[0].mxu0
      %v672 = vadd.f32 0.0, %v671
      %v673 = vpop.f32.mrb[0].mxu0
      %v674 = vpop.f32.mrb[0].mxu0
      %v675 = vadd.f32 0.0, %v674
      %v676 = vpop.f32.mrb[0].mxu0
      %677 = vmatprep.mubr.bf16.mxu0 0
      %678 = vmatmul.mubr.bf16.gmra.mrb[0].mxu0 %v521
      %v679 = vpop.f32.mrb[0].mxu0
      %v680 = vadd.f32 0.0, %v679
      %v681 = vpop.f32.mrb[0].mxu0
      %v682 = vpop.f32.mrb[0].mxu0
      %v683 = vadd.f32 0.0, %v682
      %v684 = vpop.f32.mrb[0].mxu0
      %685 = vmatprep.mubr.bf16.mxu0 0
      %686 = vmatmul.mubr.bf16.gmra.mrb[0].mxu0 %v522
      %v687 = vpop.f32.mrb[0].mxu0
      %v688 = vadd.f32 0.0, %v687
      %v689 = vpop.f32.mrb[0].mxu0
      %v690 = vpop.f32.mrb[0].mxu0
      %v691 = vadd.f32 0.0, %v690
      %v692 = vpop.f32.mrb[0].mxu0
      %693 = vmatprep.mubr.bf16.mxu0 0
      %694 = vmatmul.mubr.bf16.gmra.mrb[0].mxu0 %v523
      %v695 = vpop.f32.mrb[0].mxu0
      %v696 = vadd.f32 0.0, %v695
      %v697 = vpop.f32.mrb[0].mxu0
      %v698 = vpop.f32.mrb[0].mxu0
      %v699 = vadd.f32 0.0, %v698
      %v700 = vpop.f32.mrb[0].mxu0
      %701 = vmatprep.mubr.bf16.mxu0 0
      %702 = vmatmul.mubr.bf16.gmra.mrb[0].mxu0 %v524
      %v703 = vpop.f32.mrb[0].mxu0
      %v704 = vadd.f32 0.0, %v703
      %v705 = vpop.f32.mrb[0].mxu0
      %v706 = vpop.f32.mrb[0].mxu0
      %v707 = vadd.f32 0.0, %v706
      %v708 = vpop.f32.mrb[0].mxu0
      %709 = vmatprep.mubr.bf16.mxu0 0
      %710 = vmatmul.mubr.bf16.gmra.mrb[0].mxu0 %v525
      %v711 = vpop.f32.mrb[0].mxu0
      %v712 = vadd.f32 0.0, %v711
      %v713 = vpop.f32.mrb[0].mxu0
      %v714 = vpop.f32.mrb[0].mxu0
      %v715 = vadd.f32 0.0, %v714
      %v716 = vpop.f32.mrb[0].mxu0
      %717 = vmatprep.mubr.bf16.mxu0 0
      %718 = vmatmul.mubr.bf16.gmra.mrb[0].mxu0 %v526
      %v719 = vpop.f32.mrb[0].mxu0
      %v720 = vadd.f32 0.0, %v719
      %v721 = vpop.f32.mrb[0].mxu0
      %v722 = vpop.f32.mrb[0].mxu0
      %v723 = vadd.f32 0.0, %v722
      %v724 = vpop.f32.mrb[0].mxu0
      %725 = vmatprep.mubr.bf16.mxu0 0
      %726 = vmatmul.mubr.bf16.gmra.mrb[0].mxu0 %v527
      %v727 = vpop.f32.mrb[0].mxu0
      %v728 = vadd.f32 0.0, %v727
      %v729 = vpop.f32.mrb[0].mxu0
      %v730 = vpop.f32.mrb[0].mxu0
      %v731 = vadd.f32 0.0, %v730
      %v732 = vpop.f32.mrb[0].mxu0
      %733 = vmatprep.mubr.bf16.mxu0 0
      %734 = vmatmul.mubr.bf16.gmra.mrb[0].mxu0 %v528
      %v735 = vpop.f32.mrb[0].mxu0
      %v736 = vadd.f32 0.0, %v735
      %v737 = vpop.f32.mrb[0].mxu0
      %v738 = vpop.f32.mrb[0].mxu0
      %v739 = vadd.f32 0.0, %v738
      %v740 = vpop.f32.mrb[0].mxu0
      %741 = vmatprep.mubr.bf16.mxu0 0
      %742 = vmatmul.mubr.bf16.gmra.mrb[0].mxu0 %v529
      %v743 = vpop.f32.mrb[0].mxu0
      %v744 = vadd.f32 0.0, %v743
      %v745 = vpop.f32.mrb[0].mxu0
      %v746 = vpop.f32.mrb[0].mxu0
      %v747 = vadd.f32 0.0, %v746
      %v748 = vpop.f32.mrb[0].mxu0
      %749 = vmatprep.mubr.bf16.mxu0 0
      %750 = vmatmul.mubr.bf16.gmra.mrb[0].mxu0 %v530
      %v751 = vpop.f32.mrb[0].mxu0
      %v752 = vadd.f32 0.0, %v751
      %v753 = vpop.f32.mrb[0].mxu0
      %v754 = vpop.f32.mrb[0].mxu0
      %v755 = vadd.f32 0.0, %v754
      %v756 = vpop.f32.mrb[0].mxu0
      %757 = vmatprep.mubr.bf16.mxu0 0
      %758 = vmatmul.mubr.bf16.gmra.mrb[0].mxu0 %v531
      %v759 = vpop.f32.mrb[0].mxu0
      %v760 = vadd.f32 0.0, %v759
      %v761 = vpop.f32.mrb[0].mxu0
      %v762 = vpop.f32.mrb[0].mxu0
      %v763 = vadd.f32 0.0, %v762
      %v764 = vpop.f32.mrb[0].mxu0
      %765 = vmatprep.mubr.bf16.mxu0 0
      %766 = vmatmul.mubr.bf16.gmra.mrb[0].mxu0 %v532
      %v767 = vpop.f32.mrb[0].mxu0
      %v768 = vadd.f32 0.0, %v767
      %v769 = vpop.f32.mrb[0].mxu0
      %v770 = vpop.f32.mrb[0].mxu0
      %v771 = vadd.f32 0.0, %v770
      %v772 = vpop.f32.mrb[0].mxu0
      %773 = vmatprep.mubr.bf16.mxu0 0
      %774 = vmatmul.mubr.bf16.gmra.mrb[0].mxu0 %v533
      %v775 = vpop.f32.mrb[0].mxu0
      %v776 = vadd.f32 0.0, %v775
      %v777 = vpop.f32.mrb[0].mxu0
      %v778 = vpop.f32.mrb[0].mxu0
      %v779 = vadd.f32 0.0, %v778
      %v780 = vpop.f32.mrb[0].mxu0
      %781 = vmatprep.mubr.bf16.mxu0 0
      %782 = vmatmul.mubr.bf16.gmra.mrb[0].mxu0 %v534
      %v783 = vpop.f32.mrb[0].mxu0
      %v784 = vadd.f32 0.0, %v783
      %v785 = vpop.f32.mrb[0].mxu0
      %v786 = vpop.f32.mrb[0].mxu0
      %v787 = vadd.f32 0.0, %v786
      %v788 = vpop.f32.mrb[0].mxu0
      %789 = vmatprep.mubr.bf16.mxu0 0
      %790 = vmatmul.mubr.bf16.gmra.mrb[0].mxu0 %v535
      %v791 = vpop.f32.mrb[0].mxu0
      %v792 = vadd.f32 0.0, %v791
      %v793 = vpop.f32.mrb[0].mxu0
      %v794 = vpop.f32.mrb[0].mxu0
      %v795 = vadd.f32 0.0, %v794
      %v796 = vpop.f32.mrb[0].mxu0
      %797 = vmatprep.mubr.bf16.mxu0 0
      %798 = vmatmul.mubr.bf16.gmra.mrb[0].mxu0 %v536
      %v799 = vpop.f32.mrb[0].mxu0
      %v800 = vadd.f32 0.0, %v799
      %v801 = vpop.f32.mrb[0].mxu0
      %v802 = vpop.f32.mrb[0].mxu0
      %v803 = vadd.f32 0.0, %v802
      %v804 = vpop.f32.mrb[0].mxu0
      %805 = vmatprep.mubr.bf16.mxu0 0
      %806 = vmatmul.mubr.bf16.gmra.mrb[0].mxu0 %v537
      %v807 = vpop.f32.mrb[0].mxu0
      %v808 = vadd.f32 0.0, %v807
      %v809 = vpop.f32.mrb[0].mxu0
      %v810 = vpop.f32.mrb[0].mxu0
      %v811 = vadd.f32 0.0, %v810
      %v812 = vpop.f32.mrb[0].mxu0
      %813 = vmatprep.mubr.bf16.mxu0 0
      %814 = vmatmul.mubr.bf16.gmra.mrb[0].mxu0 %v538
      %v815 = vpop.f32.mrb[0].mxu0
      %v816 = vadd.f32 0.0, %v815
      %v817 = vpop.f32.mrb[0].mxu0
      %v818 = vpop.f32.mrb[0].mxu0
      %v819 = vadd.f32 0.0, %v818
      %v820 = vpop.f32.mrb[0].mxu0
      %821 = vmatprep.mubr.bf16.mxu0 0
      %822 = vmatmul.mubr.bf16.gmra.mrb[0].mxu0 %v539
      %v823 = vpop.f32.mrb[0].mxu0
      %v824 = vadd.f32 0.0, %v823
      %v825 = vpop.f32.mrb[0].mxu0
      %v826 = vpop.f32.mrb[0].mxu0
      %v827 = vadd.f32 0.0, %v826
      %v828 = vpop.f32.mrb[0].mxu0
      %829 = vmatprep.mubr.bf16.mxu0 0
      %830 = vmatmul.mubr.bf16.gmra.mrb[0].mxu0 %v540
      %v831 = vpop.f32.mrb[0].mxu0
      %v832 = vadd.f32 0.0, %v831
      %v833 = vpop.f32.mrb[0].mxu0
      %v834 = vpop.f32.mrb[0].mxu0
      %v835 = vadd.f32 0.0, %v834
      %v836 = vpop.f32.mrb[0].mxu0
      %837 = vdwg.mxu0
      %v838 = vadd.f32 %v357, %v648
      %v839 = vadd.f32 %v358, %v651
      %v840 = vadd.f32 %v359, %v656
      %v841 = vadd.f32 %v360, %v659
      %v842 = vadd.f32 %v361, %v664
      %v843 = vadd.f32 %v362, %v667
      %v844 = vadd.f32 %v363, %v672
      %v845 = vadd.f32 %v364, %v675
      %v846 = vadd.f32 %v365, %v680
      %v847 = vadd.f32 %v366, %v683
      %v848 = vadd.f32 %v367, %v688
      %v849 = vadd.f32 %v368, %v691
      %v850 = vadd.f32 %v369, %v696
      %v851 = vadd.f32 %v370, %v699
      %v852 = vadd.f32 %v371, %v704
      %v853 = vadd.f32 %v372, %v707
      %v854 = vadd.f32 %v373, %v712
      %v855 = vadd.f32 %v374, %v715
      %v856 = vadd.f32 %v375, %v720
      %v857 = vadd.f32 %v376, %v723
      %v858 = vadd.f32 %v377, %v728
      %v859 = vadd.f32 %v378, %v731
      %v860 = vadd.f32 %v379, %v736
      %v861 = vadd.f32 %v380, %v739
      %v862 = vadd.f32 %v381, %v744
      %v863 = vadd.f32 %v382, %v747
      %v864 = vadd.f32 %v383, %v752
      %v865 = vadd.f32 %v384, %v755
      %v866 = vadd.f32 %v385, %v760
      %v867 = vadd.f32 %v386, %v763
      %v868 = vadd.f32 %v387, %v768
      %v869 = vadd.f32 %v388, %v771
      %v870 = vadd.f32 %v389, %v776
      %v871 = vadd.f32 %v390, %v779
      %v872 = vadd.f32 %v391, %v784
      %v873 = vadd.f32 %v392, %v787
      %v874 = vadd.f32 %v393, %v792
      %v875 = vadd.f32 %v394, %v795
      %v876 = vadd.f32 %v395, %v800
      %v877 = vadd.f32 %v396, %v803
      %v878 = vadd.f32 %v397, %v808
      %v879 = vadd.f32 %v398, %v811
      %v880 = vadd.f32 %v399, %v816
      %v881 = vadd.f32 %v400, %v819
      %v882 = vadd.f32 %v401, %v824
      %v883 = vadd.f32 %v402, %v827
      %v884 = vadd.f32 %v403, %v832
      %v885 = vadd.f32 %v404, %v835
      %886 = vst [vmem:[#allocation2] sm:$0xff] %v838
      %887 = vst [vmem:[#allocation2 + $0x8] sm:$0xff] %v839
      %888 = vst [vmem:[#allocation2 + $0x10] sm:$0xff] %v840
      %889 = vst [vmem:[#allocation2 + $0x18] sm:$0xff] %v841
      %890 = vst [vmem:[#allocation2 + $0x20] sm:$0xff] %v842
      %891 = vst [vmem:[#allocation2 + $0x28] sm:$0xff] %v843
      %892 = vst [vmem:[#allocation2 + $0x30] sm:$0xff] %v844
      %893 = vst [vmem:[#allocation2 + $0x38] sm:$0xff] %v845
      %894 = vst [vmem:[#allocation2 + $0x40] sm:$0xff] %v846
      %895 = vst [vmem:[#allocation2 + $0x48] sm:$0xff] %v847
      %896 = vst [vmem:[#allocation2 + $0x50] sm:$0xff] %v848
      %897 = vst [vmem:[#allocation2 + $0x58] sm:$0xff] %v849
      %898 = vst [vmem:[#allocation2 + $0x60] sm:$0xff] %v850
      %899 = vst [vmem:[#allocation2 + $0x68] sm:$0xff] %v851
      %900 = vst [vmem:[#allocation2 + $0x70] sm:$0xff] %v852
      %901 = vst [vmem:[#allocation2 + $0x78] sm:$0xff] %v853
      %902 = vst [vmem:[#allocation2 + $0x80] sm:$0xff] %v854
      %903 = vst [vmem:[#allocation2 + $0x88] sm:$0xff] %v855
      %904 = vst [vmem:[#allocation2 + $0x90] sm:$0xff] %v856
      %905 = vst [vmem:[#allocation2 + $0x98] sm:$0xff] %v857
      %906 = vst [vmem:[#allocation2 + $0xa0] sm:$0xff] %v858
      %907 = vst [vmem:[#allocation2 + $0xa8] sm:$0xff] %v859
      %908 = vst [vmem:[#allocation2 + $0xb0] sm:$0xff] %v860
      %909 = vst [vmem:[#allocation2 + $0xb8] sm:$0xff] %v861
      %910 = vst [vmem:[#allocation2 + $0xc0] sm:$0xff] %v862
      %911 = vst [vmem:[#allocation2 + $0xc8] sm:$0xff] %v863
      %912 = vst [vmem:[#allocation2 + $0xd0] sm:$0xff] %v864
      %913 = vst [vmem:[#allocation2 + $0xd8] sm:$0xff] %v865
      %914 = vst [vmem:[#allocation2 + $0xe0] sm:$0xff] %v866
      %915 = vst [vmem:[#allocation2 + $0xe8] sm:$0xff] %v867
      %916 = vst [vmem:[#allocation2 + $0xf0] sm:$0xff] %v868
      %917 = vst [vmem:[#allocation2 + $0xf8] sm:$0xff] %v869
      %918 = vst [vmem:[#allocation2 + $0x100] sm:$0xff] %v870
      %919 = vst [vmem:[#allocation2 + $0x108] sm:$0xff] %v871
      %920 = vst [vmem:[#allocation2 + $0x110] sm:$0xff] %v872
      %921 = vst [vmem:[#allocation2 + $0x118] sm:$0xff] %v873
      %922 = vst [vmem:[#allocation2 + $0x120] sm:$0xff] %v874
      %923 = vst [vmem:[#allocation2 + $0x128] sm:$0xff] %v875
      %924 = vst [vmem:[#allocation2 + $0x130] sm:$0xff] %v876
      %925 = vst [vmem:[#allocation2 + $0x138] sm:$0xff] %v877
      %926 = vst [vmem:[#allocation2 + $0x140] sm:$0xff] %v878
      %927 = vst [vmem:[#allocation2 + $0x148] sm:$0xff] %v879
      %928 = vst [vmem:[#allocation2 + $0x150] sm:$0xff] %v880
      %929 = vst [vmem:[#allocation2 + $0x158] sm:$0xff] %v881
      %930 = vst [vmem:[#allocation2 + $0x160] sm:$0xff] %v882
      %931 = vst [vmem:[#allocation2 + $0x168] sm:$0xff] %v883
      %932 = vst [vmem:[#allocation2 + $0x170] sm:$0xff] %v884
      %933 = vst [vmem:[#allocation2 + $0x178] sm:$0xff] %v885
      %v934 = vld [vmem:[%s235] sm:$0xf]
      %v935 = vld [vmem:[%s235 + $0x4] sm:$0xf]
      %v936 = vld [vmem:[%s235 + $0x8] sm:$0xf]
      %v937 = vld [vmem:[%s235 + $0xc] sm:$0xf]
      %v938 = vld [vmem:[%s235 + $0x10] sm:$0xf]
      %v939 = vld [vmem:[%s235 + $0x14] sm:$0xf]
      %v940 = vld [vmem:[%s235 + $0x18] sm:$0xf]
      %v941 = vld [vmem:[%s235 + $0x1c] sm:$0xf]
      %v942 = vld [vmem:[%s235 + $0x20] sm:$0xf]
      %v943 = vld [vmem:[%s235 + $0x24] sm:$0xf]
      %v944 = vld [vmem:[%s235 + $0x28] sm:$0xf]
      %v945 = vld [vmem:[%s235 + $0x2c] sm:$0xf]
      %v946 = vld [vmem:[%s235 + $0x30] sm:$0xf]
      %v947 = vld [vmem:[%s235 + $0x34] sm:$0xf]
      %v948 = vld [vmem:[%s235 + $0x38] sm:$0xf]
      %v949 = vld [vmem:[%s235 + $0x3c] sm:$0xf]
      %v950 = vld [vmem:[%s235 + $0x40] sm:$0xf]
      %v951 = vld [vmem:[%s235 + $0x44] sm:$0xf]
      %v952 = vld [vmem:[%s235 + $0x48] sm:$0xf]
      %v953 = vld [vmem:[%s235 + $0x4c] sm:$0xf]
      %v954 = vld [vmem:[%s235 + $0x50] sm:$0xf]
      %v955 = vld [vmem:[%s235 + $0x54] sm:$0xf]
      %v956 = vld [vmem:[%s235 + $0x58] sm:$0xf]
      %v957 = vld [vmem:[%s235 + $0x5c] sm:$0xf]
      %v958 = vld [vmem:[%s235 + $0x60] sm:$0xf]
      %v959 = vld [vmem:[%s235 + $0x64] sm:$0xf]
      %v960 = vld [vmem:[%s235 + $0x68] sm:$0xf]
      %v961 = vld [vmem:[%s235 + $0x6c] sm:$0xf]
      %v962 = vld [vmem:[%s235 + $0x70] sm:$0xf]
      %v963 = vld [vmem:[%s235 + $0x74] sm:$0xf]
      %v964 = vld [vmem:[%s235 + $0x78] sm:$0xf]
      %v965 = vld [vmem:[%s235 + $0x7c] sm:$0xf]
      %v966 = vld [vmem:[%s235 + $0x80] sm:$0xf]
      %v967 = vld [vmem:[%s235 + $0x84] sm:$0xf]
      %v968 = vld [vmem:[%s235 + $0x88] sm:$0xf]
      %v969 = vld [vmem:[%s235 + $0x8c] sm:$0xf]
      %v970 = vld [vmem:[%s235 + $0x90] sm:$0xf]
      %v971 = vld [vmem:[%s235 + $0x94] sm:$0xf]
      %v972 = vld [vmem:[%s235 + $0x98] sm:$0xf]
      %v973 = vld [vmem:[%s235 + $0x9c] sm:$0xf]
      %v974 = vld [vmem:[%s235 + $0xa0] sm:$0xf]
      %v975 = vld [vmem:[%s235 + $0xa4] sm:$0xf]
      %v976 = vld [vmem:[%s235 + $0xa8] sm:$0xf]
      %v977 = vld [vmem:[%s235 + $0xac] sm:$0xf]
      %v978 = vld [vmem:[%s235 + $0xb0] sm:$0xf]
      %v979 = vld [vmem:[%s235 + $0xb4] sm:$0xf]
      %v980 = vld [vmem:[%s235 + $0xb8] sm:$0xf]
      %v981 = vld [vmem:[%s235 + $0xbc] sm:$0xf]
      %v982 = vld [vmem:[%s235 + $0xc0] sm:$0x1]
      %v983 = vld [vmem:[#allocation2] sm:$0xff]
      %v984 = vld [vmem:[#allocation2 + $0x8] sm:$0xff]
      %v985 = vld [vmem:[#allocation2 + $0x10] sm:$0xff]
      %v986 = vld [vmem:[#allocation2 + $0x18] sm:$0xff]
      %v987 = vld [vmem:[#allocation2 + $0x20] sm:$0xff]
      %v988 = vld [vmem:[#allocation2 + $0x28] sm:$0xff]
      %v989 = vld [vmem:[#allocation2 + $0x30] sm:$0xff]
      %v990 = vld [vmem:[#allocation2 + $0x38] sm:$0xff]
      %v991 = vld [vmem:[#allocation2 + $0x40] sm:$0xff]
      %v992 = vld [vmem:[#allocation2 + $0x48] sm:$0xff]
      %v993 = vld [vmem:[#allocation2 + $0x50] sm:$0xff]
      %v994 = vld [vmem:[#allocation2 + $0x58] sm:$0xff]
      %v995 = vld [vmem:[#allocation2 + $0x60] sm:$0xff]
      %v996 = vld [vmem:[#allocation2 + $0x68] sm:$0xff]
      %v997 = vld [vmem:[#allocation2 + $0x70] sm:$0xff]
      %v998 = vld [vmem:[#allocation2 + $0x78] sm:$0xff]
      %v999 = vld [vmem:[#allocation2 + $0x80] sm:$0xff]
      %v1000 = vld [vmem:[#allocation2 + $0x88] sm:$0xff]
      %v1001 = vld [vmem:[#allocation2 + $0x90] sm:$0xff]
      %v1002 = vld [vmem:[#allocation2 + $0x98] sm:$0xff]
      %v1003 = vld [vmem:[#allocation2 + $0xa0] sm:$0xff]
      %v1004 = vld [vmem:[#allocation2 + $0xa8] sm:$0xff]
      %v1005 = vld [vmem:[#allocation2 + $0xb0] sm:$0xff]
      %v1006 = vld [vmem:[#allocation2 + $0xb8] sm:$0xff]
      %v1007 = vld [vmem:[#allocation2 + $0xc0] sm:$0xff]
      %v1008 = vld [vmem:[#allocation2 + $0xc8] sm:$0xff]
      %v1009 = vld [vmem:[#allocation2 + $0xd0] sm:$0xff]
      %v1010 = vld [vmem:[#allocation2 + $0xd8] sm:$0xff]
      %v1011 = vld [vmem:[#allocation2 + $0xe0] sm:$0xff]
      %v1012 = vld [vmem:[#allocation2 + $0xe8] sm:$0xff]
      %v1013 = vld [vmem:[#allocation2 + $0xf0] sm:$0xff]
      %v1014 = vld [vmem:[#allocation2 + $0xf8] sm:$0xff]
      %v1015 = vld [vmem:[#allocation2 + $0x100] sm:$0xff]
      %v1016 = vld [vmem:[#allocation2 + $0x108] sm:$0xff]
      %v1017 = vld [vmem:[#allocation2 + $0x110] sm:$0xff]
      %v1018 = vld [vmem:[#allocation2 + $0x118] sm:$0xff]
      %v1019 = vld [vmem:[#allocation2 + $0x120] sm:$0xff]
      %v1020 = vld [vmem:[#allocation2 + $0x128] sm:$0xff]
      %v1021 = vld [vmem:[#allocation2 + $0x130] sm:$0xff]
      %v1022 = vld [vmem:[#allocation2 + $0x138] sm:$0xff]
      %v1023 = vld [vmem:[#allocation2 + $0x140] sm:$0xff]
      %v1024 = vld [vmem:[#allocation2 + $0x148] sm:$0xff]
      %v1025 = vld [vmem:[#allocation2 + $0x150] sm:$0xff]
      %v1026 = vld [vmem:[#allocation2 + $0x158] sm:$0xff]
      %v1027 = vld [vmem:[#allocation2 + $0x160] sm:$0xff]
      %v1028 = vld [vmem:[#allocation2 + $0x168] sm:$0xff]
      %v1029 = vld [vmem:[#allocation2 + $0x170] sm:$0xff]
      %v1030 = vld [vmem:[#allocation2 + $0x178] sm:$0xff]
      %s1031 = scalar_lea.vmem %s243, 64
      %v1032 = vld [vmem:[%s1031] sm:$0xf]
      %v1033 = vld [vmem:[%s1031 + $0x4] sm:$0xf]
      %v1034 = vld [vmem:[%s1031 + $0x8] sm:$0xf]
      %v1035 = vld [vmem:[%s1031 + $0xc] sm:$0xf]
      %v1036 = vld [vmem:[%s1031 + $0x10] sm:$0xf]
      %v1037 = vld [vmem:[%s1031 + $0x14] sm:$0xf]
      %v1038 = vld [vmem:[%s1031 + $0x18] sm:$0xf]
      %v1039 = vld [vmem:[%s1031 + $0x1c] sm:$0xf]
      %v1040 = vld [vmem:[%s1031 + $0x20] sm:$0xf]
      %v1041 = vld [vmem:[%s1031 + $0x24] sm:$0xf]
      %v1042 = vld [vmem:[%s1031 + $0x28] sm:$0xf]
      %v1043 = vld [vmem:[%s1031 + $0x2c] sm:$0xf]
      %v1044 = vld [vmem:[%s1031 + $0x30] sm:$0xf]
      %v1045 = vld [vmem:[%s1031 + $0x34] sm:$0xf]
      %v1046 = vld [vmem:[%s1031 + $0x38] sm:$0xf]
      %v1047 = vld [vmem:[%s1031 + $0x3c] sm:$0xf]
      %v1097 = vunpack.c.l.b16 %v934
      %v1098 = vunpack.c.l.b16 %v935
      %v1099 = vunpack.c.l.b16 %v936
      %v1100 = vunpack.c.l.b16 %v937
      %v1101 = vunpack.c.l.b16 %v938
      %v1102 = vunpack.c.l.b16 %v939
      %v1103 = vunpack.c.l.b16 %v940
      %v1104 = vunpack.c.l.b16 %v941
      %v1105 = vunpack.c.l.b16 %v942
      %v1106 = vunpack.c.l.b16 %v943
      %v1107 = vunpack.c.l.b16 %v944
      %v1108 = vunpack.c.l.b16 %v945
      %v1109 = vunpack.c.l.b16 %v946
      %v1110 = vunpack.c.l.b16 %v947
      %v1111 = vunpack.c.l.b16 %v948
      %v1112 = vunpack.c.l.b16 %v949
      %v1113 = vunpack.c.l.b16 %v950
      %v1114 = vunpack.c.l.b16 %v951
      %v1115 = vunpack.c.l.b16 %v952
      %v1116 = vunpack.c.l.b16 %v953
      %v1117 = vunpack.c.l.b16 %v954
      %v1118 = vunpack.c.l.b16 %v955
      %v1119 = vunpack.c.l.b16 %v956
      %v1120 = vunpack.c.l.b16 %v957
      %v1121 = vunpack.c.l.b16 %v958
      %v1122 = vunpack.c.l.b16 %v959
      %v1123 = vunpack.c.l.b16 %v960
      %v1124 = vunpack.c.l.b16 %v961
      %v1125 = vunpack.c.l.b16 %v962
      %v1126 = vunpack.c.l.b16 %v963
      %v1127 = vunpack.c.l.b16 %v964
      %v1128 = vunpack.c.l.b16 %v965
      %v1129 = vunpack.c.l.b16 %v966
      %v1130 = vunpack.c.l.b16 %v967
      %v1131 = vunpack.c.l.b16 %v968
      %v1132 = vunpack.c.l.b16 %v969
      %v1133 = vunpack.c.l.b16 %v970
      %v1134 = vunpack.c.l.b16 %v971
      %v1135 = vunpack.c.l.b16 %v972
      %v1136 = vunpack.c.l.b16 %v973
      %v1137 = vunpack.c.l.b16 %v974
      %v1138 = vunpack.c.l.b16 %v975
      %v1139 = vunpack.c.l.b16 %v976
      %v1140 = vunpack.c.l.b16 %v977
      %v1141 = vunpack.c.l.b16 %v978
      %v1142 = vunpack.c.l.b16 %v979
      %v1143 = vunpack.c.l.b16 %v980
      %v1144 = vunpack.c.l.b16 %v981
      %v1145 = vunpack.c.l.b16 %v982
      %v1146 = vpack.c.b16 %v1098, %v1097
      %v1147 = vpack.c.b16 %v1100, %v1099
      %v1148 = vpack.c.b16 %v1102, %v1101
      %v1149 = vpack.c.b16 %v1104, %v1103
      %v1150 = vpack.c.b16 %v1106, %v1105
      %v1151 = vpack.c.b16 %v1108, %v1107
      %v1152 = vpack.c.b16 %v1110, %v1109
      %v1153 = vpack.c.b16 %v1112, %v1111
      %v1154 = vpack.c.b16 %v1114, %v1113
      %v1155 = vpack.c.b16 %v1116, %v1115
      %v1156 = vpack.c.b16 %v1118, %v1117
      %v1157 = vpack.c.b16 %v1120, %v1119
      %v1158 = vpack.c.b16 %v1122, %v1121
      %v1159 = vpack.c.b16 %v1124, %v1123
      %v1160 = vpack.c.b16 %v1126, %v1125
      %v1161 = vpack.c.b16 %v1128, %v1127
      %v1162 = vpack.c.b16 %v1130, %v1129
      %v1163 = vpack.c.b16 %v1132, %v1131
      %v1164 = vpack.c.b16 %v1134, %v1133
      %v1165 = vpack.c.b16 %v1136, %v1135
      %v1166 = vpack.c.b16 %v1138, %v1137
      %v1167 = vpack.c.b16 %v1140, %v1139
      %v1168 = vpack.c.b16 %v1142, %v1141
      %v1169 = vpack.c.b16 %v1144, %v1143
      %v1170 = vpack.c.b16 %v1145, %v1145
      %vm1171 = vsmask.f32 7424
      %v1173 = vshrl.u32 %v1146, 16
      %v1175 = vshll.u32 %v1146, 16
      %v1177 = vrot.slane %v1175, 1
      %v1178 = vor.u32 %v1173, %v1177
      %v1180 = vshll.u32 %v1147, 16
      %v1182 = vrot.slane %v1180, 1
      %v1183 = vsel %vm1171, %v1178, %v1182
      %v1184 = vshrl.u32 %v1147, 16
      %v1186 = vor.u32 %v1184, %v1182
      %v1188 = vshll.u32 %v1148, 16
      %v1190 = vrot.slane %v1188, 1
      %v1191 = vsel %vm1171, %v1186, %v1190
      %v1192 = vshrl.u32 %v1148, 16
      %v1194 = vor.u32 %v1192, %v1190
      %v1196 = vshll.u32 %v1149, 16
      %v1198 = vrot.slane %v1196, 1
      %v1199 = vsel %vm1171, %v1194, %v1198
      %v1200 = vshrl.u32 %v1149, 16
      %v1202 = vor.u32 %v1200, %v1198
      %v1204 = vshll.u32 %v1150, 16
      %v1206 = vrot.slane %v1204, 1
      %v1207 = vsel %vm1171, %v1202, %v1206
      %v1208 = vshrl.u32 %v1150, 16
      %v1210 = vor.u32 %v1208, %v1206
      %v1212 = vshll.u32 %v1151, 16
      %v1214 = vrot.slane %v1212, 1
      %v1215 = vsel %vm1171, %v1210, %v1214
      %v1216 = vshrl.u32 %v1151, 16
      %v1218 = vor.u32 %v1216, %v1214
      %v1220 = vshll.u32 %v1152, 16
      %v1222 = vrot.slane %v1220, 1
      %v1223 = vsel %vm1171, %v1218, %v1222
      %v1224 = vshrl.u32 %v1152, 16
      %v1226 = vor.u32 %v1224, %v1222
      %v1228 = vshll.u32 %v1153, 16
      %v1230 = vrot.slane %v1228, 1
      %v1231 = vsel %vm1171, %v1226, %v1230
      %v1232 = vshrl.u32 %v1153, 16
      %v1234 = vor.u32 %v1232, %v1230
      %v1236 = vshll.u32 %v1154, 16
      %v1238 = vrot.slane %v1236, 1
      %v1239 = vsel %vm1171, %v1234, %v1238
      %v1240 = vshrl.u32 %v1154, 16
      %v1242 = vor.u32 %v1240, %v1238
      %v1244 = vshll.u32 %v1155, 16
      %v1246 = vrot.slane %v1244, 1
      %v1247 = vsel %vm1171, %v1242, %v1246
      %v1248 = vshrl.u32 %v1155, 16
      %v1250 = vor.u32 %v1248, %v1246
      %v1252 = vshll.u32 %v1156, 16
      %v1254 = vrot.slane %v1252, 1
      %v1255 = vsel %vm1171, %v1250, %v1254
      %v1256 = vshrl.u32 %v1156, 16
      %v1258 = vor.u32 %v1256, %v1254
      %v1260 = vshll.u32 %v1157, 16
      %v1262 = vrot.slane %v1260, 1
      %v1263 = vsel %vm1171, %v1258, %v1262
      %v1264 = vshrl.u32 %v1157, 16
      %v1266 = vor.u32 %v1264, %v1262
      %v1268 = vshll.u32 %v1158, 16
      %v1270 = vrot.slane %v1268, 1
      %v1271 = vsel %vm1171, %v1266, %v1270
      %v1272 = vshrl.u32 %v1158, 16
      %v1274 = vor.u32 %v1272, %v1270
      %v1276 = vshll.u32 %v1159, 16
      %v1278 = vrot.slane %v1276, 1
      %v1279 = vsel %vm1171, %v1274, %v1278
      %v1280 = vshrl.u32 %v1159, 16
      %v1282 = vor.u32 %v1280, %v1278
      %v1284 = vshll.u32 %v1160, 16
      %v1286 = vrot.slane %v1284, 1
      %v1287 = vsel %vm1171, %v1282, %v1286
      %v1288 = vshrl.u32 %v1160, 16
      %v1290 = vor.u32 %v1288, %v1286
      %v1292 = vshll.u32 %v1161, 16
      %v1294 = vrot.slane %v1292, 1
      %v1295 = vsel %vm1171, %v1290, %v1294
      %v1296 = vshrl.u32 %v1161, 16
      %v1298 = vor.u32 %v1296, %v1294
      %v1300 = vshll.u32 %v1162, 16
      %v1302 = vrot.slane %v1300, 1
      %v1303 = vsel %vm1171, %v1298, %v1302
      %v1304 = vshrl.u32 %v1162, 16
      %v1306 = vor.u32 %v1304, %v1302
      %v1308 = vshll.u32 %v1163, 16
      %v1310 = vrot.slane %v1308, 1
      %v1311 = vsel %vm1171, %v1306, %v1310
      %v1312 = vshrl.u32 %v1163, 16
      %v1314 = vor.u32 %v1312, %v1310
      %v1316 = vshll.u32 %v1164, 16
      %v1318 = vrot.slane %v1316, 1
      %v1319 = vsel %vm1171, %v1314, %v1318
      %v1320 = vshrl.u32 %v1164, 16
      %v1322 = vor.u32 %v1320, %v1318
      %v1324 = vshll.u32 %v1165, 16
      %v1326 = vrot.slane %v1324, 1
      %v1327 = vsel %vm1171, %v1322, %v1326
      %v1328 = vshrl.u32 %v1165, 16
      %v1330 = vor.u32 %v1328, %v1326
      %v1332 = vshll.u32 %v1166, 16
      %v1334 = vrot.slane %v1332, 1
      %v1335 = vsel %vm1171, %v1330, %v1334
      %v1336 = vshrl.u32 %v1166, 16
      %v1338 = vor.u32 %v1336, %v1334
      %v1340 = vshll.u32 %v1167, 16
      %v1342 = vrot.slane %v1340, 1
      %v1343 = vsel %vm1171, %v1338, %v1342
      %v1344 = vshrl.u32 %v1167, 16
      %v1346 = vor.u32 %v1344, %v1342
      %v1348 = vshll.u32 %v1168, 16
      %v1350 = vrot.slane %v1348, 1
      %v1351 = vsel %vm1171, %v1346, %v1350
      %v1352 = vshrl.u32 %v1168, 16
      %v1354 = vor.u32 %v1352, %v1350
      %v1356 = vshll.u32 %v1169, 16
      %v1358 = vrot.slane %v1356, 1
      %v1359 = vsel %vm1171, %v1354, %v1358
      %v1360 = vshrl.u32 %v1169, 16
      %v1362 = vor.u32 %v1360, %v1358
      %v1364 = vshll.u32 %v1170, 16
      %v1366 = vrot.slane %v1364, 1
      %v1367 = vsel %vm1171, %v1362, %v1366
      %v1408 = vunpack.c.l.b16 %v1032
      %v1409 = vunpack.c.l.b16 %v1033
      %v1410 = vunpack.c.l.b16 %v1034
      %v1411 = vunpack.c.l.b16 %v1035
      %v1412 = vunpack.c.l.b16 %v1036
      %v1413 = vunpack.c.l.b16 %v1037
      %v1414 = vunpack.c.l.b16 %v1038
      %v1415 = vunpack.c.l.b16 %v1039
      %v1416 = vunpack.c.l.b16 %v1040
      %v1417 = vunpack.c.l.b16 %v1041
      %v1418 = vunpack.c.l.b16 %v1042
      %v1419 = vunpack.c.l.b16 %v1043
      %v1420 = vunpack.c.l.b16 %v1044
      %v1421 = vunpack.c.l.b16 %v1045
      %v1422 = vunpack.c.l.b16 %v1046
      %v1423 = vunpack.c.l.b16 %v1047
      %v1424 = vpack.c.b16 %v1409, %v1408
      %v1425 = vpack.c.b16 %v1411, %v1410
      %v1426 = vpack.c.b16 %v1413, %v1412
      %v1427 = vpack.c.b16 %v1415, %v1414
      %v1428 = vpack.c.b16 %v1417, %v1416
      %v1429 = vpack.c.b16 %v1419, %v1418
      %v1430 = vpack.c.b16 %v1421, %v1420
      %v1431 = vpack.c.b16 %v1423, %v1422
      %1440 = vmatprep.subr.bf16.mxu0 0
      %1441 = vmatpush1.bf16.msra.mxu0 %v1424
      %1442 = vmatprep.subr.bf16.mxu0 0
      %1443 = vmatpush1.bf16.msra.mxu0 %v1425
      %1444 = vmatprep.subr.bf16.mxu0 0
      %1445 = vmatpush1.bf16.msra.mxu0 %v1426
      %1446 = vmatprep.subr.bf16.mxu0 0
      %1447 = vmatpush1.bf16.msra.mxu0 %v1427
      %1448 = vmatprep.subr.bf16.mxu0 0
      %1449 = vmatpush1.bf16.msra.mxu0 %v1428
      %1450 = vmatprep.subr.bf16.mxu0 0
      %1451 = vmatpush1.bf16.msra.mxu0 %v1429
      %1452 = vmatprep.subr.bf16.mxu0 0
      %1453 = vmatpush1.bf16.msra.mxu0 %v1430
      %1454 = vmatprep.subr.bf16.mxu0 0
      %1455 = vmatpush1.bf16.msra.mxu0 %v1431
      %1456 = vmatprep.subr.bf16.mxu0 0
      %1457 = vmatpush1.bf16.msra.mxu0 0
      %1458 = vmatprep.subr.bf16.mxu0 0
      %1459 = vmatpush1.bf16.msra.mxu0 0
      %1460 = vmatprep.subr.bf16.mxu0 0
      %1461 = vmatpush1.bf16.msra.mxu0 0
      %1462 = vmatprep.subr.bf16.mxu0 0
      %1463 = vmatpush1.bf16.msra.mxu0 0
      %1464 = vmatprep.subr.bf16.mxu0 0
      %1465 = vmatpush1.bf16.msra.mxu0 0
      %1466 = vmatprep.subr.bf16.mxu0 0
      %1467 = vmatpush1.bf16.msra.mxu0 0
      %1468 = vmatprep.subr.bf16.mxu0 0
      %1469 = vmatpush1.bf16.msra.mxu0 0
      %1470 = vmatprep.subr.bf16.mxu0 0
      %1471 = vmatpush1.bf16.msra.mxu0 0
      %1472 = vmatprep.mubr.bf16.mxu0 0
      %1473 = vmatmul.mubr.bf16.gmra.mrb[0].mxu0 %v1183
      %v1474 = vpop.f32.mrb[0].mxu0
      %v1475 = vadd.f32 0.0, %v1474
      %v1476 = vpop.f32.mrb[0].mxu0
      %v1477 = vpop.f32.mrb[0].mxu0
      %v1478 = vadd.f32 0.0, %v1477
      %v1479 = vpop.f32.mrb[0].mxu0
      %1480 = vmatprep.mubr.bf16.mxu0 0
      %1481 = vmatmul.mubr.bf16.gmra.mrb[0].mxu0 %v1191
      %v1482 = vpop.f32.mrb[0].mxu0
      %v1483 = vadd.f32 0.0, %v1482
      %v1484 = vpop.f32.mrb[0].mxu0
      %v1485 = vpop.f32.mrb[0].mxu0
      %v1486 = vadd.f32 0.0, %v1485
      %v1487 = vpop.f32.mrb[0].mxu0
      %1488 = vmatprep.mubr.bf16.mxu0 0
      %1489 = vmatmul.mubr.bf16.gmra.mrb[0].mxu0 %v1199
      %v1490 = vpop.f32.mrb[0].mxu0
      %v1491 = vadd.f32 0.0, %v1490
      %v1492 = vpop.f32.mrb[0].mxu0
      %v1493 = vpop.f32.mrb[0].mxu0
      %v1494 = vadd.f32 0.0, %v1493
      %v1495 = vpop.f32.mrb[0].mxu0
      %1496 = vmatprep.mubr.bf16.mxu0 0
      %1497 = vmatmul.mubr.bf16.gmra.mrb[0].mxu0 %v1207
      %v1498 = vpop.f32.mrb[0].mxu0
      %v1499 = vadd.f32 0.0, %v1498
      %v1500 = vpop.f32.mrb[0].mxu0
      %v1501 = vpop.f32.mrb[0].mxu0
      %v1502 = vadd.f32 0.0, %v1501
      %v1503 = vpop.f32.mrb[0].mxu0
      %1504 = vmatprep.mubr.bf16.mxu0 0
      %1505 = vmatmul.mubr.bf16.gmra.mrb[0].mxu0 %v1215
      %v1506 = vpop.f32.mrb[0].mxu0
      %v1507 = vadd.f32 0.0, %v1506
      %v1508 = vpop.f32.mrb[0].mxu0
      %v1509 = vpop.f32.mrb[0].mxu0
      %v1510 = vadd.f32 0.0, %v1509
      %v1511 = vpop.f32.mrb[0].mxu0
      %1512 = vmatprep.mubr.bf16.mxu0 0
      %1513 = vmatmul.mubr.bf16.gmra.mrb[0].mxu0 %v1223
      %v1514 = vpop.f32.mrb[0].mxu0
      %v1515 = vadd.f32 0.0, %v1514
      %v1516 = vpop.f32.mrb[0].mxu0
      %v1517 = vpop.f32.mrb[0].mxu0
      %v1518 = vadd.f32 0.0, %v1517
      %v1519 = vpop.f32.mrb[0].mxu0
      %1520 = vmatprep.mubr.bf16.mxu0 0
      %1521 = vmatmul.mubr.bf16.gmra.mrb[0].mxu0 %v1231
      %v1522 = vpop.f32.mrb[0].mxu0
      %v1523 = vadd.f32 0.0, %v1522
      %v1524 = vpop.f32.mrb[0].mxu0
      %v1525 = vpop.f32.mrb[0].mxu0
      %v1526 = vadd.f32 0.0, %v1525
      %v1527 = vpop.f32.mrb[0].mxu0
      %1528 = vmatprep.mubr.bf16.mxu0 0
      %1529 = vmatmul.mubr.bf16.gmra.mrb[0].mxu0 %v1239
      %v1530 = vpop.f32.mrb[0].mxu0
      %v1531 = vadd.f32 0.0, %v1530
      %v1532 = vpop.f32.mrb[0].mxu0
      %v1533 = vpop.f32.mrb[0].mxu0
      %v1534 = vadd.f32 0.0, %v1533
      %v1535 = vpop.f32.mrb[0].mxu0
      %1536 = vmatprep.mubr.bf16.mxu0 0
      %1537 = vmatmul.mubr.bf16.gmra.mrb[0].mxu0 %v1247
      %v1538 = vpop.f32.mrb[0].mxu0
      %v1539 = vadd.f32 0.0, %v1538
      %v1540 = vpop.f32.mrb[0].mxu0
      %v1541 = vpop.f32.mrb[0].mxu0
      %v1542 = vadd.f32 0.0, %v1541
      %v1543 = vpop.f32.mrb[0].mxu0
      %1544 = vmatprep.mubr.bf16.mxu0 0
      %1545 = vmatmul.mubr.bf16.gmra.mrb[0].mxu0 %v1255
      %v1546 = vpop.f32.mrb[0].mxu0
      %v1547 = vadd.f32 0.0, %v1546
      %v1548 = vpop.f32.mrb[0].mxu0
      %v1549 = vpop.f32.mrb[0].mxu0
      %v1550 = vadd.f32 0.0, %v1549
      %v1551 = vpop.f32.mrb[0].mxu0
      %1552 = vmatprep.mubr.bf16.mxu0 0
      %1553 = vmatmul.mubr.bf16.gmra.mrb[0].mxu0 %v1263
      %v1554 = vpop.f32.mrb[0].mxu0
      %v1555 = vadd.f32 0.0, %v1554
      %v1556 = vpop.f32.mrb[0].mxu0
      %v1557 = vpop.f32.mrb[0].mxu0
      %v1558 = vadd.f32 0.0, %v1557
      %v1559 = vpop.f32.mrb[0].mxu0
      %1560 = vmatprep.mubr.bf16.mxu0 0
      %1561 = vmatmul.mubr.bf16.gmra.mrb[0].mxu0 %v1271
      %v1562 = vpop.f32.mrb[0].mxu0
      %v1563 = vadd.f32 0.0, %v1562
      %v1564 = vpop.f32.mrb[0].mxu0
      %v1565 = vpop.f32.mrb[0].mxu0
      %v1566 = vadd.f32 0.0, %v1565
      %v1567 = vpop.f32.mrb[0].mxu0
      %1568 = vmatprep.mubr.bf16.mxu0 0
      %1569 = vmatmul.mubr.bf16.gmra.mrb[0].mxu0 %v1279
      %v1570 = vpop.f32.mrb[0].mxu0
      %v1571 = vadd.f32 0.0, %v1570
      %v1572 = vpop.f32.mrb[0].mxu0
      %v1573 = vpop.f32.mrb[0].mxu0
      %v1574 = vadd.f32 0.0, %v1573
      %v1575 = vpop.f32.mrb[0].mxu0
      %1576 = vmatprep.mubr.bf16.mxu0 0
      %1577 = vmatmul.mubr.bf16.gmra.mrb[0].mxu0 %v1287
      %v1578 = vpop.f32.mrb[0].mxu0
      %v1579 = vadd.f32 0.0, %v1578
      %v1580 = vpop.f32.mrb[0].mxu0
      %v1581 = vpop.f32.mrb[0].mxu0
      %v1582 = vadd.f32 0.0, %v1581
      %v1583 = vpop.f32.mrb[0].mxu0
      %1584 = vmatprep.mubr.bf16.mxu0 0
      %1585 = vmatmul.mubr.bf16.gmra.mrb[0].mxu0 %v1295
      %v1586 = vpop.f32.mrb[0].mxu0
      %v1587 = vadd.f32 0.0, %v1586
      %v1588 = vpop.f32.mrb[0].mxu0
      %v1589 = vpop.f32.mrb[0].mxu0
      %v1590 = vadd.f32 0.0, %v1589
      %v1591 = vpop.f32.mrb[0].mxu0
      %1592 = vmatprep.mubr.bf16.mxu0 0
      %1593 = vmatmul.mubr.bf16.gmra.mrb[0].mxu0 %v1303
      %v1594 = vpop.f32.mrb[0].mxu0
      %v1595 = vadd.f32 0.0, %v1594
      %v1596 = vpop.f32.mrb[0].mxu0
      %v1597 = vpop.f32.mrb[0].mxu0
      %v1598 = vadd.f32 0.0, %v1597
      %v1599 = vpop.f32.mrb[0].mxu0
      %1600 = vmatprep.mubr.bf16.mxu0 0
      %1601 = vmatmul.mubr.bf16.gmra.mrb[0].mxu0 %v1311
      %v1602 = vpop.f32.mrb[0].mxu0
      %v1603 = vadd.f32 0.0, %v1602
      %v1604 = vpop.f32.mrb[0].mxu0
      %v1605 = vpop.f32.mrb[0].mxu0
      %v1606 = vadd.f32 0.0, %v1605
      %v1607 = vpop.f32.mrb[0].mxu0
      %1608 = vmatprep.mubr.bf16.mxu0 0
      %1609 = vmatmul.mubr.bf16.gmra.mrb[0].mxu0 %v1319
      %v1610 = vpop.f32.mrb[0].mxu0
      %v1611 = vadd.f32 0.0, %v1610
      %v1612 = vpop.f32.mrb[0].mxu0
      %v1613 = vpop.f32.mrb[0].mxu0
      %v1614 = vadd.f32 0.0, %v1613
      %v1615 = vpop.f32.mrb[0].mxu0
      %1616 = vmatprep.mubr.bf16.mxu0 0
      %1617 = vmatmul.mubr.bf16.gmra.mrb[0].mxu0 %v1327
      %v1618 = vpop.f32.mrb[0].mxu0
      %v1619 = vadd.f32 0.0, %v1618
      %v1620 = vpop.f32.mrb[0].mxu0
      %v1621 = vpop.f32.mrb[0].mxu0
      %v1622 = vadd.f32 0.0, %v1621
      %v1623 = vpop.f32.mrb[0].mxu0
      %1624 = vmatprep.mubr.bf16.mxu0 0
      %1625 = vmatmul.mubr.bf16.gmra.mrb[0].mxu0 %v1335
      %v1626 = vpop.f32.mrb[0].mxu0
      %v1627 = vadd.f32 0.0, %v1626
      %v1628 = vpop.f32.mrb[0].mxu0
      %v1629 = vpop.f32.mrb[0].mxu0
      %v1630 = vadd.f32 0.0, %v1629
      %v1631 = vpop.f32.mrb[0].mxu0
      %1632 = vmatprep.mubr.bf16.mxu0 0
      %1633 = vmatmul.mubr.bf16.gmra.mrb[0].mxu0 %v1343
      %v1634 = vpop.f32.mrb[0].mxu0
      %v1635 = vadd.f32 0.0, %v1634
      %v1636 = vpop.f32.mrb[0].mxu0
      %v1637 = vpop.f32.mrb[0].mxu0
      %v1638 = vadd.f32 0.0, %v1637
      %v1639 = vpop.f32.mrb[0].mxu0
      %1640 = vmatprep.mubr.bf16.mxu0 0
      %1641 = vmatmul.mubr.bf16.gmra.mrb[0].mxu0 %v1351
      %v1642 = vpop.f32.mrb[0].mxu0
      %v1643 = vadd.f32 0.0, %v1642
      %v1644 = vpop.f32.mrb[0].mxu0
      %v1645 = vpop.f32.mrb[0].mxu0
      %v1646 = vadd.f32 0.0, %v1645
      %v1647 = vpop.f32.mrb[0].mxu0
      %1648 = vmatprep.mubr.bf16.mxu0 0
      %1649 = vmatmul.mubr.bf16.gmra.mrb[0].mxu0 %v1359
      %v1650 = vpop.f32.mrb[0].mxu0
      %v1651 = vadd.f32 0.0, %v1650
      %v1652 = vpop.f32.mrb[0].mxu0
      %v1653 = vpop.f32.mrb[0].mxu0
      %v1654 = vadd.f32 0.0, %v1653
      %v1655 = vpop.f32.mrb[0].mxu0
      %1656 = vmatprep.mubr.bf16.mxu0 0
      %1657 = vmatmul.mubr.bf16.gmra.mrb[0].mxu0 %v1367
      %v1658 = vpop.f32.mrb[0].mxu0
      %v1659 = vadd.f32 0.0, %v1658
      %v1660 = vpop.f32.mrb[0].mxu0
      %v1661 = vpop.f32.mrb[0].mxu0
      %v1662 = vadd.f32 0.0, %v1661
      %v1663 = vpop.f32.mrb[0].mxu0
      %1664 = vdwg.mxu0
      %v1665 = vadd.f32 %v983, %v1475
      %v1666 = vadd.f32 %v984, %v1478
      %v1667 = vadd.f32 %v985, %v1483
      %v1668 = vadd.f32 %v986, %v1486
      %v1669 = vadd.f32 %v987, %v1491
      %v1670 = vadd.f32 %v988, %v1494
      %v1671 = vadd.f32 %v989, %v1499
      %v1672 = vadd.f32 %v990, %v1502
      %v1673 = vadd.f32 %v991, %v1507
      %v1674 = vadd.f32 %v992, %v1510
      %v1675 = vadd.f32 %v993, %v1515
      %v1676 = vadd.f32 %v994, %v1518
      %v1677 = vadd.f32 %v995, %v1523
      %v1678 = vadd.f32 %v996, %v1526
      %v1679 = vadd.f32 %v997, %v1531
      %v1680 = vadd.f32 %v998, %v1534
      %v1681 = vadd.f32 %v999, %v1539
      %v1682 = vadd.f32 %v1000, %v1542
      %v1683 = vadd.f32 %v1001, %v1547
      %v1684 = vadd.f32 %v1002, %v1550
      %v1685 = vadd.f32 %v1003, %v1555
      %v1686 = vadd.f32 %v1004, %v1558
      %v1687 = vadd.f32 %v1005, %v1563
      %v1688 = vadd.f32 %v1006, %v1566
      %v1689 = vadd.f32 %v1007, %v1571
      %v1690 = vadd.f32 %v1008, %v1574
      %v1691 = vadd.f32 %v1009, %v1579
      %v1692 = vadd.f32 %v1010, %v1582
      %v1693 = vadd.f32 %v1011, %v1587
      %v1694 = vadd.f32 %v1012, %v1590
      %v1695 = vadd.f32 %v1013, %v1595
      %v1696 = vadd.f32 %v1014, %v1598
      %v1697 = vadd.f32 %v1015, %v1603
      %v1698 = vadd.f32 %v1016, %v1606
      %v1699 = vadd.f32 %v1017, %v1611
      %v1700 = vadd.f32 %v1018, %v1614
      %v1701 = vadd.f32 %v1019, %v1619
      %v1702 = vadd.f32 %v1020, %v1622
      %v1703 = vadd.f32 %v1021, %v1627
      %v1704 = vadd.f32 %v1022, %v1630
      %v1705 = vadd.f32 %v1023, %v1635
      %v1706 = vadd.f32 %v1024, %v1638
      %v1707 = vadd.f32 %v1025, %v1643
      %v1708 = vadd.f32 %v1026, %v1646
      %v1709 = vadd.f32 %v1027, %v1651
      %v1710 = vadd.f32 %v1028, %v1654
      %v1711 = vadd.f32 %v1029, %v1659
      %v1712 = vadd.f32 %v1030, %v1662
      %1713 = vst [vmem:[#allocation2] sm:$0xff] %v1665
      %1714 = vst [vmem:[#allocation2 + $0x8] sm:$0xff] %v1666
      %1715 = vst [vmem:[#allocation2 + $0x10] sm:$0xff] %v1667
      %1716 = vst [vmem:[#allocation2 + $0x18] sm:$0xff] %v1668
      %1717 = vst [vmem:[#allocation2 + $0x20] sm:$0xff] %v1669
      %1718 = vst [vmem:[#allocation2 + $0x28] sm:$0xff] %v1670
      %1719 = vst [vmem:[#allocation2 + $0x30] sm:$0xff] %v1671
      %1720 = vst [vmem:[#allocation2 + $0x38] sm:$0xff] %v1672
      %1721 = vst [vmem:[#allocation2 + $0x40] sm:$0xff] %v1673
      %1722 = vst [vmem:[#allocation2 + $0x48] sm:$0xff] %v1674
      %1723 = vst [vmem:[#allocation2 + $0x50] sm:$0xff] %v1675
      %1724 = vst [vmem:[#allocation2 + $0x58] sm:$0xff] %v1676
      %1725 = vst [vmem:[#allocation2 + $0x60] sm:$0xff] %v1677
      %1726 = vst [vmem:[#allocation2 + $0x68] sm:$0xff] %v1678
      %1727 = vst [vmem:[#allocation2 + $0x70] sm:$0xff] %v1679
      %1728 = vst [vmem:[#allocation2 + $0x78] sm:$0xff] %v1680
      %1729 = vst [vmem:[#allocation2 + $0x80] sm:$0xff] %v1681
      %1730 = vst [vmem:[#allocation2 + $0x88] sm:$0xff] %v1682
      %1731 = vst [vmem:[#allocation2 + $0x90] sm:$0xff] %v1683
      %1732 = vst [vmem:[#allocation2 + $0x98] sm:$0xff] %v1684
      %1733 = vst [vmem:[#allocation2 + $0xa0] sm:$0xff] %v1685
      %1734 = vst [vmem:[#allocation2 + $0xa8] sm:$0xff] %v1686
      %1735 = vst [vmem:[#allocation2 + $0xb0] sm:$0xff] %v1687
      %1736 = vst [vmem:[#allocation2 + $0xb8] sm:$0xff] %v1688
      %1737 = vst [vmem:[#allocation2 + $0xc0] sm:$0xff] %v1689
      %1738 = vst [vmem:[#allocation2 + $0xc8] sm:$0xff] %v1690
      %1739 = vst [vmem:[#allocation2 + $0xd0] sm:$0xff] %v1691
      %1740 = vst [vmem:[#allocation2 + $0xd8] sm:$0xff] %v1692
      %1741 = vst [vmem:[#allocation2 + $0xe0] sm:$0xff] %v1693
      %1742 = vst [vmem:[#allocation2 + $0xe8] sm:$0xff] %v1694
      %1743 = vst [vmem:[#allocation2 + $0xf0] sm:$0xff] %v1695
      %1744 = vst [vmem:[#allocation2 + $0xf8] sm:$0xff] %v1696
      %1745 = vst [vmem:[#allocation2 + $0x100] sm:$0xff] %v1697
      %1746 = vst [vmem:[#allocation2 + $0x108] sm:$0xff] %v1698
      %1747 = vst [vmem:[#allocation2 + $0x110] sm:$0xff] %v1699
      %1748 = vst [vmem:[#allocation2 + $0x118] sm:$0xff] %v1700
      %1749 = vst [vmem:[#allocation2 + $0x120] sm:$0xff] %v1701
      %1750 = vst [vmem:[#allocation2 + $0x128] sm:$0xff] %v1702
      %1751 = vst [vmem:[#allocation2 + $0x130] sm:$0xff] %v1703
      %1752 = vst [vmem:[#allocation2 + $0x138] sm:$0xff] %v1704
      %1753 = vst [vmem:[#allocation2 + $0x140] sm:$0xff] %v1705
      %1754 = vst [vmem:[#allocation2 + $0x148] sm:$0xff] %v1706
      %1755 = vst [vmem:[#allocation2 + $0x150] sm:$0xff] %v1707
      %1756 = vst [vmem:[#allocation2 + $0x158] sm:$0xff] %v1708
      %1757 = vst [vmem:[#allocation2 + $0x160] sm:$0xff] %v1709
      %1758 = vst [vmem:[#allocation2 + $0x168] sm:$0xff] %v1710
      %1759 = vst [vmem:[#allocation2 + $0x170] sm:$0xff] %v1711
      %1760 = vst [vmem:[#allocation2 + $0x178] sm:$0xff] %v1712
      %v1761 = vld [vmem:[%s235] sm:$0xe]
      %v1762 = vld [vmem:[%s235 + $0x4] sm:$0xf]
      %v1763 = vld [vmem:[%s235 + $0x8] sm:$0xf]
      %v1764 = vld [vmem:[%s235 + $0xc] sm:$0xf]
      %v1765 = vld [vmem:[%s235 + $0x10] sm:$0xf]
      %v1766 = vld [vmem:[%s235 + $0x14] sm:$0xf]
      %v1767 = vld [vmem:[%s235 + $0x18] sm:$0xf]
      %v1768 = vld [vmem:[%s235 + $0x1c] sm:$0xf]
      %v1769 = vld [vmem:[%s235 + $0x20] sm:$0xf]
      %v1770 = vld [vmem:[%s235 + $0x24] sm:$0xf]
      %v1771 = vld [vmem:[%s235 + $0x28] sm:$0xf]
      %v1772 = vld [vmem:[%s235 + $0x2c] sm:$0xf]
      %v1773 = vld [vmem:[%s235 + $0x30] sm:$0xf]
      %v1774 = vld [vmem:[%s235 + $0x34] sm:$0xf]
      %v1775 = vld [vmem:[%s235 + $0x38] sm:$0xf]
      %v1776 = vld [vmem:[%s235 + $0x3c] sm:$0xf]
      %v1777 = vld [vmem:[%s235 + $0x40] sm:$0xf]
      %v1778 = vld [vmem:[%s235 + $0x44] sm:$0xf]
      %v1779 = vld [vmem:[%s235 + $0x48] sm:$0xf]
      %v1780 = vld [vmem:[%s235 + $0x4c] sm:$0xf]
      %v1781 = vld [vmem:[%s235 + $0x50] sm:$0xf]
      %v1782 = vld [vmem:[%s235 + $0x54] sm:$0xf]
      %v1783 = vld [vmem:[%s235 + $0x58] sm:$0xf]
      %v1784 = vld [vmem:[%s235 + $0x5c] sm:$0xf]
      %v1785 = vld [vmem:[%s235 + $0x60] sm:$0xf]
      %v1786 = vld [vmem:[%s235 + $0x64] sm:$0xf]
      %v1787 = vld [vmem:[%s235 + $0x68] sm:$0xf]
      %v1788 = vld [vmem:[%s235 + $0x6c] sm:$0xf]
      %v1789 = vld [vmem:[%s235 + $0x70] sm:$0xf]
      %v1790 = vld [vmem:[%s235 + $0x74] sm:$0xf]
      %v1791 = vld [vmem:[%s235 + $0x78] sm:$0xf]
      %v1792 = vld [vmem:[%s235 + $0x7c] sm:$0xf]
      %v1793 = vld [vmem:[%s235 + $0x80] sm:$0xf]
      %v1794 = vld [vmem:[%s235 + $0x84] sm:$0xf]
      %v1795 = vld [vmem:[%s235 + $0x88] sm:$0xf]
      %v1796 = vld [vmem:[%s235 + $0x8c] sm:$0xf]
      %v1797 = vld [vmem:[%s235 + $0x90] sm:$0xf]
      %v1798 = vld [vmem:[%s235 + $0x94] sm:$0xf]
      %v1799 = vld [vmem:[%s235 + $0x98] sm:$0xf]
      %v1800 = vld [vmem:[%s235 + $0x9c] sm:$0xf]
      %v1801 = vld [vmem:[%s235 + $0xa0] sm:$0xf]
      %v1802 = vld [vmem:[%s235 + $0xa4] sm:$0xf]
      %v1803 = vld [vmem:[%s235 + $0xa8] sm:$0xf]
      %v1804 = vld [vmem:[%s235 + $0xac] sm:$0xf]
      %v1805 = vld [vmem:[%s235 + $0xb0] sm:$0xf]
      %v1806 = vld [vmem:[%s235 + $0xb4] sm:$0xf]
      %v1807 = vld [vmem:[%s235 + $0xb8] sm:$0xf]
      %v1808 = vld [vmem:[%s235 + $0xbc] sm:$0xf]
      %v1809 = vld [vmem:[%s235 + $0xc0] sm:$0x1]
      %v1810 = vld [vmem:[#allocation2] sm:$0xff]
      %v1811 = vld [vmem:[#allocation2 + $0x8] sm:$0xff]
      %v1812 = vld [vmem:[#allocation2 + $0x10] sm:$0xff]
      %v1813 = vld [vmem:[#allocation2 + $0x18] sm:$0xff]
      %v1814 = vld [vmem:[#allocation2 + $0x20] sm:$0xff]
      %v1815 = vld [vmem:[#allocation2 + $0x28] sm:$0xff]
      %v1816 = vld [vmem:[#allocation2 + $0x30] sm:$0xff]
      %v1817 = vld [vmem:[#allocation2 + $0x38] sm:$0xff]
      %v1818 = vld [vmem:[#allocation2 + $0x40] sm:$0xff]
      %v1819 = vld [vmem:[#allocation2 + $0x48] sm:$0xff]
      %v1820 = vld [vmem:[#allocation2 + $0x50] sm:$0xff]
      %v1821 = vld [vmem:[#allocation2 + $0x58] sm:$0xff]
      %v1822 = vld [vmem:[#allocation2 + $0x60] sm:$0xff]
      %v1823 = vld [vmem:[#allocation2 + $0x68] sm:$0xff]
      %v1824 = vld [vmem:[#allocation2 + $0x70] sm:$0xff]
      %v1825 = vld [vmem:[#allocation2 + $0x78] sm:$0xff]
      %v1826 = vld [vmem:[#allocation2 + $0x80] sm:$0xff]
      %v1827 = vld [vmem:[#allocation2 + $0x88] sm:$0xff]
      %v1828 = vld [vmem:[#allocation2 + $0x90] sm:$0xff]
      %v1829 = vld [vmem:[#allocation2 + $0x98] sm:$0xff]
      %v1830 = vld [vmem:[#allocation2 + $0xa0] sm:$0xff]
      %v1831 = vld [vmem:[#allocation2 + $0xa8] sm:$0xff]
      %v1832 = vld [vmem:[#allocation2 + $0xb0] sm:$0xff]
      %v1833 = vld [vmem:[#allocation2 + $0xb8] sm:$0xff]
      %v1834 = vld [vmem:[#allocation2 + $0xc0] sm:$0xff]
      %v1835 = vld [vmem:[#allocation2 + $0xc8] sm:$0xff]
      %v1836 = vld [vmem:[#allocation2 + $0xd0] sm:$0xff]
      %v1837 = vld [vmem:[#allocation2 + $0xd8] sm:$0xff]
      %v1838 = vld [vmem:[#allocation2 + $0xe0] sm:$0xff]
      %v1839 = vld [vmem:[#allocation2 + $0xe8] sm:$0xff]
      %v1840 = vld [vmem:[#allocation2 + $0xf0] sm:$0xff]
      %v1841 = vld [vmem:[#allocation2 + $0xf8] sm:$0xff]
      %v1842 = vld [vmem:[#allocation2 + $0x100] sm:$0xff]
      %v1843 = vld [vmem:[#allocation2 + $0x108] sm:$0xff]
      %v1844 = vld [vmem:[#allocation2 + $0x110] sm:$0xff]
      %v1845 = vld [vmem:[#allocation2 + $0x118] sm:$0xff]
      %v1846 = vld [vmem:[#allocation2 + $0x120] sm:$0xff]
      %v1847 = vld [vmem:[#allocation2 + $0x128] sm:$0xff]
      %v1848 = vld [vmem:[#allocation2 + $0x130] sm:$0xff]
      %v1849 = vld [vmem:[#allocation2 + $0x138] sm:$0xff]
      %v1850 = vld [vmem:[#allocation2 + $0x140] sm:$0xff]
      %v1851 = vld [vmem:[#allocation2 + $0x148] sm:$0xff]
      %v1852 = vld [vmem:[#allocation2 + $0x150] sm:$0xff]
      %v1853 = vld [vmem:[#allocation2 + $0x158] sm:$0xff]
      %v1854 = vld [vmem:[#allocation2 + $0x160] sm:$0xff]
      %v1855 = vld [vmem:[#allocation2 + $0x168] sm:$0xff]
      %v1856 = vld [vmem:[#allocation2 + $0x170] sm:$0xff]
      %v1857 = vld [vmem:[#allocation2 + $0x178] sm:$0xff]
      %s1858 = scalar_lea.vmem %s243, 128
      %v1859 = vld [vmem:[%s1858] sm:$0xf]
      %v1860 = vld [vmem:[%s1858 + $0x4] sm:$0xf]
      %v1861 = vld [vmem:[%s1858 + $0x8] sm:$0xf]
      %v1862 = vld [vmem:[%s1858 + $0xc] sm:$0xf]
      %v1863 = vld [vmem:[%s1858 + $0x10] sm:$0xf]
      %v1864 = vld [vmem:[%s1858 + $0x14] sm:$0xf]
      %v1865 = vld [vmem:[%s1858 + $0x18] sm:$0xf]
      %v1866 = vld [vmem:[%s1858 + $0x1c] sm:$0xf]
      %v1867 = vld [vmem:[%s1858 + $0x20] sm:$0xf]
      %v1868 = vld [vmem:[%s1858 + $0x24] sm:$0xf]
      %v1869 = vld [vmem:[%s1858 + $0x28] sm:$0xf]
      %v1870 = vld [vmem:[%s1858 + $0x2c] sm:$0xf]
      %v1871 = vld [vmem:[%s1858 + $0x30] sm:$0xf]
      %v1872 = vld [vmem:[%s1858 + $0x34] sm:$0xf]
      %v1873 = vld [vmem:[%s1858 + $0x38] sm:$0xf]
      %v1874 = vld [vmem:[%s1858 + $0x3c] sm:$0xf]
      %v1924 = vunpack.c.l.b16 %v1761
      %v1925 = vunpack.c.l.b16 %v1762
      %v1926 = vunpack.c.l.b16 %v1763
      %v1927 = vunpack.c.l.b16 %v1764
      %v1928 = vunpack.c.l.b16 %v1765
      %v1929 = vunpack.c.l.b16 %v1766
      %v1930 = vunpack.c.l.b16 %v1767
      %v1931 = vunpack.c.l.b16 %v1768
      %v1932 = vunpack.c.l.b16 %v1769
      %v1933 = vunpack.c.l.b16 %v1770
      %v1934 = vunpack.c.l.b16 %v1771
      %v1935 = vunpack.c.l.b16 %v1772
      %v1936 = vunpack.c.l.b16 %v1773
      %v1937 = vunpack.c.l.b16 %v1774
      %v1938 = vunpack.c.l.b16 %v1775
      %v1939 = vunpack.c.l.b16 %v1776
      %v1940 = vunpack.c.l.b16 %v1777
      %v1941 = vunpack.c.l.b16 %v1778
      %v1942 = vunpack.c.l.b16 %v1779
      %v1943 = vunpack.c.l.b16 %v1780
      %v1944 = vunpack.c.l.b16 %v1781
      %v1945 = vunpack.c.l.b16 %v1782
      %v1946 = vunpack.c.l.b16 %v1783
      %v1947 = vunpack.c.l.b16 %v1784
      %v1948 = vunpack.c.l.b16 %v1785
      %v1949 = vunpack.c.l.b16 %v1786
      %v1950 = vunpack.c.l.b16 %v1787
      %v1951 = vunpack.c.l.b16 %v1788
      %v1952 = vunpack.c.l.b16 %v1789
      %v1953 = vunpack.c.l.b16 %v1790
      %v1954 = vunpack.c.l.b16 %v1791
      %v1955 = vunpack.c.l.b16 %v1792
      %v1956 = vunpack.c.l.b16 %v1793
      %v1957 = vunpack.c.l.b16 %v1794
      %v1958 = vunpack.c.l.b16 %v1795
      %v1959 = vunpack.c.l.b16 %v1796
      %v1960 = vunpack.c.l.b16 %v1797
      %v1961 = vunpack.c.l.b16 %v1798
      %v1962 = vunpack.c.l.b16 %v1799
      %v1963 = vunpack.c.l.b16 %v1800
      %v1964 = vunpack.c.l.b16 %v1801
      %v1965 = vunpack.c.l.b16 %v1802
      %v1966 = vunpack.c.l.b16 %v1803
      %v1967 = vunpack.c.l.b16 %v1804
      %v1968 = vunpack.c.l.b16 %v1805
      %v1969 = vunpack.c.l.b16 %v1806
      %v1970 = vunpack.c.l.b16 %v1807
      %v1971 = vunpack.c.l.b16 %v1808
      %v1972 = vunpack.c.l.b16 %v1809
      %v1973 = vpack.c.b16 %v1925, %v1924
      %v1974 = vpack.c.b16 %v1927, %v1926
      %v1975 = vpack.c.b16 %v1929, %v1928
      %v1976 = vpack.c.b16 %v1931, %v1930
      %v1977 = vpack.c.b16 %v1933, %v1932
      %v1978 = vpack.c.b16 %v1935, %v1934
      %v1979 = vpack.c.b16 %v1937, %v1936
      %v1980 = vpack.c.b16 %v1939, %v1938
      %v1981 = vpack.c.b16 %v1941, %v1940
      %v1982 = vpack.c.b16 %v1943, %v1942
      %v1983 = vpack.c.b16 %v1945, %v1944
      %v1984 = vpack.c.b16 %v1947, %v1946
      %v1985 = vpack.c.b16 %v1949, %v1948
      %v1986 = vpack.c.b16 %v1951, %v1950
      %v1987 = vpack.c.b16 %v1953, %v1952
      %v1988 = vpack.c.b16 %v1955, %v1954
      %v1989 = vpack.c.b16 %v1957, %v1956
      %v1990 = vpack.c.b16 %v1959, %v1958
      %v1991 = vpack.c.b16 %v1961, %v1960
      %v1992 = vpack.c.b16 %v1963, %v1962
      %v1993 = vpack.c.b16 %v1965, %v1964
      %v1994 = vpack.c.b16 %v1967, %v1966
      %v1995 = vpack.c.b16 %v1969, %v1968
      %v1996 = vpack.c.b16 %v1971, %v1970
      %v1997 = vpack.c.b16 %v1972, %v1972
      %vm1998 = vcmask 1046528
      %v1999 = vrot.slane %v1973, 1
      %v2000 = vrot.slane %v1974, 1
      %v2001 = vsel %vm1998, %v1999, %v2000
      %v2002 = vrot.slane %v1975, 1
      %v2003 = vsel %vm1998, %v2000, %v2002
      %v2004 = vrot.slane %v1976, 1
      %v2005 = vsel %vm1998, %v2002, %v2004
      %v2006 = vrot.slane %v1977, 1
      %v2007 = vsel %vm1998, %v2004, %v2006
      %v2008 = vrot.slane %v1978, 1
      %v2009 = vsel %vm1998, %v2006, %v2008
      %v2010 = vrot.slane %v1979, 1
      %v2011 = vsel %vm1998, %v2008, %v2010
      %v2012 = vrot.slane %v1980, 1
      %v2013 = vsel %vm1998, %v2010, %v2012
      %v2014 = vrot.slane %v1981, 1
      %v2015 = vsel %vm1998, %v2012, %v2014
      %v2016 = vrot.slane %v1982, 1
      %v2017 = vsel %vm1998, %v2014, %v2016
      %v2018 = vrot.slane %v1983, 1
      %v2019 = vsel %vm1998, %v2016, %v2018
      %v2020 = vrot.slane %v1984, 1
      %v2021 = vsel %vm1998, %v2018, %v2020
      %v2022 = vrot.slane %v1985, 1
      %v2023 = vsel %vm1998, %v2020, %v2022
      %v2024 = vrot.slane %v1986, 1
      %v2025 = vsel %vm1998, %v2022, %v2024
      %v2026 = vrot.slane %v1987, 1
      %v2027 = vsel %vm1998, %v2024, %v2026
      %v2028 = vrot.slane %v1988, 1
      %v2029 = vsel %vm1998, %v2026, %v2028
      %v2030 = vrot.slane %v1989, 1
      %v2031 = vsel %vm1998, %v2028, %v2030
      %v2032 = vrot.slane %v1990, 1
      %v2033 = vsel %vm1998, %v2030, %v2032
      %v2034 = vrot.slane %v1991, 1
      %v2035 = vsel %vm1998, %v2032, %v2034
      %v2036 = vrot.slane %v1992, 1
      %v2037 = vsel %vm1998, %v2034, %v2036
      %v2038 = vrot.slane %v1993, 1
      %v2039 = vsel %vm1998, %v2036, %v2038
      %v2040 = vrot.slane %v1994, 1
      %v2041 = vsel %vm1998, %v2038, %v2040
      %v2042 = vrot.slane %v1995, 1
      %v2043 = vsel %vm1998, %v2040, %v2042
      %v2044 = vrot.slane %v1996, 1
      %v2045 = vsel %vm1998, %v2042, %v2044
      %v2046 = vrot.slane %v1997, 1
      %v2047 = vsel %vm1998, %v2044, %v2046
      %v2088 = vunpack.c.l.b16 %v1859
      %v2089 = vunpack.c.l.b16 %v1860
      %v2090 = vunpack.c.l.b16 %v1861
      %v2091 = vunpack.c.l.b16 %v1862
      %v2092 = vunpack.c.l.b16 %v1863
      %v2093 = vunpack.c.l.b16 %v1864
      %v2094 = vunpack.c.l.b16 %v1865
      %v2095 = vunpack.c.l.b16 %v1866
      %v2096 = vunpack.c.l.b16 %v1867
      %v2097 = vunpack.c.l.b16 %v1868
      %v2098 = vunpack.c.l.b16 %v1869
      %v2099 = vunpack.c.l.b16 %v1870
      %v2100 = vunpack.c.l.b16 %v1871
      %v2101 = vunpack.c.l.b16 %v1872
      %v2102 = vunpack.c.l.b16 %v1873
      %v2103 = vunpack.c.l.b16 %v1874
      %v2104 = vpack.c.b16 %v2089, %v2088
      %v2105 = vpack.c.b16 %v2091, %v2090
      %v2106 = vpack.c.b16 %v2093, %v2092
      %v2107 = vpack.c.b16 %v2095, %v2094
      %v2108 = vpack.c.b16 %v2097, %v2096
      %v2109 = vpack.c.b16 %v2099, %v2098
      %v2110 = vpack.c.b16 %v2101, %v2100
      %v2111 = vpack.c.b16 %v2103, %v2102
      %2120 = vmatprep.subr.bf16.mxu0 0
      %2121 = vmatpush1.bf16.msra.mxu0 %v2104
      %2122 = vmatprep.subr.bf16.mxu0 0
      %2123 = vmatpush1.bf16.msra.mxu0 %v2105
      %2124 = vmatprep.subr.bf16.mxu0 0
      %2125 = vmatpush1.bf16.msra.mxu0 %v2106
      %2126 = vmatprep.subr.bf16.mxu0 0
      %2127 = vmatpush1.bf16.msra.mxu0 %v2107
      %2128 = vmatprep.subr.bf16.mxu0 0
      %2129 = vmatpush1.bf16.msra.mxu0 %v2108
      %2130 = vmatprep.subr.bf16.mxu0 0
      %2131 = vmatpush1.bf16.msra.mxu0 %v2109
      %2132 = vmatprep.subr.bf16.mxu0 0
      %2133 = vmatpush1.bf16.msra.mxu0 %v2110
      %2134 = vmatprep.subr.bf16.mxu0 0
      %2135 = vmatpush1.bf16.msra.mxu0 %v2111
      %2136 = vmatprep.subr.bf16.mxu0 0
      %2137 = vmatpush1.bf16.msra.mxu0 0
      %2138 = vmatprep.subr.bf16.mxu0 0
      %2139 = vmatpush1.bf16.msra.mxu0 0
      %2140 = vmatprep.subr.bf16.mxu0 0
      %2141 = vmatpush1.bf16.msra.mxu0 0
      %2142 = vmatprep.subr.bf16.mxu0 0
      %2143 = vmatpush1.bf16.msra.mxu0 0
      %2144 = vmatprep.subr.bf16.mxu0 0
      %2145 = vmatpush1.bf16.msra.mxu0 0
      %2146 = vmatprep.subr.bf16.mxu0 0
      %2147 = vmatpush1.bf16.msra.mxu0 0
      %2148 = vmatprep.subr.bf16.mxu0 0
      %2149 = vmatpush1.bf16.msra.mxu0 0
      %2150 = vmatprep.subr.bf16.mxu0 0
      %2151 = vmatpush1.bf16.msra.mxu0 0
      %2152 = vmatprep.mubr.bf16.mxu0 0
      %2153 = vmatmul.mubr.bf16.gmra.mrb[0].mxu0 %v2001
      %v2154 = vpop.f32.mrb[0].mxu0
      %v2155 = vadd.f32 0.0, %v2154
      %v2156 = vpop.f32.mrb[0].mxu0
      %v2157 = vpop.f32.mrb[0].mxu0
      %v2158 = vadd.f32 0.0, %v2157
      %v2159 = vpop.f32.mrb[0].mxu0
      %2160 = vmatprep.mubr.bf16.mxu0 0
      %2161 = vmatmul.mubr.bf16.gmra.mrb[0].mxu0 %v2003
      %v2162 = vpop.f32.mrb[0].mxu0
      %v2163 = vadd.f32 0.0, %v2162
      %v2164 = vpop.f32.mrb[0].mxu0
      %v2165 = vpop.f32.mrb[0].mxu0
      %v2166 = vadd.f32 0.0, %v2165
      %v2167 = vpop.f32.mrb[0].mxu0
      %2168 = vmatprep.mubr.bf16.mxu0 0
      %2169 = vmatmul.mubr.bf16.gmra.mrb[0].mxu0 %v2005
      %v2170 = vpop.f32.mrb[0].mxu0
      %v2171 = vadd.f32 0.0, %v2170
      %v2172 = vpop.f32.mrb[0].mxu0
      %v2173 = vpop.f32.mrb[0].mxu0
      %v2174 = vadd.f32 0.0, %v2173
      %v2175 = vpop.f32.mrb[0].mxu0
      %2176 = vmatprep.mubr.bf16.mxu0 0
      %2177 = vmatmul.mubr.bf16.gmra.mrb[0].mxu0 %v2007
      %v2178 = vpop.f32.mrb[0].mxu0
      %v2179 = vadd.f32 0.0, %v2178
      %v2180 = vpop.f32.mrb[0].mxu0
      %v2181 = vpop.f32.mrb[0].mxu0
      %v2182 = vadd.f32 0.0, %v2181
      %v2183 = vpop.f32.mrb[0].mxu0
      %2184 = vmatprep.mubr.bf16.mxu0 0
      %2185 = vmatmul.mubr.bf16.gmra.mrb[0].mxu0 %v2009
      %v2186 = vpop.f32.mrb[0].mxu0
      %v2187 = vadd.f32 0.0, %v2186
      %v2188 = vpop.f32.mrb[0].mxu0
      %v2189 = vpop.f32.mrb[0].mxu0
      %v2190 = vadd.f32 0.0, %v2189
      %v2191 = vpop.f32.mrb[0].mxu0
      %2192 = vmatprep.mubr.bf16.mxu0 0
      %2193 = vmatmul.mubr.bf16.gmra.mrb[0].mxu0 %v2011
      %v2194 = vpop.f32.mrb[0].mxu0
      %v2195 = vadd.f32 0.0, %v2194
      %v2196 = vpop.f32.mrb[0].mxu0
      %v2197 = vpop.f32.mrb[0].mxu0
      %v2198 = vadd.f32 0.0, %v2197
      %v2199 = vpop.f32.mrb[0].mxu0
      %2200 = vmatprep.mubr.bf16.mxu0 0
      %2201 = vmatmul.mubr.bf16.gmra.mrb[0].mxu0 %v2013
      %v2202 = vpop.f32.mrb[0].mxu0
      %v2203 = vadd.f32 0.0, %v2202
      %v2204 = vpop.f32.mrb[0].mxu0
      %v2205 = vpop.f32.mrb[0].mxu0
      %v2206 = vadd.f32 0.0, %v2205
      %v2207 = vpop.f32.mrb[0].mxu0
      %2208 = vmatprep.mubr.bf16.mxu0 0
      %2209 = vmatmul.mubr.bf16.gmra.mrb[0].mxu0 %v2015
      %v2210 = vpop.f32.mrb[0].mxu0
      %v2211 = vadd.f32 0.0, %v2210
      %v2212 = vpop.f32.mrb[0].mxu0
      %v2213 = vpop.f32.mrb[0].mxu0
      %v2214 = vadd.f32 0.0, %v2213
      %v2215 = vpop.f32.mrb[0].mxu0
      %2216 = vmatprep.mubr.bf16.mxu0 0
      %2217 = vmatmul.mubr.bf16.gmra.mrb[0].mxu0 %v2017
      %v2218 = vpop.f32.mrb[0].mxu0
      %v2219 = vadd.f32 0.0, %v2218
      %v2220 = vpop.f32.mrb[0].mxu0
      %v2221 = vpop.f32.mrb[0].mxu0
      %v2222 = vadd.f32 0.0, %v2221
      %v2223 = vpop.f32.mrb[0].mxu0
      %2224 = vmatprep.mubr.bf16.mxu0 0
      %2225 = vmatmul.mubr.bf16.gmra.mrb[0].mxu0 %v2019
      %v2226 = vpop.f32.mrb[0].mxu0
      %v2227 = vadd.f32 0.0, %v2226
      %v2228 = vpop.f32.mrb[0].mxu0
      %v2229 = vpop.f32.mrb[0].mxu0
      %v2230 = vadd.f32 0.0, %v2229
      %v2231 = vpop.f32.mrb[0].mxu0
      %2232 = vmatprep.mubr.bf16.mxu0 0
      %2233 = vmatmul.mubr.bf16.gmra.mrb[0].mxu0 %v2021
      %v2234 = vpop.f32.mrb[0].mxu0
      %v2235 = vadd.f32 0.0, %v2234
      %v2236 = vpop.f32.mrb[0].mxu0
      %v2237 = vpop.f32.mrb[0].mxu0
      %v2238 = vadd.f32 0.0, %v2237
      %v2239 = vpop.f32.mrb[0].mxu0
      %2240 = vmatprep.mubr.bf16.mxu0 0
      %2241 = vmatmul.mubr.bf16.gmra.mrb[0].mxu0 %v2023
      %v2242 = vpop.f32.mrb[0].mxu0
      %v2243 = vadd.f32 0.0, %v2242
      %v2244 = vpop.f32.mrb[0].mxu0
      %v2245 = vpop.f32.mrb[0].mxu0
      %v2246 = vadd.f32 0.0, %v2245
      %v2247 = vpop.f32.mrb[0].mxu0
      %2248 = vmatprep.mubr.bf16.mxu0 0
      %2249 = vmatmul.mubr.bf16.gmra.mrb[0].mxu0 %v2025
      %v2250 = vpop.f32.mrb[0].mxu0
      %v2251 = vadd.f32 0.0, %v2250
      %v2252 = vpop.f32.mrb[0].mxu0
      %v2253 = vpop.f32.mrb[0].mxu0
      %v2254 = vadd.f32 0.0, %v2253
      %v2255 = vpop.f32.mrb[0].mxu0
      %2256 = vmatprep.mubr.bf16.mxu0 0
      %2257 = vmatmul.mubr.bf16.gmra.mrb[0].mxu0 %v2027
      %v2258 = vpop.f32.mrb[0].mxu0
      %v2259 = vadd.f32 0.0, %v2258
      %v2260 = vpop.f32.mrb[0].mxu0
      %v2261 = vpop.f32.mrb[0].mxu0
      %v2262 = vadd.f32 0.0, %v2261
      %v2263 = vpop.f32.mrb[0].mxu0
      %2264 = vmatprep.mubr.bf16.mxu0 0
      %2265 = vmatmul.mubr.bf16.gmra.mrb[0].mxu0 %v2029
      %v2266 = vpop.f32.mrb[0].mxu0
      %v2267 = vadd.f32 0.0, %v2266
      %v2268 = vpop.f32.mrb[0].mxu0
      %v2269 = vpop.f32.mrb[0].mxu0
      %v2270 = vadd.f32 0.0, %v2269
      %v2271 = vpop.f32.mrb[0].mxu0
      %2272 = vmatprep.mubr.bf16.mxu0 0
      %2273 = vmatmul.mubr.bf16.gmra.mrb[0].mxu0 %v2031
      %v2274 = vpop.f32.mrb[0].mxu0
      %v2275 = vadd.f32 0.0, %v2274
      %v2276 = vpop.f32.mrb[0].mxu0
      %v2277 = vpop.f32.mrb[0].mxu0
      %v2278 = vadd.f32 0.0, %v2277
      %v2279 = vpop.f32.mrb[0].mxu0
      %2280 = vmatprep.mubr.bf16.mxu0 0
      %2281 = vmatmul.mubr.bf16.gmra.mrb[0].mxu0 %v2033
      %v2282 = vpop.f32.mrb[0].mxu0
      %v2283 = vadd.f32 0.0, %v2282
      %v2284 = vpop.f32.mrb[0].mxu0
      %v2285 = vpop.f32.mrb[0].mxu0
      %v2286 = vadd.f32 0.0, %v2285
      %v2287 = vpop.f32.mrb[0].mxu0
      %2288 = vmatprep.mubr.bf16.mxu0 0
      %2289 = vmatmul.mubr.bf16.gmra.mrb[0].mxu0 %v2035
      %v2290 = vpop.f32.mrb[0].mxu0
      %v2291 = vadd.f32 0.0, %v2290
      %v2292 = vpop.f32.mrb[0].mxu0
      %v2293 = vpop.f32.mrb[0].mxu0
      %v2294 = vadd.f32 0.0, %v2293
      %v2295 = vpop.f32.mrb[0].mxu0
      %2296 = vmatprep.mubr.bf16.mxu0 0
      %2297 = vmatmul.mubr.bf16.gmra.mrb[0].mxu0 %v2037
      %v2298 = vpop.f32.mrb[0].mxu0
      %v2299 = vadd.f32 0.0, %v2298
      %v2300 = vpop.f32.mrb[0].mxu0
      %v2301 = vpop.f32.mrb[0].mxu0
      %v2302 = vadd.f32 0.0, %v2301
      %v2303 = vpop.f32.mrb[0].mxu0
      %2304 = vmatprep.mubr.bf16.mxu0 0
      %2305 = vmatmul.mubr.bf16.gmra.mrb[0].mxu0 %v2039
      %v2306 = vpop.f32.mrb[0].mxu0
      %v2307 = vadd.f32 0.0, %v2306
      %v2308 = vpop.f32.mrb[0].mxu0
      %v2309 = vpop.f32.mrb[0].mxu0
      %v2310 = vadd.f32 0.0, %v2309
      %v2311 = vpop.f32.mrb[0].mxu0
      %2312 = vmatprep.mubr.bf16.mxu0 0
      %2313 = vmatmul.mubr.bf16.gmra.mrb[0].mxu0 %v2041
      %v2314 = vpop.f32.mrb[0].mxu0
      %v2315 = vadd.f32 0.0, %v2314
      %v2316 = vpop.f32.mrb[0].mxu0
      %v2317 = vpop.f32.mrb[0].mxu0
      %v2318 = vadd.f32 0.0, %v2317
      %v2319 = vpop.f32.mrb[0].mxu0
      %2320 = vmatprep.mubr.bf16.mxu0 0
      %2321 = vmatmul.mubr.bf16.gmra.mrb[0].mxu0 %v2043
      %v2322 = vpop.f32.mrb[0].mxu0
      %v2323 = vadd.f32 0.0, %v2322
      %v2324 = vpop.f32.mrb[0].mxu0
      %v2325 = vpop.f32.mrb[0].mxu0
      %v2326 = vadd.f32 0.0, %v2325
      %v2327 = vpop.f32.mrb[0].mxu0
      %2328 = vmatprep.mubr.bf16.mxu0 0
      %2329 = vmatmul.mubr.bf16.gmra.mrb[0].mxu0 %v2045
      %v2330 = vpop.f32.mrb[0].mxu0
      %v2331 = vadd.f32 0.0, %v2330
      %v2332 = vpop.f32.mrb[0].mxu0
      %v2333 = vpop.f32.mrb[0].mxu0
      %v2334 = vadd.f32 0.0, %v2333
      %v2335 = vpop.f32.mrb[0].mxu0
      %2336 = vmatprep.mubr.bf16.mxu0 0
      %2337 = vmatmul.mubr.bf16.gmra.mrb[0].mxu0 %v2047
      %v2338 = vpop.f32.mrb[0].mxu0
      %v2339 = vadd.f32 0.0, %v2338
      %v2340 = vpop.f32.mrb[0].mxu0
      %v2341 = vpop.f32.mrb[0].mxu0
      %v2342 = vadd.f32 0.0, %v2341
      %v2343 = vpop.f32.mrb[0].mxu0
      %2344 = vdwg.mxu0
      %v2345 = vadd.f32 %v1810, %v2155
      %v2346 = vadd.f32 %v1811, %v2158
      %v2347 = vadd.f32 %v1812, %v2163
      %v2348 = vadd.f32 %v1813, %v2166
      %v2349 = vadd.f32 %v1814, %v2171
      %v2350 = vadd.f32 %v1815, %v2174
      %v2351 = vadd.f32 %v1816, %v2179
      %v2352 = vadd.f32 %v1817, %v2182
      %v2353 = vadd.f32 %v1818, %v2187
      %v2354 = vadd.f32 %v1819, %v2190
      %v2355 = vadd.f32 %v1820, %v2195
      %v2356 = vadd.f32 %v1821, %v2198
      %v2357 = vadd.f32 %v1822, %v2203
      %v2358 = vadd.f32 %v1823, %v2206
      %v2359 = vadd.f32 %v1824, %v2211
      %v2360 = vadd.f32 %v1825, %v2214
      %v2361 = vadd.f32 %v1826, %v2219
      %v2362 = vadd.f32 %v1827, %v2222
      %v2363 = vadd.f32 %v1828, %v2227
      %v2364 = vadd.f32 %v1829, %v2230
      %v2365 = vadd.f32 %v1830, %v2235
      %v2366 = vadd.f32 %v1831, %v2238
      %v2367 = vadd.f32 %v1832, %v2243
      %v2368 = vadd.f32 %v1833, %v2246
      %v2369 = vadd.f32 %v1834, %v2251
      %v2370 = vadd.f32 %v1835, %v2254
      %v2371 = vadd.f32 %v1836, %v2259
      %v2372 = vadd.f32 %v1837, %v2262
      %v2373 = vadd.f32 %v1838, %v2267
      %v2374 = vadd.f32 %v1839, %v2270
      %v2375 = vadd.f32 %v1840, %v2275
      %v2376 = vadd.f32 %v1841, %v2278
      %v2377 = vadd.f32 %v1842, %v2283
      %v2378 = vadd.f32 %v1843, %v2286
      %v2379 = vadd.f32 %v1844, %v2291
      %v2380 = vadd.f32 %v1845, %v2294
      %v2381 = vadd.f32 %v1846, %v2299
      %v2382 = vadd.f32 %v1847, %v2302
      %v2383 = vadd.f32 %v1848, %v2307
      %v2384 = vadd.f32 %v1849, %v2310
      %v2385 = vadd.f32 %v1850, %v2315
      %v2386 = vadd.f32 %v1851, %v2318
      %v2387 = vadd.f32 %v1852, %v2323
      %v2388 = vadd.f32 %v1853, %v2326
      %v2389 = vadd.f32 %v1854, %v2331
      %v2390 = vadd.f32 %v1855, %v2334
      %v2391 = vadd.f32 %v1856, %v2339
      %v2392 = vadd.f32 %v1857, %v2342
      %2393 = vst [vmem:[#allocation2] sm:$0xff] %v2345
      %2394 = vst [vmem:[#allocation2 + $0x8] sm:$0xff] %v2346
      %2395 = vst [vmem:[#allocation2 + $0x10] sm:$0xff] %v2347
      %2396 = vst [vmem:[#allocation2 + $0x18] sm:$0xff] %v2348
      %2397 = vst [vmem:[#allocation2 + $0x20] sm:$0xff] %v2349
      %2398 = vst [vmem:[#allocation2 + $0x28] sm:$0xff] %v2350
      %2399 = vst [vmem:[#allocation2 + $0x30] sm:$0xff] %v2351
      %2400 = vst [vmem:[#allocation2 + $0x38] sm:$0xff] %v2352
      %2401 = vst [vmem:[#allocation2 + $0x40] sm:$0xff] %v2353
      %2402 = vst [vmem:[#allocation2 + $0x48] sm:$0xff] %v2354
      %2403 = vst [vmem:[#allocation2 + $0x50] sm:$0xff] %v2355
      %2404 = vst [vmem:[#allocation2 + $0x58] sm:$0xff] %v2356
      %2405 = vst [vmem:[#allocation2 + $0x60] sm:$0xff] %v2357
      %2406 = vst [vmem:[#allocation2 + $0x68] sm:$0xff] %v2358
      %2407 = vst [vmem:[#allocation2 + $0x70] sm:$0xff] %v2359
      %2408 = vst [vmem:[#allocation2 + $0x78] sm:$0xff] %v2360
      %2409 = vst [vmem:[#allocation2 + $0x80] sm:$0xff] %v2361
      %2410 = vst [vmem:[#allocation2 + $0x88] sm:$0xff] %v2362
      %2411 = vst [vmem:[#allocation2 + $0x90] sm:$0xff] %v2363
      %2412 = vst [vmem:[#allocation2 + $0x98] sm:$0xff] %v2364
      %2413 = vst [vmem:[#allocation2 + $0xa0] sm:$0xff] %v2365
      %2414 = vst [vmem:[#allocation2 + $0xa8] sm:$0xff] %v2366
      %2415 = vst [vmem:[#allocation2 + $0xb0] sm:$0xff] %v2367
      %2416 = vst [vmem:[#allocation2 + $0xb8] sm:$0xff] %v2368
      %2417 = vst [vmem:[#allocation2 + $0xc0] sm:$0xff] %v2369
      %2418 = vst [vmem:[#allocation2 + $0xc8] sm:$0xff] %v2370
      %2419 = vst [vmem:[#allocation2 + $0xd0] sm:$0xff] %v2371
      %2420 = vst [vmem:[#allocation2 + $0xd8] sm:$0xff] %v2372
      %2421 = vst [vmem:[#allocation2 + $0xe0] sm:$0xff] %v2373
      %2422 = vst [vmem:[#allocation2 + $0xe8] sm:$0xff] %v2374
      %2423 = vst [vmem:[#allocation2 + $0xf0] sm:$0xff] %v2375
      %2424 = vst [vmem:[#allocation2 + $0xf8] sm:$0xff] %v2376
      %2425 = vst [vmem:[#allocation2 + $0x100] sm:$0xff] %v2377
      %2426 = vst [vmem:[#allocation2 + $0x108] sm:$0xff] %v2378
      %2427 = vst [vmem:[#allocation2 + $0x110] sm:$0xff] %v2379
      %2428 = vst [vmem:[#allocation2 + $0x118] sm:$0xff] %v2380
      %2429 = vst [vmem:[#allocation2 + $0x120] sm:$0xff] %v2381
      %2430 = vst [vmem:[#allocation2 + $0x128] sm:$0xff] %v2382
      %2431 = vst [vmem:[#allocation2 + $0x130] sm:$0xff] %v2383
      %2432 = vst [vmem:[#allocation2 + $0x138] sm:$0xff] %v2384
      %2433 = vst [vmem:[#allocation2 + $0x140] sm:$0xff] %v2385
      %2434 = vst [vmem:[#allocation2 + $0x148] sm:$0xff] %v2386
      %2435 = vst [vmem:[#allocation2 + $0x150] sm:$0xff] %v2387
      %2436 = vst [vmem:[#allocation2 + $0x158] sm:$0xff] %v2388
      %2437 = vst [vmem:[#allocation2 + $0x160] sm:$0xff] %v2389
      %2438 = vst [vmem:[#allocation2 + $0x168] sm:$0xff] %v2390
      %2439 = vst [vmem:[#allocation2 + $0x170] sm:$0xff] %v2391
      %2440 = vst [vmem:[#allocation2 + $0x178] sm:$0xff] %v2392
      %v2441 = vld [vmem:[%s235 + $0xc] sm:$0xf]
      %v2442 = vld [vmem:[%s235 + $0x10] sm:$0xf]
      %v2443 = vld [vmem:[%s235 + $0x14] sm:$0xf]
      %v2444 = vld [vmem:[%s235 + $0x18] sm:$0xf]
      %v2445 = vld [vmem:[%s235 + $0x1c] sm:$0xf]
      %v2446 = vld [vmem:[%s235 + $0x20] sm:$0xf]
      %v2447 = vld [vmem:[%s235 + $0x24] sm:$0xf]
      %v2448 = vld [vmem:[%s235 + $0x28] sm:$0xf]
      %v2449 = vld [vmem:[%s235 + $0x2c] sm:$0xf]
      %v2450 = vld [vmem:[%s235 + $0x30] sm:$0xf]
      %v2451 = vld [vmem:[%s235 + $0x34] sm:$0xf]
      %v2452 = vld [vmem:[%s235 + $0x38] sm:$0xf]
      %v2453 = vld [vmem:[%s235 + $0x3c] sm:$0xf]
      %v2454 = vld [vmem:[%s235 + $0x40] sm:$0xf]
      %v2455 = vld [vmem:[%s235 + $0x44] sm:$0xf]
      %v2456 = vld [vmem:[%s235 + $0x48] sm:$0xf]
      %v2457 = vld [vmem:[%s235 + $0x4c] sm:$0xf]
      %v2458 = vld [vmem:[%s235 + $0x50] sm:$0xf]
      %v2459 = vld [vmem:[%s235 + $0x54] sm:$0xf]
      %v2460 = vld [vmem:[%s235 + $0x58] sm:$0xf]
      %v2461 = vld [vmem:[%s235 + $0x5c] sm:$0xf]
      %v2462 = vld [vmem:[%s235 + $0x60] sm:$0xf]
      %v2463 = vld [vmem:[%s235 + $0x64] sm:$0xf]
      %v2464 = vld [vmem:[%s235 + $0x68] sm:$0xf]
      %v2465 = vld [vmem:[%s235 + $0x6c] sm:$0xf]
      %v2466 = vld [vmem:[%s235 + $0x70] sm:$0xf]
      %v2467 = vld [vmem:[%s235 + $0x74] sm:$0xf]
      %v2468 = vld [vmem:[%s235 + $0x78] sm:$0xf]
      %v2469 = vld [vmem:[%s235 + $0x7c] sm:$0xf]
      %v2470 = vld [vmem:[%s235 + $0x80] sm:$0xf]
      %v2471 = vld [vmem:[%s235 + $0x84] sm:$0xf]
      %v2472 = vld [vmem:[%s235 + $0x88] sm:$0xf]
      %v2473 = vld [vmem:[%s235 + $0x8c] sm:$0xf]
      %v2474 = vld [vmem:[%s235 + $0x90] sm:$0xf]
      %v2475 = vld [vmem:[%s235 + $0x94] sm:$0xf]
      %v2476 = vld [vmem:[%s235 + $0x98] sm:$0xf]
      %v2477 = vld [vmem:[%s235 + $0x9c] sm:$0xf]
      %v2478 = vld [vmem:[%s235 + $0xa0] sm:$0xf]
      %v2479 = vld [vmem:[%s235 + $0xa4] sm:$0xf]
      %v2480 = vld [vmem:[%s235 + $0xa8] sm:$0xf]
      %v2481 = vld [vmem:[%s235 + $0xac] sm:$0xf]
      %v2482 = vld [vmem:[%s235 + $0xb0] sm:$0xf]
      %v2483 = vld [vmem:[%s235 + $0xb4] sm:$0xf]
      %v2484 = vld [vmem:[%s235 + $0xb8] sm:$0xf]
      %v2485 = vld [vmem:[%s235 + $0xbc] sm:$0xf]
      %v2486 = vld [vmem:[%s235 + $0xc0] sm:$0xf]
      %v2487 = vld [vmem:[%s235 + $0xc4] sm:$0xf]
      %v2488 = vld [vmem:[%s235 + $0xc8] sm:$0xf]
      %v2489 = vld [vmem:[#allocation2] sm:$0xff]
      %v2490 = vld [vmem:[#allocation2 + $0x8] sm:$0xff]
      %v2491 = vld [vmem:[#allocation2 + $0x10] sm:$0xff]
      %v2492 = vld [vmem:[#allocation2 + $0x18] sm:$0xff]
      %v2493 = vld [vmem:[#allocation2 + $0x20] sm:$0xff]
      %v2494 = vld [vmem:[#allocation2 + $0x28] sm:$0xff]
      %v2495 = vld [vmem:[#allocation2 + $0x30] sm:$0xff]
      %v2496 = vld [vmem:[#allocation2 + $0x38] sm:$0xff]
      %v2497 = vld [vmem:[#allocation2 + $0x40] sm:$0xff]
      %v2498 = vld [vmem:[#allocation2 + $0x48] sm:$0xff]
      %v2499 = vld [vmem:[#allocation2 + $0x50] sm:$0xff]
      %v2500 = vld [vmem:[#allocation2 + $0x58] sm:$0xff]
      %v2501 = vld [vmem:[#allocation2 + $0x60] sm:$0xff]
      %v2502 = vld [vmem:[#allocation2 + $0x68] sm:$0xff]
      %v2503 = vld [vmem:[#allocation2 + $0x70] sm:$0xff]
      %v2504 = vld [vmem:[#allocation2 + $0x78] sm:$0xff]
      %v2505 = vld [vmem:[#allocation2 + $0x80] sm:$0xff]
      %v2506 = vld [vmem:[#allocation2 + $0x88] sm:$0xff]
      %v2507 = vld [vmem:[#allocation2 + $0x90] sm:$0xff]
      %v2508 = vld [vmem:[#allocation2 + $0x98] sm:$0xff]
      %v2509 = vld [vmem:[#allocation2 + $0xa0] sm:$0xff]
      %v2510 = vld [vmem:[#allocation2 + $0xa8] sm:$0xff]
      %v2511 = vld [vmem:[#allocation2 + $0xb0] sm:$0xff]
      %v2512 = vld [vmem:[#allocation2 + $0xb8] sm:$0xff]
      %v2513 = vld [vmem:[#allocation2 + $0xc0] sm:$0xff]
      %v2514 = vld [vmem:[#allocation2 + $0xc8] sm:$0xff]
      %v2515 = vld [vmem:[#allocation2 + $0xd0] sm:$0xff]
      %v2516 = vld [vmem:[#allocation2 + $0xd8] sm:$0xff]
      %v2517 = vld [vmem:[#allocation2 + $0xe0] sm:$0xff]
      %v2518 = vld [vmem:[#allocation2 + $0xe8] sm:$0xff]
      %v2519 = vld [vmem:[#allocation2 + $0xf0] sm:$0xff]
      %v2520 = vld [vmem:[#allocation2 + $0xf8] sm:$0xff]
      %v2521 = vld [vmem:[#allocation2 + $0x100] sm:$0xff]
      %v2522 = vld [vmem:[#allocation2 + $0x108] sm:$0xff]
      %v2523 = vld [vmem:[#allocation2 + $0x110] sm:$0xff]
      %v2524 = vld [vmem:[#allocation2 + $0x118] sm:$0xff]
      %v2525 = vld [vmem:[#allocation2 + $0x120] sm:$0xff]
      %v2526 = vld [vmem:[#allocation2 + $0x128] sm:$0xff]
      %v2527 = vld [vmem:[#allocation2 + $0x130] sm:$0xff]
      %v2528 = vld [vmem:[#allocation2 + $0x138] sm:$0xff]
      %v2529 = vld [vmem:[#allocation2 + $0x140] sm:$0xff]
      %v2530 = vld [vmem:[#allocation2 + $0x148] sm:$0xff]
      %v2531 = vld [vmem:[#allocation2 + $0x150] sm:$0xff]
      %v2532 = vld [vmem:[#allocation2 + $0x158] sm:$0xff]
      %v2533 = vld [vmem:[#allocation2 + $0x160] sm:$0xff]
      %v2534 = vld [vmem:[#allocation2 + $0x168] sm:$0xff]
      %v2535 = vld [vmem:[#allocation2 + $0x170] sm:$0xff]
      %v2536 = vld [vmem:[#allocation2 + $0x178] sm:$0xff]
      %s2537 = scalar_lea.vmem %s243, 192
      %v2538 = vld [vmem:[%s2537] sm:$0xf]
      %v2539 = vld [vmem:[%s2537 + $0x4] sm:$0xf]
      %v2540 = vld [vmem:[%s2537 + $0x8] sm:$0xf]
      %v2541 = vld [vmem:[%s2537 + $0xc] sm:$0xf]
      %v2542 = vld [vmem:[%s2537 + $0x10] sm:$0xf]
      %v2543 = vld [vmem:[%s2537 + $0x14] sm:$0xf]
      %v2544 = vld [vmem:[%s2537 + $0x18] sm:$0xf]
      %v2545 = vld [vmem:[%s2537 + $0x1c] sm:$0xf]
      %v2546 = vld [vmem:[%s2537 + $0x20] sm:$0xf]
      %v2547 = vld [vmem:[%s2537 + $0x24] sm:$0xf]
      %v2548 = vld [vmem:[%s2537 + $0x28] sm:$0xf]
      %v2549 = vld [vmem:[%s2537 + $0x2c] sm:$0xf]
      %v2550 = vld [vmem:[%s2537 + $0x30] sm:$0xf]
      %v2551 = vld [vmem:[%s2537 + $0x34] sm:$0xf]
      %v2552 = vld [vmem:[%s2537 + $0x38] sm:$0xf]
      %v2553 = vld [vmem:[%s2537 + $0x3c] sm:$0xf]
      %v2602 = vunpack.c.l.b16 %v2441
      %v2603 = vunpack.c.l.b16 %v2442
      %v2604 = vunpack.c.l.b16 %v2443
      %v2605 = vunpack.c.l.b16 %v2444
      %v2606 = vunpack.c.l.b16 %v2445
      %v2607 = vunpack.c.l.b16 %v2446
      %v2608 = vunpack.c.l.b16 %v2447
      %v2609 = vunpack.c.l.b16 %v2448
      %v2610 = vunpack.c.l.b16 %v2449
      %v2611 = vunpack.c.l.b16 %v2450
      %v2612 = vunpack.c.l.b16 %v2451
      %v2613 = vunpack.c.l.b16 %v2452
      %v2614 = vunpack.c.l.b16 %v2453
      %v2615 = vunpack.c.l.b16 %v2454
      %v2616 = vunpack.c.l.b16 %v2455
      %v2617 = vunpack.c.l.b16 %v2456
      %v2618 = vunpack.c.l.b16 %v2457
      %v2619 = vunpack.c.l.b16 %v2458
      %v2620 = vunpack.c.l.b16 %v2459
      %v2621 = vunpack.c.l.b16 %v2460
      %v2622 = vunpack.c.l.b16 %v2461
      %v2623 = vunpack.c.l.b16 %v2462
      %v2624 = vunpack.c.l.b16 %v2463
      %v2625 = vunpack.c.l.b16 %v2464
      %v2626 = vunpack.c.l.b16 %v2465
      %v2627 = vunpack.c.l.b16 %v2466
      %v2628 = vunpack.c.l.b16 %v2467
      %v2629 = vunpack.c.l.b16 %v2468
      %v2630 = vunpack.c.l.b16 %v2469
      %v2631 = vunpack.c.l.b16 %v2470
      %v2632 = vunpack.c.l.b16 %v2471
      %v2633 = vunpack.c.l.b16 %v2472
      %v2634 = vunpack.c.l.b16 %v2473
      %v2635 = vunpack.c.l.b16 %v2474
      %v2636 = vunpack.c.l.b16 %v2475
      %v2637 = vunpack.c.l.b16 %v2476
      %v2638 = vunpack.c.l.b16 %v2477
      %v2639 = vunpack.c.l.b16 %v2478
      %v2640 = vunpack.c.l.b16 %v2479
      %v2641 = vunpack.c.l.b16 %v2480
      %v2642 = vunpack.c.l.b16 %v2481
      %v2643 = vunpack.c.l.b16 %v2482
      %v2644 = vunpack.c.l.b16 %v2483
      %v2645 = vunpack.c.l.b16 %v2484
      %v2646 = vunpack.c.l.b16 %v2485
      %v2647 = vunpack.c.l.b16 %v2486
      %v2648 = vunpack.c.l.b16 %v2487
      %v2649 = vunpack.c.l.b16 %v2488
      %v2650 = vpack.c.b16 %v2603, %v2602
      %v2651 = vpack.c.b16 %v2605, %v2604
      %v2652 = vpack.c.b16 %v2607, %v2606
      %v2653 = vpack.c.b16 %v2609, %v2608
      %v2654 = vpack.c.b16 %v2611, %v2610
      %v2655 = vpack.c.b16 %v2613, %v2612
      %v2656 = vpack.c.b16 %v2615, %v2614
      %v2657 = vpack.c.b16 %v2617, %v2616
      %v2658 = vpack.c.b16 %v2619, %v2618
      %v2659 = vpack.c.b16 %v2621, %v2620
      %v2660 = vpack.c.b16 %v2623, %v2622
      %v2661 = vpack.c.b16 %v2625, %v2624
      %v2662 = vpack.c.b16 %v2627, %v2626
      %v2663 = vpack.c.b16 %v2629, %v2628
      %v2664 = vpack.c.b16 %v2631, %v2630
      %v2665 = vpack.c.b16 %v2633, %v2632
      %v2666 = vpack.c.b16 %v2635, %v2634
      %v2667 = vpack.c.b16 %v2637, %v2636
      %v2668 = vpack.c.b16 %v2639, %v2638
      %v2669 = vpack.c.b16 %v2641, %v2640
      %v2670 = vpack.c.b16 %v2643, %v2642
      %v2671 = vpack.c.b16 %v2645, %v2644
      %v2672 = vpack.c.b16 %v2647, %v2646
      %v2673 = vpack.c.b16 %v2649, %v2648
      %v2714 = vunpack.c.l.b16 %v2538
      %v2715 = vunpack.c.l.b16 %v2539
      %v2716 = vunpack.c.l.b16 %v2540
      %v2717 = vunpack.c.l.b16 %v2541
      %v2718 = vunpack.c.l.b16 %v2542
      %v2719 = vunpack.c.l.b16 %v2543
      %v2720 = vunpack.c.l.b16 %v2544
      %v2721 = vunpack.c.l.b16 %v2545
      %v2722 = vunpack.c.l.b16 %v2546
      %v2723 = vunpack.c.l.b16 %v2547
      %v2724 = vunpack.c.l.b16 %v2548
      %v2725 = vunpack.c.l.b16 %v2549
      %v2726 = vunpack.c.l.b16 %v2550
      %v2727 = vunpack.c.l.b16 %v2551
      %v2728 = vunpack.c.l.b16 %v2552
      %v2729 = vunpack.c.l.b16 %v2553
      %v2730 = vpack.c.b16 %v2715, %v2714
      %v2731 = vpack.c.b16 %v2717, %v2716
      %v2732 = vpack.c.b16 %v2719, %v2718
      %v2733 = vpack.c.b16 %v2721, %v2720
      %v2734 = vpack.c.b16 %v2723, %v2722
      %v2735 = vpack.c.b16 %v2725, %v2724
      %v2736 = vpack.c.b16 %v2727, %v2726
      %v2737 = vpack.c.b16 %v2729, %v2728
      %2746 = vmatprep.subr.bf16.mxu0 0
      %2747 = vmatpush1.bf16.msra.mxu0 %v2730
      %2748 = vmatprep.subr.bf16.mxu0 0
      %2749 = vmatpush1.bf16.msra.mxu0 %v2731
      %2750 = vmatprep.subr.bf16.mxu0 0
      %2751 = vmatpush1.bf16.msra.mxu0 %v2732
      %2752 = vmatprep.subr.bf16.mxu0 0
      %2753 = vmatpush1.bf16.msra.mxu0 %v2733
      %2754 = vmatprep.subr.bf16.mxu0 0
      %2755 = vmatpush1.bf16.msra.mxu0 %v2734
      %2756 = vmatprep.subr.bf16.mxu0 0
      %2757 = vmatpush1.bf16.msra.mxu0 %v2735
      %2758 = vmatprep.subr.bf16.mxu0 0
      %2759 = vmatpush1.bf16.msra.mxu0 %v2736
      %2760 = vmatprep.subr.bf16.mxu0 0
      %2761 = vmatpush1.bf16.msra.mxu0 %v2737
      %2762 = vmatprep.subr.bf16.mxu0 0
      %2763 = vmatpush1.bf16.msra.mxu0 0
      %2764 = vmatprep.subr.bf16.mxu0 0
      %2765 = vmatpush1.bf16.msra.mxu0 0
      %2766 = vmatprep.subr.bf16.mxu0 0
      %2767 = vmatpush1.bf16.msra.mxu0 0
      %2768 = vmatprep.subr.bf16.mxu0 0
      %2769 = vmatpush1.bf16.msra.mxu0 0
      %2770 = vmatprep.subr.bf16.mxu0 0
      %2771 = vmatpush1.bf16.msra.mxu0 0
      %2772 = vmatprep.subr.bf16.mxu0 0
      %2773 = vmatpush1.bf16.msra.mxu0 0
      %2774 = vmatprep.subr.bf16.mxu0 0
      %2775 = vmatpush1.bf16.msra.mxu0 0
      %2776 = vmatprep.subr.bf16.mxu0 0
      %2777 = vmatpush1.bf16.msra.mxu0 0
      %2778 = vmatprep.mubr.bf16.mxu0 0
      %2779 = vmatmul.mubr.bf16.gmra.mrb[0].mxu0 %v2650
      %v2780 = vpop.f32.mrb[0].mxu0
      %v2781 = vadd.f32 0.0, %v2780
      %v2782 = vpop.f32.mrb[0].mxu0
      %v2783 = vpop.f32.mrb[0].mxu0
      %v2784 = vadd.f32 0.0, %v2783
      %v2785 = vpop.f32.mrb[0].mxu0
      %2786 = vmatprep.mubr.bf16.mxu0 0
      %2787 = vmatmul.mubr.bf16.gmra.mrb[0].mxu0 %v2651
      %v2788 = vpop.f32.mrb[0].mxu0
      %v2789 = vadd.f32 0.0, %v2788
      %v2790 = vpop.f32.mrb[0].mxu0
      %v2791 = vpop.f32.mrb[0].mxu0
      %v2792 = vadd.f32 0.0, %v2791
      %v2793 = vpop.f32.mrb[0].mxu0
      %2794 = vmatprep.mubr.bf16.mxu0 0
      %2795 = vmatmul.mubr.bf16.gmra.mrb[0].mxu0 %v2652
      %v2796 = vpop.f32.mrb[0].mxu0
      %v2797 = vadd.f32 0.0, %v2796
      %v2798 = vpop.f32.mrb[0].mxu0
      %v2799 = vpop.f32.mrb[0].mxu0
      %v2800 = vadd.f32 0.0, %v2799
      %v2801 = vpop.f32.mrb[0].mxu0
      %2802 = vmatprep.mubr.bf16.mxu0 0
      %2803 = vmatmul.mubr.bf16.gmra.mrb[0].mxu0 %v2653
      %v2804 = vpop.f32.mrb[0].mxu0
      %v2805 = vadd.f32 0.0, %v2804
      %v2806 = vpop.f32.mrb[0].mxu0
      %v2807 = vpop.f32.mrb[0].mxu0
      %v2808 = vadd.f32 0.0, %v2807
      %v2809 = vpop.f32.mrb[0].mxu0
      %2810 = vmatprep.mubr.bf16.mxu0 0
      %2811 = vmatmul.mubr.bf16.gmra.mrb[0].mxu0 %v2654
      %v2812 = vpop.f32.mrb[0].mxu0
      %v2813 = vadd.f32 0.0, %v2812
      %v2814 = vpop.f32.mrb[0].mxu0
      %v2815 = vpop.f32.mrb[0].mxu0
      %v2816 = vadd.f32 0.0, %v2815
      %v2817 = vpop.f32.mrb[0].mxu0
      %2818 = vmatprep.mubr.bf16.mxu0 0
      %2819 = vmatmul.mubr.bf16.gmra.mrb[0].mxu0 %v2655
      %v2820 = vpop.f32.mrb[0].mxu0
      %v2821 = vadd.f32 0.0, %v2820
      %v2822 = vpop.f32.mrb[0].mxu0
      %v2823 = vpop.f32.mrb[0].mxu0
      %v2824 = vadd.f32 0.0, %v2823
      %v2825 = vpop.f32.mrb[0].mxu0
      %2826 = vmatprep.mubr.bf16.mxu0 0
      %2827 = vmatmul.mubr.bf16.gmra.mrb[0].mxu0 %v2656
      %v2828 = vpop.f32.mrb[0].mxu0
      %v2829 = vadd.f32 0.0, %v2828
      %v2830 = vpop.f32.mrb[0].mxu0
      %v2831 = vpop.f32.mrb[0].mxu0
      %v2832 = vadd.f32 0.0, %v2831
      %v2833 = vpop.f32.mrb[0].mxu0
      %2834 = vmatprep.mubr.bf16.mxu0 0
      %2835 = vmatmul.mubr.bf16.gmra.mrb[0].mxu0 %v2657
      %v2836 = vpop.f32.mrb[0].mxu0
      %v2837 = vadd.f32 0.0, %v2836
      %v2838 = vpop.f32.mrb[0].mxu0
      %v2839 = vpop.f32.mrb[0].mxu0
      %v2840 = vadd.f32 0.0, %v2839
      %v2841 = vpop.f32.mrb[0].mxu0
      %2842 = vmatprep.mubr.bf16.mxu0 0
      %2843 = vmatmul.mubr.bf16.gmra.mrb[0].mxu0 %v2658
      %v2844 = vpop.f32.mrb[0].mxu0
      %v2845 = vadd.f32 0.0, %v2844
      %v2846 = vpop.f32.mrb[0].mxu0
      %v2847 = vpop.f32.mrb[0].mxu0
      %v2848 = vadd.f32 0.0, %v2847
      %v2849 = vpop.f32.mrb[0].mxu0
      %2850 = vmatprep.mubr.bf16.mxu0 0
      %2851 = vmatmul.mubr.bf16.gmra.mrb[0].mxu0 %v2659
      %v2852 = vpop.f32.mrb[0].mxu0
      %v2853 = vadd.f32 0.0, %v2852
      %v2854 = vpop.f32.mrb[0].mxu0
      %v2855 = vpop.f32.mrb[0].mxu0
      %v2856 = vadd.f32 0.0, %v2855
      %v2857 = vpop.f32.mrb[0].mxu0
      %2858 = vmatprep.mubr.bf16.mxu0 0
      %2859 = vmatmul.mubr.bf16.gmra.mrb[0].mxu0 %v2660
      %v2860 = vpop.f32.mrb[0].mxu0
      %v2861 = vadd.f32 0.0, %v2860
      %v2862 = vpop.f32.mrb[0].mxu0
      %v2863 = vpop.f32.mrb[0].mxu0
      %v2864 = vadd.f32 0.0, %v2863
      %v2865 = vpop.f32.mrb[0].mxu0
      %2866 = vmatprep.mubr.bf16.mxu0 0
      %2867 = vmatmul.mubr.bf16.gmra.mrb[0].mxu0 %v2661
      %v2868 = vpop.f32.mrb[0].mxu0
      %v2869 = vadd.f32 0.0, %v2868
      %v2870 = vpop.f32.mrb[0].mxu0
      %v2871 = vpop.f32.mrb[0].mxu0
      %v2872 = vadd.f32 0.0, %v2871
      %v2873 = vpop.f32.mrb[0].mxu0
      %2874 = vmatprep.mubr.bf16.mxu0 0
      %2875 = vmatmul.mubr.bf16.gmra.mrb[0].mxu0 %v2662
      %v2876 = vpop.f32.mrb[0].mxu0
      %v2877 = vadd.f32 0.0, %v2876
      %v2878 = vpop.f32.mrb[0].mxu0
      %v2879 = vpop.f32.mrb[0].mxu0
      %v2880 = vadd.f32 0.0, %v2879
      %v2881 = vpop.f32.mrb[0].mxu0
      %2882 = vmatprep.mubr.bf16.mxu0 0
      %2883 = vmatmul.mubr.bf16.gmra.mrb[0].mxu0 %v2663
      %v2884 = vpop.f32.mrb[0].mxu0
      %v2885 = vadd.f32 0.0, %v2884
      %v2886 = vpop.f32.mrb[0].mxu0
      %v2887 = vpop.f32.mrb[0].mxu0
      %v2888 = vadd.f32 0.0, %v2887
      %v2889 = vpop.f32.mrb[0].mxu0
      %2890 = vmatprep.mubr.bf16.mxu0 0
      %2891 = vmatmul.mubr.bf16.gmra.mrb[0].mxu0 %v2664
      %v2892 = vpop.f32.mrb[0].mxu0
      %v2893 = vadd.f32 0.0, %v2892
      %v2894 = vpop.f32.mrb[0].mxu0
      %v2895 = vpop.f32.mrb[0].mxu0
      %v2896 = vadd.f32 0.0, %v2895
      %v2897 = vpop.f32.mrb[0].mxu0
      %2898 = vmatprep.mubr.bf16.mxu0 0
      %2899 = vmatmul.mubr.bf16.gmra.mrb[0].mxu0 %v2665
      %v2900 = vpop.f32.mrb[0].mxu0
      %v2901 = vadd.f32 0.0, %v2900
      %v2902 = vpop.f32.mrb[0].mxu0
      %v2903 = vpop.f32.mrb[0].mxu0
      %v2904 = vadd.f32 0.0, %v2903
      %v2905 = vpop.f32.mrb[0].mxu0
      %2906 = vmatprep.mubr.bf16.mxu0 0
      %2907 = vmatmul.mubr.bf16.gmra.mrb[0].mxu0 %v2666
      %v2908 = vpop.f32.mrb[0].mxu0
      %v2909 = vadd.f32 0.0, %v2908
      %v2910 = vpop.f32.mrb[0].mxu0
      %v2911 = vpop.f32.mrb[0].mxu0
      %v2912 = vadd.f32 0.0, %v2911
      %v2913 = vpop.f32.mrb[0].mxu0
      %2914 = vmatprep.mubr.bf16.mxu0 0
      %2915 = vmatmul.mubr.bf16.gmra.mrb[0].mxu0 %v2667
      %v2916 = vpop.f32.mrb[0].mxu0
      %v2917 = vadd.f32 0.0, %v2916
      %v2918 = vpop.f32.mrb[0].mxu0
      %v2919 = vpop.f32.mrb[0].mxu0
      %v2920 = vadd.f32 0.0, %v2919
      %v2921 = vpop.f32.mrb[0].mxu0
      %2922 = vmatprep.mubr.bf16.mxu0 0
      %2923 = vmatmul.mubr.bf16.gmra.mrb[0].mxu0 %v2668
      %v2924 = vpop.f32.mrb[0].mxu0
      %v2925 = vadd.f32 0.0, %v2924
      %v2926 = vpop.f32.mrb[0].mxu0
      %v2927 = vpop.f32.mrb[0].mxu0
      %v2928 = vadd.f32 0.0, %v2927
      %v2929 = vpop.f32.mrb[0].mxu0
      %2930 = vmatprep.mubr.bf16.mxu0 0
      %2931 = vmatmul.mubr.bf16.gmra.mrb[0].mxu0 %v2669
      %v2932 = vpop.f32.mrb[0].mxu0
      %v2933 = vadd.f32 0.0, %v2932
      %v2934 = vpop.f32.mrb[0].mxu0
      %v2935 = vpop.f32.mrb[0].mxu0
      %v2936 = vadd.f32 0.0, %v2935
      %v2937 = vpop.f32.mrb[0].mxu0
      %2938 = vmatprep.mubr.bf16.mxu0 0
      %2939 = vmatmul.mubr.bf16.gmra.mrb[0].mxu0 %v2670
      %v2940 = vpop.f32.mrb[0].mxu0
      %v2941 = vadd.f32 0.0, %v2940
      %v2942 = vpop.f32.mrb[0].mxu0
      %v2943 = vpop.f32.mrb[0].mxu0
      %v2944 = vadd.f32 0.0, %v2943
      %v2945 = vpop.f32.mrb[0].mxu0
      %2946 = vmatprep.mubr.bf16.mxu0 0
      %2947 = vmatmul.mubr.bf16.gmra.mrb[0].mxu0 %v2671
      %v2948 = vpop.f32.mrb[0].mxu0
      %v2949 = vadd.f32 0.0, %v2948
      %v2950 = vpop.f32.mrb[0].mxu0
      %v2951 = vpop.f32.mrb[0].mxu0
      %v2952 = vadd.f32 0.0, %v2951
      %v2953 = vpop.f32.mrb[0].mxu0
      %2954 = vmatprep.mubr.bf16.mxu0 0
      %2955 = vmatmul.mubr.bf16.gmra.mrb[0].mxu0 %v2672
      %v2956 = vpop.f32.mrb[0].mxu0
      %v2957 = vadd.f32 0.0, %v2956
      %v2958 = vpop.f32.mrb[0].mxu0
      %v2959 = vpop.f32.mrb[0].mxu0
      %v2960 = vadd.f32 0.0, %v2959
      %v2961 = vpop.f32.mrb[0].mxu0
      %2962 = vmatprep.mubr.bf16.mxu0 0
      %2963 = vmatmul.mubr.bf16.gmra.mrb[0].mxu0 %v2673
      %v2964 = vpop.f32.mrb[0].mxu0
      %v2965 = vadd.f32 0.0, %v2964
      %v2966 = vpop.f32.mrb[0].mxu0
      %v2967 = vpop.f32.mrb[0].mxu0
      %v2968 = vadd.f32 0.0, %v2967
      %v2969 = vpop.f32.mrb[0].mxu0
      %2970 = vdwg.mxu0
      %v2971 = vadd.f32 %v2489, %v2781
      %v2972 = vadd.f32 %v2490, %v2784
      %v2973 = vadd.f32 %v2491, %v2789
      %v2974 = vadd.f32 %v2492, %v2792
      %v2975 = vadd.f32 %v2493, %v2797
      %v2976 = vadd.f32 %v2494, %v2800
      %v2977 = vadd.f32 %v2495, %v2805
      %v2978 = vadd.f32 %v2496, %v2808
      %v2979 = vadd.f32 %v2497, %v2813
      %v2980 = vadd.f32 %v2498, %v2816
      %v2981 = vadd.f32 %v2499, %v2821
      %v2982 = vadd.f32 %v2500, %v2824
      %v2983 = vadd.f32 %v2501, %v2829
      %v2984 = vadd.f32 %v2502, %v2832
      %v2985 = vadd.f32 %v2503, %v2837
      %v2986 = vadd.f32 %v2504, %v2840
      %v2987 = vadd.f32 %v2505, %v2845
      %v2988 = vadd.f32 %v2506, %v2848
      %v2989 = vadd.f32 %v2507, %v2853
      %v2990 = vadd.f32 %v2508, %v2856
      %v2991 = vadd.f32 %v2509, %v2861
      %v2992 = vadd.f32 %v2510, %v2864
      %v2993 = vadd.f32 %v2511, %v2869
      %v2994 = vadd.f32 %v2512, %v2872
      %v2995 = vadd.f32 %v2513, %v2877
      %v2996 = vadd.f32 %v2514, %v2880
      %v2997 = vadd.f32 %v2515, %v2885
      %v2998 = vadd.f32 %v2516, %v2888
      %v2999 = vadd.f32 %v2517, %v2893
      %v3000 = vadd.f32 %v2518, %v2896
      %v3001 = vadd.f32 %v2519, %v2901
      %v3002 = vadd.f32 %v2520, %v2904
      %v3003 = vadd.f32 %v2521, %v2909
      %v3004 = vadd.f32 %v2522, %v2912
      %v3005 = vadd.f32 %v2523, %v2917
      %v3006 = vadd.f32 %v2524, %v2920
      %v3007 = vadd.f32 %v2525, %v2925
      %v3008 = vadd.f32 %v2526, %v2928
      %v3009 = vadd.f32 %v2527, %v2933
      %v3010 = vadd.f32 %v2528, %v2936
      %v3011 = vadd.f32 %v2529, %v2941
      %v3012 = vadd.f32 %v2530, %v2944
      %v3013 = vadd.f32 %v2531, %v2949
      %v3014 = vadd.f32 %v2532, %v2952
      %v3015 = vadd.f32 %v2533, %v2957
      %v3016 = vadd.f32 %v2534, %v2960
      %v3017 = vadd.f32 %v2535, %v2965
      %v3018 = vadd.f32 %v2536, %v2968
      %3019 = vst [vmem:[#allocation2] sm:$0xff] %v2971
      %3020 = vst [vmem:[#allocation2 + $0x8] sm:$0xff] %v2972
      %3021 = vst [vmem:[#allocation2 + $0x10] sm:$0xff] %v2973
      %3022 = vst [vmem:[#allocation2 + $0x18] sm:$0xff] %v2974
      %3023 = vst [vmem:[#allocation2 + $0x20] sm:$0xff] %v2975
      %3024 = vst [vmem:[#allocation2 + $0x28] sm:$0xff] %v2976
      %3025 = vst [vmem:[#allocation2 + $0x30] sm:$0xff] %v2977
      %3026 = vst [vmem:[#allocation2 + $0x38] sm:$0xff] %v2978
      %3027 = vst [vmem:[#allocation2 + $0x40] sm:$0xff] %v2979
      %3028 = vst [vmem:[#allocation2 + $0x48] sm:$0xff] %v2980
      %3029 = vst [vmem:[#allocation2 + $0x50] sm:$0xff] %v2981
      %3030 = vst [vmem:[#allocation2 + $0x58] sm:$0xff] %v2982
      %3031 = vst [vmem:[#allocation2 + $0x60] sm:$0xff] %v2983
      %3032 = vst [vmem:[#allocation2 + $0x68] sm:$0xff] %v2984
      %3033 = vst [vmem:[#allocation2 + $0x70] sm:$0xff] %v2985
      %3034 = vst [vmem:[#allocation2 + $0x78] sm:$0xff] %v2986
      %3035 = vst [vmem:[#allocation2 + $0x80] sm:$0xff] %v2987
      %3036 = vst [vmem:[#allocation2 + $0x88] sm:$0xff] %v2988
      %3037 = vst [vmem:[#allocation2 + $0x90] sm:$0xff] %v2989
      %3038 = vst [vmem:[#allocation2 + $0x98] sm:$0xff] %v2990
      %3039 = vst [vmem:[#allocation2 + $0xa0] sm:$0xff] %v2991
      %3040 = vst [vmem:[#allocation2 + $0xa8] sm:$0xff] %v2992
      %3041 = vst [vmem:[#allocation2 + $0xb0] sm:$0xff] %v2993
      %3042 = vst [vmem:[#allocation2 + $0xb8] sm:$0xff] %v2994
      %3043 = vst [vmem:[#allocation2 + $0xc0] sm:$0xff] %v2995
      %3044 = vst [vmem:[#allocation2 + $0xc8] sm:$0xff] %v2996
      %3045 = vst [vmem:[#allocation2 + $0xd0] sm:$0xff] %v2997
      %3046 = vst [vmem:[#allocation2 + $0xd8] sm:$0xff] %v2998
      %3047 = vst [vmem:[#allocation2 + $0xe0] sm:$0xff] %v2999
      %3048 = vst [vmem:[#allocation2 + $0xe8] sm:$0xff] %v3000
      %3049 = vst [vmem:[#allocation2 + $0xf0] sm:$0xff] %v3001
      %3050 = vst [vmem:[#allocation2 + $0xf8] sm:$0xff] %v3002
      %3051 = vst [vmem:[#allocation2 + $0x100] sm:$0xff] %v3003
      %3052 = vst [vmem:[#allocation2 + $0x108] sm:$0xff] %v3004
      %3053 = vst [vmem:[#allocation2 + $0x110] sm:$0xff] %v3005
      %3054 = vst [vmem:[#allocation2 + $0x118] sm:$0xff] %v3006
      %3055 = vst [vmem:[#allocation2 + $0x120] sm:$0xff] %v3007
      %3056 = vst [vmem:[#allocation2 + $0x128] sm:$0xff] %v3008
      %3057 = vst [vmem:[#allocation2 + $0x130] sm:$0xff] %v3009
      %3058 = vst [vmem:[#allocation2 + $0x138] sm:$0xff] %v3010
      %3059 = vst [vmem:[#allocation2 + $0x140] sm:$0xff] %v3011
      %3060 = vst [vmem:[#allocation2 + $0x148] sm:$0xff] %v3012
      %3061 = vst [vmem:[#allocation2 + $0x150] sm:$0xff] %v3013
      %3062 = vst [vmem:[#allocation2 + $0x158] sm:$0xff] %v3014
      %3063 = vst [vmem:[#allocation2 + $0x160] sm:$0xff] %v3015
      %3064 = vst [vmem:[#allocation2 + $0x168] sm:$0xff] %v3016
      %3065 = vst [vmem:[#allocation2 + $0x170] sm:$0xff] %v3017
      %3066 = vst [vmem:[#allocation2 + $0x178] sm:$0xff] %v3018
      %v3067 = vld [vmem:[%s235 + $0xc] sm:$0xf]
      %v3068 = vld [vmem:[%s235 + $0x10] sm:$0xf]
      %v3069 = vld [vmem:[%s235 + $0x14] sm:$0xf]
      %v3070 = vld [vmem:[%s235 + $0x18] sm:$0xf]
      %v3071 = vld [vmem:[%s235 + $0x1c] sm:$0xf]
      %v3072 = vld [vmem:[%s235 + $0x20] sm:$0xf]
      %v3073 = vld [vmem:[%s235 + $0x24] sm:$0xf]
      %v3074 = vld [vmem:[%s235 + $0x28] sm:$0xf]
      %v3075 = vld [vmem:[%s235 + $0x2c] sm:$0xf]
      %v3076 = vld [vmem:[%s235 + $0x30] sm:$0xf]
      %v3077 = vld [vmem:[%s235 + $0x34] sm:$0xf]
      %v3078 = vld [vmem:[%s235 + $0x38] sm:$0xf]
      %v3079 = vld [vmem:[%s235 + $0x3c] sm:$0xf]
      %v3080 = vld [vmem:[%s235 + $0x40] sm:$0xf]
      %v3081 = vld [vmem:[%s235 + $0x44] sm:$0xf]
      %v3082 = vld [vmem:[%s235 + $0x48] sm:$0xf]
      %v3083 = vld [vmem:[%s235 + $0x4c] sm:$0xf]
      %v3084 = vld [vmem:[%s235 + $0x50] sm:$0xf]
      %v3085 = vld [vmem:[%s235 + $0x54] sm:$0xf]
      %v3086 = vld [vmem:[%s235 + $0x58] sm:$0xf]
      %v3087 = vld [vmem:[%s235 + $0x5c] sm:$0xf]
      %v3088 = vld [vmem:[%s235 + $0x60] sm:$0xf]
      %v3089 = vld [vmem:[%s235 + $0x64] sm:$0xf]
      %v3090 = vld [vmem:[%s235 + $0x68] sm:$0xf]
      %v3091 = vld [vmem:[%s235 + $0x6c] sm:$0xf]
      %v3092 = vld [vmem:[%s235 + $0x70] sm:$0xf]
      %v3093 = vld [vmem:[%s235 + $0x74] sm:$0xf]
      %v3094 = vld [vmem:[%s235 + $0x78] sm:$0xf]
      %v3095 = vld [vmem:[%s235 + $0x7c] sm:$0xf]
      %v3096 = vld [vmem:[%s235 + $0x80] sm:$0xf]
      %v3097 = vld [vmem:[%s235 + $0x84] sm:$0xf]
      %v3098 = vld [vmem:[%s235 + $0x88] sm:$0xf]
      %v3099 = vld [vmem:[%s235 + $0x8c] sm:$0xf]
      %v3100 = vld [vmem:[%s235 + $0x90] sm:$0xf]
      %v3101 = vld [vmem:[%s235 + $0x94] sm:$0xf]
      %v3102 = vld [vmem:[%s235 + $0x98] sm:$0xf]
      %v3103 = vld [vmem:[%s235 + $0x9c] sm:$0xf]
      %v3104 = vld [vmem:[%s235 + $0xa0] sm:$0xf]
      %v3105 = vld [vmem:[%s235 + $0xa4] sm:$0xf]
      %v3106 = vld [vmem:[%s235 + $0xa8] sm:$0xf]
      %v3107 = vld [vmem:[%s235 + $0xac] sm:$0xf]
      %v3108 = vld [vmem:[%s235 + $0xb0] sm:$0xf]
      %v3109 = vld [vmem:[%s235 + $0xb4] sm:$0xf]
      %v3110 = vld [vmem:[%s235 + $0xb8] sm:$0xf]
      %v3111 = vld [vmem:[%s235 + $0xbc] sm:$0xf]
      %v3112 = vld [vmem:[%s235 + $0xc0] sm:$0xf]
      %v3113 = vld [vmem:[%s235 + $0xc4] sm:$0xf]
      %v3114 = vld [vmem:[%s235 + $0xc8] sm:$0xf]
      %v3115 = vld [vmem:[%s235 + $0xcc] sm:$0x1]
      %v3116 = vld [vmem:[#allocation2] sm:$0xff]
      %v3117 = vld [vmem:[#allocation2 + $0x8] sm:$0xff]
      %v3118 = vld [vmem:[#allocation2 + $0x10] sm:$0xff]
      %v3119 = vld [vmem:[#allocation2 + $0x18] sm:$0xff]
      %v3120 = vld [vmem:[#allocation2 + $0x20] sm:$0xff]
      %v3121 = vld [vmem:[#allocation2 + $0x28] sm:$0xff]
      %v3122 = vld [vmem:[#allocation2 + $0x30] sm:$0xff]
      %v3123 = vld [vmem:[#allocation2 + $0x38] sm:$0xff]
      %v3124 = vld [vmem:[#allocation2 + $0x40] sm:$0xff]
      %v3125 = vld [vmem:[#allocation2 + $0x48] sm:$0xff]
      %v3126 = vld [vmem:[#allocation2 + $0x50] sm:$0xff]
      %v3127 = vld [vmem:[#allocation2 + $0x58] sm:$0xff]
      %v3128 = vld [vmem:[#allocation2 + $0x60] sm:$0xff]
      %v3129 = vld [vmem:[#allocation2 + $0x68] sm:$0xff]
      %v3130 = vld [vmem:[#allocation2 + $0x70] sm:$0xff]
      %v3131 = vld [vmem:[#allocation2 + $0x78] sm:$0xff]
      %v3132 = vld [vmem:[#allocation2 + $0x80] sm:$0xff]
      %v3133 = vld [vmem:[#allocation2 + $0x88] sm:$0xff]
      %v3134 = vld [vmem:[#allocation2 + $0x90] sm:$0xff]
      %v3135 = vld [vmem:[#allocation2 + $0x98] sm:$0xff]
      %v3136 = vld [vmem:[#allocation2 + $0xa0] sm:$0xff]
      %v3137 = vld [vmem:[#allocation2 + $0xa8] sm:$0xff]
      %v3138 = vld [vmem:[#allocation2 + $0xb0] sm:$0xff]
      %v3139 = vld [vmem:[#allocation2 + $0xb8] sm:$0xff]
      %v3140 = vld [vmem:[#allocation2 + $0xc0] sm:$0xff]
      %v3141 = vld [vmem:[#allocation2 + $0xc8] sm:$0xff]
      %v3142 = vld [vmem:[#allocation2 + $0xd0] sm:$0xff]
      %v3143 = vld [vmem:[#allocation2 + $0xd8] sm:$0xff]
      %v3144 = vld [vmem:[#allocation2 + $0xe0] sm:$0xff]
      %v3145 = vld [vmem:[#allocation2 + $0xe8] sm:$0xff]
      %v3146 = vld [vmem:[#allocation2 + $0xf0] sm:$0xff]
      %v3147 = vld [vmem:[#allocation2 + $0xf8] sm:$0xff]
      %v3148 = vld [vmem:[#allocation2 + $0x100] sm:$0xff]
      %v3149 = vld [vmem:[#allocation2 + $0x108] sm:$0xff]
      %v3150 = vld [vmem:[#allocation2 + $0x110] sm:$0xff]
      %v3151 = vld [vmem:[#allocation2 + $0x118] sm:$0xff]
      %v3152 = vld [vmem:[#allocation2 + $0x120] sm:$0xff]
      %v3153 = vld [vmem:[#allocation2 + $0x128] sm:$0xff]
      %v3154 = vld [vmem:[#allocation2 + $0x130] sm:$0xff]
      %v3155 = vld [vmem:[#allocation2 + $0x138] sm:$0xff]
      %v3156 = vld [vmem:[#allocation2 + $0x140] sm:$0xff]
      %v3157 = vld [vmem:[#allocation2 + $0x148] sm:$0xff]
      %v3158 = vld [vmem:[#allocation2 + $0x150] sm:$0xff]
      %v3159 = vld [vmem:[#allocation2 + $0x158] sm:$0xff]
      %v3160 = vld [vmem:[#allocation2 + $0x160] sm:$0xff]
      %v3161 = vld [vmem:[#allocation2 + $0x168] sm:$0xff]
      %v3162 = vld [vmem:[#allocation2 + $0x170] sm:$0xff]
      %v3163 = vld [vmem:[#allocation2 + $0x178] sm:$0xff]
      %s3164 = scalar_lea.vmem %s243, 256
      %v3165 = vld [vmem:[%s3164] sm:$0xf]
      %v3166 = vld [vmem:[%s3164 + $0x4] sm:$0xf]
      %v3167 = vld [vmem:[%s3164 + $0x8] sm:$0xf]
      %v3168 = vld [vmem:[%s3164 + $0xc] sm:$0xf]
      %v3169 = vld [vmem:[%s3164 + $0x10] sm:$0xf]
      %v3170 = vld [vmem:[%s3164 + $0x14] sm:$0xf]
      %v3171 = vld [vmem:[%s3164 + $0x18] sm:$0xf]
      %v3172 = vld [vmem:[%s3164 + $0x1c] sm:$0xf]
      %v3173 = vld [vmem:[%s3164 + $0x20] sm:$0xf]
      %v3174 = vld [vmem:[%s3164 + $0x24] sm:$0xf]
      %v3175 = vld [vmem:[%s3164 + $0x28] sm:$0xf]
      %v3176 = vld [vmem:[%s3164 + $0x2c] sm:$0xf]
      %v3177 = vld [vmem:[%s3164 + $0x30] sm:$0xf]
      %v3178 = vld [vmem:[%s3164 + $0x34] sm:$0xf]
      %v3179 = vld [vmem:[%s3164 + $0x38] sm:$0xf]
      %v3180 = vld [vmem:[%s3164 + $0x3c] sm:$0xf]
      %v3230 = vunpack.c.l.b16 %v3067
      %v3231 = vunpack.c.l.b16 %v3068
      %v3232 = vunpack.c.l.b16 %v3069
      %v3233 = vunpack.c.l.b16 %v3070
      %v3234 = vunpack.c.l.b16 %v3071
      %v3235 = vunpack.c.l.b16 %v3072
      %v3236 = vunpack.c.l.b16 %v3073
      %v3237 = vunpack.c.l.b16 %v3074
      %v3238 = vunpack.c.l.b16 %v3075
      %v3239 = vunpack.c.l.b16 %v3076
      %v3240 = vunpack.c.l.b16 %v3077
      %v3241 = vunpack.c.l.b16 %v3078
      %v3242 = vunpack.c.l.b16 %v3079
      %v3243 = vunpack.c.l.b16 %v3080
      %v3244 = vunpack.c.l.b16 %v3081
      %v3245 = vunpack.c.l.b16 %v3082
      %v3246 = vunpack.c.l.b16 %v3083
      %v3247 = vunpack.c.l.b16 %v3084
      %v3248 = vunpack.c.l.b16 %v3085
      %v3249 = vunpack.c.l.b16 %v3086
      %v3250 = vunpack.c.l.b16 %v3087
      %v3251 = vunpack.c.l.b16 %v3088
      %v3252 = vunpack.c.l.b16 %v3089
      %v3253 = vunpack.c.l.b16 %v3090
      %v3254 = vunpack.c.l.b16 %v3091
      %v3255 = vunpack.c.l.b16 %v3092
      %v3256 = vunpack.c.l.b16 %v3093
      %v3257 = vunpack.c.l.b16 %v3094
      %v3258 = vunpack.c.l.b16 %v3095
      %v3259 = vunpack.c.l.b16 %v3096
      %v3260 = vunpack.c.l.b16 %v3097
      %v3261 = vunpack.c.l.b16 %v3098
      %v3262 = vunpack.c.l.b16 %v3099
      %v3263 = vunpack.c.l.b16 %v3100
      %v3264 = vunpack.c.l.b16 %v3101
      %v3265 = vunpack.c.l.b16 %v3102
      %v3266 = vunpack.c.l.b16 %v3103
      %v3267 = vunpack.c.l.b16 %v3104
      %v3268 = vunpack.c.l.b16 %v3105
      %v3269 = vunpack.c.l.b16 %v3106
      %v3270 = vunpack.c.l.b16 %v3107
      %v3271 = vunpack.c.l.b16 %v3108
      %v3272 = vunpack.c.l.b16 %v3109
      %v3273 = vunpack.c.l.b16 %v3110
      %v3274 = vunpack.c.l.b16 %v3111
      %v3275 = vunpack.c.l.b16 %v3112
      %v3276 = vunpack.c.l.b16 %v3113
      %v3277 = vunpack.c.l.b16 %v3114
      %v3278 = vunpack.c.l.b16 %v3115
      %v3279 = vpack.c.b16 %v3231, %v3230
      %v3280 = vpack.c.b16 %v3233, %v3232
      %v3281 = vpack.c.b16 %v3235, %v3234
      %v3282 = vpack.c.b16 %v3237, %v3236
      %v3283 = vpack.c.b16 %v3239, %v3238
      %v3284 = vpack.c.b16 %v3241, %v3240
      %v3285 = vpack.c.b16 %v3243, %v3242
      %v3286 = vpack.c.b16 %v3245, %v3244
      %v3287 = vpack.c.b16 %v3247, %v3246
      %v3288 = vpack.c.b16 %v3249, %v3248
      %v3289 = vpack.c.b16 %v3251, %v3250
      %v3290 = vpack.c.b16 %v3253, %v3252
      %v3291 = vpack.c.b16 %v3255, %v3254
      %v3292 = vpack.c.b16 %v3257, %v3256
      %v3293 = vpack.c.b16 %v3259, %v3258
      %v3294 = vpack.c.b16 %v3261, %v3260
      %v3295 = vpack.c.b16 %v3263, %v3262
      %v3296 = vpack.c.b16 %v3265, %v3264
      %v3297 = vpack.c.b16 %v3267, %v3266
      %v3298 = vpack.c.b16 %v3269, %v3268
      %v3299 = vpack.c.b16 %v3271, %v3270
      %v3300 = vpack.c.b16 %v3273, %v3272
      %v3301 = vpack.c.b16 %v3275, %v3274
      %v3302 = vpack.c.b16 %v3277, %v3276
      %v3303 = vpack.c.b16 %v3278, %v3278
      %v3305 = vshrl.u32 %v3279, 16
      %v3307 = vshll.u32 %v3279, 16
      %v3309 = vrot.slane %v3307, 1
      %v3310 = vor.u32 %v3305, %v3309
      %v3312 = vshll.u32 %v3280, 16
      %v3314 = vrot.slane %v3312, 1
      %v3315 = vsel %vm1171, %v3310, %v3314
      %v3316 = vshrl.u32 %v3280, 16
      %v3318 = vor.u32 %v3316, %v3314
      %v3320 = vshll.u32 %v3281, 16
      %v3322 = vrot.slane %v3320, 1
      %v3323 = vsel %vm1171, %v3318, %v3322
      %v3324 = vshrl.u32 %v3281, 16
      %v3326 = vor.u32 %v3324, %v3322
      %v3328 = vshll.u32 %v3282, 16
      %v3330 = vrot.slane %v3328, 1
      %v3331 = vsel %vm1171, %v3326, %v3330
      %v3332 = vshrl.u32 %v3282, 16
      %v3334 = vor.u32 %v3332, %v3330
      %v3336 = vshll.u32 %v3283, 16
      %v3338 = vrot.slane %v3336, 1
      %v3339 = vsel %vm1171, %v3334, %v3338
      %v3340 = vshrl.u32 %v3283, 16
      %v3342 = vor.u32 %v3340, %v3338
      %v3344 = vshll.u32 %v3284, 16
      %v3346 = vrot.slane %v3344, 1
      %v3347 = vsel %vm1171, %v3342, %v3346
      %v3348 = vshrl.u32 %v3284, 16
      %v3350 = vor.u32 %v3348, %v3346
      %v3352 = vshll.u32 %v3285, 16
      %v3354 = vrot.slane %v3352, 1
      %v3355 = vsel %vm1171, %v3350, %v3354
      %v3356 = vshrl.u32 %v3285, 16
      %v3358 = vor.u32 %v3356, %v3354
      %v3360 = vshll.u32 %v3286, 16
      %v3362 = vrot.slane %v3360, 1
      %v3363 = vsel %vm1171, %v3358, %v3362
      %v3364 = vshrl.u32 %v3286, 16
      %v3366 = vor.u32 %v3364, %v3362
      %v3368 = vshll.u32 %v3287, 16
      %v3370 = vrot.slane %v3368, 1
      %v3371 = vsel %vm1171, %v3366, %v3370
      %v3372 = vshrl.u32 %v3287, 16
      %v3374 = vor.u32 %v3372, %v3370
      %v3376 = vshll.u32 %v3288, 16
      %v3378 = vrot.slane %v3376, 1
      %v3379 = vsel %vm1171, %v3374, %v3378
      %v3380 = vshrl.u32 %v3288, 16
      %v3382 = vor.u32 %v3380, %v3378
      %v3384 = vshll.u32 %v3289, 16
      %v3386 = vrot.slane %v3384, 1
      %v3387 = vsel %vm1171, %v3382, %v3386
      %v3388 = vshrl.u32 %v3289, 16
      %v3390 = vor.u32 %v3388, %v3386
      %v3392 = vshll.u32 %v3290, 16
      %v3394 = vrot.slane %v3392, 1
      %v3395 = vsel %vm1171, %v3390, %v3394
      %v3396 = vshrl.u32 %v3290, 16
      %v3398 = vor.u32 %v3396, %v3394
      %v3400 = vshll.u32 %v3291, 16
      %v3402 = vrot.slane %v3400, 1
      %v3403 = vsel %vm1171, %v3398, %v3402
      %v3404 = vshrl.u32 %v3291, 16
      %v3406 = vor.u32 %v3404, %v3402
      %v3408 = vshll.u32 %v3292, 16
      %v3410 = vrot.slane %v3408, 1
      %v3411 = vsel %vm1171, %v3406, %v3410
      %v3412 = vshrl.u32 %v3292, 16
      %v3414 = vor.u32 %v3412, %v3410
      %v3416 = vshll.u32 %v3293, 16
      %v3418 = vrot.slane %v3416, 1
      %v3419 = vsel %vm1171, %v3414, %v3418
      %v3420 = vshrl.u32 %v3293, 16
      %v3422 = vor.u32 %v3420, %v3418
      %v3424 = vshll.u32 %v3294, 16
      %v3426 = vrot.slane %v3424, 1
      %v3427 = vsel %vm1171, %v3422, %v3426
      %v3428 = vshrl.u32 %v3294, 16
      %v3430 = vor.u32 %v3428, %v3426
      %v3432 = vshll.u32 %v3295, 16
      %v3434 = vrot.slane %v3432, 1
      %v3435 = vsel %vm1171, %v3430, %v3434
      %v3436 = vshrl.u32 %v3295, 16
      %v3438 = vor.u32 %v3436, %v3434
      %v3440 = vshll.u32 %v3296, 16
      %v3442 = vrot.slane %v3440, 1
      %v3443 = vsel %vm1171, %v3438, %v3442
      %v3444 = vshrl.u32 %v3296, 16
      %v3446 = vor.u32 %v3444, %v3442
      %v3448 = vshll.u32 %v3297, 16
      %v3450 = vrot.slane %v3448, 1
      %v3451 = vsel %vm1171, %v3446, %v3450
      %v3452 = vshrl.u32 %v3297, 16
      %v3454 = vor.u32 %v3452, %v3450
      %v3456 = vshll.u32 %v3298, 16
      %v3458 = vrot.slane %v3456, 1
      %v3459 = vsel %vm1171, %v3454, %v3458
      %v3460 = vshrl.u32 %v3298, 16
      %v3462 = vor.u32 %v3460, %v3458
      %v3464 = vshll.u32 %v3299, 16
      %v3466 = vrot.slane %v3464, 1
      %v3467 = vsel %vm1171, %v3462, %v3466
      %v3468 = vshrl.u32 %v3299, 16
      %v3470 = vor.u32 %v3468, %v3466
      %v3472 = vshll.u32 %v3300, 16
      %v3474 = vrot.slane %v3472, 1
      %v3475 = vsel %vm1171, %v3470, %v3474
      %v3476 = vshrl.u32 %v3300, 16
      %v3478 = vor.u32 %v3476, %v3474
      %v3480 = vshll.u32 %v3301, 16
      %v3482 = vrot.slane %v3480, 1
      %v3483 = vsel %vm1171, %v3478, %v3482
      %v3484 = vshrl.u32 %v3301, 16
      %v3486 = vor.u32 %v3484, %v3482
      %v3488 = vshll.u32 %v3302, 16
      %v3490 = vrot.slane %v3488, 1
      %v3491 = vsel %vm1171, %v3486, %v3490
      %v3492 = vshrl.u32 %v3302, 16
      %v3494 = vor.u32 %v3492, %v3490
      %v3496 = vshll.u32 %v3303, 16
      %v3498 = vrot.slane %v3496, 1
      %v3499 = vsel %vm1171, %v3494, %v3498
      %v3540 = vunpack.c.l.b16 %v3165
      %v3541 = vunpack.c.l.b16 %v3166
      %v3542 = vunpack.c.l.b16 %v3167
      %v3543 = vunpack.c.l.b16 %v3168
      %v3544 = vunpack.c.l.b16 %v3169
      %v3545 = vunpack.c.l.b16 %v3170
      %v3546 = vunpack.c.l.b16 %v3171
      %v3547 = vunpack.c.l.b16 %v3172
      %v3548 = vunpack.c.l.b16 %v3173
      %v3549 = vunpack.c.l.b16 %v3174
      %v3550 = vunpack.c.l.b16 %v3175
      %v3551 = vunpack.c.l.b16 %v3176
      %v3552 = vunpack.c.l.b16 %v3177
      %v3553 = vunpack.c.l.b16 %v3178
      %v3554 = vunpack.c.l.b16 %v3179
      %v3555 = vunpack.c.l.b16 %v3180
      %v3556 = vpack.c.b16 %v3541, %v3540
      %v3557 = vpack.c.b16 %v3543, %v3542
      %v3558 = vpack.c.b16 %v3545, %v3544
      %v3559 = vpack.c.b16 %v3547, %v3546
      %v3560 = vpack.c.b16 %v3549, %v3548
      %v3561 = vpack.c.b16 %v3551, %v3550
      %v3562 = vpack.c.b16 %v3553, %v3552
      %v3563 = vpack.c.b16 %v3555, %v3554
      %3572 = vmatprep.subr.bf16.mxu0 0
      %3573 = vmatpush1.bf16.msra.mxu0 %v3556
      %3574 = vmatprep.subr.bf16.mxu0 0
      %3575 = vmatpush1.bf16.msra.mxu0 %v3557
      %3576 = vmatprep.subr.bf16.mxu0 0
      %3577 = vmatpush1.bf16.msra.mxu0 %v3558
      %3578 = vmatprep.subr.bf16.mxu0 0
      %3579 = vmatpush1.bf16.msra.mxu0 %v3559
      %3580 = vmatprep.subr.bf16.mxu0 0
      %3581 = vmatpush1.bf16.msra.mxu0 %v3560
      %3582 = vmatprep.subr.bf16.mxu0 0
      %3583 = vmatpush1.bf16.msra.mxu0 %v3561
      %3584 = vmatprep.subr.bf16.mxu0 0
      %3585 = vmatpush1.bf16.msra.mxu0 %v3562
      %3586 = vmatprep.subr.bf16.mxu0 0
      %3587 = vmatpush1.bf16.msra.mxu0 %v3563
      %3588 = vmatprep.subr.bf16.mxu0 0
      %3589 = vmatpush1.bf16.msra.mxu0 0
      %3590 = vmatprep.subr.bf16.mxu0 0
      %3591 = vmatpush1.bf16.msra.mxu0 0
      %3592 = vmatprep.subr.bf16.mxu0 0
      %3593 = vmatpush1.bf16.msra.mxu0 0
      %3594 = vmatprep.subr.bf16.mxu0 0
      %3595 = vmatpush1.bf16.msra.mxu0 0
      %3596 = vmatprep.subr.bf16.mxu0 0
      %3597 = vmatpush1.bf16.msra.mxu0 0
      %3598 = vmatprep.subr.bf16.mxu0 0
      %3599 = vmatpush1.bf16.msra.mxu0 0
      %3600 = vmatprep.subr.bf16.mxu0 0
      %3601 = vmatpush1.bf16.msra.mxu0 0
      %3602 = vmatprep.subr.bf16.mxu0 0
      %3603 = vmatpush1.bf16.msra.mxu0 0
      %3604 = vmatprep.mubr.bf16.mxu0 0
      %3605 = vmatmul.mubr.bf16.gmra.mrb[0].mxu0 %v3315
      %v3606 = vpop.f32.mrb[0].mxu0
      %v3607 = vadd.f32 0.0, %v3606
      %v3608 = vpop.f32.mrb[0].mxu0
      %v3609 = vpop.f32.mrb[0].mxu0
      %v3610 = vadd.f32 0.0, %v3609
      %v3611 = vpop.f32.mrb[0].mxu0
      %3612 = vmatprep.mubr.bf16.mxu0 0
      %3613 = vmatmul.mubr.bf16.gmra.mrb[0].mxu0 %v3323
      %v3614 = vpop.f32.mrb[0].mxu0
      %v3615 = vadd.f32 0.0, %v3614
      %v3616 = vpop.f32.mrb[0].mxu0
      %v3617 = vpop.f32.mrb[0].mxu0
      %v3618 = vadd.f32 0.0, %v3617
      %v3619 = vpop.f32.mrb[0].mxu0
      %3620 = vmatprep.mubr.bf16.mxu0 0
      %3621 = vmatmul.mubr.bf16.gmra.mrb[0].mxu0 %v3331
      %v3622 = vpop.f32.mrb[0].mxu0
      %v3623 = vadd.f32 0.0, %v3622
      %v3624 = vpop.f32.mrb[0].mxu0
      %v3625 = vpop.f32.mrb[0].mxu0
      %v3626 = vadd.f32 0.0, %v3625
      %v3627 = vpop.f32.mrb[0].mxu0
      %3628 = vmatprep.mubr.bf16.mxu0 0
      %3629 = vmatmul.mubr.bf16.gmra.mrb[0].mxu0 %v3339
      %v3630 = vpop.f32.mrb[0].mxu0
      %v3631 = vadd.f32 0.0, %v3630
      %v3632 = vpop.f32.mrb[0].mxu0
      %v3633 = vpop.f32.mrb[0].mxu0
      %v3634 = vadd.f32 0.0, %v3633
      %v3635 = vpop.f32.mrb[0].mxu0
      %3636 = vmatprep.mubr.bf16.mxu0 0
      %3637 = vmatmul.mubr.bf16.gmra.mrb[0].mxu0 %v3347
      %v3638 = vpop.f32.mrb[0].mxu0
      %v3639 = vadd.f32 0.0, %v3638
      %v3640 = vpop.f32.mrb[0].mxu0
      %v3641 = vpop.f32.mrb[0].mxu0
      %v3642 = vadd.f32 0.0, %v3641
      %v3643 = vpop.f32.mrb[0].mxu0
      %3644 = vmatprep.mubr.bf16.mxu0 0
      %3645 = vmatmul.mubr.bf16.gmra.mrb[0].mxu0 %v3355
      %v3646 = vpop.f32.mrb[0].mxu0
      %v3647 = vadd.f32 0.0, %v3646
      %v3648 = vpop.f32.mrb[0].mxu0
      %v3649 = vpop.f32.mrb[0].mxu0
      %v3650 = vadd.f32 0.0, %v3649
      %v3651 = vpop.f32.mrb[0].mxu0
      %3652 = vmatprep.mubr.bf16.mxu0 0
      %3653 = vmatmul.mubr.bf16.gmra.mrb[0].mxu0 %v3363
      %v3654 = vpop.f32.mrb[0].mxu0
      %v3655 = vadd.f32 0.0, %v3654
      %v3656 = vpop.f32.mrb[0].mxu0
      %v3657 = vpop.f32.mrb[0].mxu0
      %v3658 = vadd.f32 0.0, %v3657
      %v3659 = vpop.f32.mrb[0].mxu0
      %3660 = vmatprep.mubr.bf16.mxu0 0
      %3661 = vmatmul.mubr.bf16.gmra.mrb[0].mxu0 %v3371
      %v3662 = vpop.f32.mrb[0].mxu0
      %v3663 = vadd.f32 0.0, %v3662
      %v3664 = vpop.f32.mrb[0].mxu0
      %v3665 = vpop.f32.mrb[0].mxu0
      %v3666 = vadd.f32 0.0, %v3665
      %v3667 = vpop.f32.mrb[0].mxu0
      %3668 = vmatprep.mubr.bf16.mxu0 0
      %3669 = vmatmul.mubr.bf16.gmra.mrb[0].mxu0 %v3379
      %v3670 = vpop.f32.mrb[0].mxu0
      %v3671 = vadd.f32 0.0, %v3670
      %v3672 = vpop.f32.mrb[0].mxu0
      %v3673 = vpop.f32.mrb[0].mxu0
      %v3674 = vadd.f32 0.0, %v3673
      %v3675 = vpop.f32.mrb[0].mxu0
      %3676 = vmatprep.mubr.bf16.mxu0 0
      %3677 = vmatmul.mubr.bf16.gmra.mrb[0].mxu0 %v3387
      %v3678 = vpop.f32.mrb[0].mxu0
      %v3679 = vadd.f32 0.0, %v3678
      %v3680 = vpop.f32.mrb[0].mxu0
      %v3681 = vpop.f32.mrb[0].mxu0
      %v3682 = vadd.f32 0.0, %v3681
      %v3683 = vpop.f32.mrb[0].mxu0
      %3684 = vmatprep.mubr.bf16.mxu0 0
      %3685 = vmatmul.mubr.bf16.gmra.mrb[0].mxu0 %v3395
      %v3686 = vpop.f32.mrb[0].mxu0
      %v3687 = vadd.f32 0.0, %v3686
      %v3688 = vpop.f32.mrb[0].mxu0
      %v3689 = vpop.f32.mrb[0].mxu0
      %v3690 = vadd.f32 0.0, %v3689
      %v3691 = vpop.f32.mrb[0].mxu0
      %3692 = vmatprep.mubr.bf16.mxu0 0
      %3693 = vmatmul.mubr.bf16.gmra.mrb[0].mxu0 %v3403
      %v3694 = vpop.f32.mrb[0].mxu0
      %v3695 = vadd.f32 0.0, %v3694
      %v3696 = vpop.f32.mrb[0].mxu0
      %v3697 = vpop.f32.mrb[0].mxu0
      %v3698 = vadd.f32 0.0, %v3697
      %v3699 = vpop.f32.mrb[0].mxu0
      %3700 = vmatprep.mubr.bf16.mxu0 0
      %3701 = vmatmul.mubr.bf16.gmra.mrb[0].mxu0 %v3411
      %v3702 = vpop.f32.mrb[0].mxu0
      %v3703 = vadd.f32 0.0, %v3702
      %v3704 = vpop.f32.mrb[0].mxu0
      %v3705 = vpop.f32.mrb[0].mxu0
      %v3706 = vadd.f32 0.0, %v3705
      %v3707 = vpop.f32.mrb[0].mxu0
      %3708 = vmatprep.mubr.bf16.mxu0 0
      %3709 = vmatmul.mubr.bf16.gmra.mrb[0].mxu0 %v3419
      %v3710 = vpop.f32.mrb[0].mxu0
      %v3711 = vadd.f32 0.0, %v3710
      %v3712 = vpop.f32.mrb[0].mxu0
      %v3713 = vpop.f32.mrb[0].mxu0
      %v3714 = vadd.f32 0.0, %v3713
      %v3715 = vpop.f32.mrb[0].mxu0
      %3716 = vmatprep.mubr.bf16.mxu0 0
      %3717 = vmatmul.mubr.bf16.gmra.mrb[0].mxu0 %v3427
      %v3718 = vpop.f32.mrb[0].mxu0
      %v3719 = vadd.f32 0.0, %v3718
      %v3720 = vpop.f32.mrb[0].mxu0
      %v3721 = vpop.f32.mrb[0].mxu0
      %v3722 = vadd.f32 0.0, %v3721
      %v3723 = vpop.f32.mrb[0].mxu0
      %3724 = vmatprep.mubr.bf16.mxu0 0
      %3725 = vmatmul.mubr.bf16.gmra.mrb[0].mxu0 %v3435
      %v3726 = vpop.f32.mrb[0].mxu0
      %v3727 = vadd.f32 0.0, %v3726
      %v3728 = vpop.f32.mrb[0].mxu0
      %v3729 = vpop.f32.mrb[0].mxu0
      %v3730 = vadd.f32 0.0, %v3729
      %v3731 = vpop.f32.mrb[0].mxu0
      %3732 = vmatprep.mubr.bf16.mxu0 0
      %3733 = vmatmul.mubr.bf16.gmra.mrb[0].mxu0 %v3443
      %v3734 = vpop.f32.mrb[0].mxu0
      %v3735 = vadd.f32 0.0, %v3734
      %v3736 = vpop.f32.mrb[0].mxu0
      %v3737 = vpop.f32.mrb[0].mxu0
      %v3738 = vadd.f32 0.0, %v3737
      %v3739 = vpop.f32.mrb[0].mxu0
      %3740 = vmatprep.mubr.bf16.mxu0 0
      %3741 = vmatmul.mubr.bf16.gmra.mrb[0].mxu0 %v3451
      %v3742 = vpop.f32.mrb[0].mxu0
      %v3743 = vadd.f32 0.0, %v3742
      %v3744 = vpop.f32.mrb[0].mxu0
      %v3745 = vpop.f32.mrb[0].mxu0
      %v3746 = vadd.f32 0.0, %v3745
      %v3747 = vpop.f32.mrb[0].mxu0
      %3748 = vmatprep.mubr.bf16.mxu0 0
      %3749 = vmatmul.mubr.bf16.gmra.mrb[0].mxu0 %v3459
      %v3750 = vpop.f32.mrb[0].mxu0
      %v3751 = vadd.f32 0.0, %v3750
      %v3752 = vpop.f32.mrb[0].mxu0
      %v3753 = vpop.f32.mrb[0].mxu0
      %v3754 = vadd.f32 0.0, %v3753
      %v3755 = vpop.f32.mrb[0].mxu0
      %3756 = vmatprep.mubr.bf16.mxu0 0
      %3757 = vmatmul.mubr.bf16.gmra.mrb[0].mxu0 %v3467
      %v3758 = vpop.f32.mrb[0].mxu0
      %v3759 = vadd.f32 0.0, %v3758
      %v3760 = vpop.f32.mrb[0].mxu0
      %v3761 = vpop.f32.mrb[0].mxu0
      %v3762 = vadd.f32 0.0, %v3761
      %v3763 = vpop.f32.mrb[0].mxu0
      %3764 = vmatprep.mubr.bf16.mxu0 0
      %3765 = vmatmul.mubr.bf16.gmra.mrb[0].mxu0 %v3475
      %v3766 = vpop.f32.mrb[0].mxu0
      %v3767 = vadd.f32 0.0, %v3766
      %v3768 = vpop.f32.mrb[0].mxu0
      %v3769 = vpop.f32.mrb[0].mxu0
      %v3770 = vadd.f32 0.0, %v3769
      %v3771 = vpop.f32.mrb[0].mxu0
      %3772 = vmatprep.mubr.bf16.mxu0 0
      %3773 = vmatmul.mubr.bf16.gmra.mrb[0].mxu0 %v3483
      %v3774 = vpop.f32.mrb[0].mxu0
      %v3775 = vadd.f32 0.0, %v3774
      %v3776 = vpop.f32.mrb[0].mxu0
      %v3777 = vpop.f32.mrb[0].mxu0
      %v3778 = vadd.f32 0.0, %v3777
      %v3779 = vpop.f32.mrb[0].mxu0
      %3780 = vmatprep.mubr.bf16.mxu0 0
      %3781 = vmatmul.mubr.bf16.gmra.mrb[0].mxu0 %v3491
      %v3782 = vpop.f32.mrb[0].mxu0
      %v3783 = vadd.f32 0.0, %v3782
      %v3784 = vpop.f32.mrb[0].mxu0
      %v3785 = vpop.f32.mrb[0].mxu0
      %v3786 = vadd.f32 0.0, %v3785
      %v3787 = vpop.f32.mrb[0].mxu0
      %3788 = vmatprep.mubr.bf16.mxu0 0
      %3789 = vmatmul.mubr.bf16.gmra.mrb[0].mxu0 %v3499
      %v3790 = vpop.f32.mrb[0].mxu0
      %v3791 = vadd.f32 0.0, %v3790
      %v3792 = vpop.f32.mrb[0].mxu0
      %v3793 = vpop.f32.mrb[0].mxu0
      %v3794 = vadd.f32 0.0, %v3793
      %v3795 = vpop.f32.mrb[0].mxu0
      %3796 = vdwg.mxu0
      %v3797 = vadd.f32 %v3116, %v3607
      %v3798 = vadd.f32 %v3117, %v3610
      %v3799 = vadd.f32 %v3118, %v3615
      %v3800 = vadd.f32 %v3119, %v3618
      %v3801 = vadd.f32 %v3120, %v3623
      %v3802 = vadd.f32 %v3121, %v3626
      %v3803 = vadd.f32 %v3122, %v3631
      %v3804 = vadd.f32 %v3123, %v3634
      %v3805 = vadd.f32 %v3124, %v3639
      %v3806 = vadd.f32 %v3125, %v3642
      %v3807 = vadd.f32 %v3126, %v3647
      %v3808 = vadd.f32 %v3127, %v3650
      %v3809 = vadd.f32 %v3128, %v3655
      %v3810 = vadd.f32 %v3129, %v3658
      %v3811 = vadd.f32 %v3130, %v3663
      %v3812 = vadd.f32 %v3131, %v3666
      %v3813 = vadd.f32 %v3132, %v3671
      %v3814 = vadd.f32 %v3133, %v3674
      %v3815 = vadd.f32 %v3134, %v3679
      %v3816 = vadd.f32 %v3135, %v3682
      %v3817 = vadd.f32 %v3136, %v3687
      %v3818 = vadd.f32 %v3137, %v3690
      %v3819 = vadd.f32 %v3138, %v3695
      %v3820 = vadd.f32 %v3139, %v3698
      %v3821 = vadd.f32 %v3140, %v3703
      %v3822 = vadd.f32 %v3141, %v3706
      %v3823 = vadd.f32 %v3142, %v3711
      %v3824 = vadd.f32 %v3143, %v3714
      %v3825 = vadd.f32 %v3144, %v3719
      %v3826 = vadd.f32 %v3145, %v3722
      %v3827 = vadd.f32 %v3146, %v3727
      %v3828 = vadd.f32 %v3147, %v3730
      %v3829 = vadd.f32 %v3148, %v3735
      %v3830 = vadd.f32 %v3149, %v3738
      %v3831 = vadd.f32 %v3150, %v3743
      %v3832 = vadd.f32 %v3151, %v3746
      %v3833 = vadd.f32 %v3152, %v3751
      %v3834 = vadd.f32 %v3153, %v3754
      %v3835 = vadd.f32 %v3154, %v3759
      %v3836 = vadd.f32 %v3155, %v3762
      %v3837 = vadd.f32 %v3156, %v3767
      %v3838 = vadd.f32 %v3157, %v3770
      %v3839 = vadd.f32 %v3158, %v3775
      %v3840 = vadd.f32 %v3159, %v3778
      %v3841 = vadd.f32 %v3160, %v3783
      %v3842 = vadd.f32 %v3161, %v3786
      %v3843 = vadd.f32 %v3162, %v3791
      %v3844 = vadd.f32 %v3163, %v3794
      %3845 = vst [vmem:[#allocation2] sm:$0xff] %v3797
      %3846 = vst [vmem:[#allocation2 + $0x8] sm:$0xff] %v3798
      %3847 = vst [vmem:[#allocation2 + $0x10] sm:$0xff] %v3799
      %3848 = vst [vmem:[#allocation2 + $0x18] sm:$0xff] %v3800
      %3849 = vst [vmem:[#allocation2 + $0x20] sm:$0xff] %v3801
      %3850 = vst [vmem:[#allocation2 + $0x28] sm:$0xff] %v3802
      %3851 = vst [vmem:[#allocation2 + $0x30] sm:$0xff] %v3803
      %3852 = vst [vmem:[#allocation2 + $0x38] sm:$0xff] %v3804
      %3853 = vst [vmem:[#allocation2 + $0x40] sm:$0xff] %v3805
      %3854 = vst [vmem:[#allocation2 + $0x48] sm:$0xff] %v3806
      %3855 = vst [vmem:[#allocation2 + $0x50] sm:$0xff] %v3807
      %3856 = vst [vmem:[#allocation2 + $0x58] sm:$0xff] %v3808
      %3857 = vst [vmem:[#allocation2 + $0x60] sm:$0xff] %v3809
      %3858 = vst [vmem:[#allocation2 + $0x68] sm:$0xff] %v3810
      %3859 = vst [vmem:[#allocation2 + $0x70] sm:$0xff] %v3811
      %3860 = vst [vmem:[#allocation2 + $0x78] sm:$0xff] %v3812
      %3861 = vst [vmem:[#allocation2 + $0x80] sm:$0xff] %v3813
      %3862 = vst [vmem:[#allocation2 + $0x88] sm:$0xff] %v3814
      %3863 = vst [vmem:[#allocation2 + $0x90] sm:$0xff] %v3815
      %3864 = vst [vmem:[#allocation2 + $0x98] sm:$0xff] %v3816
      %3865 = vst [vmem:[#allocation2 + $0xa0] sm:$0xff] %v3817
      %3866 = vst [vmem:[#allocation2 + $0xa8] sm:$0xff] %v3818
      %3867 = vst [vmem:[#allocation2 + $0xb0] sm:$0xff] %v3819
      %3868 = vst [vmem:[#allocation2 + $0xb8] sm:$0xff] %v3820
      %3869 = vst [vmem:[#allocation2 + $0xc0] sm:$0xff] %v3821
      %3870 = vst [vmem:[#allocation2 + $0xc8] sm:$0xff] %v3822
      %3871 = vst [vmem:[#allocation2 + $0xd0] sm:$0xff] %v3823
      %3872 = vst [vmem:[#allocation2 + $0xd8] sm:$0xff] %v3824
      %3873 = vst [vmem:[#allocation2 + $0xe0] sm:$0xff] %v3825
      %3874 = vst [vmem:[#allocation2 + $0xe8] sm:$0xff] %v3826
      %3875 = vst [vmem:[#allocation2 + $0xf0] sm:$0xff] %v3827
      %3876 = vst [vmem:[#allocation2 + $0xf8] sm:$0xff] %v3828
      %3877 = vst [vmem:[#allocation2 + $0x100] sm:$0xff] %v3829
      %3878 = vst [vmem:[#allocation2 + $0x108] sm:$0xff] %v3830
      %3879 = vst [vmem:[#allocation2 + $0x110] sm:$0xff] %v3831
      %3880 = vst [vmem:[#allocation2 + $0x118] sm:$0xff] %v3832
      %3881 = vst [vmem:[#allocation2 + $0x120] sm:$0xff] %v3833
      %3882 = vst [vmem:[#allocation2 + $0x128] sm:$0xff] %v3834
      %3883 = vst [vmem:[#allocation2 + $0x130] sm:$0xff] %v3835
      %3884 = vst [vmem:[#allocation2 + $0x138] sm:$0xff] %v3836
      %3885 = vst [vmem:[#allocation2 + $0x140] sm:$0xff] %v3837
      %3886 = vst [vmem:[#allocation2 + $0x148] sm:$0xff] %v3838
      %3887 = vst [vmem:[#allocation2 + $0x150] sm:$0xff] %v3839
      %3888 = vst [vmem:[#allocation2 + $0x158] sm:$0xff] %v3840
      %3889 = vst [vmem:[#allocation2 + $0x160] sm:$0xff] %v3841
      %3890 = vst [vmem:[#allocation2 + $0x168] sm:$0xff] %v3842
      %3891 = vst [vmem:[#allocation2 + $0x170] sm:$0xff] %v3843
      %3892 = vst [vmem:[#allocation2 + $0x178] sm:$0xff] %v3844
      %v3893 = vld [vmem:[%s235 + $0xc] sm:$0xe]
      %v3894 = vld [vmem:[%s235 + $0x10] sm:$0xf]
      %v3895 = vld [vmem:[%s235 + $0x14] sm:$0xf]
      %v3896 = vld [vmem:[%s235 + $0x18] sm:$0xf]
      %v3897 = vld [vmem:[%s235 + $0x1c] sm:$0xf]
      %v3898 = vld [vmem:[%s235 + $0x20] sm:$0xf]
      %v3899 = vld [vmem:[%s235 + $0x24] sm:$0xf]
      %v3900 = vld [vmem:[%s235 + $0x28] sm:$0xf]
      %v3901 = vld [vmem:[%s235 + $0x2c] sm:$0xf]
      %v3902 = vld [vmem:[%s235 + $0x30] sm:$0xf]
      %v3903 = vld [vmem:[%s235 + $0x34] sm:$0xf]
      %v3904 = vld [vmem:[%s235 + $0x38] sm:$0xf]
      %v3905 = vld [vmem:[%s235 + $0x3c] sm:$0xf]
      %v3906 = vld [vmem:[%s235 + $0x40] sm:$0xf]
      %v3907 = vld [vmem:[%s235 + $0x44] sm:$0xf]
      %v3908 = vld [vmem:[%s235 + $0x48] sm:$0xf]
      %v3909 = vld [vmem:[%s235 + $0x4c] sm:$0xf]
      %v3910 = vld [vmem:[%s235 + $0x50] sm:$0xf]
      %v3911 = vld [vmem:[%s235 + $0x54] sm:$0xf]
      %v3912 = vld [vmem:[%s235 + $0x58] sm:$0xf]
      %v3913 = vld [vmem:[%s235 + $0x5c] sm:$0xf]
      %v3914 = vld [vmem:[%s235 + $0x60] sm:$0xf]
      %v3915 = vld [vmem:[%s235 + $0x64] sm:$0xf]
      %v3916 = vld [vmem:[%s235 + $0x68] sm:$0xf]
      %v3917 = vld [vmem:[%s235 + $0x6c] sm:$0xf]
      %v3918 = vld [vmem:[%s235 + $0x70] sm:$0xf]
      %v3919 = vld [vmem:[%s235 + $0x74] sm:$0xf]
      %v3920 = vld [vmem:[%s235 + $0x78] sm:$0xf]
      %v3921 = vld [vmem:[%s235 + $0x7c] sm:$0xf]
      %v3922 = vld [vmem:[%s235 + $0x80] sm:$0xf]
      %v3923 = vld [vmem:[%s235 + $0x84] sm:$0xf]
      %v3924 = vld [vmem:[%s235 + $0x88] sm:$0xf]
      %v3925 = vld [vmem:[%s235 + $0x8c] sm:$0xf]
      %v3926 = vld [vmem:[%s235 + $0x90] sm:$0xf]
      %v3927 = vld [vmem:[%s235 + $0x94] sm:$0xf]
      %v3928 = vld [vmem:[%s235 + $0x98] sm:$0xf]
      %v3929 = vld [vmem:[%s235 + $0x9c] sm:$0xf]
      %v3930 = vld [vmem:[%s235 + $0xa0] sm:$0xf]
      %v3931 = vld [vmem:[%s235 + $0xa4] sm:$0xf]
      %v3932 = vld [vmem:[%s235 + $0xa8] sm:$0xf]
      %v3933 = vld [vmem:[%s235 + $0xac] sm:$0xf]
      %v3934 = vld [vmem:[%s235 + $0xb0] sm:$0xf]
      %v3935 = vld [vmem:[%s235 + $0xb4] sm:$0xf]
      %v3936 = vld [vmem:[%s235 + $0xb8] sm:$0xf]
      %v3937 = vld [vmem:[%s235 + $0xbc] sm:$0xf]
      %v3938 = vld [vmem:[%s235 + $0xc0] sm:$0xf]
      %v3939 = vld [vmem:[%s235 + $0xc4] sm:$0xf]
      %v3940 = vld [vmem:[%s235 + $0xc8] sm:$0xf]
      %v3941 = vld [vmem:[%s235 + $0xcc] sm:$0x1]
      %v3942 = vld [vmem:[#allocation2] sm:$0xff]
      %v3943 = vld [vmem:[#allocation2 + $0x8] sm:$0xff]
      %v3944 = vld [vmem:[#allocation2 + $0x10] sm:$0xff]
      %v3945 = vld [vmem:[#allocation2 + $0x18] sm:$0xff]
      %v3946 = vld [vmem:[#allocation2 + $0x20] sm:$0xff]
      %v3947 = vld [vmem:[#allocation2 + $0x28] sm:$0xff]
      %v3948 = vld [vmem:[#allocation2 + $0x30] sm:$0xff]
      %v3949 = vld [vmem:[#allocation2 + $0x38] sm:$0xff]
      %v3950 = vld [vmem:[#allocation2 + $0x40] sm:$0xff]
      %v3951 = vld [vmem:[#allocation2 + $0x48] sm:$0xff]
      %v3952 = vld [vmem:[#allocation2 + $0x50] sm:$0xff]
      %v3953 = vld [vmem:[#allocation2 + $0x58] sm:$0xff]
      %v3954 = vld [vmem:[#allocation2 + $0x60] sm:$0xff]
      %v3955 = vld [vmem:[#allocation2 + $0x68] sm:$0xff]
      %v3956 = vld [vmem:[#allocation2 + $0x70] sm:$0xff]
      %v3957 = vld [vmem:[#allocation2 + $0x78] sm:$0xff]
      %v3958 = vld [vmem:[#allocation2 + $0x80] sm:$0xff]
      %v3959 = vld [vmem:[#allocation2 + $0x88] sm:$0xff]
      %v3960 = vld [vmem:[#allocation2 + $0x90] sm:$0xff]
      %v3961 = vld [vmem:[#allocation2 + $0x98] sm:$0xff]
      %v3962 = vld [vmem:[#allocation2 + $0xa0] sm:$0xff]
      %v3963 = vld [vmem:[#allocation2 + $0xa8] sm:$0xff]
      %v3964 = vld [vmem:[#allocation2 + $0xb0] sm:$0xff]
      %v3965 = vld [vmem:[#allocation2 + $0xb8] sm:$0xff]
      %v3966 = vld [vmem:[#allocation2 + $0xc0] sm:$0xff]
      %v3967 = vld [vmem:[#allocation2 + $0xc8] sm:$0xff]
      %v3968 = vld [vmem:[#allocation2 + $0xd0] sm:$0xff]
      %v3969 = vld [vmem:[#allocation2 + $0xd8] sm:$0xff]
      %v3970 = vld [vmem:[#allocation2 + $0xe0] sm:$0xff]
      %v3971 = vld [vmem:[#allocation2 + $0xe8] sm:$0xff]
      %v3972 = vld [vmem:[#allocation2 + $0xf0] sm:$0xff]
      %v3973 = vld [vmem:[#allocation2 + $0xf8] sm:$0xff]
      %v3974 = vld [vmem:[#allocation2 + $0x100] sm:$0xff]
      %v3975 = vld [vmem:[#allocation2 + $0x108] sm:$0xff]
      %v3976 = vld [vmem:[#allocation2 + $0x110] sm:$0xff]
      %v3977 = vld [vmem:[#allocation2 + $0x118] sm:$0xff]
      %v3978 = vld [vmem:[#allocation2 + $0x120] sm:$0xff]
      %v3979 = vld [vmem:[#allocation2 + $0x128] sm:$0xff]
      %v3980 = vld [vmem:[#allocation2 + $0x130] sm:$0xff]
      %v3981 = vld [vmem:[#allocation2 + $0x138] sm:$0xff]
      %v3982 = vld [vmem:[#allocation2 + $0x140] sm:$0xff]
      %v3983 = vld [vmem:[#allocation2 + $0x148] sm:$0xff]
      %v3984 = vld [vmem:[#allocation2 + $0x150] sm:$0xff]
      %v3985 = vld [vmem:[#allocation2 + $0x158] sm:$0xff]
      %v3986 = vld [vmem:[#allocation2 + $0x160] sm:$0xff]
      %v3987 = vld [vmem:[#allocation2 + $0x168] sm:$0xff]
      %v3988 = vld [vmem:[#allocation2 + $0x170] sm:$0xff]
      %v3989 = vld [vmem:[#allocation2 + $0x178] sm:$0xff]
      %s3990 = scalar_lea.vmem %s243, 320
      %v3991 = vld [vmem:[%s3990] sm:$0xf]
      %v3992 = vld [vmem:[%s3990 + $0x4] sm:$0xf]
      %v3993 = vld [vmem:[%s3990 + $0x8] sm:$0xf]
      %v3994 = vld [vmem:[%s3990 + $0xc] sm:$0xf]
      %v3995 = vld [vmem:[%s3990 + $0x10] sm:$0xf]
      %v3996 = vld [vmem:[%s3990 + $0x14] sm:$0xf]
      %v3997 = vld [vmem:[%s3990 + $0x18] sm:$0xf]
      %v3998 = vld [vmem:[%s3990 + $0x1c] sm:$0xf]
      %v3999 = vld [vmem:[%s3990 + $0x20] sm:$0xf]
      %v4000 = vld [vmem:[%s3990 + $0x24] sm:$0xf]
      %v4001 = vld [vmem:[%s3990 + $0x28] sm:$0xf]
      %v4002 = vld [vmem:[%s3990 + $0x2c] sm:$0xf]
      %v4003 = vld [vmem:[%s3990 + $0x30] sm:$0xf]
      %v4004 = vld [vmem:[%s3990 + $0x34] sm:$0xf]
      %v4005 = vld [vmem:[%s3990 + $0x38] sm:$0xf]
      %v4006 = vld [vmem:[%s3990 + $0x3c] sm:$0xf]
      %v4056 = vunpack.c.l.b16 %v3893
      %v4057 = vunpack.c.l.b16 %v3894
      %v4058 = vunpack.c.l.b16 %v3895
      %v4059 = vunpack.c.l.b16 %v3896
      %v4060 = vunpack.c.l.b16 %v3897
      %v4061 = vunpack.c.l.b16 %v3898
      %v4062 = vunpack.c.l.b16 %v3899
      %v4063 = vunpack.c.l.b16 %v3900
      %v4064 = vunpack.c.l.b16 %v3901
      %v4065 = vunpack.c.l.b16 %v3902
      %v4066 = vunpack.c.l.b16 %v3903
      %v4067 = vunpack.c.l.b16 %v3904
      %v4068 = vunpack.c.l.b16 %v3905
      %v4069 = vunpack.c.l.b16 %v3906
      %v4070 = vunpack.c.l.b16 %v3907
      %v4071 = vunpack.c.l.b16 %v3908
      %v4072 = vunpack.c.l.b16 %v3909
      %v4073 = vunpack.c.l.b16 %v3910
      %v4074 = vunpack.c.l.b16 %v3911
      %v4075 = vunpack.c.l.b16 %v3912
      %v4076 = vunpack.c.l.b16 %v3913
      %v4077 = vunpack.c.l.b16 %v3914
      %v4078 = vunpack.c.l.b16 %v3915
      %v4079 = vunpack.c.l.b16 %v3916
      %v4080 = vunpack.c.l.b16 %v3917
      %v4081 = vunpack.c.l.b16 %v3918
      %v4082 = vunpack.c.l.b16 %v3919
      %v4083 = vunpack.c.l.b16 %v3920
      %v4084 = vunpack.c.l.b16 %v3921
      %v4085 = vunpack.c.l.b16 %v3922
      %v4086 = vunpack.c.l.b16 %v3923
      %v4087 = vunpack.c.l.b16 %v3924
      %v4088 = vunpack.c.l.b16 %v3925
      %v4089 = vunpack.c.l.b16 %v3926
      %v4090 = vunpack.c.l.b16 %v3927
      %v4091 = vunpack.c.l.b16 %v3928
      %v4092 = vunpack.c.l.b16 %v3929
      %v4093 = vunpack.c.l.b16 %v3930
      %v4094 = vunpack.c.l.b16 %v3931
      %v4095 = vunpack.c.l.b16 %v3932
      %v4096 = vunpack.c.l.b16 %v3933
      %v4097 = vunpack.c.l.b16 %v3934
      %v4098 = vunpack.c.l.b16 %v3935
      %v4099 = vunpack.c.l.b16 %v3936
      %v4100 = vunpack.c.l.b16 %v3937
      %v4101 = vunpack.c.l.b16 %v3938
      %v4102 = vunpack.c.l.b16 %v3939
      %v4103 = vunpack.c.l.b16 %v3940
      %v4104 = vunpack.c.l.b16 %v3941
      %v4105 = vpack.c.b16 %v4057, %v4056
      %v4106 = vpack.c.b16 %v4059, %v4058
      %v4107 = vpack.c.b16 %v4061, %v4060
      %v4108 = vpack.c.b16 %v4063, %v4062
      %v4109 = vpack.c.b16 %v4065, %v4064
      %v4110 = vpack.c.b16 %v4067, %v4066
      %v4111 = vpack.c.b16 %v4069, %v4068
      %v4112 = vpack.c.b16 %v4071, %v4070
      %v4113 = vpack.c.b16 %v4073, %v4072
      %v4114 = vpack.c.b16 %v4075, %v4074
      %v4115 = vpack.c.b16 %v4077, %v4076
      %v4116 = vpack.c.b16 %v4079, %v4078
      %v4117 = vpack.c.b16 %v4081, %v4080
      %v4118 = vpack.c.b16 %v4083, %v4082
      %v4119 = vpack.c.b16 %v4085, %v4084
      %v4120 = vpack.c.b16 %v4087, %v4086
      %v4121 = vpack.c.b16 %v4089, %v4088
      %v4122 = vpack.c.b16 %v4091, %v4090
      %v4123 = vpack.c.b16 %v4093, %v4092
      %v4124 = vpack.c.b16 %v4095, %v4094
      %v4125 = vpack.c.b16 %v4097, %v4096
      %v4126 = vpack.c.b16 %v4099, %v4098
      %v4127 = vpack.c.b16 %v4101, %v4100
      %v4128 = vpack.c.b16 %v4103, %v4102
      %v4129 = vpack.c.b16 %v4104, %v4104
      %v4130 = vrot.slane %v4105, 1
      %v4131 = vrot.slane %v4106, 1
      %v4132 = vsel %vm1998, %v4130, %v4131
      %v4133 = vrot.slane %v4107, 1
      %v4134 = vsel %vm1998, %v4131, %v4133
      %v4135 = vrot.slane %v4108, 1
      %v4136 = vsel %vm1998, %v4133, %v4135
      %v4137 = vrot.slane %v4109, 1
      %v4138 = vsel %vm1998, %v4135, %v4137
      %v4139 = vrot.slane %v4110, 1
      %v4140 = vsel %vm1998, %v4137, %v4139
      %v4141 = vrot.slane %v4111, 1
      %v4142 = vsel %vm1998, %v4139, %v4141
      %v4143 = vrot.slane %v4112, 1
      %v4144 = vsel %vm1998, %v4141, %v4143
      %v4145 = vrot.slane %v4113, 1
      %v4146 = vsel %vm1998, %v4143, %v4145
      %v4147 = vrot.slane %v4114, 1
      %v4148 = vsel %vm1998, %v4145, %v4147
      %v4149 = vrot.slane %v4115, 1
      %v4150 = vsel %vm1998, %v4147, %v4149
      %v4151 = vrot.slane %v4116, 1
      %v4152 = vsel %vm1998, %v4149, %v4151
      %v4153 = vrot.slane %v4117, 1
      %v4154 = vsel %vm1998, %v4151, %v4153
      %v4155 = vrot.slane %v4118, 1
      %v4156 = vsel %vm1998, %v4153, %v4155
      %v4157 = vrot.slane %v4119, 1
      %v4158 = vsel %vm1998, %v4155, %v4157
      %v4159 = vrot.slane %v4120, 1
      %v4160 = vsel %vm1998, %v4157, %v4159
      %v4161 = vrot.slane %v4121, 1
      %v4162 = vsel %vm1998, %v4159, %v4161
      %v4163 = vrot.slane %v4122, 1
      %v4164 = vsel %vm1998, %v4161, %v4163
      %v4165 = vrot.slane %v4123, 1
      %v4166 = vsel %vm1998, %v4163, %v4165
      %v4167 = vrot.slane %v4124, 1
      %v4168 = vsel %vm1998, %v4165, %v4167
      %v4169 = vrot.slane %v4125, 1
      %v4170 = vsel %vm1998, %v4167, %v4169
      %v4171 = vrot.slane %v4126, 1
      %v4172 = vsel %vm1998, %v4169, %v4171
      %v4173 = vrot.slane %v4127, 1
      %v4174 = vsel %vm1998, %v4171, %v4173
      %v4175 = vrot.slane %v4128, 1
      %v4176 = vsel %vm1998, %v4173, %v4175
      %v4177 = vrot.slane %v4129, 1
      %v4178 = vsel %vm1998, %v4175, %v4177
      %v4219 = vunpack.c.l.b16 %v3991
      %v4220 = vunpack.c.l.b16 %v3992
      %v4221 = vunpack.c.l.b16 %v3993
      %v4222 = vunpack.c.l.b16 %v3994
      %v4223 = vunpack.c.l.b16 %v3995
      %v4224 = vunpack.c.l.b16 %v3996
      %v4225 = vunpack.c.l.b16 %v3997
      %v4226 = vunpack.c.l.b16 %v3998
      %v4227 = vunpack.c.l.b16 %v3999
      %v4228 = vunpack.c.l.b16 %v4000
      %v4229 = vunpack.c.l.b16 %v4001
      %v4230 = vunpack.c.l.b16 %v4002
      %v4231 = vunpack.c.l.b16 %v4003
      %v4232 = vunpack.c.l.b16 %v4004
      %v4233 = vunpack.c.l.b16 %v4005
      %v4234 = vunpack.c.l.b16 %v4006
      %v4235 = vpack.c.b16 %v4220, %v4219
      %v4236 = vpack.c.b16 %v4222, %v4221
      %v4237 = vpack.c.b16 %v4224, %v4223
      %v4238 = vpack.c.b16 %v4226, %v4225
      %v4239 = vpack.c.b16 %v4228, %v4227
      %v4240 = vpack.c.b16 %v4230, %v4229
      %v4241 = vpack.c.b16 %v4232, %v4231
      %v4242 = vpack.c.b16 %v4234, %v4233
      %4251 = vmatprep.subr.bf16.mxu0 0
      %4252 = vmatpush1.bf16.msra.mxu0 %v4235
      %4253 = vmatprep.subr.bf16.mxu0 0
      %4254 = vmatpush1.bf16.msra.mxu0 %v4236
      %4255 = vmatprep.subr.bf16.mxu0 0
      %4256 = vmatpush1.bf16.msra.mxu0 %v4237
      %4257 = vmatprep.subr.bf16.mxu0 0
      %4258 = vmatpush1.bf16.msra.mxu0 %v4238
      %4259 = vmatprep.subr.bf16.mxu0 0
      %4260 = vmatpush1.bf16.msra.mxu0 %v4239
      %4261 = vmatprep.subr.bf16.mxu0 0
      %4262 = vmatpush1.bf16.msra.mxu0 %v4240
      %4263 = vmatprep.subr.bf16.mxu0 0
      %4264 = vmatpush1.bf16.msra.mxu0 %v4241
      %4265 = vmatprep.subr.bf16.mxu0 0
      %4266 = vmatpush1.bf16.msra.mxu0 %v4242
      %4267 = vmatprep.subr.bf16.mxu0 0
      %4268 = vmatpush1.bf16.msra.mxu0 0
      %4269 = vmatprep.subr.bf16.mxu0 0
      %4270 = vmatpush1.bf16.msra.mxu0 0
      %4271 = vmatprep.subr.bf16.mxu0 0
      %4272 = vmatpush1.bf16.msra.mxu0 0
      %4273 = vmatprep.subr.bf16.mxu0 0
      %4274 = vmatpush1.bf16.msra.mxu0 0
      %4275 = vmatprep.subr.bf16.mxu0 0
      %4276 = vmatpush1.bf16.msra.mxu0 0
      %4277 = vmatprep.subr.bf16.mxu0 0
      %4278 = vmatpush1.bf16.msra.mxu0 0
      %4279 = vmatprep.subr.bf16.mxu0 0
      %4280 = vmatpush1.bf16.msra.mxu0 0
      %4281 = vmatprep.subr.bf16.mxu0 0
      %4282 = vmatpush1.bf16.msra.mxu0 0
      %4283 = vmatprep.mubr.bf16.mxu0 0
      %4284 = vmatmul.mubr.bf16.gmra.mrb[0].mxu0 %v4132
      %v4285 = vpop.f32.mrb[0].mxu0
      %v4286 = vadd.f32 0.0, %v4285
      %v4287 = vpop.f32.mrb[0].mxu0
      %v4288 = vpop.f32.mrb[0].mxu0
      %v4289 = vadd.f32 0.0, %v4288
      %v4290 = vpop.f32.mrb[0].mxu0
      %4291 = vmatprep.mubr.bf16.mxu0 0
      %4292 = vmatmul.mubr.bf16.gmra.mrb[0].mxu0 %v4134
      %v4293 = vpop.f32.mrb[0].mxu0
      %v4294 = vadd.f32 0.0, %v4293
      %v4295 = vpop.f32.mrb[0].mxu0
      %v4296 = vpop.f32.mrb[0].mxu0
      %v4297 = vadd.f32 0.0, %v4296
      %v4298 = vpop.f32.mrb[0].mxu0
      %4299 = vmatprep.mubr.bf16.mxu0 0
      %4300 = vmatmul.mubr.bf16.gmra.mrb[0].mxu0 %v4136
      %v4301 = vpop.f32.mrb[0].mxu0
      %v4302 = vadd.f32 0.0, %v4301
      %v4303 = vpop.f32.mrb[0].mxu0
      %v4304 = vpop.f32.mrb[0].mxu0
      %v4305 = vadd.f32 0.0, %v4304
      %v4306 = vpop.f32.mrb[0].mxu0
      %4307 = vmatprep.mubr.bf16.mxu0 0
      %4308 = vmatmul.mubr.bf16.gmra.mrb[0].mxu0 %v4138
      %v4309 = vpop.f32.mrb[0].mxu0
      %v4310 = vadd.f32 0.0, %v4309
      %v4311 = vpop.f32.mrb[0].mxu0
      %v4312 = vpop.f32.mrb[0].mxu0
      %v4313 = vadd.f32 0.0, %v4312
      %v4314 = vpop.f32.mrb[0].mxu0
      %4315 = vmatprep.mubr.bf16.mxu0 0
      %4316 = vmatmul.mubr.bf16.gmra.mrb[0].mxu0 %v4140
      %v4317 = vpop.f32.mrb[0].mxu0
      %v4318 = vadd.f32 0.0, %v4317
      %v4319 = vpop.f32.mrb[0].mxu0
      %v4320 = vpop.f32.mrb[0].mxu0
      %v4321 = vadd.f32 0.0, %v4320
      %v4322 = vpop.f32.mrb[0].mxu0
      %4323 = vmatprep.mubr.bf16.mxu0 0
      %4324 = vmatmul.mubr.bf16.gmra.mrb[0].mxu0 %v4142
      %v4325 = vpop.f32.mrb[0].mxu0
      %v4326 = vadd.f32 0.0, %v4325
      %v4327 = vpop.f32.mrb[0].mxu0
      %v4328 = vpop.f32.mrb[0].mxu0
      %v4329 = vadd.f32 0.0, %v4328
      %v4330 = vpop.f32.mrb[0].mxu0
      %4331 = vmatprep.mubr.bf16.mxu0 0
      %4332 = vmatmul.mubr.bf16.gmra.mrb[0].mxu0 %v4144
      %v4333 = vpop.f32.mrb[0].mxu0
      %v4334 = vadd.f32 0.0, %v4333
      %v4335 = vpop.f32.mrb[0].mxu0
      %v4336 = vpop.f32.mrb[0].mxu0
      %v4337 = vadd.f32 0.0, %v4336
      %v4338 = vpop.f32.mrb[0].mxu0
      %4339 = vmatprep.mubr.bf16.mxu0 0
      %4340 = vmatmul.mubr.bf16.gmra.mrb[0].mxu0 %v4146
      %v4341 = vpop.f32.mrb[0].mxu0
      %v4342 = vadd.f32 0.0, %v4341
      %v4343 = vpop.f32.mrb[0].mxu0
      %v4344 = vpop.f32.mrb[0].mxu0
      %v4345 = vadd.f32 0.0, %v4344
      %v4346 = vpop.f32.mrb[0].mxu0
      %4347 = vmatprep.mubr.bf16.mxu0 0
      %4348 = vmatmul.mubr.bf16.gmra.mrb[0].mxu0 %v4148
      %v4349 = vpop.f32.mrb[0].mxu0
      %v4350 = vadd.f32 0.0, %v4349
      %v4351 = vpop.f32.mrb[0].mxu0
      %v4352 = vpop.f32.mrb[0].mxu0
      %v4353 = vadd.f32 0.0, %v4352
      %v4354 = vpop.f32.mrb[0].mxu0
      %4355 = vmatprep.mubr.bf16.mxu0 0
      %4356 = vmatmul.mubr.bf16.gmra.mrb[0].mxu0 %v4150
      %v4357 = vpop.f32.mrb[0].mxu0
      %v4358 = vadd.f32 0.0, %v4357
      %v4359 = vpop.f32.mrb[0].mxu0
      %v4360 = vpop.f32.mrb[0].mxu0
      %v4361 = vadd.f32 0.0, %v4360
      %v4362 = vpop.f32.mrb[0].mxu0
      %4363 = vmatprep.mubr.bf16.mxu0 0
      %4364 = vmatmul.mubr.bf16.gmra.mrb[0].mxu0 %v4152
      %v4365 = vpop.f32.mrb[0].mxu0
      %v4366 = vadd.f32 0.0, %v4365
      %v4367 = vpop.f32.mrb[0].mxu0
      %v4368 = vpop.f32.mrb[0].mxu0
      %v4369 = vadd.f32 0.0, %v4368
      %v4370 = vpop.f32.mrb[0].mxu0
      %4371 = vmatprep.mubr.bf16.mxu0 0
      %4372 = vmatmul.mubr.bf16.gmra.mrb[0].mxu0 %v4154
      %v4373 = vpop.f32.mrb[0].mxu0
      %v4374 = vadd.f32 0.0, %v4373
      %v4375 = vpop.f32.mrb[0].mxu0
      %v4376 = vpop.f32.mrb[0].mxu0
      %v4377 = vadd.f32 0.0, %v4376
      %v4378 = vpop.f32.mrb[0].mxu0
      %4379 = vmatprep.mubr.bf16.mxu0 0
      %4380 = vmatmul.mubr.bf16.gmra.mrb[0].mxu0 %v4156
      %v4381 = vpop.f32.mrb[0].mxu0
      %v4382 = vadd.f32 0.0, %v4381
      %v4383 = vpop.f32.mrb[0].mxu0
      %v4384 = vpop.f32.mrb[0].mxu0
      %v4385 = vadd.f32 0.0, %v4384
      %v4386 = vpop.f32.mrb[0].mxu0
      %4387 = vmatprep.mubr.bf16.mxu0 0
      %4388 = vmatmul.mubr.bf16.gmra.mrb[0].mxu0 %v4158
      %v4389 = vpop.f32.mrb[0].mxu0
      %v4390 = vadd.f32 0.0, %v4389
      %v4391 = vpop.f32.mrb[0].mxu0
      %v4392 = vpop.f32.mrb[0].mxu0
      %v4393 = vadd.f32 0.0, %v4392
      %v4394 = vpop.f32.mrb[0].mxu0
      %4395 = vmatprep.mubr.bf16.mxu0 0
      %4396 = vmatmul.mubr.bf16.gmra.mrb[0].mxu0 %v4160
      %v4397 = vpop.f32.mrb[0].mxu0
      %v4398 = vadd.f32 0.0, %v4397
      %v4399 = vpop.f32.mrb[0].mxu0
      %v4400 = vpop.f32.mrb[0].mxu0
      %v4401 = vadd.f32 0.0, %v4400
      %v4402 = vpop.f32.mrb[0].mxu0
      %4403 = vmatprep.mubr.bf16.mxu0 0
      %4404 = vmatmul.mubr.bf16.gmra.mrb[0].mxu0 %v4162
      %v4405 = vpop.f32.mrb[0].mxu0
      %v4406 = vadd.f32 0.0, %v4405
      %v4407 = vpop.f32.mrb[0].mxu0
      %v4408 = vpop.f32.mrb[0].mxu0
      %v4409 = vadd.f32 0.0, %v4408
      %v4410 = vpop.f32.mrb[0].mxu0
      %4411 = vmatprep.mubr.bf16.mxu0 0
      %4412 = vmatmul.mubr.bf16.gmra.mrb[0].mxu0 %v4164
      %v4413 = vpop.f32.mrb[0].mxu0
      %v4414 = vadd.f32 0.0, %v4413
      %v4415 = vpop.f32.mrb[0].mxu0
      %v4416 = vpop.f32.mrb[0].mxu0
      %v4417 = vadd.f32 0.0, %v4416
      %v4418 = vpop.f32.mrb[0].mxu0
      %4419 = vmatprep.mubr.bf16.mxu0 0
      %4420 = vmatmul.mubr.bf16.gmra.mrb[0].mxu0 %v4166
      %v4421 = vpop.f32.mrb[0].mxu0
      %v4422 = vadd.f32 0.0, %v4421
      %v4423 = vpop.f32.mrb[0].mxu0
      %v4424 = vpop.f32.mrb[0].mxu0
      %v4425 = vadd.f32 0.0, %v4424
      %v4426 = vpop.f32.mrb[0].mxu0
      %4427 = vmatprep.mubr.bf16.mxu0 0
      %4428 = vmatmul.mubr.bf16.gmra.mrb[0].mxu0 %v4168
      %v4429 = vpop.f32.mrb[0].mxu0
      %v4430 = vadd.f32 0.0, %v4429
      %v4431 = vpop.f32.mrb[0].mxu0
      %v4432 = vpop.f32.mrb[0].mxu0
      %v4433 = vadd.f32 0.0, %v4432
      %v4434 = vpop.f32.mrb[0].mxu0
      %4435 = vmatprep.mubr.bf16.mxu0 0
      %4436 = vmatmul.mubr.bf16.gmra.mrb[0].mxu0 %v4170
      %v4437 = vpop.f32.mrb[0].mxu0
      %v4438 = vadd.f32 0.0, %v4437
      %v4439 = vpop.f32.mrb[0].mxu0
      %v4440 = vpop.f32.mrb[0].mxu0
      %v4441 = vadd.f32 0.0, %v4440
      %v4442 = vpop.f32.mrb[0].mxu0
      %4443 = vmatprep.mubr.bf16.mxu0 0
      %4444 = vmatmul.mubr.bf16.gmra.mrb[0].mxu0 %v4172
      %v4445 = vpop.f32.mrb[0].mxu0
      %v4446 = vadd.f32 0.0, %v4445
      %v4447 = vpop.f32.mrb[0].mxu0
      %v4448 = vpop.f32.mrb[0].mxu0
      %v4449 = vadd.f32 0.0, %v4448
      %v4450 = vpop.f32.mrb[0].mxu0
      %4451 = vmatprep.mubr.bf16.mxu0 0
      %4452 = vmatmul.mubr.bf16.gmra.mrb[0].mxu0 %v4174
      %v4453 = vpop.f32.mrb[0].mxu0
      %v4454 = vadd.f32 0.0, %v4453
      %v4455 = vpop.f32.mrb[0].mxu0
      %v4456 = vpop.f32.mrb[0].mxu0
      %v4457 = vadd.f32 0.0, %v4456
      %v4458 = vpop.f32.mrb[0].mxu0
      %4459 = vmatprep.mubr.bf16.mxu0 0
      %4460 = vmatmul.mubr.bf16.gmra.mrb[0].mxu0 %v4176
      %v4461 = vpop.f32.mrb[0].mxu0
      %v4462 = vadd.f32 0.0, %v4461
      %v4463 = vpop.f32.mrb[0].mxu0
      %v4464 = vpop.f32.mrb[0].mxu0
      %v4465 = vadd.f32 0.0, %v4464
      %v4466 = vpop.f32.mrb[0].mxu0
      %4467 = vmatprep.mubr.bf16.mxu0 0
      %4468 = vmatmul.mubr.bf16.gmra.mrb[0].mxu0 %v4178
      %v4469 = vpop.f32.mrb[0].mxu0
      %v4470 = vadd.f32 0.0, %v4469
      %v4471 = vpop.f32.mrb[0].mxu0
      %v4472 = vpop.f32.mrb[0].mxu0
      %v4473 = vadd.f32 0.0, %v4472
      %v4474 = vpop.f32.mrb[0].mxu0
      %4475 = vdwg.mxu0
      %v4476 = vadd.f32 %v3942, %v4286
      %v4477 = vadd.f32 %v3943, %v4289
      %v4478 = vadd.f32 %v3944, %v4294
      %v4479 = vadd.f32 %v3945, %v4297
      %v4480 = vadd.f32 %v3946, %v4302
      %v4481 = vadd.f32 %v3947, %v4305
      %v4482 = vadd.f32 %v3948, %v4310
      %v4483 = vadd.f32 %v3949, %v4313
      %v4484 = vadd.f32 %v3950, %v4318
      %v4485 = vadd.f32 %v3951, %v4321
      %v4486 = vadd.f32 %v3952, %v4326
      %v4487 = vadd.f32 %v3953, %v4329
      %v4488 = vadd.f32 %v3954, %v4334
      %v4489 = vadd.f32 %v3955, %v4337
      %v4490 = vadd.f32 %v3956, %v4342
      %v4491 = vadd.f32 %v3957, %v4345
      %v4492 = vadd.f32 %v3958, %v4350
      %v4493 = vadd.f32 %v3959, %v4353
      %v4494 = vadd.f32 %v3960, %v4358
      %v4495 = vadd.f32 %v3961, %v4361
      %v4496 = vadd.f32 %v3962, %v4366
      %v4497 = vadd.f32 %v3963, %v4369
      %v4498 = vadd.f32 %v3964, %v4374
      %v4499 = vadd.f32 %v3965, %v4377
      %v4500 = vadd.f32 %v3966, %v4382
      %v4501 = vadd.f32 %v3967, %v4385
      %v4502 = vadd.f32 %v3968, %v4390
      %v4503 = vadd.f32 %v3969, %v4393
      %v4504 = vadd.f32 %v3970, %v4398
      %v4505 = vadd.f32 %v3971, %v4401
      %v4506 = vadd.f32 %v3972, %v4406
      %v4507 = vadd.f32 %v3973, %v4409
      %v4508 = vadd.f32 %v3974, %v4414
      %v4509 = vadd.f32 %v3975, %v4417
      %v4510 = vadd.f32 %v3976, %v4422
      %v4511 = vadd.f32 %v3977, %v4425
      %v4512 = vadd.f32 %v3978, %v4430
      %v4513 = vadd.f32 %v3979, %v4433
      %v4514 = vadd.f32 %v3980, %v4438
      %v4515 = vadd.f32 %v3981, %v4441
      %v4516 = vadd.f32 %v3982, %v4446
      %v4517 = vadd.f32 %v3983, %v4449
      %v4518 = vadd.f32 %v3984, %v4454
      %v4519 = vadd.f32 %v3985, %v4457
      %v4520 = vadd.f32 %v3986, %v4462
      %v4521 = vadd.f32 %v3987, %v4465
      %v4522 = vadd.f32 %v3988, %v4470
      %v4523 = vadd.f32 %v3989, %v4473
      %4524 = vst [vmem:[#allocation2] sm:$0xff] %v4476
      %4525 = vst [vmem:[#allocation2 + $0x8] sm:$0xff] %v4477
      %4526 = vst [vmem:[#allocation2 + $0x10] sm:$0xff] %v4478
      %4527 = vst [vmem:[#allocation2 + $0x18] sm:$0xff] %v4479
      %4528 = vst [vmem:[#allocation2 + $0x20] sm:$0xff] %v4480
      %4529 = vst [vmem:[#allocation2 + $0x28] sm:$0xff] %v4481
      %4530 = vst [vmem:[#allocation2 + $0x30] sm:$0xff] %v4482
      %4531 = vst [vmem:[#allocation2 + $0x38] sm:$0xff] %v4483
      %4532 = vst [vmem:[#allocation2 + $0x40] sm:$0xff] %v4484
      %4533 = vst [vmem:[#allocation2 + $0x48] sm:$0xff] %v4485
      %4534 = vst [vmem:[#allocation2 + $0x50] sm:$0xff] %v4486
      %4535 = vst [vmem:[#allocation2 + $0x58] sm:$0xff] %v4487
      %4536 = vst [vmem:[#allocation2 + $0x60] sm:$0xff] %v4488
      %4537 = vst [vmem:[#allocation2 + $0x68] sm:$0xff] %v4489
      %4538 = vst [vmem:[#allocation2 + $0x70] sm:$0xff] %v4490
      %4539 = vst [vmem:[#allocation2 + $0x78] sm:$0xff] %v4491
      %4540 = vst [vmem:[#allocation2 + $0x80] sm:$0xff] %v4492
      %4541 = vst [vmem:[#allocation2 + $0x88] sm:$0xff] %v4493
      %4542 = vst [vmem:[#allocation2 + $0x90] sm:$0xff] %v4494
      %4543 = vst [vmem:[#allocation2 + $0x98] sm:$0xff] %v4495
      %4544 = vst [vmem:[#allocation2 + $0xa0] sm:$0xff] %v4496
      %4545 = vst [vmem:[#allocation2 + $0xa8] sm:$0xff] %v4497
      %4546 = vst [vmem:[#allocation2 + $0xb0] sm:$0xff] %v4498
      %4547 = vst [vmem:[#allocation2 + $0xb8] sm:$0xff] %v4499
      %4548 = vst [vmem:[#allocation2 + $0xc0] sm:$0xff] %v4500
      %4549 = vst [vmem:[#allocation2 + $0xc8] sm:$0xff] %v4501
      %4550 = vst [vmem:[#allocation2 + $0xd0] sm:$0xff] %v4502
      %4551 = vst [vmem:[#allocation2 + $0xd8] sm:$0xff] %v4503
      %4552 = vst [vmem:[#allocation2 + $0xe0] sm:$0xff] %v4504
      %4553 = vst [vmem:[#allocation2 + $0xe8] sm:$0xff] %v4505
      %4554 = vst [vmem:[#allocation2 + $0xf0] sm:$0xff] %v4506
      %4555 = vst [vmem:[#allocation2 + $0xf8] sm:$0xff] %v4507
      %4556 = vst [vmem:[#allocation2 + $0x100] sm:$0xff] %v4508
      %4557 = vst [vmem:[#allocation2 + $0x108] sm:$0xff] %v4509
      %4558 = vst [vmem:[#allocation2 + $0x110] sm:$0xff] %v4510
      %4559 = vst [vmem:[#allocation2 + $0x118] sm:$0xff] %v4511
      %4560 = vst [vmem:[#allocation2 + $0x120] sm:$0xff] %v4512
      %4561 = vst [vmem:[#allocation2 + $0x128] sm:$0xff] %v4513
      %4562 = vst [vmem:[#allocation2 + $0x130] sm:$0xff] %v4514
      %4563 = vst [vmem:[#allocation2 + $0x138] sm:$0xff] %v4515
      %4564 = vst [vmem:[#allocation2 + $0x140] sm:$0xff] %v4516
      %4565 = vst [vmem:[#allocation2 + $0x148] sm:$0xff] %v4517
      %4566 = vst [vmem:[#allocation2 + $0x150] sm:$0xff] %v4518
      %4567 = vst [vmem:[#allocation2 + $0x158] sm:$0xff] %v4519
      %4568 = vst [vmem:[#allocation2 + $0x160] sm:$0xff] %v4520
      %4569 = vst [vmem:[#allocation2 + $0x168] sm:$0xff] %v4521
      %4570 = vst [vmem:[#allocation2 + $0x170] sm:$0xff] %v4522
      %4571 = vst [vmem:[#allocation2 + $0x178] sm:$0xff] %v4523
      %v4572 = vld [vmem:[%s235 + $0x18] sm:$0xf]
      %v4573 = vld [vmem:[%s235 + $0x1c] sm:$0xf]
      %v4574 = vld [vmem:[%s235 + $0x20] sm:$0xf]
      %v4575 = vld [vmem:[%s235 + $0x24] sm:$0xf]
      %v4576 = vld [vmem:[%s235 + $0x28] sm:$0xf]
      %v4577 = vld [vmem:[%s235 + $0x2c] sm:$0xf]
      %v4578 = vld [vmem:[%s235 + $0x30] sm:$0xf]
      %v4579 = vld [vmem:[%s235 + $0x34] sm:$0xf]
      %v4580 = vld [vmem:[%s235 + $0x38] sm:$0xf]
      %v4581 = vld [vmem:[%s235 + $0x3c] sm:$0xf]
      %v4582 = vld [vmem:[%s235 + $0x40] sm:$0xf]
      %v4583 = vld [vmem:[%s235 + $0x44] sm:$0xf]
      %v4584 = vld [vmem:[%s235 + $0x48] sm:$0xf]
      %v4585 = vld [vmem:[%s235 + $0x4c] sm:$0xf]
      %v4586 = vld [vmem:[%s235 + $0x50] sm:$0xf]
      %v4587 = vld [vmem:[%s235 + $0x54] sm:$0xf]
      %v4588 = vld [vmem:[%s235 + $0x58] sm:$0xf]
      %v4589 = vld [vmem:[%s235 + $0x5c] sm:$0xf]
      %v4590 = vld [vmem:[%s235 + $0x60] sm:$0xf]
      %v4591 = vld [vmem:[%s235 + $0x64] sm:$0xf]
      %v4592 = vld [vmem:[%s235 + $0x68] sm:$0xf]
      %v4593 = vld [vmem:[%s235 + $0x6c] sm:$0xf]
      %v4594 = vld [vmem:[%s235 + $0x70] sm:$0xf]
      %v4595 = vld [vmem:[%s235 + $0x74] sm:$0xf]
      %v4596 = vld [vmem:[%s235 + $0x78] sm:$0xf]
      %v4597 = vld [vmem:[%s235 + $0x7c] sm:$0xf]
      %v4598 = vld [vmem:[%s235 + $0x80] sm:$0xf]
      %v4599 = vld [vmem:[%s235 + $0x84] sm:$0xf]
      %v4600 = vld [vmem:[%s235 + $0x88] sm:$0xf]
      %v4601 = vld [vmem:[%s235 + $0x8c] sm:$0xf]
      %v4602 = vld [vmem:[%s235 + $0x90] sm:$0xf]
      %v4603 = vld [vmem:[%s235 + $0x94] sm:$0xf]
      %v4604 = vld [vmem:[%s235 + $0x98] sm:$0xf]
      %v4605 = vld [vmem:[%s235 + $0x9c] sm:$0xf]
      %v4606 = vld [vmem:[%s235 + $0xa0] sm:$0xf]
      %v4607 = vld [vmem:[%s235 + $0xa4] sm:$0xf]
      %v4608 = vld [vmem:[%s235 + $0xa8] sm:$0xf]
      %v4609 = vld [vmem:[%s235 + $0xac] sm:$0xf]
      %v4610 = vld [vmem:[%s235 + $0xb0] sm:$0xf]
      %v4611 = vld [vmem:[%s235 + $0xb4] sm:$0xf]
      %v4612 = vld [vmem:[%s235 + $0xb8] sm:$0xf]
      %v4613 = vld [vmem:[%s235 + $0xbc] sm:$0xf]
      %v4614 = vld [vmem:[%s235 + $0xc0] sm:$0xf]
      %v4615 = vld [vmem:[%s235 + $0xc4] sm:$0xf]
      %v4616 = vld [vmem:[%s235 + $0xc8] sm:$0xf]
      %v4617 = vld [vmem:[%s235 + $0xcc] sm:$0xf]
      %v4618 = vld [vmem:[%s235 + $0xd0] sm:$0xf]
      %v4619 = vld [vmem:[%s235 + $0xd4] sm:$0xf]
      %v4620 = vld [vmem:[#allocation2] sm:$0xff]
      %v4621 = vld [vmem:[#allocation2 + $0x8] sm:$0xff]
      %v4622 = vld [vmem:[#allocation2 + $0x10] sm:$0xff]
      %v4623 = vld [vmem:[#allocation2 + $0x18] sm:$0xff]
      %v4624 = vld [vmem:[#allocation2 + $0x20] sm:$0xff]
      %v4625 = vld [vmem:[#allocation2 + $0x28] sm:$0xff]
      %v4626 = vld [vmem:[#allocation2 + $0x30] sm:$0xff]
      %v4627 = vld [vmem:[#allocation2 + $0x38] sm:$0xff]
      %v4628 = vld [vmem:[#allocation2 + $0x40] sm:$0xff]
      %v4629 = vld [vmem:[#allocation2 + $0x48] sm:$0xff]
      %v4630 = vld [vmem:[#allocation2 + $0x50] sm:$0xff]
      %v4631 = vld [vmem:[#allocation2 + $0x58] sm:$0xff]
      %v4632 = vld [vmem:[#allocation2 + $0x60] sm:$0xff]
      %v4633 = vld [vmem:[#allocation2 + $0x68] sm:$0xff]
      %v4634 = vld [vmem:[#allocation2 + $0x70] sm:$0xff]
      %v4635 = vld [vmem:[#allocation2 + $0x78] sm:$0xff]
      %v4636 = vld [vmem:[#allocation2 + $0x80] sm:$0xff]
      %v4637 = vld [vmem:[#allocation2 + $0x88] sm:$0xff]
      %v4638 = vld [vmem:[#allocation2 + $0x90] sm:$0xff]
      %v4639 = vld [vmem:[#allocation2 + $0x98] sm:$0xff]
      %v4640 = vld [vmem:[#allocation2 + $0xa0] sm:$0xff]
      %v4641 = vld [vmem:[#allocation2 + $0xa8] sm:$0xff]
      %v4642 = vld [vmem:[#allocation2 + $0xb0] sm:$0xff]
      %v4643 = vld [vmem:[#allocation2 + $0xb8] sm:$0xff]
      %v4644 = vld [vmem:[#allocation2 + $0xc0] sm:$0xff]
      %v4645 = vld [vmem:[#allocation2 + $0xc8] sm:$0xff]
      %v4646 = vld [vmem:[#allocation2 + $0xd0] sm:$0xff]
      %v4647 = vld [vmem:[#allocation2 + $0xd8] sm:$0xff]
      %v4648 = vld [vmem:[#allocation2 + $0xe0] sm:$0xff]
      %v4649 = vld [vmem:[#allocation2 + $0xe8] sm:$0xff]
      %v4650 = vld [vmem:[#allocation2 + $0xf0] sm:$0xff]
      %v4651 = vld [vmem:[#allocation2 + $0xf8] sm:$0xff]
      %v4652 = vld [vmem:[#allocation2 + $0x100] sm:$0xff]
      %v4653 = vld [vmem:[#allocation2 + $0x108] sm:$0xff]
      %v4654 = vld [vmem:[#allocation2 + $0x110] sm:$0xff]
      %v4655 = vld [vmem:[#allocation2 + $0x118] sm:$0xff]
      %v4656 = vld [vmem:[#allocation2 + $0x120] sm:$0xff]
      %v4657 = vld [vmem:[#allocation2 + $0x128] sm:$0xff]
      %v4658 = vld [vmem:[#allocation2 + $0x130] sm:$0xff]
      %v4659 = vld [vmem:[#allocation2 + $0x138] sm:$0xff]
      %v4660 = vld [vmem:[#allocation2 + $0x140] sm:$0xff]
      %v4661 = vld [vmem:[#allocation2 + $0x148] sm:$0xff]
      %v4662 = vld [vmem:[#allocation2 + $0x150] sm:$0xff]
      %v4663 = vld [vmem:[#allocation2 + $0x158] sm:$0xff]
      %v4664 = vld [vmem:[#allocation2 + $0x160] sm:$0xff]
      %v4665 = vld [vmem:[#allocation2 + $0x168] sm:$0xff]
      %v4666 = vld [vmem:[#allocation2 + $0x170] sm:$0xff]
      %v4667 = vld [vmem:[#allocation2 + $0x178] sm:$0xff]
      %s4668 = scalar_lea.vmem %s243, 384
      %v4669 = vld [vmem:[%s4668] sm:$0xf]
      %v4670 = vld [vmem:[%s4668 + $0x4] sm:$0xf]
      %v4671 = vld [vmem:[%s4668 + $0x8] sm:$0xf]
      %v4672 = vld [vmem:[%s4668 + $0xc] sm:$0xf]
      %v4673 = vld [vmem:[%s4668 + $0x10] sm:$0xf]
      %v4674 = vld [vmem:[%s4668 + $0x14] sm:$0xf]
      %v4675 = vld [vmem:[%s4668 + $0x18] sm:$0xf]
      %v4676 = vld [vmem:[%s4668 + $0x1c] sm:$0xf]
      %v4677 = vld [vmem:[%s4668 + $0x20] sm:$0xf]
      %v4678 = vld [vmem:[%s4668 + $0x24] sm:$0xf]
      %v4679 = vld [vmem:[%s4668 + $0x28] sm:$0xf]
      %v4680 = vld [vmem:[%s4668 + $0x2c] sm:$0xf]
      %v4681 = vld [vmem:[%s4668 + $0x30] sm:$0xf]
      %v4682 = vld [vmem:[%s4668 + $0x34] sm:$0xf]
      %v4683 = vld [vmem:[%s4668 + $0x38] sm:$0xf]
      %v4684 = vld [vmem:[%s4668 + $0x3c] sm:$0xf]
      %v4733 = vunpack.c.l.b16 %v4572
      %v4734 = vunpack.c.l.b16 %v4573
      %v4735 = vunpack.c.l.b16 %v4574
      %v4736 = vunpack.c.l.b16 %v4575
      %v4737 = vunpack.c.l.b16 %v4576
      %v4738 = vunpack.c.l.b16 %v4577
      %v4739 = vunpack.c.l.b16 %v4578
      %v4740 = vunpack.c.l.b16 %v4579
      %v4741 = vunpack.c.l.b16 %v4580
      %v4742 = vunpack.c.l.b16 %v4581
      %v4743 = vunpack.c.l.b16 %v4582
      %v4744 = vunpack.c.l.b16 %v4583
      %v4745 = vunpack.c.l.b16 %v4584
      %v4746 = vunpack.c.l.b16 %v4585
      %v4747 = vunpack.c.l.b16 %v4586
      %v4748 = vunpack.c.l.b16 %v4587
      %v4749 = vunpack.c.l.b16 %v4588
      %v4750 = vunpack.c.l.b16 %v4589
      %v4751 = vunpack.c.l.b16 %v4590
      %v4752 = vunpack.c.l.b16 %v4591
      %v4753 = vunpack.c.l.b16 %v4592
      %v4754 = vunpack.c.l.b16 %v4593
      %v4755 = vunpack.c.l.b16 %v4594
      %v4756 = vunpack.c.l.b16 %v4595
      %v4757 = vunpack.c.l.b16 %v4596
      %v4758 = vunpack.c.l.b16 %v4597
      %v4759 = vunpack.c.l.b16 %v4598
      %v4760 = vunpack.c.l.b16 %v4599
      %v4761 = vunpack.c.l.b16 %v4600
      %v4762 = vunpack.c.l.b16 %v4601
      %v4763 = vunpack.c.l.b16 %v4602
      %v4764 = vunpack.c.l.b16 %v4603
      %v4765 = vunpack.c.l.b16 %v4604
      %v4766 = vunpack.c.l.b16 %v4605
      %v4767 = vunpack.c.l.b16 %v4606
      %v4768 = vunpack.c.l.b16 %v4607
      %v4769 = vunpack.c.l.b16 %v4608
      %v4770 = vunpack.c.l.b16 %v4609
      %v4771 = vunpack.c.l.b16 %v4610
      %v4772 = vunpack.c.l.b16 %v4611
      %v4773 = vunpack.c.l.b16 %v4612
      %v4774 = vunpack.c.l.b16 %v4613
      %v4775 = vunpack.c.l.b16 %v4614
      %v4776 = vunpack.c.l.b16 %v4615
      %v4777 = vunpack.c.l.b16 %v4616
      %v4778 = vunpack.c.l.b16 %v4617
      %v4779 = vunpack.c.l.b16 %v4618
      %v4780 = vunpack.c.l.b16 %v4619
      %v4781 = vpack.c.b16 %v4734, %v4733
      %v4782 = vpack.c.b16 %v4736, %v4735
      %v4783 = vpack.c.b16 %v4738, %v4737
      %v4784 = vpack.c.b16 %v4740, %v4739
      %v4785 = vpack.c.b16 %v4742, %v4741
      %v4786 = vpack.c.b16 %v4744, %v4743
      %v4787 = vpack.c.b16 %v4746, %v4745
      %v4788 = vpack.c.b16 %v4748, %v4747
      %v4789 = vpack.c.b16 %v4750, %v4749
      %v4790 = vpack.c.b16 %v4752, %v4751
      %v4791 = vpack.c.b16 %v4754, %v4753
      %v4792 = vpack.c.b16 %v4756, %v4755
      %v4793 = vpack.c.b16 %v4758, %v4757
      %v4794 = vpack.c.b16 %v4760, %v4759
      %v4795 = vpack.c.b16 %v4762, %v4761
      %v4796 = vpack.c.b16 %v4764, %v4763
      %v4797 = vpack.c.b16 %v4766, %v4765
      %v4798 = vpack.c.b16 %v4768, %v4767
      %v4799 = vpack.c.b16 %v4770, %v4769
      %v4800 = vpack.c.b16 %v4772, %v4771
      %v4801 = vpack.c.b16 %v4774, %v4773
      %v4802 = vpack.c.b16 %v4776, %v4775
      %v4803 = vpack.c.b16 %v4778, %v4777
      %v4804 = vpack.c.b16 %v4780, %v4779
      %v4845 = vunpack.c.l.b16 %v4669
      %v4846 = vunpack.c.l.b16 %v4670
      %v4847 = vunpack.c.l.b16 %v4671
      %v4848 = vunpack.c.l.b16 %v4672
      %v4849 = vunpack.c.l.b16 %v4673
      %v4850 = vunpack.c.l.b16 %v4674
      %v4851 = vunpack.c.l.b16 %v4675
      %v4852 = vunpack.c.l.b16 %v4676
      %v4853 = vunpack.c.l.b16 %v4677
      %v4854 = vunpack.c.l.b16 %v4678
      %v4855 = vunpack.c.l.b16 %v4679
      %v4856 = vunpack.c.l.b16 %v4680
      %v4857 = vunpack.c.l.b16 %v4681
      %v4858 = vunpack.c.l.b16 %v4682
      %v4859 = vunpack.c.l.b16 %v4683
      %v4860 = vunpack.c.l.b16 %v4684
      %v4861 = vpack.c.b16 %v4846, %v4845
      %v4862 = vpack.c.b16 %v4848, %v4847
      %v4863 = vpack.c.b16 %v4850, %v4849
      %v4864 = vpack.c.b16 %v4852, %v4851
      %v4865 = vpack.c.b16 %v4854, %v4853
      %v4866 = vpack.c.b16 %v4856, %v4855
      %v4867 = vpack.c.b16 %v4858, %v4857
      %v4868 = vpack.c.b16 %v4860, %v4859
      %4877 = vmatprep.subr.bf16.mxu0 0
      %4878 = vmatpush1.bf16.msra.mxu0 %v4861
      %4879 = vmatprep.subr.bf16.mxu0 0
      %4880 = vmatpush1.bf16.msra.mxu0 %v4862
      %4881 = vmatprep.subr.bf16.mxu0 0
      %4882 = vmatpush1.bf16.msra.mxu0 %v4863
      %4883 = vmatprep.subr.bf16.mxu0 0
      %4884 = vmatpush1.bf16.msra.mxu0 %v4864
      %4885 = vmatprep.subr.bf16.mxu0 0
      %4886 = vmatpush1.bf16.msra.mxu0 %v4865
      %4887 = vmatprep.subr.bf16.mxu0 0
      %4888 = vmatpush1.bf16.msra.mxu0 %v4866
      %4889 = vmatprep.subr.bf16.mxu0 0
      %4890 = vmatpush1.bf16.msra.mxu0 %v4867
      %4891 = vmatprep.subr.bf16.mxu0 0
      %4892 = vmatpush1.bf16.msra.mxu0 %v4868
      %4893 = vmatprep.subr.bf16.mxu0 0
      %4894 = vmatpush1.bf16.msra.mxu0 0
      %4895 = vmatprep.subr.bf16.mxu0 0
      %4896 = vmatpush1.bf16.msra.mxu0 0
      %4897 = vmatprep.subr.bf16.mxu0 0
      %4898 = vmatpush1.bf16.msra.mxu0 0
      %4899 = vmatprep.subr.bf16.mxu0 0
      %4900 = vmatpush1.bf16.msra.mxu0 0
      %4901 = vmatprep.subr.bf16.mxu0 0
      %4902 = vmatpush1.bf16.msra.mxu0 0
      %4903 = vmatprep.subr.bf16.mxu0 0
      %4904 = vmatpush1.bf16.msra.mxu0 0
      %4905 = vmatprep.subr.bf16.mxu0 0
      %4906 = vmatpush1.bf16.msra.mxu0 0
      %4907 = vmatprep.subr.bf16.mxu0 0
      %4908 = vmatpush1.bf16.msra.mxu0 0
      %4909 = vmatprep.mubr.bf16.mxu0 0
      %4910 = vmatmul.mubr.bf16.gmra.mrb[0].mxu0 %v4781
      %v4911 = vpop.f32.mrb[0].mxu0
      %v4912 = vadd.f32 0.0, %v4911
      %v4913 = vpop.f32.mrb[0].mxu0
      %v4914 = vpop.f32.mrb[0].mxu0
      %v4915 = vadd.f32 0.0, %v4914
      %v4916 = vpop.f32.mrb[0].mxu0
      %4917 = vmatprep.mubr.bf16.mxu0 0
      %4918 = vmatmul.mubr.bf16.gmra.mrb[0].mxu0 %v4782
      %v4919 = vpop.f32.mrb[0].mxu0
      %v4920 = vadd.f32 0.0, %v4919
      %v4921 = vpop.f32.mrb[0].mxu0
      %v4922 = vpop.f32.mrb[0].mxu0
      %v4923 = vadd.f32 0.0, %v4922
      %v4924 = vpop.f32.mrb[0].mxu0
      %4925 = vmatprep.mubr.bf16.mxu0 0
      %4926 = vmatmul.mubr.bf16.gmra.mrb[0].mxu0 %v4783
      %v4927 = vpop.f32.mrb[0].mxu0
      %v4928 = vadd.f32 0.0, %v4927
      %v4929 = vpop.f32.mrb[0].mxu0
      %v4930 = vpop.f32.mrb[0].mxu0
      %v4931 = vadd.f32 0.0, %v4930
      %v4932 = vpop.f32.mrb[0].mxu0
      %4933 = vmatprep.mubr.bf16.mxu0 0
      %4934 = vmatmul.mubr.bf16.gmra.mrb[0].mxu0 %v4784
      %v4935 = vpop.f32.mrb[0].mxu0
      %v4936 = vadd.f32 0.0, %v4935
      %v4937 = vpop.f32.mrb[0].mxu0
      %v4938 = vpop.f32.mrb[0].mxu0
      %v4939 = vadd.f32 0.0, %v4938
      %v4940 = vpop.f32.mrb[0].mxu0
      %4941 = vmatprep.mubr.bf16.mxu0 0
      %4942 = vmatmul.mubr.bf16.gmra.mrb[0].mxu0 %v4785
      %v4943 = vpop.f32.mrb[0].mxu0
      %v4944 = vadd.f32 0.0, %v4943
      %v4945 = vpop.f32.mrb[0].mxu0
      %v4946 = vpop.f32.mrb[0].mxu0
      %v4947 = vadd.f32 0.0, %v4946
      %v4948 = vpop.f32.mrb[0].mxu0
      %4949 = vmatprep.mubr.bf16.mxu0 0
      %4950 = vmatmul.mubr.bf16.gmra.mrb[0].mxu0 %v4786
      %v4951 = vpop.f32.mrb[0].mxu0
      %v4952 = vadd.f32 0.0, %v4951
      %v4953 = vpop.f32.mrb[0].mxu0
      %v4954 = vpop.f32.mrb[0].mxu0
      %v4955 = vadd.f32 0.0, %v4954
      %v4956 = vpop.f32.mrb[0].mxu0
      %4957 = vmatprep.mubr.bf16.mxu0 0
      %4958 = vmatmul.mubr.bf16.gmra.mrb[0].mxu0 %v4787
      %v4959 = vpop.f32.mrb[0].mxu0
      %v4960 = vadd.f32 0.0, %v4959
      %v4961 = vpop.f32.mrb[0].mxu0
      %v4962 = vpop.f32.mrb[0].mxu0
      %v4963 = vadd.f32 0.0, %v4962
      %v4964 = vpop.f32.mrb[0].mxu0
      %4965 = vmatprep.mubr.bf16.mxu0 0
      %4966 = vmatmul.mubr.bf16.gmra.mrb[0].mxu0 %v4788
      %v4967 = vpop.f32.mrb[0].mxu0
      %v4968 = vadd.f32 0.0, %v4967
      %v4969 = vpop.f32.mrb[0].mxu0
      %v4970 = vpop.f32.mrb[0].mxu0
      %v4971 = vadd.f32 0.0, %v4970
      %v4972 = vpop.f32.mrb[0].mxu0
      %4973 = vmatprep.mubr.bf16.mxu0 0
      %4974 = vmatmul.mubr.bf16.gmra.mrb[0].mxu0 %v4789
      %v4975 = vpop.f32.mrb[0].mxu0
      %v4976 = vadd.f32 0.0, %v4975
      %v4977 = vpop.f32.mrb[0].mxu0
      %v4978 = vpop.f32.mrb[0].mxu0
      %v4979 = vadd.f32 0.0, %v4978
      %v4980 = vpop.f32.mrb[0].mxu0
      %4981 = vmatprep.mubr.bf16.mxu0 0
      %4982 = vmatmul.mubr.bf16.gmra.mrb[0].mxu0 %v4790
      %v4983 = vpop.f32.mrb[0].mxu0
      %v4984 = vadd.f32 0.0, %v4983
      %v4985 = vpop.f32.mrb[0].mxu0
      %v4986 = vpop.f32.mrb[0].mxu0
      %v4987 = vadd.f32 0.0, %v4986
      %v4988 = vpop.f32.mrb[0].mxu0
      %4989 = vmatprep.mubr.bf16.mxu0 0
      %4990 = vmatmul.mubr.bf16.gmra.mrb[0].mxu0 %v4791
      %v4991 = vpop.f32.mrb[0].mxu0
      %v4992 = vadd.f32 0.0, %v4991
      %v4993 = vpop.f32.mrb[0].mxu0
      %v4994 = vpop.f32.mrb[0].mxu0
      %v4995 = vadd.f32 0.0, %v4994
      %v4996 = vpop.f32.mrb[0].mxu0
      %4997 = vmatprep.mubr.bf16.mxu0 0
      %4998 = vmatmul.mubr.bf16.gmra.mrb[0].mxu0 %v4792
      %v4999 = vpop.f32.mrb[0].mxu0
      %v5000 = vadd.f32 0.0, %v4999
      %v5001 = vpop.f32.mrb[0].mxu0
      %v5002 = vpop.f32.mrb[0].mxu0
      %v5003 = vadd.f32 0.0, %v5002
      %v5004 = vpop.f32.mrb[0].mxu0
      %5005 = vmatprep.mubr.bf16.mxu0 0
      %5006 = vmatmul.mubr.bf16.gmra.mrb[0].mxu0 %v4793
      %v5007 = vpop.f32.mrb[0].mxu0
      %v5008 = vadd.f32 0.0, %v5007
      %v5009 = vpop.f32.mrb[0].mxu0
      %v5010 = vpop.f32.mrb[0].mxu0
      %v5011 = vadd.f32 0.0, %v5010
      %v5012 = vpop.f32.mrb[0].mxu0
      %5013 = vmatprep.mubr.bf16.mxu0 0
      %5014 = vmatmul.mubr.bf16.gmra.mrb[0].mxu0 %v4794
      %v5015 = vpop.f32.mrb[0].mxu0
      %v5016 = vadd.f32 0.0, %v5015
      %v5017 = vpop.f32.mrb[0].mxu0
      %v5018 = vpop.f32.mrb[0].mxu0
      %v5019 = vadd.f32 0.0, %v5018
      %v5020 = vpop.f32.mrb[0].mxu0
      %5021 = vmatprep.mubr.bf16.mxu0 0
      %5022 = vmatmul.mubr.bf16.gmra.mrb[0].mxu0 %v4795
      %v5023 = vpop.f32.mrb[0].mxu0
      %v5024 = vadd.f32 0.0, %v5023
      %v5025 = vpop.f32.mrb[0].mxu0
      %v5026 = vpop.f32.mrb[0].mxu0
      %v5027 = vadd.f32 0.0, %v5026
      %v5028 = vpop.f32.mrb[0].mxu0
      %5029 = vmatprep.mubr.bf16.mxu0 0
      %5030 = vmatmul.mubr.bf16.gmra.mrb[0].mxu0 %v4796
      %v5031 = vpop.f32.mrb[0].mxu0
      %v5032 = vadd.f32 0.0, %v5031
      %v5033 = vpop.f32.mrb[0].mxu0
      %v5034 = vpop.f32.mrb[0].mxu0
      %v5035 = vadd.f32 0.0, %v5034
      %v5036 = vpop.f32.mrb[0].mxu0
      %5037 = vmatprep.mubr.bf16.mxu0 0
      %5038 = vmatmul.mubr.bf16.gmra.mrb[0].mxu0 %v4797
      %v5039 = vpop.f32.mrb[0].mxu0
      %v5040 = vadd.f32 0.0, %v5039
      %v5041 = vpop.f32.mrb[0].mxu0
      %v5042 = vpop.f32.mrb[0].mxu0
      %v5043 = vadd.f32 0.0, %v5042
      %v5044 = vpop.f32.mrb[0].mxu0
      %5045 = vmatprep.mubr.bf16.mxu0 0
      %5046 = vmatmul.mubr.bf16.gmra.mrb[0].mxu0 %v4798
      %v5047 = vpop.f32.mrb[0].mxu0
      %v5048 = vadd.f32 0.0, %v5047
      %v5049 = vpop.f32.mrb[0].mxu0
      %v5050 = vpop.f32.mrb[0].mxu0
      %v5051 = vadd.f32 0.0, %v5050
      %v5052 = vpop.f32.mrb[0].mxu0
      %5053 = vmatprep.mubr.bf16.mxu0 0
      %5054 = vmatmul.mubr.bf16.gmra.mrb[0].mxu0 %v4799
      %v5055 = vpop.f32.mrb[0].mxu0
      %v5056 = vadd.f32 0.0, %v5055
      %v5057 = vpop.f32.mrb[0].mxu0
      %v5058 = vpop.f32.mrb[0].mxu0
      %v5059 = vadd.f32 0.0, %v5058
      %v5060 = vpop.f32.mrb[0].mxu0
      %5061 = vmatprep.mubr.bf16.mxu0 0
      %5062 = vmatmul.mubr.bf16.gmra.mrb[0].mxu0 %v4800
      %v5063 = vpop.f32.mrb[0].mxu0
      %v5064 = vadd.f32 0.0, %v5063
      %v5065 = vpop.f32.mrb[0].mxu0
      %v5066 = vpop.f32.mrb[0].mxu0
      %v5067 = vadd.f32 0.0, %v5066
      %v5068 = vpop.f32.mrb[0].mxu0
      %5069 = vmatprep.mubr.bf16.mxu0 0
      %5070 = vmatmul.mubr.bf16.gmra.mrb[0].mxu0 %v4801
      %v5071 = vpop.f32.mrb[0].mxu0
      %v5072 = vadd.f32 0.0, %v5071
      %v5073 = vpop.f32.mrb[0].mxu0
      %v5074 = vpop.f32.mrb[0].mxu0
      %v5075 = vadd.f32 0.0, %v5074
      %v5076 = vpop.f32.mrb[0].mxu0
      %5077 = vmatprep.mubr.bf16.mxu0 0
      %5078 = vmatmul.mubr.bf16.gmra.mrb[0].mxu0 %v4802
      %v5079 = vpop.f32.mrb[0].mxu0
      %v5080 = vadd.f32 0.0, %v5079
      %v5081 = vpop.f32.mrb[0].mxu0
      %v5082 = vpop.f32.mrb[0].mxu0
      %v5083 = vadd.f32 0.0, %v5082
      %v5084 = vpop.f32.mrb[0].mxu0
      %5085 = vmatprep.mubr.bf16.mxu0 0
      %5086 = vmatmul.mubr.bf16.gmra.mrb[0].mxu0 %v4803
      %v5087 = vpop.f32.mrb[0].mxu0
      %v5088 = vadd.f32 0.0, %v5087
      %v5089 = vpop.f32.mrb[0].mxu0
      %v5090 = vpop.f32.mrb[0].mxu0
      %v5091 = vadd.f32 0.0, %v5090
      %v5092 = vpop.f32.mrb[0].mxu0
      %5093 = vmatprep.mubr.bf16.mxu0 0
      %5094 = vmatmul.mubr.bf16.gmra.mrb[0].mxu0 %v4804
      %v5095 = vpop.f32.mrb[0].mxu0
      %v5096 = vadd.f32 0.0, %v5095
      %v5097 = vpop.f32.mrb[0].mxu0
      %v5098 = vpop.f32.mrb[0].mxu0
      %v5099 = vadd.f32 0.0, %v5098
      %v5100 = vpop.f32.mrb[0].mxu0
      %5101 = vdwg.mxu0
      %v5102 = vadd.f32 %v4620, %v4912
      %v5103 = vadd.f32 %v4621, %v4915
      %v5104 = vadd.f32 %v4622, %v4920
      %v5105 = vadd.f32 %v4623, %v4923
      %v5106 = vadd.f32 %v4624, %v4928
      %v5107 = vadd.f32 %v4625, %v4931
      %v5108 = vadd.f32 %v4626, %v4936
      %v5109 = vadd.f32 %v4627, %v4939
      %v5110 = vadd.f32 %v4628, %v4944
      %v5111 = vadd.f32 %v4629, %v4947
      %v5112 = vadd.f32 %v4630, %v4952
      %v5113 = vadd.f32 %v4631, %v4955
      %v5114 = vadd.f32 %v4632, %v4960
      %v5115 = vadd.f32 %v4633, %v4963
      %v5116 = vadd.f32 %v4634, %v4968
      %v5117 = vadd.f32 %v4635, %v4971
      %v5118 = vadd.f32 %v4636, %v4976
      %v5119 = vadd.f32 %v4637, %v4979
      %v5120 = vadd.f32 %v4638, %v4984
      %v5121 = vadd.f32 %v4639, %v4987
      %v5122 = vadd.f32 %v4640, %v4992
      %v5123 = vadd.f32 %v4641, %v4995
      %v5124 = vadd.f32 %v4642, %v5000
      %v5125 = vadd.f32 %v4643, %v5003
      %v5126 = vadd.f32 %v4644, %v5008
      %v5127 = vadd.f32 %v4645, %v5011
      %v5128 = vadd.f32 %v4646, %v5016
      %v5129 = vadd.f32 %v4647, %v5019
      %v5130 = vadd.f32 %v4648, %v5024
      %v5131 = vadd.f32 %v4649, %v5027
      %v5132 = vadd.f32 %v4650, %v5032
      %v5133 = vadd.f32 %v4651, %v5035
      %v5134 = vadd.f32 %v4652, %v5040
      %v5135 = vadd.f32 %v4653, %v5043
      %v5136 = vadd.f32 %v4654, %v5048
      %v5137 = vadd.f32 %v4655, %v5051
      %v5138 = vadd.f32 %v4656, %v5056
      %v5139 = vadd.f32 %v4657, %v5059
      %v5140 = vadd.f32 %v4658, %v5064
      %v5141 = vadd.f32 %v4659, %v5067
      %v5142 = vadd.f32 %v4660, %v5072
      %v5143 = vadd.f32 %v4661, %v5075
      %v5144 = vadd.f32 %v4662, %v5080
      %v5145 = vadd.f32 %v4663, %v5083
      %v5146 = vadd.f32 %v4664, %v5088
      %v5147 = vadd.f32 %v4665, %v5091
      %v5148 = vadd.f32 %v4666, %v5096
      %v5149 = vadd.f32 %v4667, %v5099
      %5150 = vst [vmem:[#allocation2] sm:$0xff] %v5102
      %5151 = vst [vmem:[#allocation2 + $0x8] sm:$0xff] %v5103
      %5152 = vst [vmem:[#allocation2 + $0x10] sm:$0xff] %v5104
      %5153 = vst [vmem:[#allocation2 + $0x18] sm:$0xff] %v5105
      %5154 = vst [vmem:[#allocation2 + $0x20] sm:$0xff] %v5106
      %5155 = vst [vmem:[#allocation2 + $0x28] sm:$0xff] %v5107
      %5156 = vst [vmem:[#allocation2 + $0x30] sm:$0xff] %v5108
      %5157 = vst [vmem:[#allocation2 + $0x38] sm:$0xff] %v5109
      %5158 = vst [vmem:[#allocation2 + $0x40] sm:$0xff] %v5110
      %5159 = vst [vmem:[#allocation2 + $0x48] sm:$0xff] %v5111
      %5160 = vst [vmem:[#allocation2 + $0x50] sm:$0xff] %v5112
      %5161 = vst [vmem:[#allocation2 + $0x58] sm:$0xff] %v5113
      %5162 = vst [vmem:[#allocation2 + $0x60] sm:$0xff] %v5114
      %5163 = vst [vmem:[#allocation2 + $0x68] sm:$0xff] %v5115
      %5164 = vst [vmem:[#allocation2 + $0x70] sm:$0xff] %v5116
      %5165 = vst [vmem:[#allocation2 + $0x78] sm:$0xff] %v5117
      %5166 = vst [vmem:[#allocation2 + $0x80] sm:$0xff] %v5118
      %5167 = vst [vmem:[#allocation2 + $0x88] sm:$0xff] %v5119
      %5168 = vst [vmem:[#allocation2 + $0x90] sm:$0xff] %v5120
      %5169 = vst [vmem:[#allocation2 + $0x98] sm:$0xff] %v5121
      %5170 = vst [vmem:[#allocation2 + $0xa0] sm:$0xff] %v5122
      %5171 = vst [vmem:[#allocation2 + $0xa8] sm:$0xff] %v5123
      %5172 = vst [vmem:[#allocation2 + $0xb0] sm:$0xff] %v5124
      %5173 = vst [vmem:[#allocation2 + $0xb8] sm:$0xff] %v5125
      %5174 = vst [vmem:[#allocation2 + $0xc0] sm:$0xff] %v5126
      %5175 = vst [vmem:[#allocation2 + $0xc8] sm:$0xff] %v5127
      %5176 = vst [vmem:[#allocation2 + $0xd0] sm:$0xff] %v5128
      %5177 = vst [vmem:[#allocation2 + $0xd8] sm:$0xff] %v5129
      %5178 = vst [vmem:[#allocation2 + $0xe0] sm:$0xff] %v5130
      %5179 = vst [vmem:[#allocation2 + $0xe8] sm:$0xff] %v5131
      %5180 = vst [vmem:[#allocation2 + $0xf0] sm:$0xff] %v5132
      %5181 = vst [vmem:[#allocation2 + $0xf8] sm:$0xff] %v5133
      %5182 = vst [vmem:[#allocation2 + $0x100] sm:$0xff] %v5134
      %5183 = vst [vmem:[#allocation2 + $0x108] sm:$0xff] %v5135
      %5184 = vst [vmem:[#allocation2 + $0x110] sm:$0xff] %v5136
      %5185 = vst [vmem:[#allocation2 + $0x118] sm:$0xff] %v5137
      %5186 = vst [vmem:[#allocation2 + $0x120] sm:$0xff] %v5138
      %5187 = vst [vmem:[#allocation2 + $0x128] sm:$0xff] %v5139
      %5188 = vst [vmem:[#allocation2 + $0x130] sm:$0xff] %v5140
      %5189 = vst [vmem:[#allocation2 + $0x138] sm:$0xff] %v5141
      %5190 = vst [vmem:[#allocation2 + $0x140] sm:$0xff] %v5142
      %5191 = vst [vmem:[#allocation2 + $0x148] sm:$0xff] %v5143
      %5192 = vst [vmem:[#allocation2 + $0x150] sm:$0xff] %v5144
      %5193 = vst [vmem:[#allocation2 + $0x158] sm:$0xff] %v5145
      %5194 = vst [vmem:[#allocation2 + $0x160] sm:$0xff] %v5146
      %5195 = vst [vmem:[#allocation2 + $0x168] sm:$0xff] %v5147
      %5196 = vst [vmem:[#allocation2 + $0x170] sm:$0xff] %v5148
      %5197 = vst [vmem:[#allocation2 + $0x178] sm:$0xff] %v5149
      %v5198 = vld [vmem:[%s235 + $0x18] sm:$0xf]
      %v5199 = vld [vmem:[%s235 + $0x1c] sm:$0xf]
      %v5200 = vld [vmem:[%s235 + $0x20] sm:$0xf]
      %v5201 = vld [vmem:[%s235 + $0x24] sm:$0xf]
      %v5202 = vld [vmem:[%s235 + $0x28] sm:$0xf]
      %v5203 = vld [vmem:[%s235 + $0x2c] sm:$0xf]
      %v5204 = vld [vmem:[%s235 + $0x30] sm:$0xf]
      %v5205 = vld [vmem:[%s235 + $0x34] sm:$0xf]
      %v5206 = vld [vmem:[%s235 + $0x38] sm:$0xf]
      %v5207 = vld [vmem:[%s235 + $0x3c] sm:$0xf]
      %v5208 = vld [vmem:[%s235 + $0x40] sm:$0xf]
      %v5209 = vld [vmem:[%s235 + $0x44] sm:$0xf]
      %v5210 = vld [vmem:[%s235 + $0x48] sm:$0xf]
      %v5211 = vld [vmem:[%s235 + $0x4c] sm:$0xf]
      %v5212 = vld [vmem:[%s235 + $0x50] sm:$0xf]
      %v5213 = vld [vmem:[%s235 + $0x54] sm:$0xf]
      %v5214 = vld [vmem:[%s235 + $0x58] sm:$0xf]
      %v5215 = vld [vmem:[%s235 + $0x5c] sm:$0xf]
      %v5216 = vld [vmem:[%s235 + $0x60] sm:$0xf]
      %v5217 = vld [vmem:[%s235 + $0x64] sm:$0xf]
      %v5218 = vld [vmem:[%s235 + $0x68] sm:$0xf]
      %v5219 = vld [vmem:[%s235 + $0x6c] sm:$0xf]
      %v5220 = vld [vmem:[%s235 + $0x70] sm:$0xf]
      %v5221 = vld [vmem:[%s235 + $0x74] sm:$0xf]
      %v5222 = vld [vmem:[%s235 + $0x78] sm:$0xf]
      %v5223 = vld [vmem:[%s235 + $0x7c] sm:$0xf]
      %v5224 = vld [vmem:[%s235 + $0x80] sm:$0xf]
      %v5225 = vld [vmem:[%s235 + $0x84] sm:$0xf]
      %v5226 = vld [vmem:[%s235 + $0x88] sm:$0xf]
      %v5227 = vld [vmem:[%s235 + $0x8c] sm:$0xf]
      %v5228 = vld [vmem:[%s235 + $0x90] sm:$0xf]
      %v5229 = vld [vmem:[%s235 + $0x94] sm:$0xf]
      %v5230 = vld [vmem:[%s235 + $0x98] sm:$0xf]
      %v5231 = vld [vmem:[%s235 + $0x9c] sm:$0xf]
      %v5232 = vld [vmem:[%s235 + $0xa0] sm:$0xf]
      %v5233 = vld [vmem:[%s235 + $0xa4] sm:$0xf]
      %v5234 = vld [vmem:[%s235 + $0xa8] sm:$0xf]
      %v5235 = vld [vmem:[%s235 + $0xac] sm:$0xf]
      %v5236 = vld [vmem:[%s235 + $0xb0] sm:$0xf]
      %v5237 = vld [vmem:[%s235 + $0xb4] sm:$0xf]
      %v5238 = vld [vmem:[%s235 + $0xb8] sm:$0xf]
      %v5239 = vld [vmem:[%s235 + $0xbc] sm:$0xf]
      %v5240 = vld [vmem:[%s235 + $0xc0] sm:$0xf]
      %v5241 = vld [vmem:[%s235 + $0xc4] sm:$0xf]
      %v5242 = vld [vmem:[%s235 + $0xc8] sm:$0xf]
      %v5243 = vld [vmem:[%s235 + $0xcc] sm:$0xf]
      %v5244 = vld [vmem:[%s235 + $0xd0] sm:$0xf]
      %v5245 = vld [vmem:[%s235 + $0xd4] sm:$0xf]
      %v5246 = vld [vmem:[%s235 + $0xd8] sm:$0x1]
      %v5247 = vld [vmem:[#allocation2] sm:$0xff]
      %v5248 = vld [vmem:[#allocation2 + $0x8] sm:$0xff]
      %v5249 = vld [vmem:[#allocation2 + $0x10] sm:$0xff]
      %v5250 = vld [vmem:[#allocation2 + $0x18] sm:$0xff]
      %v5251 = vld [vmem:[#allocation2 + $0x20] sm:$0xff]
      %v5252 = vld [vmem:[#allocation2 + $0x28] sm:$0xff]
      %v5253 = vld [vmem:[#allocation2 + $0x30] sm:$0xff]
      %v5254 = vld [vmem:[#allocation2 + $0x38] sm:$0xff]
      %v5255 = vld [vmem:[#allocation2 + $0x40] sm:$0xff]
      %v5256 = vld [vmem:[#allocation2 + $0x48] sm:$0xff]
      %v5257 = vld [vmem:[#allocation2 + $0x50] sm:$0xff]
      %v5258 = vld [vmem:[#allocation2 + $0x58] sm:$0xff]
      %v5259 = vld [vmem:[#allocation2 + $0x60] sm:$0xff]
      %v5260 = vld [vmem:[#allocation2 + $0x68] sm:$0xff]
      %v5261 = vld [vmem:[#allocation2 + $0x70] sm:$0xff]
      %v5262 = vld [vmem:[#allocation2 + $0x78] sm:$0xff]
      %v5263 = vld [vmem:[#allocation2 + $0x80] sm:$0xff]
      %v5264 = vld [vmem:[#allocation2 + $0x88] sm:$0xff]
      %v5265 = vld [vmem:[#allocation2 + $0x90] sm:$0xff]
      %v5266 = vld [vmem:[#allocation2 + $0x98] sm:$0xff]
      %v5267 = vld [vmem:[#allocation2 + $0xa0] sm:$0xff]
      %v5268 = vld [vmem:[#allocation2 + $0xa8] sm:$0xff]
      %v5269 = vld [vmem:[#allocation2 + $0xb0] sm:$0xff]
      %v5270 = vld [vmem:[#allocation2 + $0xb8] sm:$0xff]
      %v5271 = vld [vmem:[#allocation2 + $0xc0] sm:$0xff]
      %v5272 = vld [vmem:[#allocation2 + $0xc8] sm:$0xff]
      %v5273 = vld [vmem:[#allocation2 + $0xd0] sm:$0xff]
      %v5274 = vld [vmem:[#allocation2 + $0xd8] sm:$0xff]
      %v5275 = vld [vmem:[#allocation2 + $0xe0] sm:$0xff]
      %v5276 = vld [vmem:[#allocation2 + $0xe8] sm:$0xff]
      %v5277 = vld [vmem:[#allocation2 + $0xf0] sm:$0xff]
      %v5278 = vld [vmem:[#allocation2 + $0xf8] sm:$0xff]
      %v5279 = vld [vmem:[#allocation2 + $0x100] sm:$0xff]
      %v5280 = vld [vmem:[#allocation2 + $0x108] sm:$0xff]
      %v5281 = vld [vmem:[#allocation2 + $0x110] sm:$0xff]
      %v5282 = vld [vmem:[#allocation2 + $0x118] sm:$0xff]
      %v5283 = vld [vmem:[#allocation2 + $0x120] sm:$0xff]
      %v5284 = vld [vmem:[#allocation2 + $0x128] sm:$0xff]
      %v5285 = vld [vmem:[#allocation2 + $0x130] sm:$0xff]
      %v5286 = vld [vmem:[#allocation2 + $0x138] sm:$0xff]
      %v5287 = vld [vmem:[#allocation2 + $0x140] sm:$0xff]
      %v5288 = vld [vmem:[#allocation2 + $0x148] sm:$0xff]
      %v5289 = vld [vmem:[#allocation2 + $0x150] sm:$0xff]
      %v5290 = vld [vmem:[#allocation2 + $0x158] sm:$0xff]
      %v5291 = vld [vmem:[#allocation2 + $0x160] sm:$0xff]
      %v5292 = vld [vmem:[#allocation2 + $0x168] sm:$0xff]
      %v5293 = vld [vmem:[#allocation2 + $0x170] sm:$0xff]
      %v5294 = vld [vmem:[#allocation2 + $0x178] sm:$0xff]
      %s5295 = scalar_lea.vmem %s243, 448
      %v5296 = vld [vmem:[%s5295] sm:$0xf]
      %v5297 = vld [vmem:[%s5295 + $0x4] sm:$0xf]
      %v5298 = vld [vmem:[%s5295 + $0x8] sm:$0xf]
      %v5299 = vld [vmem:[%s5295 + $0xc] sm:$0xf]
      %v5300 = vld [vmem:[%s5295 + $0x10] sm:$0xf]
      %v5301 = vld [vmem:[%s5295 + $0x14] sm:$0xf]
      %v5302 = vld [vmem:[%s5295 + $0x18] sm:$0xf]
      %v5303 = vld [vmem:[%s5295 + $0x1c] sm:$0xf]
      %v5304 = vld [vmem:[%s5295 + $0x20] sm:$0xf]
      %v5305 = vld [vmem:[%s5295 + $0x24] sm:$0xf]
      %v5306 = vld [vmem:[%s5295 + $0x28] sm:$0xf]
      %v5307 = vld [vmem:[%s5295 + $0x2c] sm:$0xf]
      %v5308 = vld [vmem:[%s5295 + $0x30] sm:$0xf]
      %v5309 = vld [vmem:[%s5295 + $0x34] sm:$0xf]
      %v5310 = vld [vmem:[%s5295 + $0x38] sm:$0xf]
      %v5311 = vld [vmem:[%s5295 + $0x3c] sm:$0xf]
      %v5361 = vunpack.c.l.b16 %v5198
      %v5362 = vunpack.c.l.b16 %v5199
      %v5363 = vunpack.c.l.b16 %v5200
      %v5364 = vunpack.c.l.b16 %v5201
      %v5365 = vunpack.c.l.b16 %v5202
      %v5366 = vunpack.c.l.b16 %v5203
      %v5367 = vunpack.c.l.b16 %v5204
      %v5368 = vunpack.c.l.b16 %v5205
      %v5369 = vunpack.c.l.b16 %v5206
      %v5370 = vunpack.c.l.b16 %v5207
      %v5371 = vunpack.c.l.b16 %v5208
      %v5372 = vunpack.c.l.b16 %v5209
      %v5373 = vunpack.c.l.b16 %v5210
      %v5374 = vunpack.c.l.b16 %v5211
      %v5375 = vunpack.c.l.b16 %v5212
      %v5376 = vunpack.c.l.b16 %v5213
      %v5377 = vunpack.c.l.b16 %v5214
      %v5378 = vunpack.c.l.b16 %v5215
      %v5379 = vunpack.c.l.b16 %v5216
      %v5380 = vunpack.c.l.b16 %v5217
      %v5381 = vunpack.c.l.b16 %v5218
      %v5382 = vunpack.c.l.b16 %v5219
      %v5383 = vunpack.c.l.b16 %v5220
      %v5384 = vunpack.c.l.b16 %v5221
      %v5385 = vunpack.c.l.b16 %v5222
      %v5386 = vunpack.c.l.b16 %v5223
      %v5387 = vunpack.c.l.b16 %v5224
      %v5388 = vunpack.c.l.b16 %v5225
      %v5389 = vunpack.c.l.b16 %v5226
      %v5390 = vunpack.c.l.b16 %v5227
      %v5391 = vunpack.c.l.b16 %v5228
      %v5392 = vunpack.c.l.b16 %v5229
      %v5393 = vunpack.c.l.b16 %v5230
      %v5394 = vunpack.c.l.b16 %v5231
      %v5395 = vunpack.c.l.b16 %v5232
      %v5396 = vunpack.c.l.b16 %v5233
      %v5397 = vunpack.c.l.b16 %v5234
      %v5398 = vunpack.c.l.b16 %v5235
      %v5399 = vunpack.c.l.b16 %v5236
      %v5400 = vunpack.c.l.b16 %v5237
      %v5401 = vunpack.c.l.b16 %v5238
      %v5402 = vunpack.c.l.b16 %v5239
      %v5403 = vunpack.c.l.b16 %v5240
      %v5404 = vunpack.c.l.b16 %v5241
      %v5405 = vunpack.c.l.b16 %v5242
      %v5406 = vunpack.c.l.b16 %v5243
      %v5407 = vunpack.c.l.b16 %v5244
      %v5408 = vunpack.c.l.b16 %v5245
      %v5409 = vunpack.c.l.b16 %v5246
      %v5410 = vpack.c.b16 %v5362, %v5361
      %v5411 = vpack.c.b16 %v5364, %v5363
      %v5412 = vpack.c.b16 %v5366, %v5365
      %v5413 = vpack.c.b16 %v5368, %v5367
      %v5414 = vpack.c.b16 %v5370, %v5369
      %v5415 = vpack.c.b16 %v5372, %v5371
      %v5416 = vpack.c.b16 %v5374, %v5373
      %v5417 = vpack.c.b16 %v5376, %v5375
      %v5418 = vpack.c.b16 %v5378, %v5377
      %v5419 = vpack.c.b16 %v5380, %v5379
      %v5420 = vpack.c.b16 %v5382, %v5381
      %v5421 = vpack.c.b16 %v5384, %v5383
      %v5422 = vpack.c.b16 %v5386, %v5385
      %v5423 = vpack.c.b16 %v5388, %v5387
      %v5424 = vpack.c.b16 %v5390, %v5389
      %v5425 = vpack.c.b16 %v5392, %v5391
      %v5426 = vpack.c.b16 %v5394, %v5393
      %v5427 = vpack.c.b16 %v5396, %v5395
      %v5428 = vpack.c.b16 %v5398, %v5397
      %v5429 = vpack.c.b16 %v5400, %v5399
      %v5430 = vpack.c.b16 %v5402, %v5401
      %v5431 = vpack.c.b16 %v5404, %v5403
      %v5432 = vpack.c.b16 %v5406, %v5405
      %v5433 = vpack.c.b16 %v5408, %v5407
      %v5434 = vpack.c.b16 %v5409, %v5409
      %v5436 = vshrl.u32 %v5410, 16
      %v5438 = vshll.u32 %v5410, 16
      %v5440 = vrot.slane %v5438, 1
      %v5441 = vor.u32 %v5436, %v5440
      %v5443 = vshll.u32 %v5411, 16
      %v5445 = vrot.slane %v5443, 1
      %v5446 = vsel %vm1171, %v5441, %v5445
      %v5447 = vshrl.u32 %v5411, 16
      %v5449 = vor.u32 %v5447, %v5445
      %v5451 = vshll.u32 %v5412, 16
      %v5453 = vrot.slane %v5451, 1
      %v5454 = vsel %vm1171, %v5449, %v5453
      %v5455 = vshrl.u32 %v5412, 16
      %v5457 = vor.u32 %v5455, %v5453
      %v5459 = vshll.u32 %v5413, 16
      %v5461 = vrot.slane %v5459, 1
      %v5462 = vsel %vm1171, %v5457, %v5461
      %v5463 = vshrl.u32 %v5413, 16
      %v5465 = vor.u32 %v5463, %v5461
      %v5467 = vshll.u32 %v5414, 16
      %v5469 = vrot.slane %v5467, 1
      %v5470 = vsel %vm1171, %v5465, %v5469
      %v5471 = vshrl.u32 %v5414, 16
      %v5473 = vor.u32 %v5471, %v5469
      %v5475 = vshll.u32 %v5415, 16
      %v5477 = vrot.slane %v5475, 1
      %v5478 = vsel %vm1171, %v5473, %v5477
      %v5479 = vshrl.u32 %v5415, 16
      %v5481 = vor.u32 %v5479, %v5477
      %v5483 = vshll.u32 %v5416, 16
      %v5485 = vrot.slane %v5483, 1
      %v5486 = vsel %vm1171, %v5481, %v5485
      %v5487 = vshrl.u32 %v5416, 16
      %v5489 = vor.u32 %v5487, %v5485
      %v5491 = vshll.u32 %v5417, 16
      %v5493 = vrot.slane %v5491, 1
      %v5494 = vsel %vm1171, %v5489, %v5493
      %v5495 = vshrl.u32 %v5417, 16
      %v5497 = vor.u32 %v5495, %v5493
      %v5499 = vshll.u32 %v5418, 16
      %v5501 = vrot.slane %v5499, 1
      %v5502 = vsel %vm1171, %v5497, %v5501
      %v5503 = vshrl.u32 %v5418, 16
      %v5505 = vor.u32 %v5503, %v5501
      %v5507 = vshll.u32 %v5419, 16
      %v5509 = vrot.slane %v5507, 1
      %v5510 = vsel %vm1171, %v5505, %v5509
      %v5511 = vshrl.u32 %v5419, 16
      %v5513 = vor.u32 %v5511, %v5509
      %v5515 = vshll.u32 %v5420, 16
      %v5517 = vrot.slane %v5515, 1
      %v5518 = vsel %vm1171, %v5513, %v5517
      %v5519 = vshrl.u32 %v5420, 16
      %v5521 = vor.u32 %v5519, %v5517
      %v5523 = vshll.u32 %v5421, 16
      %v5525 = vrot.slane %v5523, 1
      %v5526 = vsel %vm1171, %v5521, %v5525
      %v5527 = vshrl.u32 %v5421, 16
      %v5529 = vor.u32 %v5527, %v5525
      %v5531 = vshll.u32 %v5422, 16
      %v5533 = vrot.slane %v5531, 1
      %v5534 = vsel %vm1171, %v5529, %v5533
      %v5535 = vshrl.u32 %v5422, 16
      %v5537 = vor.u32 %v5535, %v5533
      %v5539 = vshll.u32 %v5423, 16
      %v5541 = vrot.slane %v5539, 1
      %v5542 = vsel %vm1171, %v5537, %v5541
      %v5543 = vshrl.u32 %v5423, 16
      %v5545 = vor.u32 %v5543, %v5541
      %v5547 = vshll.u32 %v5424, 16
      %v5549 = vrot.slane %v5547, 1
      %v5550 = vsel %vm1171, %v5545, %v5549
      %v5551 = vshrl.u32 %v5424, 16
      %v5553 = vor.u32 %v5551, %v5549
      %v5555 = vshll.u32 %v5425, 16
      %v5557 = vrot.slane %v5555, 1
      %v5558 = vsel %vm1171, %v5553, %v5557
      %v5559 = vshrl.u32 %v5425, 16
      %v5561 = vor.u32 %v5559, %v5557
      %v5563 = vshll.u32 %v5426, 16
      %v5565 = vrot.slane %v5563, 1
      %v5566 = vsel %vm1171, %v5561, %v5565
      %v5567 = vshrl.u32 %v5426, 16
      %v5569 = vor.u32 %v5567, %v5565
      %v5571 = vshll.u32 %v5427, 16
      %v5573 = vrot.slane %v5571, 1
      %v5574 = vsel %vm1171, %v5569, %v5573
      %v5575 = vshrl.u32 %v5427, 16
      %v5577 = vor.u32 %v5575, %v5573
      %v5579 = vshll.u32 %v5428, 16
      %v5581 = vrot.slane %v5579, 1
      %v5582 = vsel %vm1171, %v5577, %v5581
      %v5583 = vshrl.u32 %v5428, 16
      %v5585 = vor.u32 %v5583, %v5581
      %v5587 = vshll.u32 %v5429, 16
      %v5589 = vrot.slane %v5587, 1
      %v5590 = vsel %vm1171, %v5585, %v5589
      %v5591 = vshrl.u32 %v5429, 16
      %v5593 = vor.u32 %v5591, %v5589
      %v5595 = vshll.u32 %v5430, 16
      %v5597 = vrot.slane %v5595, 1
      %v5598 = vsel %vm1171, %v5593, %v5597
      %v5599 = vshrl.u32 %v5430, 16
      %v5601 = vor.u32 %v5599, %v5597
      %v5603 = vshll.u32 %v5431, 16
      %v5605 = vrot.slane %v5603, 1
      %v5606 = vsel %vm1171, %v5601, %v5605
      %v5607 = vshrl.u32 %v5431, 16
      %v5609 = vor.u32 %v5607, %v5605
      %v5611 = vshll.u32 %v5432, 16
      %v5613 = vrot.slane %v5611, 1
      %v5614 = vsel %vm1171, %v5609, %v5613
      %v5615 = vshrl.u32 %v5432, 16
      %v5617 = vor.u32 %v5615, %v5613
      %v5619 = vshll.u32 %v5433, 16
      %v5621 = vrot.slane %v5619, 1
      %v5622 = vsel %vm1171, %v5617, %v5621
      %v5623 = vshrl.u32 %v5433, 16
      %v5625 = vor.u32 %v5623, %v5621
      %v5627 = vshll.u32 %v5434, 16
      %v5629 = vrot.slane %v5627, 1
      %v5630 = vsel %vm1171, %v5625, %v5629
      %v5671 = vunpack.c.l.b16 %v5296
      %v5672 = vunpack.c.l.b16 %v5297
      %v5673 = vunpack.c.l.b16 %v5298
      %v5674 = vunpack.c.l.b16 %v5299
      %v5675 = vunpack.c.l.b16 %v5300
      %v5676 = vunpack.c.l.b16 %v5301
      %v5677 = vunpack.c.l.b16 %v5302
      %v5678 = vunpack.c.l.b16 %v5303
      %v5679 = vunpack.c.l.b16 %v5304
      %v5680 = vunpack.c.l.b16 %v5305
      %v5681 = vunpack.c.l.b16 %v5306
      %v5682 = vunpack.c.l.b16 %v5307
      %v5683 = vunpack.c.l.b16 %v5308
      %v5684 = vunpack.c.l.b16 %v5309
      %v5685 = vunpack.c.l.b16 %v5310
      %v5686 = vunpack.c.l.b16 %v5311
      %v5687 = vpack.c.b16 %v5672, %v5671
      %v5688 = vpack.c.b16 %v5674, %v5673
      %v5689 = vpack.c.b16 %v5676, %v5675
      %v5690 = vpack.c.b16 %v5678, %v5677
      %v5691 = vpack.c.b16 %v5680, %v5679
      %v5692 = vpack.c.b16 %v5682, %v5681
      %v5693 = vpack.c.b16 %v5684, %v5683
      %v5694 = vpack.c.b16 %v5686, %v5685
      %5703 = vmatprep.subr.bf16.mxu0 0
      %5704 = vmatpush1.bf16.msra.mxu0 %v5687
      %5705 = vmatprep.subr.bf16.mxu0 0
      %5706 = vmatpush1.bf16.msra.mxu0 %v5688
      %5707 = vmatprep.subr.bf16.mxu0 0
      %5708 = vmatpush1.bf16.msra.mxu0 %v5689
      %5709 = vmatprep.subr.bf16.mxu0 0
      %5710 = vmatpush1.bf16.msra.mxu0 %v5690
      %5711 = vmatprep.subr.bf16.mxu0 0
      %5712 = vmatpush1.bf16.msra.mxu0 %v5691
      %5713 = vmatprep.subr.bf16.mxu0 0
      %5714 = vmatpush1.bf16.msra.mxu0 %v5692
      %5715 = vmatprep.subr.bf16.mxu0 0
      %5716 = vmatpush1.bf16.msra.mxu0 %v5693
      %5717 = vmatprep.subr.bf16.mxu0 0
      %5718 = vmatpush1.bf16.msra.mxu0 %v5694
      %5719 = vmatprep.subr.bf16.mxu0 0
      %5720 = vmatpush1.bf16.msra.mxu0 0
      %5721 = vmatprep.subr.bf16.mxu0 0
      %5722 = vmatpush1.bf16.msra.mxu0 0
      %5723 = vmatprep.subr.bf16.mxu0 0
      %5724 = vmatpush1.bf16.msra.mxu0 0
      %5725 = vmatprep.subr.bf16.mxu0 0
      %5726 = vmatpush1.bf16.msra.mxu0 0
      %5727 = vmatprep.subr.bf16.mxu0 0
      %5728 = vmatpush1.bf16.msra.mxu0 0
      %5729 = vmatprep.subr.bf16.mxu0 0
      %5730 = vmatpush1.bf16.msra.mxu0 0
      %5731 = vmatprep.subr.bf16.mxu0 0
      %5732 = vmatpush1.bf16.msra.mxu0 0
      %5733 = vmatprep.subr.bf16.mxu0 0
      %5734 = vmatpush1.bf16.msra.mxu0 0
      %5735 = vmatprep.mubr.bf16.mxu0 0
      %5736 = vmatmul.mubr.bf16.gmra.mrb[0].mxu0 %v5446
      %v5737 = vpop.f32.mrb[0].mxu0
      %v5738 = vadd.f32 0.0, %v5737
      %v5739 = vpop.f32.mrb[0].mxu0
      %v5740 = vpop.f32.mrb[0].mxu0
      %v5741 = vadd.f32 0.0, %v5740
      %v5742 = vpop.f32.mrb[0].mxu0
      %5743 = vmatprep.mubr.bf16.mxu0 0
      %5744 = vmatmul.mubr.bf16.gmra.mrb[0].mxu0 %v5454
      %v5745 = vpop.f32.mrb[0].mxu0
      %v5746 = vadd.f32 0.0, %v5745
      %v5747 = vpop.f32.mrb[0].mxu0
      %v5748 = vpop.f32.mrb[0].mxu0
      %v5749 = vadd.f32 0.0, %v5748
      %v5750 = vpop.f32.mrb[0].mxu0
      %5751 = vmatprep.mubr.bf16.mxu0 0
      %5752 = vmatmul.mubr.bf16.gmra.mrb[0].mxu0 %v5462
      %v5753 = vpop.f32.mrb[0].mxu0
      %v5754 = vadd.f32 0.0, %v5753
      %v5755 = vpop.f32.mrb[0].mxu0
      %v5756 = vpop.f32.mrb[0].mxu0
      %v5757 = vadd.f32 0.0, %v5756
      %v5758 = vpop.f32.mrb[0].mxu0
      %5759 = vmatprep.mubr.bf16.mxu0 0
      %5760 = vmatmul.mubr.bf16.gmra.mrb[0].mxu0 %v5470
      %v5761 = vpop.f32.mrb[0].mxu0
      %v5762 = vadd.f32 0.0, %v5761
      %v5763 = vpop.f32.mrb[0].mxu0
      %v5764 = vpop.f32.mrb[0].mxu0
      %v5765 = vadd.f32 0.0, %v5764
      %v5766 = vpop.f32.mrb[0].mxu0
      %5767 = vmatprep.mubr.bf16.mxu0 0
      %5768 = vmatmul.mubr.bf16.gmra.mrb[0].mxu0 %v5478
      %v5769 = vpop.f32.mrb[0].mxu0
      %v5770 = vadd.f32 0.0, %v5769
      %v5771 = vpop.f32.mrb[0].mxu0
      %v5772 = vpop.f32.mrb[0].mxu0
      %v5773 = vadd.f32 0.0, %v5772
      %v5774 = vpop.f32.mrb[0].mxu0
      %5775 = vmatprep.mubr.bf16.mxu0 0
      %5776 = vmatmul.mubr.bf16.gmra.mrb[0].mxu0 %v5486
      %v5777 = vpop.f32.mrb[0].mxu0
      %v5778 = vadd.f32 0.0, %v5777
      %v5779 = vpop.f32.mrb[0].mxu0
      %v5780 = vpop.f32.mrb[0].mxu0
      %v5781 = vadd.f32 0.0, %v5780
      %v5782 = vpop.f32.mrb[0].mxu0
      %5783 = vmatprep.mubr.bf16.mxu0 0
      %5784 = vmatmul.mubr.bf16.gmra.mrb[0].mxu0 %v5494
      %v5785 = vpop.f32.mrb[0].mxu0
      %v5786 = vadd.f32 0.0, %v5785
      %v5787 = vpop.f32.mrb[0].mxu0
      %v5788 = vpop.f32.mrb[0].mxu0
      %v5789 = vadd.f32 0.0, %v5788
      %v5790 = vpop.f32.mrb[0].mxu0
      %5791 = vmatprep.mubr.bf16.mxu0 0
      %5792 = vmatmul.mubr.bf16.gmra.mrb[0].mxu0 %v5502
      %v5793 = vpop.f32.mrb[0].mxu0
      %v5794 = vadd.f32 0.0, %v5793
      %v5795 = vpop.f32.mrb[0].mxu0
      %v5796 = vpop.f32.mrb[0].mxu0
      %v5797 = vadd.f32 0.0, %v5796
      %v5798 = vpop.f32.mrb[0].mxu0
      %5799 = vmatprep.mubr.bf16.mxu0 0
      %5800 = vmatmul.mubr.bf16.gmra.mrb[0].mxu0 %v5510
      %v5801 = vpop.f32.mrb[0].mxu0
      %v5802 = vadd.f32 0.0, %v5801
      %v5803 = vpop.f32.mrb[0].mxu0
      %v5804 = vpop.f32.mrb[0].mxu0
      %v5805 = vadd.f32 0.0, %v5804
      %v5806 = vpop.f32.mrb[0].mxu0
      %5807 = vmatprep.mubr.bf16.mxu0 0
      %5808 = vmatmul.mubr.bf16.gmra.mrb[0].mxu0 %v5518
      %v5809 = vpop.f32.mrb[0].mxu0
      %v5810 = vadd.f32 0.0, %v5809
      %v5811 = vpop.f32.mrb[0].mxu0
      %v5812 = vpop.f32.mrb[0].mxu0
      %v5813 = vadd.f32 0.0, %v5812
      %v5814 = vpop.f32.mrb[0].mxu0
      %5815 = vmatprep.mubr.bf16.mxu0 0
      %5816 = vmatmul.mubr.bf16.gmra.mrb[0].mxu0 %v5526
      %v5817 = vpop.f32.mrb[0].mxu0
      %v5818 = vadd.f32 0.0, %v5817
      %v5819 = vpop.f32.mrb[0].mxu0
      %v5820 = vpop.f32.mrb[0].mxu0
      %v5821 = vadd.f32 0.0, %v5820
      %v5822 = vpop.f32.mrb[0].mxu0
      %5823 = vmatprep.mubr.bf16.mxu0 0
      %5824 = vmatmul.mubr.bf16.gmra.mrb[0].mxu0 %v5534
      %v5825 = vpop.f32.mrb[0].mxu0
      %v5826 = vadd.f32 0.0, %v5825
      %v5827 = vpop.f32.mrb[0].mxu0
      %v5828 = vpop.f32.mrb[0].mxu0
      %v5829 = vadd.f32 0.0, %v5828
      %v5830 = vpop.f32.mrb[0].mxu0
      %5831 = vmatprep.mubr.bf16.mxu0 0
      %5832 = vmatmul.mubr.bf16.gmra.mrb[0].mxu0 %v5542
      %v5833 = vpop.f32.mrb[0].mxu0
      %v5834 = vadd.f32 0.0, %v5833
      %v5835 = vpop.f32.mrb[0].mxu0
      %v5836 = vpop.f32.mrb[0].mxu0
      %v5837 = vadd.f32 0.0, %v5836
      %v5838 = vpop.f32.mrb[0].mxu0
      %5839 = vmatprep.mubr.bf16.mxu0 0
      %5840 = vmatmul.mubr.bf16.gmra.mrb[0].mxu0 %v5550
      %v5841 = vpop.f32.mrb[0].mxu0
      %v5842 = vadd.f32 0.0, %v5841
      %v5843 = vpop.f32.mrb[0].mxu0
      %v5844 = vpop.f32.mrb[0].mxu0
      %v5845 = vadd.f32 0.0, %v5844
      %v5846 = vpop.f32.mrb[0].mxu0
      %5847 = vmatprep.mubr.bf16.mxu0 0
      %5848 = vmatmul.mubr.bf16.gmra.mrb[0].mxu0 %v5558
      %v5849 = vpop.f32.mrb[0].mxu0
      %v5850 = vadd.f32 0.0, %v5849
      %v5851 = vpop.f32.mrb[0].mxu0
      %v5852 = vpop.f32.mrb[0].mxu0
      %v5853 = vadd.f32 0.0, %v5852
      %v5854 = vpop.f32.mrb[0].mxu0
      %5855 = vmatprep.mubr.bf16.mxu0 0
      %5856 = vmatmul.mubr.bf16.gmra.mrb[0].mxu0 %v5566
      %v5857 = vpop.f32.mrb[0].mxu0
      %v5858 = vadd.f32 0.0, %v5857
      %v5859 = vpop.f32.mrb[0].mxu0
      %v5860 = vpop.f32.mrb[0].mxu0
      %v5861 = vadd.f32 0.0, %v5860
      %v5862 = vpop.f32.mrb[0].mxu0
      %5863 = vmatprep.mubr.bf16.mxu0 0
      %5864 = vmatmul.mubr.bf16.gmra.mrb[0].mxu0 %v5574
      %v5865 = vpop.f32.mrb[0].mxu0
      %v5866 = vadd.f32 0.0, %v5865
      %v5867 = vpop.f32.mrb[0].mxu0
      %v5868 = vpop.f32.mrb[0].mxu0
      %v5869 = vadd.f32 0.0, %v5868
      %v5870 = vpop.f32.mrb[0].mxu0
      %5871 = vmatprep.mubr.bf16.mxu0 0
      %5872 = vmatmul.mubr.bf16.gmra.mrb[0].mxu0 %v5582
      %v5873 = vpop.f32.mrb[0].mxu0
      %v5874 = vadd.f32 0.0, %v5873
      %v5875 = vpop.f32.mrb[0].mxu0
      %v5876 = vpop.f32.mrb[0].mxu0
      %v5877 = vadd.f32 0.0, %v5876
      %v5878 = vpop.f32.mrb[0].mxu0
      %5879 = vmatprep.mubr.bf16.mxu0 0
      %5880 = vmatmul.mubr.bf16.gmra.mrb[0].mxu0 %v5590
      %v5881 = vpop.f32.mrb[0].mxu0
      %v5882 = vadd.f32 0.0, %v5881
      %v5883 = vpop.f32.mrb[0].mxu0
      %v5884 = vpop.f32.mrb[0].mxu0
      %v5885 = vadd.f32 0.0, %v5884
      %v5886 = vpop.f32.mrb[0].mxu0
      %5887 = vmatprep.mubr.bf16.mxu0 0
      %5888 = vmatmul.mubr.bf16.gmra.mrb[0].mxu0 %v5598
      %v5889 = vpop.f32.mrb[0].mxu0
      %v5890 = vadd.f32 0.0, %v5889
      %v5891 = vpop.f32.mrb[0].mxu0
      %v5892 = vpop.f32.mrb[0].mxu0
      %v5893 = vadd.f32 0.0, %v5892
      %v5894 = vpop.f32.mrb[0].mxu0
      %5895 = vmatprep.mubr.bf16.mxu0 0
      %5896 = vmatmul.mubr.bf16.gmra.mrb[0].mxu0 %v5606
      %v5897 = vpop.f32.mrb[0].mxu0
      %v5898 = vadd.f32 0.0, %v5897
      %v5899 = vpop.f32.mrb[0].mxu0
      %v5900 = vpop.f32.mrb[0].mxu0
      %v5901 = vadd.f32 0.0, %v5900
      %v5902 = vpop.f32.mrb[0].mxu0
      %5903 = vmatprep.mubr.bf16.mxu0 0
      %5904 = vmatmul.mubr.bf16.gmra.mrb[0].mxu0 %v5614
      %v5905 = vpop.f32.mrb[0].mxu0
      %v5906 = vadd.f32 0.0, %v5905
      %v5907 = vpop.f32.mrb[0].mxu0
      %v5908 = vpop.f32.mrb[0].mxu0
      %v5909 = vadd.f32 0.0, %v5908
      %v5910 = vpop.f32.mrb[0].mxu0
      %5911 = vmatprep.mubr.bf16.mxu0 0
      %5912 = vmatmul.mubr.bf16.gmra.mrb[0].mxu0 %v5622
      %v5913 = vpop.f32.mrb[0].mxu0
      %v5914 = vadd.f32 0.0, %v5913
      %v5915 = vpop.f32.mrb[0].mxu0
      %v5916 = vpop.f32.mrb[0].mxu0
      %v5917 = vadd.f32 0.0, %v5916
      %v5918 = vpop.f32.mrb[0].mxu0
      %5919 = vmatprep.mubr.bf16.mxu0 0
      %5920 = vmatmul.mubr.bf16.gmra.mrb[0].mxu0 %v5630
      %v5921 = vpop.f32.mrb[0].mxu0
      %v5922 = vadd.f32 0.0, %v5921
      %v5923 = vpop.f32.mrb[0].mxu0
      %v5924 = vpop.f32.mrb[0].mxu0
      %v5925 = vadd.f32 0.0, %v5924
      %v5926 = vpop.f32.mrb[0].mxu0
      %5927 = vdwg.mxu0
      %v5928 = vadd.f32 %v5247, %v5738
      %v5929 = vadd.f32 %v5248, %v5741
      %v5930 = vadd.f32 %v5249, %v5746
      %v5931 = vadd.f32 %v5250, %v5749
      %v5932 = vadd.f32 %v5251, %v5754
      %v5933 = vadd.f32 %v5252, %v5757
      %v5934 = vadd.f32 %v5253, %v5762
      %v5935 = vadd.f32 %v5254, %v5765
      %v5936 = vadd.f32 %v5255, %v5770
      %v5937 = vadd.f32 %v5256, %v5773
      %v5938 = vadd.f32 %v5257, %v5778
      %v5939 = vadd.f32 %v5258, %v5781
      %v5940 = vadd.f32 %v5259, %v5786
      %v5941 = vadd.f32 %v5260, %v5789
      %v5942 = vadd.f32 %v5261, %v5794
      %v5943 = vadd.f32 %v5262, %v5797
      %v5944 = vadd.f32 %v5263, %v5802
      %v5945 = vadd.f32 %v5264, %v5805
      %v5946 = vadd.f32 %v5265, %v5810
      %v5947 = vadd.f32 %v5266, %v5813
      %v5948 = vadd.f32 %v5267, %v5818
      %v5949 = vadd.f32 %v5268, %v5821
      %v5950 = vadd.f32 %v5269, %v5826
      %v5951 = vadd.f32 %v5270, %v5829
      %v5952 = vadd.f32 %v5271, %v5834
      %v5953 = vadd.f32 %v5272, %v5837
      %v5954 = vadd.f32 %v5273, %v5842
      %v5955 = vadd.f32 %v5274, %v5845
      %v5956 = vadd.f32 %v5275, %v5850
      %v5957 = vadd.f32 %v5276, %v5853
      %v5958 = vadd.f32 %v5277, %v5858
      %v5959 = vadd.f32 %v5278, %v5861
      %v5960 = vadd.f32 %v5279, %v5866
      %v5961 = vadd.f32 %v5280, %v5869
      %v5962 = vadd.f32 %v5281, %v5874
      %v5963 = vadd.f32 %v5282, %v5877
      %v5964 = vadd.f32 %v5283, %v5882
      %v5965 = vadd.f32 %v5284, %v5885
      %v5966 = vadd.f32 %v5285, %v5890
      %v5967 = vadd.f32 %v5286, %v5893
      %v5968 = vadd.f32 %v5287, %v5898
      %v5969 = vadd.f32 %v5288, %v5901
      %v5970 = vadd.f32 %v5289, %v5906
      %v5971 = vadd.f32 %v5290, %v5909
      %v5972 = vadd.f32 %v5291, %v5914
      %v5973 = vadd.f32 %v5292, %v5917
      %v5974 = vadd.f32 %v5293, %v5922
      %v5975 = vadd.f32 %v5294, %v5925
      %5976 = vst [vmem:[#allocation2] sm:$0xff] %v5928
      %5977 = vst [vmem:[#allocation2 + $0x8] sm:$0xff] %v5929
      %5978 = vst [vmem:[#allocation2 + $0x10] sm:$0xff] %v5930
      %5979 = vst [vmem:[#allocation2 + $0x18] sm:$0xff] %v5931
      %5980 = vst [vmem:[#allocation2 + $0x20] sm:$0xff] %v5932
      %5981 = vst [vmem:[#allocation2 + $0x28] sm:$0xff] %v5933
      %5982 = vst [vmem:[#allocation2 + $0x30] sm:$0xff] %v5934
      %5983 = vst [vmem:[#allocation2 + $0x38] sm:$0xff] %v5935
      %5984 = vst [vmem:[#allocation2 + $0x40] sm:$0xff] %v5936
      %5985 = vst [vmem:[#allocation2 + $0x48] sm:$0xff] %v5937
      %5986 = vst [vmem:[#allocation2 + $0x50] sm:$0xff] %v5938
      %5987 = vst [vmem:[#allocation2 + $0x58] sm:$0xff] %v5939
      %5988 = vst [vmem:[#allocation2 + $0x60] sm:$0xff] %v5940
      %5989 = vst [vmem:[#allocation2 + $0x68] sm:$0xff] %v5941
      %5990 = vst [vmem:[#allocation2 + $0x70] sm:$0xff] %v5942
      %5991 = vst [vmem:[#allocation2 + $0x78] sm:$0xff] %v5943
      %5992 = vst [vmem:[#allocation2 + $0x80] sm:$0xff] %v5944
      %5993 = vst [vmem:[#allocation2 + $0x88] sm:$0xff] %v5945
      %5994 = vst [vmem:[#allocation2 + $0x90] sm:$0xff] %v5946
      %5995 = vst [vmem:[#allocation2 + $0x98] sm:$0xff] %v5947
      %5996 = vst [vmem:[#allocation2 + $0xa0] sm:$0xff] %v5948
      %5997 = vst [vmem:[#allocation2 + $0xa8] sm:$0xff] %v5949
      %5998 = vst [vmem:[#allocation2 + $0xb0] sm:$0xff] %v5950
      %5999 = vst [vmem:[#allocation2 + $0xb8] sm:$0xff] %v5951
      %6000 = vst [vmem:[#allocation2 + $0xc0] sm:$0xff] %v5952
      %6001 = vst [vmem:[#allocation2 + $0xc8] sm:$0xff] %v5953
      %6002 = vst [vmem:[#allocation2 + $0xd0] sm:$0xff] %v5954
      %6003 = vst [vmem:[#allocation2 + $0xd8] sm:$0xff] %v5955
      %6004 = vst [vmem:[#allocation2 + $0xe0] sm:$0xff] %v5956
      %6005 = vst [vmem:[#allocation2 + $0xe8] sm:$0xff] %v5957
      %6006 = vst [vmem:[#allocation2 + $0xf0] sm:$0xff] %v5958
      %6007 = vst [vmem:[#allocation2 + $0xf8] sm:$0xff] %v5959
      %6008 = vst [vmem:[#allocation2 + $0x100] sm:$0xff] %v5960
      %6009 = vst [vmem:[#allocation2 + $0x108] sm:$0xff] %v5961
      %6010 = vst [vmem:[#allocation2 + $0x110] sm:$0xff] %v5962
      %6011 = vst [vmem:[#allocation2 + $0x118] sm:$0xff] %v5963
      %6012 = vst [vmem:[#allocation2 + $0x120] sm:$0xff] %v5964
      %6013 = vst [vmem:[#allocation2 + $0x128] sm:$0xff] %v5965
      %6014 = vst [vmem:[#allocation2 + $0x130] sm:$0xff] %v5966
      %6015 = vst [vmem:[#allocation2 + $0x138] sm:$0xff] %v5967
      %6016 = vst [vmem:[#allocation2 + $0x140] sm:$0xff] %v5968
      %6017 = vst [vmem:[#allocation2 + $0x148] sm:$0xff] %v5969
      %6018 = vst [vmem:[#allocation2 + $0x150] sm:$0xff] %v5970
      %6019 = vst [vmem:[#allocation2 + $0x158] sm:$0xff] %v5971
      %6020 = vst [vmem:[#allocation2 + $0x160] sm:$0xff] %v5972
      %6021 = vst [vmem:[#allocation2 + $0x168] sm:$0xff] %v5973
      %6022 = vst [vmem:[#allocation2 + $0x170] sm:$0xff] %v5974
      %6023 = vst [vmem:[#allocation2 + $0x178] sm:$0xff] %v5975
      %v6024 = vld [vmem:[%s235 + $0x18] sm:$0xe]
      %v6025 = vld [vmem:[%s235 + $0x1c] sm:$0xf]
      %v6026 = vld [vmem:[%s235 + $0x20] sm:$0xf]
      %v6027 = vld [vmem:[%s235 + $0x24] sm:$0xf]
      %v6028 = vld [vmem:[%s235 + $0x28] sm:$0xf]
      %v6029 = vld [vmem:[%s235 + $0x2c] sm:$0xf]
      %v6030 = vld [vmem:[%s235 + $0x30] sm:$0xf]
      %v6031 = vld [vmem:[%s235 + $0x34] sm:$0xf]
      %v6032 = vld [vmem:[%s235 + $0x38] sm:$0xf]
      %v6033 = vld [vmem:[%s235 + $0x3c] sm:$0xf]
      %v6034 = vld [vmem:[%s235 + $0x40] sm:$0xf]
      %v6035 = vld [vmem:[%s235 + $0x44] sm:$0xf]
      %v6036 = vld [vmem:[%s235 + $0x48] sm:$0xf]
      %v6037 = vld [vmem:[%s235 + $0x4c] sm:$0xf]
      %v6038 = vld [vmem:[%s235 + $0x50] sm:$0xf]
      %v6039 = vld [vmem:[%s235 + $0x54] sm:$0xf]
      %v6040 = vld [vmem:[%s235 + $0x58] sm:$0xf]
      %v6041 = vld [vmem:[%s235 + $0x5c] sm:$0xf]
      %v6042 = vld [vmem:[%s235 + $0x60] sm:$0xf]
      %v6043 = vld [vmem:[%s235 + $0x64] sm:$0xf]
      %v6044 = vld [vmem:[%s235 + $0x68] sm:$0xf]
      %v6045 = vld [vmem:[%s235 + $0x6c] sm:$0xf]
      %v6046 = vld [vmem:[%s235 + $0x70] sm:$0xf]
      %v6047 = vld [vmem:[%s235 + $0x74] sm:$0xf]
      %v6048 = vld [vmem:[%s235 + $0x78] sm:$0xf]
      %v6049 = vld [vmem:[%s235 + $0x7c] sm:$0xf]
      %v6050 = vld [vmem:[%s235 + $0x80] sm:$0xf]
      %v6051 = vld [vmem:[%s235 + $0x84] sm:$0xf]
      %v6052 = vld [vmem:[%s235 + $0x88] sm:$0xf]
      %v6053 = vld [vmem:[%s235 + $0x8c] sm:$0xf]
      %v6054 = vld [vmem:[%s235 + $0x90] sm:$0xf]
      %v6055 = vld [vmem:[%s235 + $0x94] sm:$0xf]
      %v6056 = vld [vmem:[%s235 + $0x98] sm:$0xf]
      %v6057 = vld [vmem:[%s235 + $0x9c] sm:$0xf]
      %v6058 = vld [vmem:[%s235 + $0xa0] sm:$0xf]
      %v6059 = vld [vmem:[%s235 + $0xa4] sm:$0xf]
      %v6060 = vld [vmem:[%s235 + $0xa8] sm:$0xf]
      %v6061 = vld [vmem:[%s235 + $0xac] sm:$0xf]
      %v6062 = vld [vmem:[%s235 + $0xb0] sm:$0xf]
      %v6063 = vld [vmem:[%s235 + $0xb4] sm:$0xf]
      %v6064 = vld [vmem:[%s235 + $0xb8] sm:$0xf]
      %v6065 = vld [vmem:[%s235 + $0xbc] sm:$0xf]
      %v6066 = vld [vmem:[%s235 + $0xc0] sm:$0xf]
      %v6067 = vld [vmem:[%s235 + $0xc4] sm:$0xf]
      %v6068 = vld [vmem:[%s235 + $0xc8] sm:$0xf]
      %v6069 = vld [vmem:[%s235 + $0xcc] sm:$0xf]
      %v6070 = vld [vmem:[%s235 + $0xd0] sm:$0xf]
      %v6071 = vld [vmem:[%s235 + $0xd4] sm:$0xf]
      %v6072 = vld [vmem:[%s235 + $0xd8] sm:$0x1]
      %v6073 = vld [vmem:[#allocation2] sm:$0xff]
      %v6074 = vld [vmem:[#allocation2 + $0x8] sm:$0xff]
      %v6075 = vld [vmem:[#allocation2 + $0x10] sm:$0xff]
      %v6076 = vld [vmem:[#allocation2 + $0x18] sm:$0xff]
      %v6077 = vld [vmem:[#allocation2 + $0x20] sm:$0xff]
      %v6078 = vld [vmem:[#allocation2 + $0x28] sm:$0xff]
      %v6079 = vld [vmem:[#allocation2 + $0x30] sm:$0xff]
      %v6080 = vld [vmem:[#allocation2 + $0x38] sm:$0xff]
      %v6081 = vld [vmem:[#allocation2 + $0x40] sm:$0xff]
      %v6082 = vld [vmem:[#allocation2 + $0x48] sm:$0xff]
      %v6083 = vld [vmem:[#allocation2 + $0x50] sm:$0xff]
      %v6084 = vld [vmem:[#allocation2 + $0x58] sm:$0xff]
      %v6085 = vld [vmem:[#allocation2 + $0x60] sm:$0xff]
      %v6086 = vld [vmem:[#allocation2 + $0x68] sm:$0xff]
      %v6087 = vld [vmem:[#allocation2 + $0x70] sm:$0xff]
      %v6088 = vld [vmem:[#allocation2 + $0x78] sm:$0xff]
      %v6089 = vld [vmem:[#allocation2 + $0x80] sm:$0xff]
      %v6090 = vld [vmem:[#allocation2 + $0x88] sm:$0xff]
      %v6091 = vld [vmem:[#allocation2 + $0x90] sm:$0xff]
      %v6092 = vld [vmem:[#allocation2 + $0x98] sm:$0xff]
      %v6093 = vld [vmem:[#allocation2 + $0xa0] sm:$0xff]
      %v6094 = vld [vmem:[#allocation2 + $0xa8] sm:$0xff]
      %v6095 = vld [vmem:[#allocation2 + $0xb0] sm:$0xff]
      %v6096 = vld [vmem:[#allocation2 + $0xb8] sm:$0xff]
      %v6097 = vld [vmem:[#allocation2 + $0xc0] sm:$0xff]
      %v6098 = vld [vmem:[#allocation2 + $0xc8] sm:$0xff]
      %v6099 = vld [vmem:[#allocation2 + $0xd0] sm:$0xff]
      %v6100 = vld [vmem:[#allocation2 + $0xd8] sm:$0xff]
      %v6101 = vld [vmem:[#allocation2 + $0xe0] sm:$0xff]
      %v6102 = vld [vmem:[#allocation2 + $0xe8] sm:$0xff]
      %v6103 = vld [vmem:[#allocation2 + $0xf0] sm:$0xff]
      %v6104 = vld [vmem:[#allocation2 + $0xf8] sm:$0xff]
      %v6105 = vld [vmem:[#allocation2 + $0x100] sm:$0xff]
      %v6106 = vld [vmem:[#allocation2 + $0x108] sm:$0xff]
      %v6107 = vld [vmem:[#allocation2 + $0x110] sm:$0xff]
      %v6108 = vld [vmem:[#allocation2 + $0x118] sm:$0xff]
      %v6109 = vld [vmem:[#allocation2 + $0x120] sm:$0xff]
      %v6110 = vld [vmem:[#allocation2 + $0x128] sm:$0xff]
      %v6111 = vld [vmem:[#allocation2 + $0x130] sm:$0xff]
      %v6112 = vld [vmem:[#allocation2 + $0x138] sm:$0xff]
      %v6113 = vld [vmem:[#allocation2 + $0x140] sm:$0xff]
      %v6114 = vld [vmem:[#allocation2 + $0x148] sm:$0xff]
      %v6115 = vld [vmem:[#allocation2 + $0x150] sm:$0xff]
      %v6116 = vld [vmem:[#allocation2 + $0x158] sm:$0xff]
      %v6117 = vld [vmem:[#allocation2 + $0x160] sm:$0xff]
      %v6118 = vld [vmem:[#allocation2 + $0x168] sm:$0xff]
      %v6119 = vld [vmem:[#allocation2 + $0x170] sm:$0xff]
      %v6120 = vld [vmem:[#allocation2 + $0x178] sm:$0xff]
      %s6121 = scalar_lea.vmem %s243, 512
      %v6122 = vld [vmem:[%s6121] sm:$0xf]
      %v6123 = vld [vmem:[%s6121 + $0x4] sm:$0xf]
      %v6124 = vld [vmem:[%s6121 + $0x8] sm:$0xf]
      %v6125 = vld [vmem:[%s6121 + $0xc] sm:$0xf]
      %v6126 = vld [vmem:[%s6121 + $0x10] sm:$0xf]
      %v6127 = vld [vmem:[%s6121 + $0x14] sm:$0xf]
      %v6128 = vld [vmem:[%s6121 + $0x18] sm:$0xf]
      %v6129 = vld [vmem:[%s6121 + $0x1c] sm:$0xf]
      %v6130 = vld [vmem:[%s6121 + $0x20] sm:$0xf]
      %v6131 = vld [vmem:[%s6121 + $0x24] sm:$0xf]
      %v6132 = vld [vmem:[%s6121 + $0x28] sm:$0xf]
      %v6133 = vld [vmem:[%s6121 + $0x2c] sm:$0xf]
      %v6134 = vld [vmem:[%s6121 + $0x30] sm:$0xf]
      %v6135 = vld [vmem:[%s6121 + $0x34] sm:$0xf]
      %v6136 = vld [vmem:[%s6121 + $0x38] sm:$0xf]
      %v6137 = vld [vmem:[%s6121 + $0x3c] sm:$0xf]
      %v6187 = vunpack.c.l.b16 %v6024
      %v6188 = vunpack.c.l.b16 %v6025
      %v6189 = vunpack.c.l.b16 %v6026
      %v6190 = vunpack.c.l.b16 %v6027
      %v6191 = vunpack.c.l.b16 %v6028
      %v6192 = vunpack.c.l.b16 %v6029
      %v6193 = vunpack.c.l.b16 %v6030
      %v6194 = vunpack.c.l.b16 %v6031
      %v6195 = vunpack.c.l.b16 %v6032
      %v6196 = vunpack.c.l.b16 %v6033
      %v6197 = vunpack.c.l.b16 %v6034
      %v6198 = vunpack.c.l.b16 %v6035
      %v6199 = vunpack.c.l.b16 %v6036
      %v6200 = vunpack.c.l.b16 %v6037
      %v6201 = vunpack.c.l.b16 %v6038
      %v6202 = vunpack.c.l.b16 %v6039
      %v6203 = vunpack.c.l.b16 %v6040
      %v6204 = vunpack.c.l.b16 %v6041
      %v6205 = vunpack.c.l.b16 %v6042
      %v6206 = vunpack.c.l.b16 %v6043
      %v6207 = vunpack.c.l.b16 %v6044
      %v6208 = vunpack.c.l.b16 %v6045
      %v6209 = vunpack.c.l.b16 %v6046
      %v6210 = vunpack.c.l.b16 %v6047
      %v6211 = vunpack.c.l.b16 %v6048
      %v6212 = vunpack.c.l.b16 %v6049
      %v6213 = vunpack.c.l.b16 %v6050
      %v6214 = vunpack.c.l.b16 %v6051
      %v6215 = vunpack.c.l.b16 %v6052
      %v6216 = vunpack.c.l.b16 %v6053
      %v6217 = vunpack.c.l.b16 %v6054
      %v6218 = vunpack.c.l.b16 %v6055
      %v6219 = vunpack.c.l.b16 %v6056
      %v6220 = vunpack.c.l.b16 %v6057
      %v6221 = vunpack.c.l.b16 %v6058
      %v6222 = vunpack.c.l.b16 %v6059
      %v6223 = vunpack.c.l.b16 %v6060
      %v6224 = vunpack.c.l.b16 %v6061
      %v6225 = vunpack.c.l.b16 %v6062
      %v6226 = vunpack.c.l.b16 %v6063
      %v6227 = vunpack.c.l.b16 %v6064
      %v6228 = vunpack.c.l.b16 %v6065
      %v6229 = vunpack.c.l.b16 %v6066
      %v6230 = vunpack.c.l.b16 %v6067
      %v6231 = vunpack.c.l.b16 %v6068
      %v6232 = vunpack.c.l.b16 %v6069
      %v6233 = vunpack.c.l.b16 %v6070
      %v6234 = vunpack.c.l.b16 %v6071
      %v6235 = vunpack.c.l.b16 %v6072
      %v6236 = vpack.c.b16 %v6188, %v6187
      %v6237 = vpack.c.b16 %v6190, %v6189
      %v6238 = vpack.c.b16 %v6192, %v6191
      %v6239 = vpack.c.b16 %v6194, %v6193
      %v6240 = vpack.c.b16 %v6196, %v6195
      %v6241 = vpack.c.b16 %v6198, %v6197
      %v6242 = vpack.c.b16 %v6200, %v6199
      %v6243 = vpack.c.b16 %v6202, %v6201
      %v6244 = vpack.c.b16 %v6204, %v6203
      %v6245 = vpack.c.b16 %v6206, %v6205
      %v6246 = vpack.c.b16 %v6208, %v6207
      %v6247 = vpack.c.b16 %v6210, %v6209
      %v6248 = vpack.c.b16 %v6212, %v6211
      %v6249 = vpack.c.b16 %v6214, %v6213
      %v6250 = vpack.c.b16 %v6216, %v6215
      %v6251 = vpack.c.b16 %v6218, %v6217
      %v6252 = vpack.c.b16 %v6220, %v6219
      %v6253 = vpack.c.b16 %v6222, %v6221
      %v6254 = vpack.c.b16 %v6224, %v6223
      %v6255 = vpack.c.b16 %v6226, %v6225
      %v6256 = vpack.c.b16 %v6228, %v6227
      %v6257 = vpack.c.b16 %v6230, %v6229
      %v6258 = vpack.c.b16 %v6232, %v6231
      %v6259 = vpack.c.b16 %v6234, %v6233
      %v6260 = vpack.c.b16 %v6235, %v6235
      %v6261 = vrot.slane %v6236, 1
      %v6262 = vrot.slane %v6237, 1
      %v6263 = vsel %vm1998, %v6261, %v6262
      %v6264 = vrot.slane %v6238, 1
      %v6265 = vsel %vm1998, %v6262, %v6264
      %v6266 = vrot.slane %v6239, 1
      %v6267 = vsel %vm1998, %v6264, %v6266
      %v6268 = vrot.slane %v6240, 1
      %v6269 = vsel %vm1998, %v6266, %v6268
      %v6270 = vrot.slane %v6241, 1
      %v6271 = vsel %vm1998, %v6268, %v6270
      %v6272 = vrot.slane %v6242, 1
      %v6273 = vsel %vm1998, %v6270, %v6272
      %v6274 = vrot.slane %v6243, 1
      %v6275 = vsel %vm1998, %v6272, %v6274
      %v6276 = vrot.slane %v6244, 1
      %v6277 = vsel %vm1998, %v6274, %v6276
      %v6278 = vrot.slane %v6245, 1
      %v6279 = vsel %vm1998, %v6276, %v6278
      %v6280 = vrot.slane %v6246, 1
      %v6281 = vsel %vm1998, %v6278, %v6280
      %v6282 = vrot.slane %v6247, 1
      %v6283 = vsel %vm1998, %v6280, %v6282
      %v6284 = vrot.slane %v6248, 1
      %v6285 = vsel %vm1998, %v6282, %v6284
      %v6286 = vrot.slane %v6249, 1
      %v6287 = vsel %vm1998, %v6284, %v6286
      %v6288 = vrot.slane %v6250, 1
      %v6289 = vsel %vm1998, %v6286, %v6288
      %v6290 = vrot.slane %v6251, 1
      %v6291 = vsel %vm1998, %v6288, %v6290
      %v6292 = vrot.slane %v6252, 1
      %v6293 = vsel %vm1998, %v6290, %v6292
      %v6294 = vrot.slane %v6253, 1
      %v6295 = vsel %vm1998, %v6292, %v6294
      %v6296 = vrot.slane %v6254, 1
      %v6297 = vsel %vm1998, %v6294, %v6296
      %v6298 = vrot.slane %v6255, 1
      %v6299 = vsel %vm1998, %v6296, %v6298
      %v6300 = vrot.slane %v6256, 1
      %v6301 = vsel %vm1998, %v6298, %v6300
      %v6302 = vrot.slane %v6257, 1
      %v6303 = vsel %vm1998, %v6300, %v6302
      %v6304 = vrot.slane %v6258, 1
      %v6305 = vsel %vm1998, %v6302, %v6304
      %v6306 = vrot.slane %v6259, 1
      %v6307 = vsel %vm1998, %v6304, %v6306
      %v6308 = vrot.slane %v6260, 1
      %v6309 = vsel %vm1998, %v6306, %v6308
      %v6350 = vunpack.c.l.b16 %v6122
      %v6351 = vunpack.c.l.b16 %v6123
      %v6352 = vunpack.c.l.b16 %v6124
      %v6353 = vunpack.c.l.b16 %v6125
      %v6354 = vunpack.c.l.b16 %v6126
      %v6355 = vunpack.c.l.b16 %v6127
      %v6356 = vunpack.c.l.b16 %v6128
      %v6357 = vunpack.c.l.b16 %v6129
      %v6358 = vunpack.c.l.b16 %v6130
      %v6359 = vunpack.c.l.b16 %v6131
      %v6360 = vunpack.c.l.b16 %v6132
      %v6361 = vunpack.c.l.b16 %v6133
      %v6362 = vunpack.c.l.b16 %v6134
      %v6363 = vunpack.c.l.b16 %v6135
      %v6364 = vunpack.c.l.b16 %v6136
      %v6365 = vunpack.c.l.b16 %v6137
      %v6366 = vpack.c.b16 %v6351, %v6350
      %v6367 = vpack.c.b16 %v6353, %v6352
      %v6368 = vpack.c.b16 %v6355, %v6354
      %v6369 = vpack.c.b16 %v6357, %v6356
      %v6370 = vpack.c.b16 %v6359, %v6358
      %v6371 = vpack.c.b16 %v6361, %v6360
      %v6372 = vpack.c.b16 %v6363, %v6362
      %v6373 = vpack.c.b16 %v6365, %v6364
      %6382 = vmatprep.subr.bf16.mxu0 0
      %6383 = vmatpush1.bf16.msra.mxu0 %v6366
      %6384 = vmatprep.subr.bf16.mxu0 0
      %6385 = vmatpush1.bf16.msra.mxu0 %v6367
      %6386 = vmatprep.subr.bf16.mxu0 0
      %6387 = vmatpush1.bf16.msra.mxu0 %v6368
      %6388 = vmatprep.subr.bf16.mxu0 0
      %6389 = vmatpush1.bf16.msra.mxu0 %v6369
      %6390 = vmatprep.subr.bf16.mxu0 0
      %6391 = vmatpush1.bf16.msra.mxu0 %v6370
      %6392 = vmatprep.subr.bf16.mxu0 0
      %6393 = vmatpush1.bf16.msra.mxu0 %v6371
      %6394 = vmatprep.subr.bf16.mxu0 0
      %6395 = vmatpush1.bf16.msra.mxu0 %v6372
      %6396 = vmatprep.subr.bf16.mxu0 0
      %6397 = vmatpush1.bf16.msra.mxu0 %v6373
      %6398 = vmatprep.subr.bf16.mxu0 0
      %6399 = vmatpush1.bf16.msra.mxu0 0
      %6400 = vmatprep.subr.bf16.mxu0 0
      %6401 = vmatpush1.bf16.msra.mxu0 0
      %6402 = vmatprep.subr.bf16.mxu0 0
      %6403 = vmatpush1.bf16.msra.mxu0 0
      %6404 = vmatprep.subr.bf16.mxu0 0
      %6405 = vmatpush1.bf16.msra.mxu0 0
      %6406 = vmatprep.subr.bf16.mxu0 0
      %6407 = vmatpush1.bf16.msra.mxu0 0
      %6408 = vmatprep.subr.bf16.mxu0 0
      %6409 = vmatpush1.bf16.msra.mxu0 0
      %6410 = vmatprep.subr.bf16.mxu0 0
      %6411 = vmatpush1.bf16.msra.mxu0 0
      %6412 = vmatprep.subr.bf16.mxu0 0
      %6413 = vmatpush1.bf16.msra.mxu0 0
      %6414 = vmatprep.mubr.bf16.mxu0 0
      %6415 = vmatmul.mubr.bf16.gmra.mrb[0].mxu0 %v6263
      %v6416 = vpop.f32.mrb[0].mxu0
      %v6417 = vadd.f32 0.0, %v6416
      %v6418 = vpop.f32.mrb[0].mxu0
      %v6419 = vpop.f32.mrb[0].mxu0
      %v6420 = vadd.f32 0.0, %v6419
      %v6421 = vpop.f32.mrb[0].mxu0
      %6422 = vmatprep.mubr.bf16.mxu0 0
      %6423 = vmatmul.mubr.bf16.gmra.mrb[0].mxu0 %v6265
      %v6424 = vpop.f32.mrb[0].mxu0
      %v6425 = vadd.f32 0.0, %v6424
      %v6426 = vpop.f32.mrb[0].mxu0
      %v6427 = vpop.f32.mrb[0].mxu0
      %v6428 = vadd.f32 0.0, %v6427
      %v6429 = vpop.f32.mrb[0].mxu0
      %6430 = vmatprep.mubr.bf16.mxu0 0
      %6431 = vmatmul.mubr.bf16.gmra.mrb[0].mxu0 %v6267
      %v6432 = vpop.f32.mrb[0].mxu0
      %v6433 = vadd.f32 0.0, %v6432
      %v6434 = vpop.f32.mrb[0].mxu0
      %v6435 = vpop.f32.mrb[0].mxu0
      %v6436 = vadd.f32 0.0, %v6435
      %v6437 = vpop.f32.mrb[0].mxu0
      %6438 = vmatprep.mubr.bf16.mxu0 0
      %6439 = vmatmul.mubr.bf16.gmra.mrb[0].mxu0 %v6269
      %v6440 = vpop.f32.mrb[0].mxu0
      %v6441 = vadd.f32 0.0, %v6440
      %v6442 = vpop.f32.mrb[0].mxu0
      %v6443 = vpop.f32.mrb[0].mxu0
      %v6444 = vadd.f32 0.0, %v6443
      %v6445 = vpop.f32.mrb[0].mxu0
      %6446 = vmatprep.mubr.bf16.mxu0 0
      %6447 = vmatmul.mubr.bf16.gmra.mrb[0].mxu0 %v6271
      %v6448 = vpop.f32.mrb[0].mxu0
      %v6449 = vadd.f32 0.0, %v6448
      %v6450 = vpop.f32.mrb[0].mxu0
      %v6451 = vpop.f32.mrb[0].mxu0
      %v6452 = vadd.f32 0.0, %v6451
      %v6453 = vpop.f32.mrb[0].mxu0
      %6454 = vmatprep.mubr.bf16.mxu0 0
      %6455 = vmatmul.mubr.bf16.gmra.mrb[0].mxu0 %v6273
      %v6456 = vpop.f32.mrb[0].mxu0
      %v6457 = vadd.f32 0.0, %v6456
      %v6458 = vpop.f32.mrb[0].mxu0
      %v6459 = vpop.f32.mrb[0].mxu0
      %v6460 = vadd.f32 0.0, %v6459
      %v6461 = vpop.f32.mrb[0].mxu0
      %6462 = vmatprep.mubr.bf16.mxu0 0
      %6463 = vmatmul.mubr.bf16.gmra.mrb[0].mxu0 %v6275
      %v6464 = vpop.f32.mrb[0].mxu0
      %v6465 = vadd.f32 0.0, %v6464
      %v6466 = vpop.f32.mrb[0].mxu0
      %v6467 = vpop.f32.mrb[0].mxu0
      %v6468 = vadd.f32 0.0, %v6467
      %v6469 = vpop.f32.mrb[0].mxu0
      %6470 = vmatprep.mubr.bf16.mxu0 0
      %6471 = vmatmul.mubr.bf16.gmra.mrb[0].mxu0 %v6277
      %v6472 = vpop.f32.mrb[0].mxu0
      %v6473 = vadd.f32 0.0, %v6472
      %v6474 = vpop.f32.mrb[0].mxu0
      %v6475 = vpop.f32.mrb[0].mxu0
      %v6476 = vadd.f32 0.0, %v6475
      %v6477 = vpop.f32.mrb[0].mxu0
      %6478 = vmatprep.mubr.bf16.mxu0 0
      %6479 = vmatmul.mubr.bf16.gmra.mrb[0].mxu0 %v6279
      %v6480 = vpop.f32.mrb[0].mxu0
      %v6481 = vadd.f32 0.0, %v6480
      %v6482 = vpop.f32.mrb[0].mxu0
      %v6483 = vpop.f32.mrb[0].mxu0
      %v6484 = vadd.f32 0.0, %v6483
      %v6485 = vpop.f32.mrb[0].mxu0
      %6486 = vmatprep.mubr.bf16.mxu0 0
      %6487 = vmatmul.mubr.bf16.gmra.mrb[0].mxu0 %v6281
      %v6488 = vpop.f32.mrb[0].mxu0
      %v6489 = vadd.f32 0.0, %v6488
      %v6490 = vpop.f32.mrb[0].mxu0
      %v6491 = vpop.f32.mrb[0].mxu0
      %v6492 = vadd.f32 0.0, %v6491
      %v6493 = vpop.f32.mrb[0].mxu0
      %6494 = vmatprep.mubr.bf16.mxu0 0
      %6495 = vmatmul.mubr.bf16.gmra.mrb[0].mxu0 %v6283
      %v6496 = vpop.f32.mrb[0].mxu0
      %v6497 = vadd.f32 0.0, %v6496
      %v6498 = vpop.f32.mrb[0].mxu0
      %v6499 = vpop.f32.mrb[0].mxu0
      %v6500 = vadd.f32 0.0, %v6499
      %v6501 = vpop.f32.mrb[0].mxu0
      %6502 = vmatprep.mubr.bf16.mxu0 0
      %6503 = vmatmul.mubr.bf16.gmra.mrb[0].mxu0 %v6285
      %v6504 = vpop.f32.mrb[0].mxu0
      %v6505 = vadd.f32 0.0, %v6504
      %v6506 = vpop.f32.mrb[0].mxu0
      %v6507 = vpop.f32.mrb[0].mxu0
      %v6508 = vadd.f32 0.0, %v6507
      %v6509 = vpop.f32.mrb[0].mxu0
      %6510 = vmatprep.mubr.bf16.mxu0 0
      %6511 = vmatmul.mubr.bf16.gmra.mrb[0].mxu0 %v6287
      %v6512 = vpop.f32.mrb[0].mxu0
      %v6513 = vadd.f32 0.0, %v6512
      %v6514 = vpop.f32.mrb[0].mxu0
      %v6515 = vpop.f32.mrb[0].mxu0
      %v6516 = vadd.f32 0.0, %v6515
      %v6517 = vpop.f32.mrb[0].mxu0
      %6518 = vmatprep.mubr.bf16.mxu0 0
      %6519 = vmatmul.mubr.bf16.gmra.mrb[0].mxu0 %v6289
      %v6520 = vpop.f32.mrb[0].mxu0
      %v6521 = vadd.f32 0.0, %v6520
      %v6522 = vpop.f32.mrb[0].mxu0
      %v6523 = vpop.f32.mrb[0].mxu0
      %v6524 = vadd.f32 0.0, %v6523
      %v6525 = vpop.f32.mrb[0].mxu0
      %6526 = vmatprep.mubr.bf16.mxu0 0
      %6527 = vmatmul.mubr.bf16.gmra.mrb[0].mxu0 %v6291
      %v6528 = vpop.f32.mrb[0].mxu0
      %v6529 = vadd.f32 0.0, %v6528
      %v6530 = vpop.f32.mrb[0].mxu0
      %v6531 = vpop.f32.mrb[0].mxu0
      %v6532 = vadd.f32 0.0, %v6531
      %v6533 = vpop.f32.mrb[0].mxu0
      %6534 = vmatprep.mubr.bf16.mxu0 0
      %6535 = vmatmul.mubr.bf16.gmra.mrb[0].mxu0 %v6293
      %v6536 = vpop.f32.mrb[0].mxu0
      %v6537 = vadd.f32 0.0, %v6536
      %v6538 = vpop.f32.mrb[0].mxu0
      %v6539 = vpop.f32.mrb[0].mxu0
      %v6540 = vadd.f32 0.0, %v6539
      %v6541 = vpop.f32.mrb[0].mxu0
      %6542 = vmatprep.mubr.bf16.mxu0 0
      %6543 = vmatmul.mubr.bf16.gmra.mrb[0].mxu0 %v6295
      %v6544 = vpop.f32.mrb[0].mxu0
      %v6545 = vadd.f32 0.0, %v6544
      %v6546 = vpop.f32.mrb[0].mxu0
      %v6547 = vpop.f32.mrb[0].mxu0
      %v6548 = vadd.f32 0.0, %v6547
      %v6549 = vpop.f32.mrb[0].mxu0
      %6550 = vmatprep.mubr.bf16.mxu0 0
      %6551 = vmatmul.mubr.bf16.gmra.mrb[0].mxu0 %v6297
      %v6552 = vpop.f32.mrb[0].mxu0
      %v6553 = vadd.f32 0.0, %v6552
      %v6554 = vpop.f32.mrb[0].mxu0
      %v6555 = vpop.f32.mrb[0].mxu0
      %v6556 = vadd.f32 0.0, %v6555
      %v6557 = vpop.f32.mrb[0].mxu0
      %6558 = vmatprep.mubr.bf16.mxu0 0
      %6559 = vmatmul.mubr.bf16.gmra.mrb[0].mxu0 %v6299
      %v6560 = vpop.f32.mrb[0].mxu0
      %v6561 = vadd.f32 0.0, %v6560
      %v6562 = vpop.f32.mrb[0].mxu0
      %v6563 = vpop.f32.mrb[0].mxu0
      %v6564 = vadd.f32 0.0, %v6563
      %v6565 = vpop.f32.mrb[0].mxu0
      %6566 = vmatprep.mubr.bf16.mxu0 0
      %6567 = vmatmul.mubr.bf16.gmra.mrb[0].mxu0 %v6301
      %v6568 = vpop.f32.mrb[0].mxu0
      %v6569 = vadd.f32 0.0, %v6568
      %v6570 = vpop.f32.mrb[0].mxu0
      %v6571 = vpop.f32.mrb[0].mxu0
      %v6572 = vadd.f32 0.0, %v6571
      %v6573 = vpop.f32.mrb[0].mxu0
      %6574 = vmatprep.mubr.bf16.mxu0 0
      %6575 = vmatmul.mubr.bf16.gmra.mrb[0].mxu0 %v6303
      %v6576 = vpop.f32.mrb[0].mxu0
      %v6577 = vadd.f32 0.0, %v6576
      %v6578 = vpop.f32.mrb[0].mxu0
      %v6579 = vpop.f32.mrb[0].mxu0
      %v6580 = vadd.f32 0.0, %v6579
      %v6581 = vpop.f32.mrb[0].mxu0
      %6582 = vmatprep.mubr.bf16.mxu0 0
      %6583 = vmatmul.mubr.bf16.gmra.mrb[0].mxu0 %v6305
      %v6584 = vpop.f32.mrb[0].mxu0
      %v6585 = vadd.f32 0.0, %v6584
      %v6586 = vpop.f32.mrb[0].mxu0
      %v6587 = vpop.f32.mrb[0].mxu0
      %v6588 = vadd.f32 0.0, %v6587
      %v6589 = vpop.f32.mrb[0].mxu0
      %6590 = vmatprep.mubr.bf16.mxu0 0
      %6591 = vmatmul.mubr.bf16.gmra.mrb[0].mxu0 %v6307
      %v6592 = vpop.f32.mrb[0].mxu0
      %v6593 = vadd.f32 0.0, %v6592
      %v6594 = vpop.f32.mrb[0].mxu0
      %v6595 = vpop.f32.mrb[0].mxu0
      %v6596 = vadd.f32 0.0, %v6595
      %v6597 = vpop.f32.mrb[0].mxu0
      %6598 = vmatprep.mubr.bf16.mxu0 0
      %6599 = vmatmul.mubr.bf16.gmra.mrb[0].mxu0 %v6309
      %v6600 = vpop.f32.mrb[0].mxu0
      %v6601 = vadd.f32 0.0, %v6600
      %v6602 = vpop.f32.mrb[0].mxu0
      %v6603 = vpop.f32.mrb[0].mxu0
      %v6604 = vadd.f32 0.0, %v6603
      %v6605 = vpop.f32.mrb[0].mxu0
      %6606 = vdwg.mxu0
      %v6607 = vadd.f32 %v6073, %v6417
      %v6608 = vadd.f32 %v6074, %v6420
      %v6609 = vadd.f32 %v6075, %v6425
      %v6610 = vadd.f32 %v6076, %v6428
      %v6611 = vadd.f32 %v6077, %v6433
      %v6612 = vadd.f32 %v6078, %v6436
      %v6613 = vadd.f32 %v6079, %v6441
      %v6614 = vadd.f32 %v6080, %v6444
      %v6615 = vadd.f32 %v6081, %v6449
      %v6616 = vadd.f32 %v6082, %v6452
      %v6617 = vadd.f32 %v6083, %v6457
      %v6618 = vadd.f32 %v6084, %v6460
      %v6619 = vadd.f32 %v6085, %v6465
      %v6620 = vadd.f32 %v6086, %v6468
      %v6621 = vadd.f32 %v6087, %v6473
      %v6622 = vadd.f32 %v6088, %v6476
      %v6623 = vadd.f32 %v6089, %v6481
      %v6624 = vadd.f32 %v6090, %v6484
      %v6625 = vadd.f32 %v6091, %v6489
      %v6626 = vadd.f32 %v6092, %v6492
      %v6627 = vadd.f32 %v6093, %v6497
      %v6628 = vadd.f32 %v6094, %v6500
      %v6629 = vadd.f32 %v6095, %v6505
      %v6630 = vadd.f32 %v6096, %v6508
      %v6631 = vadd.f32 %v6097, %v6513
      %v6632 = vadd.f32 %v6098, %v6516
      %v6633 = vadd.f32 %v6099, %v6521
      %v6634 = vadd.f32 %v6100, %v6524
      %v6635 = vadd.f32 %v6101, %v6529
      %v6636 = vadd.f32 %v6102, %v6532
      %v6637 = vadd.f32 %v6103, %v6537
      %v6638 = vadd.f32 %v6104, %v6540
      %v6639 = vadd.f32 %v6105, %v6545
      %v6640 = vadd.f32 %v6106, %v6548
      %v6641 = vadd.f32 %v6107, %v6553
      %v6642 = vadd.f32 %v6108, %v6556
      %v6643 = vadd.f32 %v6109, %v6561
      %v6644 = vadd.f32 %v6110, %v6564
      %v6645 = vadd.f32 %v6111, %v6569
      %v6646 = vadd.f32 %v6112, %v6572
      %v6647 = vadd.f32 %v6113, %v6577
      %v6648 = vadd.f32 %v6114, %v6580
      %v6649 = vadd.f32 %v6115, %v6585
      %v6650 = vadd.f32 %v6116, %v6588
      %v6651 = vadd.f32 %v6117, %v6593
      %v6652 = vadd.f32 %v6118, %v6596
      %v6653 = vadd.f32 %v6119, %v6601
      %v6654 = vadd.f32 %v6120, %v6604
      %6655 = vst [vmem:[#allocation2] sm:$0xff] %v6607
      %6656 = vst [vmem:[#allocation2 + $0x8] sm:$0xff] %v6608
      %6657 = vst [vmem:[#allocation2 + $0x10] sm:$0xff] %v6609
      %6658 = vst [vmem:[#allocation2 + $0x18] sm:$0xff] %v6610
      %6659 = vst [vmem:[#allocation2 + $0x20] sm:$0xff] %v6611
      %6660 = vst [vmem:[#allocation2 + $0x28] sm:$0xff] %v6612
      %6661 = vst [vmem:[#allocation2 + $0x30] sm:$0xff] %v6613
      %6662 = vst [vmem:[#allocation2 + $0x38] sm:$0xff] %v6614
      %6663 = vst [vmem:[#allocation2 + $0x40] sm:$0xff] %v6615
      %6664 = vst [vmem:[#allocation2 + $0x48] sm:$0xff] %v6616
      %6665 = vst [vmem:[#allocation2 + $0x50] sm:$0xff] %v6617
      %6666 = vst [vmem:[#allocation2 + $0x58] sm:$0xff] %v6618
      %6667 = vst [vmem:[#allocation2 + $0x60] sm:$0xff] %v6619
      %6668 = vst [vmem:[#allocation2 + $0x68] sm:$0xff] %v6620
      %6669 = vst [vmem:[#allocation2 + $0x70] sm:$0xff] %v6621
      %6670 = vst [vmem:[#allocation2 + $0x78] sm:$0xff] %v6622
      %6671 = vst [vmem:[#allocation2 + $0x80] sm:$0xff] %v6623
      %6672 = vst [vmem:[#allocation2 + $0x88] sm:$0xff] %v6624
      %6673 = vst [vmem:[#allocation2 + $0x90] sm:$0xff] %v6625
      %6674 = vst [vmem:[#allocation2 + $0x98] sm:$0xff] %v6626
      %6675 = vst [vmem:[#allocation2 + $0xa0] sm:$0xff] %v6627
      %6676 = vst [vmem:[#allocation2 + $0xa8] sm:$0xff] %v6628
      %6677 = vst [vmem:[#allocation2 + $0xb0] sm:$0xff] %v6629
      %6678 = vst [vmem:[#allocation2 + $0xb8] sm:$0xff] %v6630
      %6679 = vst [vmem:[#allocation2 + $0xc0] sm:$0xff] %v6631
      %6680 = vst [vmem:[#allocation2 + $0xc8] sm:$0xff] %v6632
      %6681 = vst [vmem:[#allocation2 + $0xd0] sm:$0xff] %v6633
      %6682 = vst [vmem:[#allocation2 + $0xd8] sm:$0xff] %v6634
      %6683 = vst [vmem:[#allocation2 + $0xe0] sm:$0xff] %v6635
      %6684 = vst [vmem:[#allocation2 + $0xe8] sm:$0xff] %v6636
      %6685 = vst [vmem:[#allocation2 + $0xf0] sm:$0xff] %v6637
      %6686 = vst [vmem:[#allocation2 + $0xf8] sm:$0xff] %v6638
      %6687 = vst [vmem:[#allocation2 + $0x100] sm:$0xff] %v6639
      %6688 = vst [vmem:[#allocation2 + $0x108] sm:$0xff] %v6640
      %6689 = vst [vmem:[#allocation2 + $0x110] sm:$0xff] %v6641
      %6690 = vst [vmem:[#allocation2 + $0x118] sm:$0xff] %v6642
      %6691 = vst [vmem:[#allocation2 + $0x120] sm:$0xff] %v6643
      %6692 = vst [vmem:[#allocation2 + $0x128] sm:$0xff] %v6644
      %6693 = vst [vmem:[#allocation2 + $0x130] sm:$0xff] %v6645
      %6694 = vst [vmem:[#allocation2 + $0x138] sm:$0xff] %v6646
      %6695 = vst [vmem:[#allocation2 + $0x140] sm:$0xff] %v6647
      %6696 = vst [vmem:[#allocation2 + $0x148] sm:$0xff] %v6648
      %6697 = vst [vmem:[#allocation2 + $0x150] sm:$0xff] %v6649
      %6698 = vst [vmem:[#allocation2 + $0x158] sm:$0xff] %v6650
      %6699 = vst [vmem:[#allocation2 + $0x160] sm:$0xff] %v6651
      %6700 = vst [vmem:[#allocation2 + $0x168] sm:$0xff] %v6652
      %6701 = vst [vmem:[#allocation2 + $0x170] sm:$0xff] %v6653
      %6702 = vst [vmem:[#allocation2 + $0x178] sm:$0xff] %v6654
      // Predicated region
      $region37: #{ipex_conv2d_forward.1} parent=31 // pred_check
        %p6703 = pneg %p257
      $region38: #{ipex_conv2d_forward.1} parent=31 // pred_check_branch
        %6705 = sbr.rel (%p6703) target = $region40
      $region39: #{ipex_conv2d_forward.1} parent=31 // pred_region
        %v6706 = vld [vmem:[#allocation2] sm:$0xff]
        %v6707 = vld [vmem:[#allocation2 + $0x8] sm:$0xff]
        %v6708 = vld [vmem:[#allocation2 + $0x10] sm:$0xff]
        %v6709 = vld [vmem:[#allocation2 + $0x18] sm:$0xff]
        %v6710 = vld [vmem:[#allocation2 + $0x20] sm:$0xff]
        %v6711 = vld [vmem:[#allocation2 + $0x28] sm:$0xff]
        %v6712 = vld [vmem:[#allocation2 + $0x30] sm:$0xff]
        %v6713 = vld [vmem:[#allocation2 + $0x38] sm:$0xff]
        %v6714 = vld [vmem:[#allocation2 + $0x40] sm:$0xff]
        %v6715 = vld [vmem:[#allocation2 + $0x48] sm:$0xff]
        %v6716 = vld [vmem:[#allocation2 + $0x50] sm:$0xff]
        %v6717 = vld [vmem:[#allocation2 + $0x58] sm:$0xff]
        %v6718 = vld [vmem:[#allocation2 + $0x60] sm:$0xff]
        %v6719 = vld [vmem:[#allocation2 + $0x68] sm:$0xff]
        %v6720 = vld [vmem:[#allocation2 + $0x70] sm:$0xff]
        %v6721 = vld [vmem:[#allocation2 + $0x78] sm:$0xff]
        %v6722 = vld [vmem:[#allocation2 + $0x80] sm:$0xff]
        %v6723 = vld [vmem:[#allocation2 + $0x88] sm:$0xff]
        %v6724 = vld [vmem:[#allocation2 + $0x90] sm:$0xff]
        %v6725 = vld [vmem:[#allocation2 + $0x98] sm:$0xff]
        %v6726 = vld [vmem:[#allocation2 + $0xa0] sm:$0xff]
        %v6727 = vld [vmem:[#allocation2 + $0xa8] sm:$0xff]
        %v6728 = vld [vmem:[#allocation2 + $0xb0] sm:$0xff]
        %v6729 = vld [vmem:[#allocation2 + $0xb8] sm:$0xff]
        %v6730 = vld [vmem:[#allocation2 + $0xc0] sm:$0xff]
        %v6731 = vld [vmem:[#allocation2 + $0xc8] sm:$0xff]
        %v6732 = vld [vmem:[#allocation2 + $0xd0] sm:$0xff]
        %v6733 = vld [vmem:[#allocation2 + $0xd8] sm:$0xff]
        %v6734 = vld [vmem:[#allocation2 + $0xe0] sm:$0xff]
        %v6735 = vld [vmem:[#allocation2 + $0xe8] sm:$0xff]
        %v6736 = vld [vmem:[#allocation2 + $0xf0] sm:$0xff]
        %v6737 = vld [vmem:[#allocation2 + $0xf8] sm:$0xff]
        %v6738 = vld [vmem:[#allocation2 + $0x100] sm:$0xff]
        %v6739 = vld [vmem:[#allocation2 + $0x108] sm:$0xff]
        %v6740 = vld [vmem:[#allocation2 + $0x110] sm:$0xff]
        %v6741 = vld [vmem:[#allocation2 + $0x118] sm:$0xff]
        %v6742 = vld [vmem:[#allocation2 + $0x120] sm:$0xff]
        %v6743 = vld [vmem:[#allocation2 + $0x128] sm:$0xff]
        %v6744 = vld [vmem:[#allocation2 + $0x130] sm:$0xff]
        %v6745 = vld [vmem:[#allocation2 + $0x138] sm:$0xff]
        %v6746 = vld [vmem:[#allocation2 + $0x140] sm:$0xff]
        %v6747 = vld [vmem:[#allocation2 + $0x148] sm:$0xff]
        %v6748 = vld [vmem:[#allocation2 + $0x150] sm:$0xff]
        %v6749 = vld [vmem:[#allocation2 + $0x158] sm:$0xff]
        %v6750 = vld [vmem:[#allocation2 + $0x160] sm:$0xff]
        %v6751 = vld [vmem:[#allocation2 + $0x168] sm:$0xff]
        %v6752 = vld [vmem:[#allocation2 + $0x170] sm:$0xff]
        %v6753 = vld [vmem:[#allocation2 + $0x178] sm:$0xff]
        %v6754 = vld [vmem:[%s247] sm:$0x1]
        %v6756 = vlaneseq
        %v6757 = vshrl.u32 %v6756, 7
        %v6758 = vsub.s32 0, %v6757
        %v6759 = vrot.slane %v6754, %v6758
        %v6761 = vadd.f32 %v6706, %v6759
        %v6762 = vadd.f32 %v6707, %v6759
        %v6763 = vadd.f32 %v6708, %v6759
        %v6764 = vadd.f32 %v6709, %v6759
        %v6765 = vadd.f32 %v6710, %v6759
        %v6766 = vadd.f32 %v6711, %v6759
        %v6767 = vadd.f32 %v6712, %v6759
        %v6768 = vadd.f32 %v6713, %v6759
        %v6769 = vadd.f32 %v6714, %v6759
        %v6770 = vadd.f32 %v6715, %v6759
        %v6771 = vadd.f32 %v6716, %v6759
        %v6772 = vadd.f32 %v6717, %v6759
        %v6773 = vadd.f32 %v6718, %v6759
        %v6774 = vadd.f32 %v6719, %v6759
        %v6775 = vadd.f32 %v6720, %v6759
        %v6776 = vadd.f32 %v6721, %v6759
        %v6777 = vadd.f32 %v6722, %v6759
        %v6778 = vadd.f32 %v6723, %v6759
        %v6779 = vadd.f32 %v6724, %v6759
        %v6780 = vadd.f32 %v6725, %v6759
        %v6781 = vadd.f32 %v6726, %v6759
        %v6782 = vadd.f32 %v6727, %v6759
        %v6783 = vadd.f32 %v6728, %v6759
        %v6784 = vadd.f32 %v6729, %v6759
        %v6785 = vadd.f32 %v6730, %v6759
        %v6786 = vadd.f32 %v6731, %v6759
        %v6787 = vadd.f32 %v6732, %v6759
        %v6788 = vadd.f32 %v6733, %v6759
        %v6789 = vadd.f32 %v6734, %v6759
        %v6790 = vadd.f32 %v6735, %v6759
        %v6791 = vadd.f32 %v6736, %v6759
        %v6792 = vadd.f32 %v6737, %v6759
        %v6793 = vadd.f32 %v6738, %v6759
        %v6794 = vadd.f32 %v6739, %v6759
        %v6795 = vadd.f32 %v6740, %v6759
        %v6796 = vadd.f32 %v6741, %v6759
        %v6797 = vadd.f32 %v6742, %v6759
        %v6798 = vadd.f32 %v6743, %v6759
        %v6799 = vadd.f32 %v6744, %v6759
        %v6800 = vadd.f32 %v6745, %v6759
        %v6801 = vadd.f32 %v6746, %v6759
        %v6802 = vadd.f32 %v6747, %v6759
        %v6803 = vadd.f32 %v6748, %v6759
        %v6804 = vadd.f32 %v6749, %v6759
        %v6805 = vadd.f32 %v6750, %v6759
        %v6806 = vadd.f32 %v6751, %v6759
        %v6807 = vadd.f32 %v6752, %v6759
        %v6808 = vadd.f32 %v6753, %v6759
        %6809 = vst [vmem:[%s255] sm:$0xff] %v6761
        %6810 = vst [vmem:[%s255 + $0x8] sm:$0xff] %v6762
        %6811 = vst [vmem:[%s255 + $0x10] sm:$0xff] %v6763
        %6812 = vst [vmem:[%s255 + $0x18] sm:$0xff] %v6764
        %6813 = vst [vmem:[%s255 + $0x20] sm:$0xff] %v6765
        %6814 = vst [vmem:[%s255 + $0x28] sm:$0xff] %v6766
        %6815 = vst [vmem:[%s255 + $0x30] sm:$0xff] %v6767
        %6816 = vst [vmem:[%s255 + $0x38] sm:$0xff] %v6768
        %6817 = vst [vmem:[%s255 + $0x40] sm:$0xff] %v6769
        %6818 = vst [vmem:[%s255 + $0x48] sm:$0xff] %v6770
        %6819 = vst [vmem:[%s255 + $0x50] sm:$0xff] %v6771
        %6820 = vst [vmem:[%s255 + $0x58] sm:$0xff] %v6772
        %6821 = vst [vmem:[%s255 + $0x60] sm:$0xff] %v6773
        %6822 = vst [vmem:[%s255 + $0x68] sm:$0xff] %v6774
        %6823 = vst [vmem:[%s255 + $0x70] sm:$0xff] %v6775
        %6824 = vst [vmem:[%s255 + $0x78] sm:$0xff] %v6776
        %6825 = vst [vmem:[%s255 + $0x80] sm:$0xff] %v6777
        %6826 = vst [vmem:[%s255 + $0x88] sm:$0xff] %v6778
        %6827 = vst [vmem:[%s255 + $0x90] sm:$0xff] %v6779
        %6828 = vst [vmem:[%s255 + $0x98] sm:$0xff] %v6780
        %6829 = vst [vmem:[%s255 + $0xa0] sm:$0xff] %v6781
        %6830 = vst [vmem:[%s255 + $0xa8] sm:$0xff] %v6782
        %6831 = vst [vmem:[%s255 + $0xb0] sm:$0xff] %v6783
        %6832 = vst [vmem:[%s255 + $0xb8] sm:$0xff] %v6784
        %6833 = vst [vmem:[%s255 + $0xc0] sm:$0xff] %v6785
        %6834 = vst [vmem:[%s255 + $0xc8] sm:$0xff] %v6786
        %6835 = vst [vmem:[%s255 + $0xd0] sm:$0xff] %v6787
        %6836 = vst [vmem:[%s255 + $0xd8] sm:$0xff] %v6788
        %6837 = vst [vmem:[%s255 + $0xe0] sm:$0xff] %v6789
        %6838 = vst [vmem:[%s255 + $0xe8] sm:$0xff] %v6790
        %6839 = vst [vmem:[%s255 + $0xf0] sm:$0xff] %v6791
        %6840 = vst [vmem:[%s255 + $0xf8] sm:$0xff] %v6792
        %6841 = vst [vmem:[%s255 + $0x100] sm:$0xff] %v6793
        %6842 = vst [vmem:[%s255 + $0x108] sm:$0xff] %v6794
        %6843 = vst [vmem:[%s255 + $0x110] sm:$0xff] %v6795
        %6844 = vst [vmem:[%s255 + $0x118] sm:$0xff] %v6796
        %6845 = vst [vmem:[%s255 + $0x120] sm:$0xff] %v6797
        %6846 = vst [vmem:[%s255 + $0x128] sm:$0xff] %v6798
        %6847 = vst [vmem:[%s255 + $0x130] sm:$0xff] %v6799
        %6848 = vst [vmem:[%s255 + $0x138] sm:$0xff] %v6800
        %6849 = vst [vmem:[%s255 + $0x140] sm:$0xff] %v6801
        %6850 = vst [vmem:[%s255 + $0x148] sm:$0xff] %v6802
        %6851 = vst [vmem:[%s255 + $0x150] sm:$0xff] %v6803
        %6852 = vst [vmem:[%s255 + $0x158] sm:$0xff] %v6804
        %6853 = vst [vmem:[%s255 + $0x160] sm:$0xff] %v6805
        %6854 = vst [vmem:[%s255 + $0x168] sm:$0xff] %v6806
        %6855 = vst [vmem:[%s255 + $0x170] sm:$0xff] %v6807
        %6856 = vst [vmem:[%s255 + $0x178] sm:$0xff] %v6808
      $region40: #{ipex_conv2d_forward.1} parent=31 // pred_fallthru
        _
      %p6857 = scmp.lt.s32.totalorder %s19, 1
      %s6858 = scalar_select %p6857, %s19, 1
      %p6859 = scmp.lt.s32.totalorder %s20, 0
      %s6860 = scalar_select %p6859, %s20, 0
      %s6861 = smul.addr %s6858, 48
      %s6862 = sadd.s32 %s6860, %s6861
      %s6863 = smul.addr %s6862, 8
      %s6864 = scalar_lea.vmem %s3, %s6863
      // Predicated region
      $region41: #{ipex_conv2d_forward.1} parent=31 // pred_check
        %p6865 = pneg %p135
      $region42: #{ipex_conv2d_forward.1} parent=31 // pred_check_branch
        %6867 = sbr.rel (%p6865) target = $region44
      $region43: #{ipex_conv2d_forward.1} parent=31 // pred_region
        _
      $region44: #{ipex_conv2d_forward.1} parent=31 // pred_fallthru
        _
    $region32: #{ipex_conv2d_forward.1} parent=5 // pred_fallthru
      _
    %p6868 = scmp.le.s32.totalorder 2, %s9
    // Predicated region
    $region45: #{ipex_conv2d_forward.1} parent=5 // pred_check
      %p6869 = pneg %p6868
    $region46: #{ipex_conv2d_forward.1} parent=5 // pred_check_branch
      %6871 = sbr.rel (%p6869) target = $region48
    $region47: #{ipex_conv2d_forward.1} parent=5 // pred_region
      %s6872 = ssub.s32 %s9, 2
      // Predicated region
      $region49: #{ipex_conv2d_forward.1} parent=47 // pred_check
        %p6873 = pneg %p141
      $region50: #{ipex_conv2d_forward.1} parent=47 // pred_check_branch
        %6875 = sbr.rel (%p6873) target = $region52
      $region51: #{ipex_conv2d_forward.1} parent=47 // pred_region
        %p6876 = scmp.lt.s32.totalorder %s22, 1
        %s6877 = scalar_select %p6876, %s22, 1
        %p6878 = scmp.lt.s32.totalorder %s23, 0
        %s6879 = scalar_select %p6878, %s23, 0
        %s6880 = smul.addr %s6877, 48
        %s6881 = sadd.s32 %s6879, %s6880
        %s6882 = smul.addr %s6881, 8
        %s6883 = scalar_lea.vmem %s3, %s6882
      $region52: #{ipex_conv2d_forward.1} parent=47 // pred_fallthru
        _
    $region48: #{ipex_conv2d_forward.1} parent=5 // pred_fallthru
      _
  $region6: #{ipex_conv2d_forward.1} parent=0 // loop_footer
    %s13 = sadd.s32 1, %s9
  $region7: #{ipex_conv2d_forward.1} parent=0 // loop_footer_branch
    %8 = sbr.rel target = $region3
  $region8: #{ipex_conv2d_forward.1} parent=0 // loop_exit
    _

</llo_original>
